<compile_context>
chip_gen: v5e
topology: v5e:2x2
jax: 0.10.0
libtpu: 0.0.40
codegen_flags: <defaults>
</compile_context>

<pallas_src>
import functools

import jax
import jax.numpy as jnp
from jax.experimental import pallas as pl
from jax.experimental.pallas import tpu as pltpu

_LANES = 128


def _round_up(x, m):
    return ((x + m - 1) // m) * m


def _vmem_limit(*byte_counts):
    """Derived per-call VMEM budget (double-buffer allowance + headroom), v7x-safe cap."""
    need = 2 * int(sum(byte_counts)) + (8 << 20)
    return int(max(16 << 20, min(need, 64 << 20)))


def _pick_rows(oh, ow, cout_p):
    """Largest divisor of OH such that M = TH*OW ~ 512 and the f32 block stays <= 2 MiB."""
    target = max(1, -(-512 // ow))
    cap = max(1, (2 << 20) // max(1, ow * cout_p * 4))
    th = max(1, min(oh, target, cap))
    while oh % th:
        th -= 1
    return th


# ----------------------------- in-kernel helpers ---------------------------- #

def _conv_rows(pieces_fn, w_ref, b_ref, nrows, ow, fuse_k, slope):
    """Shared 3x3-conv row-block matmul (f32 accumulation, bias + optional LeakyReLU).

    pieces_fn(kh, r, nr) -> list of three bf16 arrays (nr, ow, csz), one per kw tap.
    fuse_k=True : weights (3, 3*csz, cout_p); kw taps are lane-concatenated (csz is a
                  multiple of 128 -> vreg-aligned) and fed to one MXU dot per kh.
    fuse_k=False: weights (3, 3, csz, cout_p); one dot per (kh, kw) tap (used for the
                  3-channel first layer whose taps are not lane-aligned).
    Returns the (nrows, ow, cout_p) float32 block.
    """
    cout_p = w_ref.shape[-1]

    def block(r, nr):
        m = nr * ow
        acc = jnp.zeros((m, cout_p), jnp.float32)
        for kh in range(3):
            pieces = pieces_fn(kh, r, nr)
            if fuse_k:
                lhs = jnp.concatenate(pieces, axis=-1).reshape(m, -1)
                acc = acc + jnp.dot(lhs, w_ref[kh], preferred_element_type=jnp.float32)
            else:
                for kw in range(3):
                    acc = acc + jnp.dot(pieces[kw].reshape(m, -1), w_ref[kh, kw],
                                        preferred_element_type=jnp.float32)
        acc = acc + b_ref[...]
        if slope is not None:
            acc = jnp.where(acc >= 0.0, acc, slope * acc)
        return acc.reshape(nr, ow, cout_p)

    # Only flatten (TH, OW) -> TH*OW when the merge is layout-trivial; otherwise fall back
    # to per-row dots (only ever hit by tiny late-stage maps where M is irrelevant).
    if ow % 8 == 0 or nrows == 1 or ow == 1:
        return block(0, nrows)
    return jnp.concatenate([block(r, 1) for r in range(nrows)], axis=0)


def _pad_pieces(pad_ref, ow):
    """kw tap slices for a stride-1 conv read from a zero-padded VMEM scratch."""
    def pieces(kh, r, nr):
        return [pad_ref[pl.ds(r + kh, nr), pl.ds(kw, ow), :] for kw in range(3)]
    return pieces


# ------------------------------ Pallas kernels ------------------------------ #

def _down_conv_kernel(x_ref, w_ref, b_ref, o_ref, *, th, ow, cin_p, quad, slope):
    """Stride-2 3x3 conv (pad 1) on a 2x2 space-to-depth packed, VMEM-resident input.

    x_ref: (PH, PW, 4*cin_p) bf16 -- whole padded image of one batch element (block index is
           constant along the row-block axis, so it is DMA'd once per batch element).
    """
    r0 = pl.multiple_of(th * pl.program_id(1), th)

    def pieces(kh, r, nr):
        out = []
        row = pl.ds(r0 + r + kh // 2, nr)
        for kw in range(3):
            col = pl.ds(kw // 2, ow)
            if quad:  # lane-aligned quadrant slice (cin_p is a multiple of 128)
                q = (kh % 2) * 2 + (kw % 2)
                out.append(x_ref[row, col, pl.ds(q * cin_p, cin_p)])
            else:     # first layer: quadrant selection folded into zero weight rows
                out.append(x_ref[row, col, :])
        return out

    y = _conv_rows(pieces, w_ref, b_ref, th, ow, fuse_k=quad, slope=slope)
    o_ref[...] = y.astype(o_ref.dtype)


def _residual_core(x_ref, w1_ref, b1_ref, w2_ref, b2_ref, xpad_ref, tpad_ref, slope):
    """conv3x3 -> LeakyReLU -> conv3x3 -> +skip, all inside one kernel (whole map)."""
    oh, ow, _ = x_ref.shape
    xpad_ref[...] = jnp.zeros(xpad_ref.shape, xpad_ref.dtype)
    xpad_ref[1:oh + 1, 1:ow + 1, :] = x_ref[...]
    t = _conv_rows(_pad_pieces(xpad_ref, ow), w1_ref, b1_ref, oh, ow, fuse_k=True, slope=slope)
    tpad_ref[...] = jnp.zeros(tpad_ref.shape, tpad_ref.dtype)
    tpad_ref[1:oh + 1, 1:ow + 1, :] = t.astype(tpad_ref.dtype)
    y = _conv_rows(_pad_pieces(tpad_ref, ow), w2_ref, b2_ref, oh, ow, fuse_k=True, slope=None)
    return y + x_ref[...].astype(jnp.float32)


def _res_block_kernel(x_ref, w1_ref, b1_ref, w2_ref, b2_ref, o_ref, xpad_ref, tpad_ref, *,
                      slope):
    y = _residual_core(x_ref, w1_ref, b1_ref, w2_ref, b2_ref, xpad_ref, tpad_ref, slope)
    o_ref[...] = y.astype(o_ref.dtype)


def _res_final_kernel(x_ref, w1_ref, b1_ref, w2_ref, b2_ref, w3_ref, b3_ref,
                      o1_ref, o2_ref, xpad_ref, tpad_ref, *, slope):
    oh, ow, _ = x_ref.shape
    y = _residual_core(x_ref, w1_ref, b1_ref, w2_ref, b2_ref, xpad_ref, tpad_ref, slope)
    o1_ref[...] = y.astype(o1_ref.dtype)
    # Fused final 1-channel conv (lane-padded to 128): reuse the padded scratch for y.
    tpad_ref[1:oh + 1, 1:ow + 1, :] = y.astype(tpad_ref.dtype)
    z = _conv_rows(_pad_pieces(tpad_ref, ow), w3_ref, b3_ref, oh, ow, fuse_k=True, slope=None)
    o2_ref[...] = z.astype(o2_ref.dtype)


# ------------------------------- host wrappers ------------------------------ #

def _space_to_depth_pad(x):
    """pad=1 + 2x2 space-to-depth, cast to bf16 (single fused XLA pass).

    (N, H, W, C) -> (N, ceil((H+2)/2), ceil((W+2)/2), 4*C); channel index = (ph*2+pw)*C + c.
    """
    n, h, w, c = x.shape
    hp = _round_up(h + 2, 2)
    wp = _round_up(w + 2, 2)
    xp = jnp.pad(x, ((0, 0), (1, hp - h - 1), (1, wp - w - 1), (0, 0)))
    xp = xp.reshape(n, hp // 2, 2, wp // 2, 2, c)
    xp = jnp.transpose(xp, (0, 1, 3, 2, 4, 5)).reshape(n, hp // 2, wp // 2, 4 * c)
    return xp.astype(jnp.bfloat16)


def down_conv(x, p, *, slope=0.01):
    """3x3 / stride 2 / pad 1 conv (+ LeakyReLU) as one Pallas call; bf16 output."""
    n, h, w, cin_p = x.shape
    oh = (h - 1) // 2 + 1
    ow = (w - 1) // 2 + 1
    xs = _space_to_depth_pad(x)
    ph, pw = xs.shape[1], xs.shape[2]
    cout_p = p["w"].shape[-1]
    th = _pick_rows(oh, ow, cout_p)

    kern = functools.partial(_down_conv_kernel, th=th, ow=ow, cin_p=cin_p,
                             quad=p["quad"], slope=slope)
    w_ndim = p["w"].ndim
    in_specs = [
        pl.BlockSpec((None, ph, pw, 4 * cin_p), lambda b, r: (b, 0, 0, 0)),
        pl.BlockSpec(p["w"].shape, lambda b, r: (0,) * w_ndim),   # VMEM-resident weights
        pl.BlockSpec(p["b"].shape, lambda b, r: (0, 0)),          # VMEM-resident bias
    ]
    out_specs = pl.BlockSpec((None, th, ow, cout_p), lambda b, r: (b, r, 0, 0))

    x_bytes = ph * pw * 4 * cin_p * 2
    w_bytes = int(p["w"].size) * 2
    o_blk_bytes = th * ow * cout_p * 2
    flops = 2 * n * oh * ow * 9 * cin_p * cout_p
    return pl.pallas_call(
        kern,
        out_shape=jax.ShapeDtypeStruct((n, oh, ow, cout_p), jnp.bfloat16),
        grid=(n, oh // th),
        in_specs=in_specs,
        out_specs=out_specs,
        compiler_params=pltpu.CompilerParams(
            dimension_semantics=("parallel", "parallel"),
            vmem_limit_bytes=_vmem_limit(x_bytes, w_bytes, o_blk_bytes)),
        cost_estimate=pl.CostEstimate(
            flops=flops, transcendentals=0,
            bytes_accessed=n * (x_bytes + oh * ow * cout_p * 2) + w_bytes),
    )(xs, p["w"], p["b"])


def residual_block(h, p1, p2, *, slope=0.01):
    """Fused ResidualBlock: conv->LeakyReLU->conv->+skip in one pallas_call."""
    n, oh, ow, c = h.shape
    kern = functools.partial(_res_block_kernel, slope=slope)
    in_specs = [
        pl.BlockSpec((None, oh, ow, c), lambda b: (b, 0, 0, 0)),
        pl.BlockSpec(p1["w"].shape, lambda b: (0, 0, 0)),
        pl.BlockSpec(p1["b"].shape, lambda b: (0, 0)),
        pl.BlockSpec(p2["w"].shape, lambda b: (0, 0, 0)),
        pl.BlockSpec(p2["b"].shape, lambda b: (0, 0)),
    ]
    out_specs = pl.BlockSpec((None, oh, ow, c), lambda b: (b, 0, 0, 0))
    scratch = [pltpu.VMEM((oh + 2, ow + 2, c), jnp.bfloat16),
               pltpu.VMEM((oh + 2, ow + 2, c), jnp.bfloat16)]
    hw_bytes = oh * ow * c * 2
    w_bytes = (int(p1["w"].size) + int(p2["w"].size)) * 2
    flops = 2 * 2 * n * oh * ow * 9 * c * c
    return pl.pallas_call(
        kern,
        out_shape=jax.ShapeDtypeStruct((n, oh, ow, c), jnp.bfloat16),
        grid=(n,),
        in_specs=in_specs,
        out_specs=out_specs,
        scratch_shapes=scratch,
        compiler_params=pltpu.CompilerParams(
            dimension_semantics=("parallel",),
            vmem_limit_bytes=_vmem_limit(hw_bytes * 4, w_bytes)),
        cost_estimate=pl.CostEstimate(flops=flops, transcendentals=0,
                                      bytes_accessed=n * hw_bytes * 2 + w_bytes),
    )(h, p1["w"], p1["b"], p2["w"], p2["b"])


def residual_final_block(h, p1, p2, pf, *, slope=0.01):
    """Fused ResidualBlock + final 1-channel conv (two outputs) in one pallas_call."""
    n, oh, ow, c = h.shape
    cf = pf["w"].shape[-1]
    kern = functools.partial(_res_final_kernel, slope=slope)
    in_specs = [
        pl.BlockSpec((None, oh, ow, c), lambda b: (b, 0, 0, 0)),
        pl.BlockSpec(p1["w"].shape, lambda b: (0, 0, 0)),
        pl.BlockSpec(p1["b"].shape, lambda b: (0, 0)),
        pl.BlockSpec(p2["w"].shape, lambda b: (0, 0, 0)),
        pl.BlockSpec(p2["b"].shape, lambda b: (0, 0)),
        pl.BlockSpec(pf["w"].shape, lambda b: (0, 0, 0)),
        pl.BlockSpec(pf["b"].shape, lambda b: (0, 0)),
    ]
    out_specs = (pl.BlockSpec((None, oh, ow, c), lambda b: (b, 0, 0, 0)),
                 pl.BlockSpec((None, oh, ow, cf), lambda b: (b, 0, 0, 0)))
    out_shape = (jax.ShapeDtypeStruct((n, oh, ow, c), jnp.bfloat16),
                 jax.ShapeDtypeStruct((n, oh, ow, cf), jnp.bfloat16))
    scratch = [pltpu.VMEM((oh + 2, ow + 2, c), jnp.bfloat16),
               pltpu.VMEM((oh + 2, ow + 2, c), jnp.bfloat16)]
    hw_bytes = oh * ow * c * 2
    w_bytes = (int(p1["w"].size) + int(p2["w"].size) + int(pf["w"].size)) * 2
    flops = 2 * n * oh * ow * 9 * c * (2 * c + cf)
    return pl.pallas_call(
        kern,
        out_shape=out_shape,
        grid=(n,),
        in_specs=in_specs,
        out_specs=out_specs,
        scratch_shapes=scratch,
        compiler_params=pltpu.CompilerParams(
            dimension_semantics=("parallel",),
            vmem_limit_bytes=_vmem_limit(hw_bytes * 5, w_bytes)),
        cost_estimate=pl.CostEstimate(flops=flops, transcendentals=0,
                                      bytes_accessed=n * hw_bytes * 3 + w_bytes),
    )(h, p1["w"], p1["b"], p2["w"], p2["b"], pf["w"], pf["b"])


# --------------------------- parameter construction ------------------------- #

def _init_conv(key, cout, cin):
    k_w, k_b = jax.random.split(key)
    std = jnp.sqrt(2.0 / (cin * 9)).astype(jnp.float32)
    w = std * jax.random.normal(k_w, (cout, cin, 3, 3), jnp.float32)   # PyTorch OIHW layout
    b = 0.01 * jax.random.normal(k_b, (cout,), jnp.float32)
    return w, b


def _pack_standard(w, b, cin_p, cout_p):
    """(cout, cin, 3, 3) -> (3, 3*cin_p, cout_p) bf16, row index = kw*cin_p + cin."""
    cout, cin = w.shape[0], w.shape[1]
    wt = jnp.transpose(w, (2, 3, 1, 0))
    wt = jnp.pad(wt, ((0, 0), (0, 0), (0, cin_p - cin), (0, cout_p - cout)))
    w_k = wt.reshape(3, 3 * cin_p, cout_p).astype(jnp.bfloat16)
    b_k = jnp.pad(b, (0, cout_p - cout)).reshape(1, cout_p).astype(jnp.float32)
    return w_k, b_k


def _pack_quad_embedded(w, b, cin_p, cout_p):
    """First-layer packing (non-lane-aligned cin): (3, 3, 4*cin_p, cout_p) with the 2x2
    space-to-depth quadrant selection folded into zero rows, so the kernel never slices
    channels at non-128-aligned offsets."""
    cout, cin = w.shape[0], w.shape[1]
    wt = jnp.transpose(w, (2, 3, 1, 0))          # (kh, kw, cin, cout)
    w_k = jnp.zeros((3, 3, 4 * cin_p, cout_p), jnp.float32)
    for kh in range(3):
        for kw in range(3):
            q = (kh % 2) * 2 + (kw % 2)
            w_k = w_k.at[kh, kw, q * cin_p:q * cin_p + cin, :cout].set(wt[kh, kw])
    b_k = jnp.pad(b, (0, cout_p - cout)).reshape(1, cout_p).astype(jnp.float32)
    return w_k.astype(jnp.bfloat16), b_k


def make_discriminator_params(key, fm_mult=1.0):
    n_fmap = [3] + [int(c * fm_mult) for c in (64, 128, 256, 512, 512)]
    pad_c = [3] + [_round_up(c, _LANES) for c in n_fmap[1:]]   # raw 3-ch image left unpadded
    keys = jax.random.split(key, 10)
    ki = iter(keys)
    params = {"down": [], "res": [], "final": None, "n_fmap": n_fmap}
    for i in range(5):
        cin, cout = n_fmap[i], n_fmap[i + 1]
        cin_p, cout_p = pad_c[i], pad_c[i + 1]
        w, b = _init_conv(next(ki), cout, cin)
        quad = (cin_p % _LANES == 0)
        if quad:
            w_k, b_k = _pack_standard(w, b, cin_p, cout_p)
        else:
            w_k, b_k = _pack_quad_embedded(w, b, cin_p, cout_p)
        params["down"].append({"w": w_k, "b": b_k, "cout": cout, "cin_p": cin_p, "quad": quad})
        if i >= 3:
            c_t, c_p = n_fmap[i + 1], pad_c[i + 1]
            blk = []
            for _ in range(2):
                rw, rb = _init_conv(next(ki), c_t, c_t)
                rw_k, rb_k = _pack_standard(rw, rb, c_p, c_p)
                blk.append({"w": rw_k, "b": rb_k, "cout": c_t})
            params["res"].append(tuple(blk))
    fw, fb = _init_conv(next(ki), 1, n_fmap[-1])
    fw_k, fb_k = _pack_standard(fw, fb, pad_c[-1], _LANES)
    params["final"] = {"w": fw_k, "b": fb_k, "cout": 1}
    return params


# -------------------------------- forward pass ------------------------------ #

def _to_nchw(x_nhwc, c_true):
    return jnp.transpose(x_nhwc[..., :c_true].astype(jnp.float32), (0, 3, 1, 2))


def discriminator_forward(x_nchw, params):
    # Each conv-block (Conv2d + LeakyReLU(0.01)) and each ResidualBlock is one "layer" for
    # h_list (5 down blocks + 2 residual blocks + final conv = 8 entries).
    # TODO(synk): `sequential()` may flatten blocks into individual Conv2d / LeakyReLU
    # modules, which would change h_list granularity (not its values).
    # TODO(synk): ResidualBlock assumed to be conv->LeakyReLU(0.01)->conv->(+skip), no
    # activation after the add; verify against the reference PyTorch implementation.
    h = jnp.transpose(x_nchw, (0, 2, 3, 1))     # NCHW -> NHWC (lane-dense channels)
    h_list = []
    for i in range(5):
        p = params["down"][i]
        h = down_conv(h, p, slope=0.01)                           # conv s2 + LeakyReLU(0.01)
        h_list.append(_to_nchw(h, p["cout"]))
        if i == 3:
            p1, p2 = params["res"][0]
            h = residual_block(h, p1, p2, slope=0.01)             # fused residual block
            h_list.append(_to_nchw(h, p2["cout"]))
        elif i == 4:
            p1, p2 = params["res"][1]
            pf = params["final"]
            h, z = residual_final_block(h, p1, p2, pf, slope=0.01)  # fused res + final conv
            h_list.append(_to_nchw(h, p2["cout"]))
            h_list.append(_to_nchw(z, pf["cout"]))
    return h_list[-1], h_list


# ----------------------------------- main ----------------------------------- #

if __name__ == "__main__":
    key = jax.random.PRNGKey(0)
    k_x, k_p = jax.random.split(key)

    # Small, module-consistent config: fm_mult=0.25 -> channels [3, 16, 32, 64, 128, 128]
    params = make_discriminator_params(k_p, fm_mult=0.25)
    x = jax.random.normal(k_x, (2, 3, 16, 16), jnp.float32)   # NCHW, like PyTorch

    fwd = jax.jit(lambda inp: discriminator_forward(inp, params))
    h, h_list = fwd(x)
    h = jax.block_until_ready(h)
    for t in h_list:
        jax.block_until_ready(t)

    assert h.shape == (2, 1, 1, 1), h.shape
    assert len(h_list) == 8, len(h_list)
    print("KERNEL_OK")
</pallas_src>

<mosaic_0001>
module attributes {stable_mosaic.version = 11 : i64} {
  func.func @_down_conv_kernel(%arg0: i32, %arg1: i32, %arg2: memref<1x9x9x12xbf16, #tpu.memory_space<vmem>>, %arg3: memref<3x3x12x128xbf16, #tpu.memory_space<vmem>>, %arg4: memref<1x128xf32, #tpu.memory_space<vmem>>, %arg5: memref<1x8x8x128xbf16, #tpu.memory_space<vmem>>) attributes {dimension_semantics = [#tpu.dimension_semantics<parallel>, #tpu.dimension_semantics<parallel>], iteration_bounds = array<i64: 2, 1>, scalar_prefetch = 0 : i64, scratch_operands = 0 : i64, tpu.core_type = #tpu.core_type<tc>, window_params = [{transform_indices = @transform_0, window_bounds = array<i64: 1, 9, 9, 12>}, {pipeline_mode = #tpu.pipeline_mode<synchronous>, transform_indices = @transform_1, window_bounds = array<i64: 3, 3, 12, 128>}, {pipeline_mode = #tpu.pipeline_mode<synchronous>, transform_indices = @transform_2, window_bounds = array<i64: 1, 128>}, {transform_indices = @transform_3, window_bounds = array<i64: 1, 8, 8, 128>}]} {
    %c8_i32 = arith.constant 8 : i32
    %0 = arith.muli %c8_i32, %arg1 : i32
    %1 = tpu.assume_multiple %0, 8 : i32
    %cst = arith.constant 0.000000e+00 : f32
    %2 = vector.broadcast %cst : f32 to vector<64x128xf32>
    %c0_i32 = arith.constant 0 : i32
    %3 = arith.addi %1, %c0_i32 : i32
    %c0_i32_0 = arith.constant 0 : i32
    %4 = arith.addi %3, %c0_i32_0 : i32
    %c0 = arith.constant 0 : index
    %5 = arith.index_cast %4 : i32 to index
    %c0_1 = arith.constant 0 : index
    %c0_2 = arith.constant 0 : index
    %6 = vector.load %arg2[%c0, %5, %c0_1, %c0_2] : memref<1x9x9x12xbf16, #tpu.memory_space<vmem>>, vector<1x8x8x12xbf16>
    %7 = vector.shape_cast %6 : vector<1x8x8x12xbf16> to vector<8x8x12xbf16>
    %c0_3 = arith.constant 0 : index
    %8 = arith.index_cast %4 : i32 to index
    %c0_4 = arith.constant 0 : index
    %c0_5 = arith.constant 0 : index
    %9 = vector.load %arg2[%c0_3, %8, %c0_4, %c0_5] : memref<1x9x9x12xbf16, #tpu.memory_space<vmem>>, vector<1x8x8x12xbf16>
    %10 = vector.shape_cast %9 : vector<1x8x8x12xbf16> to vector<8x8x12xbf16>
    %c0_6 = arith.constant 0 : index
    %11 = arith.index_cast %4 : i32 to index
    %c1 = arith.constant 1 : index
    %c0_7 = arith.constant 0 : index
    %12 = vector.load %arg2[%c0_6, %11, %c1, %c0_7] : memref<1x9x9x12xbf16, #tpu.memory_space<vmem>>, vector<1x8x8x12xbf16>
    %13 = vector.shape_cast %12 : vector<1x8x8x12xbf16> to vector<8x8x12xbf16>
    %14 = vector.shape_cast %7 : vector<8x8x12xbf16> to vector<64x12xbf16>
    %c0_8 = arith.constant 0 : index
    %c0_9 = arith.constant 0 : index
    %c0_10 = arith.constant 0 : index
    %c0_11 = arith.constant 0 : index
    %15 = vector.load %arg3[%c0_8, %c0_9, %c0_10, %c0_11] : memref<3x3x12x128xbf16, #tpu.memory_space<vmem>>, vector<1x1x12x128xbf16>
    %16 = vector.shape_cast %15 : vector<1x1x12x128xbf16> to vector<12x128xbf16>
    %cst_12 = arith.constant dense<0.000000e+00> : vector<64x128xf32>
    %17 = tpu.matmul %14, %16, %cst_12 {dimension_numbers = #tpu.dot_dimension_numbers<[1], [0], [0], [1], [0, 0, 1, 1], [], []>} : vector<64x12xbf16>, vector<12x128xbf16>, vector<64x128xf32> -> vector<64x128xf32>
    %18 = arith.addf %2, %17 : vector<64x128xf32>
    %19 = vector.shape_cast %10 : vector<8x8x12xbf16> to vector<64x12xbf16>
    %c0_13 = arith.constant 0 : index
    %c1_14 = arith.constant 1 : index
    %c0_15 = arith.constant 0 : index
    %c0_16 = arith.constant 0 : index
    %20 = vector.load %arg3[%c0_13, %c1_14, %c0_15, %c0_16] : memref<3x3x12x128xbf16, #tpu.memory_space<vmem>>, vector<1x1x12x128xbf16>
    %21 = vector.shape_cast %20 : vector<1x1x12x128xbf16> to vector<12x128xbf16>
    %cst_17 = arith.constant dense<0.000000e+00> : vector<64x128xf32>
    %22 = tpu.matmul %19, %21, %cst_17 {dimension_numbers = #tpu.dot_dimension_numbers<[1], [0], [0], [1], [0, 0, 1, 1], [], []>} : vector<64x12xbf16>, vector<12x128xbf16>, vector<64x128xf32> -> vector<64x128xf32>
    %23 = arith.addf %18, %22 : vector<64x128xf32>
    %24 = vector.shape_cast %13 : vector<8x8x12xbf16> to vector<64x12xbf16>
    %c0_18 = arith.constant 0 : index
    %c2 = arith.constant 2 : index
    %c0_19 = arith.constant 0 : index
    %c0_20 = arith.constant 0 : index
    %25 = vector.load %arg3[%c0_18, %c2, %c0_19, %c0_20] : memref<3x3x12x128xbf16, #tpu.memory_space<vmem>>, vector<1x1x12x128xbf16>
    %26 = vector.shape_cast %25 : vector<1x1x12x128xbf16> to vector<12x128xbf16>
    %cst_21 = arith.constant dense<0.000000e+00> : vector<64x128xf32>
    %27 = tpu.matmul %24, %26, %cst_21 {dimension_numbers = #tpu.dot_dimension_numbers<[1], [0], [0], [1], [0, 0, 1, 1], [], []>} : vector<64x12xbf16>, vector<12x128xbf16>, vector<64x128xf32> -> vector<64x128xf32>
    %28 = arith.addf %23, %27 : vector<64x128xf32>
    %c0_i32_22 = arith.constant 0 : i32
    %29 = arith.addi %1, %c0_i32_22 : i32
    %c0_i32_23 = arith.constant 0 : i32
    %30 = arith.addi %29, %c0_i32_23 : i32
    %c0_24 = arith.constant 0 : index
    %31 = arith.index_cast %30 : i32 to index
    %c0_25 = arith.constant 0 : index
    %c0_26 = arith.constant 0 : index
    %32 = vector.load %arg2[%c0_24, %31, %c0_25, %c0_26] : memref<1x9x9x12xbf16, #tpu.memory_space<vmem>>, vector<1x8x8x12xbf16>
    %33 = vector.shape_cast %32 : vector<1x8x8x12xbf16> to vector<8x8x12xbf16>
    %c0_27 = arith.constant 0 : index
    %34 = arith.index_cast %30 : i32 to index
    %c0_28 = arith.constant 0 : index
    %c0_29 = arith.constant 0 : index
    %35 = vector.load %arg2[%c0_27, %34, %c0_28, %c0_29] : memref<1x9x9x12xbf16, #tpu.memory_space<vmem>>, vector<1x8x8x12xbf16>
    %36 = vector.shape_cast %35 : vector<1x8x8x12xbf16> to vector<8x8x12xbf16>
    %c0_30 = arith.constant 0 : index
    %37 = arith.index_cast %30 : i32 to index
    %c1_31 = arith.constant 1 : index
    %c0_32 = arith.constant 0 : index
    %38 = vector.load %arg2[%c0_30, %37, %c1_31, %c0_32] : memref<1x9x9x12xbf16, #tpu.memory_space<vmem>>, vector<1x8x8x12xbf16>
    %39 = vector.shape_cast %38 : vector<1x8x8x12xbf16> to vector<8x8x12xbf16>
    %40 = vector.shape_cast %33 : vector<8x8x12xbf16> to vector<64x12xbf16>
    %c1_33 = arith.constant 1 : index
    %c0_34 = arith.constant 0 : index
    %c0_35 = arith.constant 0 : index
    %c0_36 = arith.constant 0 : index
    %41 = vector.load %arg3[%c1_33, %c0_34, %c0_35, %c0_36] : memref<3x3x12x128xbf16, #tpu.memory_space<vmem>>, vector<1x1x12x128xbf16>
    %42 = vector.shape_cast %41 : vector<1x1x12x128xbf16> to vector<12x128xbf16>
    %cst_37 = arith.constant dense<0.000000e+00> : vector<64x128xf32>
    %43 = tpu.matmul %40, %42, %cst_37 {dimension_numbers = #tpu.dot_dimension_numbers<[1], [0], [0], [1], [0, 0, 1, 1], [], []>} : vector<64x12xbf16>, vector<12x128xbf16>, vector<64x128xf32> -> vector<64x128xf32>
    %44 = arith.addf %28, %43 : vector<64x128xf32>
    %45 = vector.shape_cast %36 : vector<8x8x12xbf16> to vector<64x12xbf16>
    %c1_38 = arith.constant 1 : index
    %c1_39 = arith.constant 1 : index
    %c0_40 = arith.constant 0 : index
    %c0_41 = arith.constant 0 : index
    %46 = vector.load %arg3[%c1_38, %c1_39, %c0_40, %c0_41] : memref<3x3x12x128xbf16, #tpu.memory_space<vmem>>, vector<1x1x12x128xbf16>
    %47 = vector.shape_cast %46 : vector<1x1x12x128xbf16> to vector<12x128xbf16>
    %cst_42 = arith.constant dense<0.000000e+00> : vector<64x128xf32>
    %48 = tpu.matmul %45, %47, %cst_42 {dimension_numbers = #tpu.dot_dimension_numbers<[1], [0], [0], [1], [0, 0, 1, 1], [], []>} : vector<64x12xbf16>, vector<12x128xbf16>, vector<64x128xf32> -> vector<64x128xf32>
    %49 = arith.addf %44, %48 : vector<64x128xf32>
    %50 = vector.shape_cast %39 : vector<8x8x12xbf16> to vector<64x12xbf16>
    %c1_43 = arith.constant 1 : index
    %c2_44 = arith.constant 2 : index
    %c0_45 = arith.constant 0 : index
    %c0_46 = arith.constant 0 : index
    %51 = vector.load %arg3[%c1_43, %c2_44, %c0_45, %c0_46] : memref<3x3x12x128xbf16, #tpu.memory_space<vmem>>, vector<1x1x12x128xbf16>
    %52 = vector.shape_cast %51 : vector<1x1x12x128xbf16> to vector<12x128xbf16>
    %cst_47 = arith.constant dense<0.000000e+00> : vector<64x128xf32>
    %53 = tpu.matmul %50, %52, %cst_47 {dimension_numbers = #tpu.dot_dimension_numbers<[1], [0], [0], [1], [0, 0, 1, 1], [], []>} : vector<64x12xbf16>, vector<12x128xbf16>, vector<64x128xf32> -> vector<64x128xf32>
    %54 = arith.addf %49, %53 : vector<64x128xf32>
    %c0_i32_48 = arith.constant 0 : i32
    %55 = arith.addi %1, %c0_i32_48 : i32
    %c1_i32 = arith.constant 1 : i32
    %56 = arith.addi %55, %c1_i32 : i32
    %c0_49 = arith.constant 0 : index
    %57 = arith.index_cast %56 : i32 to index
    %c0_50 = arith.constant 0 : index
    %c0_51 = arith.constant 0 : index
    %58 = vector.load %arg2[%c0_49, %57, %c0_50, %c0_51] : memref<1x9x9x12xbf16, #tpu.memory_space<vmem>>, vector<1x8x8x12xbf16>
    %59 = vector.shape_cast %58 : vector<1x8x8x12xbf16> to vector<8x8x12xbf16>
    %c0_52 = arith.constant 0 : index
    %60 = arith.index_cast %56 : i32 to index
    %c0_53 = arith.constant 0 : index
    %c0_54 = arith.constant 0 : index
    %61 = vector.load %arg2[%c0_52, %60, %c0_53, %c0_54] : memref<1x9x9x12xbf16, #tpu.memory_space<vmem>>, vector<1x8x8x12xbf16>
    %62 = vector.shape_cast %61 : vector<1x8x8x12xbf16> to vector<8x8x12xbf16>
    %c0_55 = arith.constant 0 : index
    %63 = arith.index_cast %56 : i32 to index
    %c1_56 = arith.constant 1 : index
    %c0_57 = arith.constant 0 : index
    %64 = vector.load %arg2[%c0_55, %63, %c1_56, %c0_57] : memref<1x9x9x12xbf16, #tpu.memory_space<vmem>>, vector<1x8x8x12xbf16>
    %65 = vector.shape_cast %64 : vector<1x8x8x12xbf16> to vector<8x8x12xbf16>
    %66 = vector.shape_cast %59 : vector<8x8x12xbf16> to vector<64x12xbf16>
    %c2_58 = arith.constant 2 : index
    %c0_59 = arith.constant 0 : index
    %c0_60 = arith.constant 0 : index
    %c0_61 = arith.constant 0 : index
    %67 = vector.load %arg3[%c2_58, %c0_59, %c0_60, %c0_61] : memref<3x3x12x128xbf16, #tpu.memory_space<vmem>>, vector<1x1x12x128xbf16>
    %68 = vector.shape_cast %67 : vector<1x1x12x128xbf16> to vector<12x128xbf16>
    %cst_62 = arith.constant dense<0.000000e+00> : vector<64x128xf32>
    %69 = tpu.matmul %66, %68, %cst_62 {dimension_numbers = #tpu.dot_dimension_numbers<[1], [0], [0], [1], [0, 0, 1, 1], [], []>} : vector<64x12xbf16>, vector<12x128xbf16>, vector<64x128xf32> -> vector<64x128xf32>
    %70 = arith.addf %54, %69 : vector<64x128xf32>
    %71 = vector.shape_cast %62 : vector<8x8x12xbf16> to vector<64x12xbf16>
    %c2_63 = arith.constant 2 : index
    %c1_64 = arith.constant 1 : index
    %c0_65 = arith.constant 0 : index
    %c0_66 = arith.constant 0 : index
    %72 = vector.load %arg3[%c2_63, %c1_64, %c0_65, %c0_66] : memref<3x3x12x128xbf16, #tpu.memory_space<vmem>>, vector<1x1x12x128xbf16>
    %73 = vector.shape_cast %72 : vector<1x1x12x128xbf16> to vector<12x128xbf16>
    %cst_67 = arith.constant dense<0.000000e+00> : vector<64x128xf32>
    %74 = tpu.matmul %71, %73, %cst_67 {dimension_numbers = #tpu.dot_dimension_numbers<[1], [0], [0], [1], [0, 0, 1, 1], [], []>} : vector<64x12xbf16>, vector<12x128xbf16>, vector<64x128xf32> -> vector<64x128xf32>
    %75 = arith.addf %70, %74 : vector<64x128xf32>
    %76 = vector.shape_cast %65 : vector<8x8x12xbf16> to vector<64x12xbf16>
    %c2_68 = arith.constant 2 : index
    %c2_69 = arith.constant 2 : index
    %c0_70 = arith.constant 0 : index
    %c0_71 = arith.constant 0 : index
    %77 = vector.load %arg3[%c2_68, %c2_69, %c0_70, %c0_71] : memref<3x3x12x128xbf16, #tpu.memory_space<vmem>>, vector<1x1x12x128xbf16>
    %78 = vector.shape_cast %77 : vector<1x1x12x128xbf16> to vector<12x128xbf16>
    %cst_72 = arith.constant dense<0.000000e+00> : vector<64x128xf32>
    %79 = tpu.matmul %76, %78, %cst_72 {dimension_numbers = #tpu.dot_dimension_numbers<[1], [0], [0], [1], [0, 0, 1, 1], [], []>} : vector<64x12xbf16>, vector<12x128xbf16>, vector<64x128xf32> -> vector<64x128xf32>
    %80 = arith.addf %75, %79 : vector<64x128xf32>
    %c0_73 = arith.constant 0 : index
    %c0_74 = arith.constant 0 : index
    %81 = vector.load %arg4[%c0_73, %c0_74] : memref<1x128xf32, #tpu.memory_space<vmem>>, vector<1x128xf32>
    %82 = vector.broadcast %81 : vector<1x128xf32> to vector<64x128xf32>
    %83 = arith.addf %80, %82 : vector<64x128xf32>
    %cst_75 = arith.constant 0.000000e+00 : f32
    %84 = vector.broadcast %cst_75 : f32 to vector<64x128xf32>
    %85 = arith.cmpf oge, %83, %84 : vector<64x128xf32>
    %cst_76 = arith.constant 0.00999999977 : f32
    %86 = vector.broadcast %cst_76 : f32 to vector<64x128xf32>
    %87 = arith.mulf %86, %83 : vector<64x128xf32>
    %88 = arith.select %85, %83, %87 : vector<64x128xi1>, vector<64x128xf32>
    %89 = vector.shape_cast %88 : vector<64x128xf32> to vector<8x8x128xf32>
    %90 = arith.truncf %89 : vector<8x8x128xf32> to vector<8x8x128xbf16>
    %c0_77 = arith.constant 0 : index
    %c0_78 = arith.constant 0 : index
    %c0_79 = arith.constant 0 : index
    %c0_80 = arith.constant 0 : index
    %91 = vector.load %arg5[%c0_77, %c0_78, %c0_79, %c0_80] : memref<1x8x8x128xbf16, #tpu.memory_space<vmem>>, vector<1x8x8x128xbf16>
    %92 = vector.shape_cast %91 : vector<1x8x8x128xbf16> to vector<8x8x128xbf16>
    %93 = vector.shape_cast %90 : vector<8x8x128xbf16> to vector<1x8x8x128xbf16>
    tpu.vector_store %arg5[%c0_77, %c0_78, %c0_79, %c0_80], %93 {strides = array<i32>} : memref<1x8x8x128xbf16, #tpu.memory_space<vmem>>, vector<1x8x8x128xbf16>,
    return
  }
  func.func @transform_0(%arg0: i32, %arg1: i32) -> (i32, i32, i32, i32) {
    %c0_i32 = arith.constant 0 : i32
    %c0_i32_0 = arith.constant 0 : i32
    %c0_i32_1 = arith.constant 0 : i32
    %c0_i32_2 = arith.constant 0 : i32
    return %arg0, %c0_i32, %c0_i32_0, %c0_i32_1 : i32, i32, i32, i32
  }
  func.func @transform_1(%arg0: i32, %arg1: i32) -> (i32, i32, i32, i32) {
    %c0_i32 = arith.constant 0 : i32
    %c0_i32_0 = arith.constant 0 : i32
    %c0_i32_1 = arith.constant 0 : i32
    %c0_i32_2 = arith.constant 0 : i32
    %c0_i32_3 = arith.constant 0 : i32
    return %c0_i32, %c0_i32_0, %c0_i32_1, %c0_i32_2 : i32, i32, i32, i32
  }
  func.func @transform_2(%arg0: i32, %arg1: i32) -> (i32, i32) {
    %c0_i32 = arith.constant 0 : i32
    %c0_i32_0 = arith.constant 0 : i32
    %c0_i32_1 = arith.constant 0 : i32
    return %c0_i32, %c0_i32_0 : i32, i32
  }
  func.func @transform_3(%arg0: i32, %arg1: i32) -> (i32, i32, i32, i32) {
    %c0_i32 = arith.constant 0 : i32
    %c0_i32_0 = arith.constant 0 : i32
    %c0_i32_1 = arith.constant 0 : i32
    return %arg0, %arg1, %c0_i32, %c0_i32_0 : i32, i32, i32, i32
  }
}

module attributes {stable_mosaic.version = 11 : i64} {
  func.func @_down_conv_kernel(%arg0: i32, %arg1: i32, %arg2: memref<1x5x5x512xbf16, #tpu.memory_space<vmem>>, %arg3: memref<3x384x128xbf16, #tpu.memory_space<vmem>>, %arg4: memref<1x128xf32, #tpu.memory_space<vmem>>, %arg5: memref<1x4x4x128xbf16, #tpu.memory_space<vmem>>) attributes {dimension_semantics = [#tpu.dimension_semantics<parallel>, #tpu.dimension_semantics<parallel>], iteration_bounds = array<i64: 2, 1>, scalar_prefetch = 0 : i64, scratch_operands = 0 : i64, tpu.core_type = #tpu.core_type<tc>, window_params = [{transform_indices = @transform_0, window_bounds = array<i64: 1, 5, 5, 512>}, {pipeline_mode = #tpu.pipeline_mode<synchronous>, transform_indices = @transform_1, window_bounds = array<i64: 3, 384, 128>}, {pipeline_mode = #tpu.pipeline_mode<synchronous>, transform_indices = @transform_2, window_bounds = array<i64: 1, 128>}, {transform_indices = @transform_3, window_bounds = array<i64: 1, 4, 4, 128>}]} {
    %c4_i32 = arith.constant 4 : i32
    %0 = arith.muli %c4_i32, %arg1 : i32
    %1 = tpu.assume_multiple %0, 4 : i32
    %cst = arith.constant 0.000000e+00 : f32
    %2 = vector.broadcast %cst : f32 to vector<4x128xf32>
    %c0_i32 = arith.constant 0 : i32
    %3 = arith.addi %1, %c0_i32 : i32
    %c0_i32_0 = arith.constant 0 : i32
    %4 = arith.addi %3, %c0_i32_0 : i32
    %c0 = arith.constant 0 : index
    %5 = arith.index_cast %4 : i32 to index
    %c0_1 = arith.constant 0 : index
    %c0_2 = arith.constant 0 : index
    %6 = vector.load %arg2[%c0, %5, %c0_1, %c0_2] : memref<1x5x5x512xbf16, #tpu.memory_space<vmem>>, vector<1x1x4x128xbf16>
    %7 = vector.shape_cast %6 : vector<1x1x4x128xbf16> to vector<1x4x128xbf16>
    %c0_3 = arith.constant 0 : index
    %8 = arith.index_cast %4 : i32 to index
    %c0_4 = arith.constant 0 : index
    %c128 = arith.constant 128 : index
    %9 = vector.load %arg2[%c0_3, %8, %c0_4, %c128] : memref<1x5x5x512xbf16, #tpu.memory_space<vmem>>, vector<1x1x4x128xbf16>
    %10 = vector.shape_cast %9 : vector<1x1x4x128xbf16> to vector<1x4x128xbf16>
    %c0_5 = arith.constant 0 : index
    %11 = arith.index_cast %4 : i32 to index
    %c1 = arith.constant 1 : index
    %c0_6 = arith.constant 0 : index
    %12 = vector.load %arg2[%c0_5, %11, %c1, %c0_6] : memref<1x5x5x512xbf16, #tpu.memory_space<vmem>>, vector<1x1x4x128xbf16>
    %13 = vector.shape_cast %12 : vector<1x1x4x128xbf16> to vector<1x4x128xbf16>
    %14 = tpu.concatenate %7, %10, %13 in 2 : vector<1x4x128xbf16>, vector<1x4x128xbf16>, vector<1x4x128xbf16> -> vector<1x4x384xbf16>
    %15 = vector.shape_cast %14 : vector<1x4x384xbf16> to vector<4x384xbf16>
    %c0_7 = arith.constant 0 : index
    %c0_8 = arith.constant 0 : index
    %c0_9 = arith.constant 0 : index
    %16 = vector.load %arg3[%c0_7, %c0_8, %c0_9] : memref<3x384x128xbf16, #tpu.memory_space<vmem>>, vector<1x384x128xbf16>
    %17 = vector.shape_cast %16 : vector<1x384x128xbf16> to vector<384x128xbf16>
    %cst_10 = arith.constant dense<0.000000e+00> : vector<4x128xf32>
    %18 = tpu.matmul %15, %17, %cst_10 {dimension_numbers = #tpu.dot_dimension_numbers<[1], [0], [0], [1], [0, 0, 1, 1], [], []>} : vector<4x384xbf16>, vector<384x128xbf16>, vector<4x128xf32> -> vector<4x128xf32>
    %19 = arith.addf %2, %18 : vector<4x128xf32>
    %c0_i32_11 = arith.constant 0 : i32
    %20 = arith.addi %1, %c0_i32_11 : i32
    %c0_i32_12 = arith.constant 0 : i32
    %21 = arith.addi %20, %c0_i32_12 : i32
    %c0_13 = arith.constant 0 : index
    %22 = arith.index_cast %21 : i32 to index
    %c0_14 = arith.constant 0 : index
    %c256 = arith.constant 256 : index
    %23 = vector.load %arg2[%c0_13, %22, %c0_14, %c256] : memref<1x5x5x512xbf16, #tpu.memory_space<vmem>>, vector<1x1x4x128xbf16>
    %24 = vector.shape_cast %23 : vector<1x1x4x128xbf16> to vector<1x4x128xbf16>
    %c0_15 = arith.constant 0 : index
    %25 = arith.index_cast %21 : i32 to index
    %c0_16 = arith.constant 0 : index
    %c384 = arith.constant 384 : index
    %26 = vector.load %arg2[%c0_15, %25, %c0_16, %c384] : memref<1x5x5x512xbf16, #tpu.memory_space<vmem>>, vector<1x1x4x128xbf16>
    %27 = vector.shape_cast %26 : vector<1x1x4x128xbf16> to vector<1x4x128xbf16>
    %c0_17 = arith.constant 0 : index
    %28 = arith.index_cast %21 : i32 to index
    %c1_18 = arith.constant 1 : index
    %c256_19 = arith.constant 256 : index
    %29 = vector.load %arg2[%c0_17, %28, %c1_18, %c256_19] : memref<1x5x5x512xbf16, #tpu.memory_space<vmem>>, vector<1x1x4x128xbf16>
    %30 = vector.shape_cast %29 : vector<1x1x4x128xbf16> to vector<1x4x128xbf16>
    %31 = tpu.concatenate %24, %27, %30 in 2 : vector<1x4x128xbf16>, vector<1x4x128xbf16>, vector<1x4x128xbf16> -> vector<1x4x384xbf16>
    %32 = vector.shape_cast %31 : vector<1x4x384xbf16> to vector<4x384xbf16>
    %c1_20 = arith.constant 1 : index
    %c0_21 = arith.constant 0 : index
    %c0_22 = arith.constant 0 : index
    %33 = vector.load %arg3[%c1_20, %c0_21, %c0_22] : memref<3x384x128xbf16, #tpu.memory_space<vmem>>, vector<1x384x128xbf16>
    %34 = vector.shape_cast %33 : vector<1x384x128xbf16> to vector<384x128xbf16>
    %cst_23 = arith.constant dense<0.000000e+00> : vector<4x128xf32>
    %35 = tpu.matmul %32, %34, %cst_23 {dimension_numbers = #tpu.dot_dimension_numbers<[1], [0], [0], [1], [0, 0, 1, 1], [], []>} : vector<4x384xbf16>, vector<384x128xbf16>, vector<4x128xf32> -> vector<4x128xf32>
    %36 = arith.addf %19, %35 : vector<4x128xf32>
    %c0_i32_24 = arith.constant 0 : i32
    %37 = arith.addi %1, %c0_i32_24 : i32
    %c1_i32 = arith.constant 1 : i32
    %38 = arith.addi %37, %c1_i32 : i32
    %c0_25 = arith.constant 0 : index
    %39 = arith.index_cast %38 : i32 to index
    %c0_26 = arith.constant 0 : index
    %c0_27 = arith.constant 0 : index
    %40 = vector.load %arg2[%c0_25, %39, %c0_26, %c0_27] : memref<1x5x5x512xbf16, #tpu.memory_space<vmem>>, vector<1x1x4x128xbf16>
    %41 = vector.shape_cast %40 : vector<1x1x4x128xbf16> to vector<1x4x128xbf16>
    %c0_28 = arith.constant 0 : index
    %42 = arith.index_cast %38 : i32 to index
    %c0_29 = arith.constant 0 : index
    %c128_30 = arith.constant 128 : index
    %43 = vector.load %arg2[%c0_28, %42, %c0_29, %c128_30] : memref<1x5x5x512xbf16, #tpu.memory_space<vmem>>, vector<1x1x4x128xbf16>
    %44 = vector.shape_cast %43 : vector<1x1x4x128xbf16> to vector<1x4x128xbf16>
    %c0_31 = arith.constant 0 : index
    %45 = arith.index_cast %38 : i32 to index
    %c1_32 = arith.constant 1 : index
    %c0_33 = arith.constant 0 : index
    %46 = vector.load %arg2[%c0_31, %45, %c1_32, %c0_33] : memref<1x5x5x512xbf16, #tpu.memory_space<vmem>>, vector<1x1x4x128xbf16>
    %47 = vector.shape_cast %46 : vector<1x1x4x128xbf16> to vector<1x4x128xbf16>
    %48 = tpu.concatenate %41, %44, %47 in 2 : vector<1x4x128xbf16>, vector<1x4x128xbf16>, vector<1x4x128xbf16> -> vector<1x4x384xbf16>
    %49 = vector.shape_cast %48 : vector<1x4x384xbf16> to vector<4x384xbf16>
    %c2 = arith.constant 2 : index
    %c0_34 = arith.constant 0 : index
    %c0_35 = arith.constant 0 : index
    %50 = vector.load %arg3[%c2, %c0_34, %c0_35] : memref<3x384x128xbf16, #tpu.memory_space<vmem>>, vector<1x384x128xbf16>
    %51 = vector.shape_cast %50 : vector<1x384x128xbf16> to vector<384x128xbf16>
    %cst_36 = arith.constant dense<0.000000e+00> : vector<4x128xf32>
    %52 = tpu.matmul %49, %51, %cst_36 {dimension_numbers = #tpu.dot_dimension_numbers<[1], [0], [0], [1], [0, 0, 1, 1], [], []>} : vector<4x384xbf16>, vector<384x128xbf16>, vector<4x128xf32> -> vector<4x128xf32>
    %53 = arith.addf %36, %52 : vector<4x128xf32>
    %c0_37 = arith.constant 0 : index
    %c0_38 = arith.constant 0 : index
    %54 = vector.load %arg4[%c0_37, %c0_38] : memref<1x128xf32, #tpu.memory_space<vmem>>, vector<1x128xf32>
    %55 = vector.broadcast %54 : vector<1x128xf32> to vector<4x128xf32>
    %56 = arith.addf %53, %55 : vector<4x128xf32>
    %cst_39 = arith.constant 0.000000e+00 : f32
    %57 = vector.broadcast %cst_39 : f32 to vector<4x128xf32>
    %58 = arith.cmpf oge, %56, %57 : vector<4x128xf32>
    %cst_40 = arith.constant 0.00999999977 : f32
    %59 = vector.broadcast %cst_40 : f32 to vector<4x128xf32>
    %60 = arith.mulf %59, %56 : vector<4x128xf32>
    %61 = arith.select %58, %56, %60 : vector<4x128xi1>, vector<4x128xf32>
    %62 = vector.shape_cast %61 : vector<4x128xf32> to vector<1x4x128xf32>
    %cst_41 = arith.constant 0.000000e+00 : f32
    %63 = vector.broadcast %cst_41 : f32 to vector<4x128xf32>
    %c1_i32_42 = arith.constant 1 : i32
    %64 = arith.addi %1, %c1_i32_42 : i32
    %c0_i32_43 = arith.constant 0 : i32
    %65 = arith.addi %64, %c0_i32_43 : i32
    %c0_44 = arith.constant 0 : index
    %66 = arith.index_cast %65 : i32 to index
    %c0_45 = arith.constant 0 : index
    %c0_46 = arith.constant 0 : index
    %67 = vector.load %arg2[%c0_44, %66, %c0_45, %c0_46] : memref<1x5x5x512xbf16, #tpu.memory_space<vmem>>, vector<1x1x4x128xbf16>
    %68 = vector.shape_cast %67 : vector<1x1x4x128xbf16> to vector<1x4x128xbf16>
    %c0_47 = arith.constant 0 : index
    %69 = arith.index_cast %65 : i32 to index
    %c0_48 = arith.constant 0 : index
    %c128_49 = arith.constant 128 : index
    %70 = vector.load %arg2[%c0_47, %69, %c0_48, %c128_49] : memref<1x5x5x512xbf16, #tpu.memory_space<vmem>>, vector<1x1x4x128xbf16>
    %71 = vector.shape_cast %70 : vector<1x1x4x128xbf16> to vector<1x4x128xbf16>
    %c0_50 = arith.constant 0 : index
    %72 = arith.index_cast %65 : i32 to index
    %c1_51 = arith.constant 1 : index
    %c0_52 = arith.constant 0 : index
    %73 = vector.load %arg2[%c0_50, %72, %c1_51, %c0_52] : memref<1x5x5x512xbf16, #tpu.memory_space<vmem>>, vector<1x1x4x128xbf16>
    %74 = vector.shape_cast %73 : vector<1x1x4x128xbf16> to vector<1x4x128xbf16>
    %75 = tpu.concatenate %68, %71, %74 in 2 : vector<1x4x128xbf16>, vector<1x4x128xbf16>, vector<1x4x128xbf16> -> vector<1x4x384xbf16>
    %76 = vector.shape_cast %75 : vector<1x4x384xbf16> to vector<4x384xbf16>
    %c0_53 = arith.constant 0 : index
    %c0_54 = arith.constant 0 : index
    %c0_55 = arith.constant 0 : index
    %77 = vector.load %arg3[%c0_53, %c0_54, %c0_55] : memref<3x384x128xbf16, #tpu.memory_space<vmem>>, vector<1x384x128xbf16>
    %78 = vector.shape_cast %77 : vector<1x384x128xbf16> to vector<384x128xbf16>
    %cst_56 = arith.constant dense<0.000000e+00> : vector<4x128xf32>
    %79 = tpu.matmul %76, %78, %cst_56 {dimension_numbers = #tpu.dot_dimension_numbers<[1], [0], [0], [1], [0, 0, 1, 1], [], []>} : vector<4x384xbf16>, vector<384x128xbf16>, vector<4x128xf32> -> vector<4x128xf32>
    %80 = arith.addf %63, %79 : vector<4x128xf32>
    %c1_i32_57 = arith.constant 1 : i32
    %81 = arith.addi %1, %c1_i32_57 : i32
    %c0_i32_58 = arith.constant 0 : i32
    %82 = arith.addi %81, %c0_i32_58 : i32
    %c0_59 = arith.constant 0 : index
    %83 = arith.index_cast %82 : i32 to index
    %c0_60 = arith.constant 0 : index
    %c256_61 = arith.constant 256 : index
    %84 = vector.load %arg2[%c0_59, %83, %c0_60, %c256_61] : memref<1x5x5x512xbf16, #tpu.memory_space<vmem>>, vector<1x1x4x128xbf16>
    %85 = vector.shape_cast %84 : vector<1x1x4x128xbf16> to vector<1x4x128xbf16>
    %c0_62 = arith.constant 0 : index
    %86 = arith.index_cast %82 : i32 to index
    %c0_63 = arith.constant 0 : index
    %c384_64 = arith.constant 384 : index
    %87 = vector.load %arg2[%c0_62, %86, %c0_63, %c384_64] : memref<1x5x5x512xbf16, #tpu.memory_space<vmem>>, vector<1x1x4x128xbf16>
    %88 = vector.shape_cast %87 : vector<1x1x4x128xbf16> to vector<1x4x128xbf16>
    %c0_65 = arith.constant 0 : index
    %89 = arith.index_cast %82 : i32 to index
    %c1_66 = arith.constant 1 : index
    %c256_67 = arith.constant 256 : index
    %90 = vector.load %arg2[%c0_65, %89, %c1_66, %c256_67] : memref<1x5x5x512xbf16, #tpu.memory_space<vmem>>, vector<1x1x4x128xbf16>
    %91 = vector.shape_cast %90 : vector<1x1x4x128xbf16> to vector<1x4x128xbf16>
    %92 = tpu.concatenate %85, %88, %91 in 2 : vector<1x4x128xbf16>, vector<1x4x128xbf16>, vector<1x4x128xbf16> -> vector<1x4x384xbf16>
    %93 = vector.shape_cast %92 : vector<1x4x384xbf16> to vector<4x384xbf16>
    %c1_68 = arith.constant 1 : index
    %c0_69 = arith.constant 0 : index
    %c0_70 = arith.constant 0 : index
    %94 = vector.load %arg3[%c1_68, %c0_69, %c0_70] : memref<3x384x128xbf16, #tpu.memory_space<vmem>>, vector<1x384x128xbf16>
    %95 = vector.shape_cast %94 : vector<1x384x128xbf16> to vector<384x128xbf16>
    %cst_71 = arith.constant dense<0.000000e+00> : vector<4x128xf32>
    %96 = tpu.matmul %93, %95, %cst_71 {dimension_numbers = #tpu.dot_dimension_numbers<[1], [0], [0], [1], [0, 0, 1, 1], [], []>} : vector<4x384xbf16>, vector<384x128xbf16>, vector<4x128xf32> -> vector<4x128xf32>
    %97 = arith.addf %80, %96 : vector<4x128xf32>
    %c1_i32_72 = arith.constant 1 : i32
    %98 = arith.addi %1, %c1_i32_72 : i32
    %c1_i32_73 = arith.constant 1 : i32
    %99 = arith.addi %98, %c1_i32_73 : i32
    %c0_74 = arith.constant 0 : index
    %100 = arith.index_cast %99 : i32 to index
    %c0_75 = arith.constant 0 : index
    %c0_76 = arith.constant 0 : index
    %101 = vector.load %arg2[%c0_74, %100, %c0_75, %c0_76] : memref<1x5x5x512xbf16, #tpu.memory_space<vmem>>, vector<1x1x4x128xbf16>
    %102 = vector.shape_cast %101 : vector<1x1x4x128xbf16> to vector<1x4x128xbf16>
    %c0_77 = arith.constant 0 : index
    %103 = arith.index_cast %99 : i32 to index
    %c0_78 = arith.constant 0 : index
    %c128_79 = arith.constant 128 : index
    %104 = vector.load %arg2[%c0_77, %103, %c0_78, %c128_79] : memref<1x5x5x512xbf16, #tpu.memory_space<vmem>>, vector<1x1x4x128xbf16>
    %105 = vector.shape_cast %104 : vector<1x1x4x128xbf16> to vector<1x4x128xbf16>
    %c0_80 = arith.constant 0 : index
    %106 = arith.index_cast %99 : i32 to index
    %c1_81 = arith.constant 1 : index
    %c0_82 = arith.constant 0 : index
    %107 = vector.load %arg2[%c0_80, %106, %c1_81, %c0_82] : memref<1x5x5x512xbf16, #tpu.memory_space<vmem>>, vector<1x1x4x128xbf16>
    %108 = vector.shape_cast %107 : vector<1x1x4x128xbf16> to vector<1x4x128xbf16>
    %109 = tpu.concatenate %102, %105, %108 in 2 : vector<1x4x128xbf16>, vector<1x4x128xbf16>, vector<1x4x128xbf16> -> vector<1x4x384xbf16>
    %110 = vector.shape_cast %109 : vector<1x4x384xbf16> to vector<4x384xbf16>
    %c2_83 = arith.constant 2 : index
    %c0_84 = arith.constant 0 : index
    %c0_85 = arith.constant 0 : index
    %111 = vector.load %arg3[%c2_83, %c0_84, %c0_85] : memref<3x384x128xbf16, #tpu.memory_space<vmem>>, vector<1x384x128xbf16>
    %112 = vector.shape_cast %111 : vector<1x384x128xbf16> to vector<384x128xbf16>
    %cst_86 = arith.constant dense<0.000000e+00> : vector<4x128xf32>
    %113 = tpu.matmul %110, %112, %cst_86 {dimension_numbers = #tpu.dot_dimension_numbers<[1], [0], [0], [1], [0, 0, 1, 1], [], []>} : vector<4x384xbf16>, vector<384x128xbf16>, vector<4x128xf32> -> vector<4x128xf32>
    %114 = arith.addf %97, %113 : vector<4x128xf32>
    %c0_87 = arith.constant 0 : index
    %c0_88 = arith.constant 0 : index
    %115 = vector.load %arg4[%c0_87, %c0_88] : memref<1x128xf32, #tpu.memory_space<vmem>>, vector<1x128xf32>
    %116 = vector.broadcast %115 : vector<1x128xf32> to vector<4x128xf32>
    %117 = arith.addf %114, %116 : vector<4x128xf32>
    %cst_89 = arith.constant 0.000000e+00 : f32
    %118 = vector.broadcast %cst_89 : f32 to vector<4x128xf32>
    %119 = arith.cmpf oge, %117, %118 : vector<4x128xf32>
    %cst_90 = arith.constant 0.00999999977 : f32
    %120 = vector.broadcast %cst_90 : f32 to vector<4x128xf32>
    %121 = arith.mulf %120, %117 : vector<4x128xf32>
    %122 = arith.select %119, %117, %121 : vector<4x128xi1>, vector<4x128xf32>
    %123 = vector.shape_cast %122 : vector<4x128xf32> to vector<1x4x128xf32>
    %cst_91 = arith.constant 0.000000e+00 : f32
    %124 = vector.broadcast %cst_91 : f32 to vector<4x128xf32>
    %c2_i32 = arith.constant 2 : i32
    %125 = arith.addi %1, %c2_i32 : i32
    %c0_i32_92 = arith.constant 0 : i32
    %126 = arith.addi %125, %c0_i32_92 : i32
    %c0_93 = arith.constant 0 : index
    %127 = arith.index_cast %126 : i32 to index
    %c0_94 = arith.constant 0 : index
    %c0_95 = arith.constant 0 : index
    %128 = vector.load %arg2[%c0_93, %127, %c0_94, %c0_95] : memref<1x5x5x512xbf16, #tpu.memory_space<vmem>>, vector<1x1x4x128xbf16>
    %129 = vector.shape_cast %128 : vector<1x1x4x128xbf16> to vector<1x4x128xbf16>
    %c0_96 = arith.constant 0 : index
    %130 = arith.index_cast %126 : i32 to index
    %c0_97 = arith.constant 0 : index
    %c128_98 = arith.constant 128 : index
    %131 = vector.load %arg2[%c0_96, %130, %c0_97, %c128_98] : memref<1x5x5x512xbf16, #tpu.memory_space<vmem>>, vector<1x1x4x128xbf16>
    %132 = vector.shape_cast %131 : vector<1x1x4x128xbf16> to vector<1x4x128xbf16>
    %c0_99 = arith.constant 0 : index
    %133 = arith.index_cast %126 : i32 to index
    %c1_100 = arith.constant 1 : index
    %c0_101 = arith.constant 0 : index
    %134 = vector.load %arg2[%c0_99, %133, %c1_100, %c0_101] : memref<1x5x5x512xbf16, #tpu.memory_space<vmem>>, vector<1x1x4x128xbf16>
    %135 = vector.shape_cast %134 : vector<1x1x4x128xbf16> to vector<1x4x128xbf16>
    %136 = tpu.concatenate %129, %132, %135 in 2 : vector<1x4x128xbf16>, vector<1x4x128xbf16>, vector<1x4x128xbf16> -> vector<1x4x384xbf16>
    %137 = vector.shape_cast %136 : vector<1x4x384xbf16> to vector<4x384xbf16>
    %c0_102 = arith.constant 0 : index
    %c0_103 = arith.constant 0 : index
    %c0_104 = arith.constant 0 : index
    %138 = vector.load %arg3[%c0_102, %c0_103, %c0_104] : memref<3x384x128xbf16, #tpu.memory_space<vmem>>, vector<1x384x128xbf16>
    %139 = vector.shape_cast %138 : vector<1x384x128xbf16> to vector<384x128xbf16>
    %cst_105 = arith.constant dense<0.000000e+00> : vector<4x128xf32>
    %140 = tpu.matmul %137, %139, %cst_105 {dimension_numbers = #tpu.dot_dimension_numbers<[1], [0], [0], [1], [0, 0, 1, 1], [], []>} : vector<4x384xbf16>, vector<384x128xbf16>, vector<4x128xf32> -> vector<4x128xf32>
    %141 = arith.addf %124, %140 : vector<4x128xf32>
    %c2_i32_106 = arith.constant 2 : i32
    %142 = arith.addi %1, %c2_i32_106 : i32
    %c0_i32_107 = arith.constant 0 : i32
    %143 = arith.addi %142, %c0_i32_107 : i32
    %c0_108 = arith.constant 0 : index
    %144 = arith.index_cast %143 : i32 to index
    %c0_109 = arith.constant 0 : index
    %c256_110 = arith.constant 256 : index
    %145 = vector.load %arg2[%c0_108, %144, %c0_109, %c256_110] : memref<1x5x5x512xbf16, #tpu.memory_space<vmem>>, vector<1x1x4x128xbf16>
    %146 = vector.shape_cast %145 : vector<1x1x4x128xbf16> to vector<1x4x128xbf16>
    %c0_111 = arith.constant 0 : index
    %147 = arith.index_cast %143 : i32 to index
    %c0_112 = arith.constant 0 : index
    %c384_113 = arith.constant 384 : index
    %148 = vector.load %arg2[%c0_111, %147, %c0_112, %c384_113] : memref<1x5x5x512xbf16, #tpu.memory_space<vmem>>, vector<1x1x4x128xbf16>
    %149 = vector.shape_cast %148 : vector<1x1x4x128xbf16> to vector<1x4x128xbf16>
    %c0_114 = arith.constant 0 : index
    %150 = arith.index_cast %143 : i32 to index
    %c1_115 = arith.constant 1 : index
    %c256_116 = arith.constant 256 : index
    %151 = vector.load %arg2[%c0_114, %150, %c1_115, %c256_116] : memref<1x5x5x512xbf16, #tpu.memory_space<vmem>>, vector<1x1x4x128xbf16>
    %152 = vector.shape_cast %151 : vector<1x1x4x128xbf16> to vector<1x4x128xbf16>
    %153 = tpu.concatenate %146, %149, %152 in 2 : vector<1x4x128xbf16>, vector<1x4x128xbf16>, vector<1x4x128xbf16> -> vector<1x4x384xbf16>
    %154 = vector.shape_cast %153 : vector<1x4x384xbf16> to vector<4x384xbf16>
    %c1_117 = arith.constant 1 : index
    %c0_118 = arith.constant 0 : index
    %c0_119 = arith.constant 0 : index
    %155 = vector.load %arg3[%c1_117, %c0_118, %c0_119] : memref<3x384x128xbf16, #tpu.memory_space<vmem>>, vector<1x384x128xbf16>
    %156 = vector.shape_cast %155 : vector<1x384x128xbf16> to vector<384x128xbf16>
    %cst_120 = arith.constant dense<0.000000e+00> : vector<4x128xf32>
    %157 = tpu.matmul %154, %156, %cst_120 {dimension_numbers = #tpu.dot_dimension_numbers<[1], [0], [0], [1], [0, 0, 1, 1], [], []>} : vector<4x384xbf16>, vector<384x128xbf16>, vector<4x128xf32> -> vector<4x128xf32>
    %158 = arith.addf %141, %157 : vector<4x128xf32>
    %c2_i32_121 = arith.constant 2 : i32
    %159 = arith.addi %1, %c2_i32_121 : i32
    %c1_i32_122 = arith.constant 1 : i32
    %160 = arith.addi %159, %c1_i32_122 : i32
    %c0_123 = arith.constant 0 : index
    %161 = arith.index_cast %160 : i32 to index
    %c0_124 = arith.constant 0 : index
    %c0_125 = arith.constant 0 : index
    %162 = vector.load %arg2[%c0_123, %161, %c0_124, %c0_125] : memref<1x5x5x512xbf16, #tpu.memory_space<vmem>>, vector<1x1x4x128xbf16>
    %163 = vector.shape_cast %162 : vector<1x1x4x128xbf16> to vector<1x4x128xbf16>
    %c0_126 = arith.constant 0 : index
    %164 = arith.index_cast %160 : i32 to index
    %c0_127 = arith.constant 0 : index
    %c128_128 = arith.constant 128 : index
    %165 = vector.load %arg2[%c0_126, %164, %c0_127, %c128_128] : memref<1x5x5x512xbf16, #tpu.memory_space<vmem>>, vector<1x1x4x128xbf16>
    %166 = vector.shape_cast %165 : vector<1x1x4x128xbf16> to vector<1x4x128xbf16>
    %c0_129 = arith.constant 0 : index
    %167 = arith.index_cast %160 : i32 to index
    %c1_130 = arith.constant 1 : index
    %c0_131 = arith.constant 0 : index
    %168 = vector.load %arg2[%c0_129, %167, %c1_130, %c0_131] : memref<1x5x5x512xbf16, #tpu.memory_space<vmem>>, vector<1x1x4x128xbf16>
    %169 = vector.shape_cast %168 : vector<1x1x4x128xbf16> to vector<1x4x128xbf16>
    %170 = tpu.concatenate %163, %166, %169 in 2 : vector<1x4x128xbf16>, vector<1x4x128xbf16>, vector<1x4x128xbf16> -> vector<1x4x384xbf16>
    %171 = vector.shape_cast %170 : vector<1x4x384xbf16> to vector<4x384xbf16>
    %c2_132 = arith.constant 2 : index
    %c0_133 = arith.constant 0 : index
    %c0_134 = arith.constant 0 : index
    %172 = vector.load %arg3[%c2_132, %c0_133, %c0_134] : memref<3x384x128xbf16, #tpu.memory_space<vmem>>, vector<1x384x128xbf16>
    %173 = vector.shape_cast %172 : vector<1x384x128xbf16> to vector<384x128xbf16>
    %cst_135 = arith.constant dense<0.000000e+00> : vector<4x128xf32>
    %174 = tpu.matmul %171, %173, %cst_135 {dimension_numbers = #tpu.dot_dimension_numbers<[1], [0], [0], [1], [0, 0, 1, 1], [], []>} : vector<4x384xbf16>, vector<384x128xbf16>, vector<4x128xf32> -> vector<4x128xf32>
    %175 = arith.addf %158, %174 : vector<4x128xf32>
    %c0_136 = arith.constant 0 : index
    %c0_137 = arith.constant 0 : index
    %176 = vector.load %arg4[%c0_136, %c0_137] : memref<1x128xf32, #tpu.memory_space<vmem>>, vector<1x128xf32>
    %177 = vector.broadcast %176 : vector<1x128xf32> to vector<4x128xf32>
    %178 = arith.addf %175, %177 : vector<4x128xf32>
    %cst_138 = arith.constant 0.000000e+00 : f32
    %179 = vector.broadcast %cst_138 : f32 to vector<4x128xf32>
    %180 = arith.cmpf oge, %178, %179 : vector<4x128xf32>
    %cst_139 = arith.constant 0.00999999977 : f32
    %181 = vector.broadcast %cst_139 : f32 to vector<4x128xf32>
    %182 = arith.mulf %181, %178 : vector<4x128xf32>
    %183 = arith.select %180, %178, %182 : vector<4x128xi1>, vector<4x128xf32>
    %184 = vector.shape_cast %183 : vector<4x128xf32> to vector<1x4x128xf32>
    %cst_140 = arith.constant 0.000000e+00 : f32
    %185 = vector.broadcast %cst_140 : f32 to vector<4x128xf32>
    %c3_i32 = arith.constant 3 : i32
    %186 = arith.addi %1, %c3_i32 : i32
    %c0_i32_141 = arith.constant 0 : i32
    %187 = arith.addi %186, %c0_i32_141 : i32
    %c0_142 = arith.constant 0 : index
    %188 = arith.index_cast %187 : i32 to index
    %c0_143 = arith.constant 0 : index
    %c0_144 = arith.constant 0 : index
    %189 = vector.load %arg2[%c0_142, %188, %c0_143, %c0_144] : memref<1x5x5x512xbf16, #tpu.memory_space<vmem>>, vector<1x1x4x128xbf16>
    %190 = vector.shape_cast %189 : vector<1x1x4x128xbf16> to vector<1x4x128xbf16>
    %c0_145 = arith.constant 0 : index
    %191 = arith.index_cast %187 : i32 to index
    %c0_146 = arith.constant 0 : index
    %c128_147 = arith.constant 128 : index
    %192 = vector.load %arg2[%c0_145, %191, %c0_146, %c128_147] : memref<1x5x5x512xbf16, #tpu.memory_space<vmem>>, vector<1x1x4x128xbf16>
    %193 = vector.shape_cast %192 : vector<1x1x4x128xbf16> to vector<1x4x128xbf16>
    %c0_148 = arith.constant 0 : index
    %194 = arith.index_cast %187 : i32 to index
    %c1_149 = arith.constant 1 : index
    %c0_150 = arith.constant 0 : index
    %195 = vector.load %arg2[%c0_148, %194, %c1_149, %c0_150] : memref<1x5x5x512xbf16, #tpu.memory_space<vmem>>, vector<1x1x4x128xbf16>
    %196 = vector.shape_cast %195 : vector<1x1x4x128xbf16> to vector<1x4x128xbf16>
    %197 = tpu.concatenate %190, %193, %196 in 2 : vector<1x4x128xbf16>, vector<1x4x128xbf16>, vector<1x4x128xbf16> -> vector<1x4x384xbf16>
    %198 = vector.shape_cast %197 : vector<1x4x384xbf16> to vector<4x384xbf16>
    %c0_151 = arith.constant 0 : index
    %c0_152 = arith.constant 0 : index
    %c0_153 = arith.constant 0 : index
    %199 = vector.load %arg3[%c0_151, %c0_152, %c0_153] : memref<3x384x128xbf16, #tpu.memory_space<vmem>>, vector<1x384x128xbf16>
    %200 = vector.shape_cast %199 : vector<1x384x128xbf16> to vector<384x128xbf16>
    %cst_154 = arith.constant dense<0.000000e+00> : vector<4x128xf32>
    %201 = tpu.matmul %198, %200, %cst_154 {dimension_numbers = #tpu.dot_dimension_numbers<[1], [0], [0], [1], [0, 0, 1, 1], [], []>} : vector<4x384xbf16>, vector<384x128xbf16>, vector<4x128xf32> -> vector<4x128xf32>
    %202 = arith.addf %185, %201 : vector<4x128xf32>
    %c3_i32_155 = arith.constant 3 : i32
    %203 = arith.addi %1, %c3_i32_155 : i32
    %c0_i32_156 = arith.constant 0 : i32
    %204 = arith.addi %203, %c0_i32_156 : i32
    %c0_157 = arith.constant 0 : index
    %205 = arith.index_cast %204 : i32 to index
    %c0_158 = arith.constant 0 : index
    %c256_159 = arith.constant 256 : index
    %206 = vector.load %arg2[%c0_157, %205, %c0_158, %c256_159] : memref<1x5x5x512xbf16, #tpu.memory_space<vmem>>, vector<1x1x4x128xbf16>
    %207 = vector.shape_cast %206 : vector<1x1x4x128xbf16> to vector<1x4x128xbf16>
    %c0_160 = arith.constant 0 : index
    %208 = arith.index_cast %204 : i32 to index
    %c0_161 = arith.constant 0 : index
    %c384_162 = arith.constant 384 : index
    %209 = vector.load %arg2[%c0_160, %208, %c0_161, %c384_162] : memref<1x5x5x512xbf16, #tpu.memory_space<vmem>>, vector<1x1x4x128xbf16>
    %210 = vector.shape_cast %209 : vector<1x1x4x128xbf16> to vector<1x4x128xbf16>
    %c0_163 = arith.constant 0 : index
    %211 = arith.index_cast %204 : i32 to index
    %c1_164 = arith.constant 1 : index
    %c256_165 = arith.constant 256 : index
    %212 = vector.load %arg2[%c0_163, %211, %c1_164, %c256_165] : memref<1x5x5x512xbf16, #tpu.memory_space<vmem>>, vector<1x1x4x128xbf16>
    %213 = vector.shape_cast %212 : vector<1x1x4x128xbf16> to vector<1x4x128xbf16>
    %214 = tpu.concatenate %207, %210, %213 in 2 : vector<1x4x128xbf16>, vector<1x4x128xbf16>, vector<1x4x128xbf16> -> vector<1x4x384xbf16>
    %215 = vector.shape_cast %214 : vector<1x4x384xbf16> to vector<4x384xbf16>
    %c1_166 = arith.constant 1 : index
    %c0_167 = arith.constant 0 : index
    %c0_168 = arith.constant 0 : index
    %216 = vector.load %arg3[%c1_166, %c0_167, %c0_168] : memref<3x384x128xbf16, #tpu.memory_space<vmem>>, vector<1x384x128xbf16>
    %217 = vector.shape_cast %216 : vector<1x384x128xbf16> to vector<384x128xbf16>
    %cst_169 = arith.constant dense<0.000000e+00> : vector<4x128xf32>
    %218 = tpu.matmul %215, %217, %cst_169 {dimension_numbers = #tpu.dot_dimension_numbers<[1], [0], [0], [1], [0, 0, 1, 1], [], []>} : vector<4x384xbf16>, vector<384x128xbf16>, vector<4x128xf32> -> vector<4x128xf32>
    %219 = arith.addf %202, %218 : vector<4x128xf32>
    %c3_i32_170 = arith.constant 3 : i32
    %220 = arith.addi %1, %c3_i32_170 : i32
    %c1_i32_171 = arith.constant 1 : i32
    %221 = arith.addi %220, %c1_i32_171 : i32
    %c0_172 = arith.constant 0 : index
    %222 = arith.index_cast %221 : i32 to index
    %c0_173 = arith.constant 0 : index
    %c0_174 = arith.constant 0 : index
    %223 = vector.load %arg2[%c0_172, %222, %c0_173, %c0_174] : memref<1x5x5x512xbf16, #tpu.memory_space<vmem>>, vector<1x1x4x128xbf16>
    %224 = vector.shape_cast %223 : vector<1x1x4x128xbf16> to vector<1x4x128xbf16>
    %c0_175 = arith.constant 0 : index
    %225 = arith.index_cast %221 : i32 to index
    %c0_176 = arith.constant 0 : index
    %c128_177 = arith.constant 128 : index
    %226 = vector.load %arg2[%c0_175, %225, %c0_176, %c128_177] : memref<1x5x5x512xbf16, #tpu.memory_space<vmem>>, vector<1x1x4x128xbf16>
    %227 = vector.shape_cast %226 : vector<1x1x4x128xbf16> to vector<1x4x128xbf16>
    %c0_178 = arith.constant 0 : index
    %228 = arith.index_cast %221 : i32 to index
    %c1_179 = arith.constant 1 : index
    %c0_180 = arith.constant 0 : index
    %229 = vector.load %arg2[%c0_178, %228, %c1_179, %c0_180] : memref<1x5x5x512xbf16, #tpu.memory_space<vmem>>, vector<1x1x4x128xbf16>
    %230 = vector.shape_cast %229 : vector<1x1x4x128xbf16> to vector<1x4x128xbf16>
    %231 = tpu.concatenate %224, %227, %230 in 2 : vector<1x4x128xbf16>, vector<1x4x128xbf16>, vector<1x4x128xbf16> -> vector<1x4x384xbf16>
    %232 = vector.shape_cast %231 : vector<1x4x384xbf16> to vector<4x384xbf16>
    %c2_181 = arith.constant 2 : index
    %c0_182 = arith.constant 0 : index
    %c0_183 = arith.constant 0 : index
    %233 = vector.load %arg3[%c2_181, %c0_182, %c0_183] : memref<3x384x128xbf16, #tpu.memory_space<vmem>>, vector<1x384x128xbf16>
    %234 = vector.shape_cast %233 : vector<1x384x128xbf16> to vector<384x128xbf16>
    %cst_184 = arith.constant dense<0.000000e+00> : vector<4x128xf32>
    %235 = tpu.matmul %232, %234, %cst_184 {dimension_numbers = #tpu.dot_dimension_numbers<[1], [0], [0], [1], [0, 0, 1, 1], [], []>} : vector<4x384xbf16>, vector<384x128xbf16>, vector<4x128xf32> -> vector<4x128xf32>
    %236 = arith.addf %219, %235 : vector<4x128xf32>
    %c0_185 = arith.constant 0 : index
    %c0_186 = arith.constant 0 : index
    %237 = vector.load %arg4[%c0_185, %c0_186] : memref<1x128xf32, #tpu.memory_space<vmem>>, vector<1x128xf32>
    %238 = vector.broadcast %237 : vector<1x128xf32> to vector<4x128xf32>
    %239 = arith.addf %236, %238 : vector<4x128xf32>
    %cst_187 = arith.constant 0.000000e+00 : f32
    %240 = vector.broadcast %cst_187 : f32 to vector<4x128xf32>
    %241 = arith.cmpf oge, %239, %240 : vector<4x128xf32>
    %cst_188 = arith.constant 0.00999999977 : f32
    %242 = vector.broadcast %cst_188 : f32 to vector<4x128xf32>
    %243 = arith.mulf %242, %239 : vector<4x128xf32>
    %244 = arith.select %241, %239, %243 : vector<4x128xi1>, vector<4x128xf32>
    %245 = vector.shape_cast %244 : vector<4x128xf32> to vector<1x4x128xf32>
    %246 = tpu.concatenate %62, %123, %184, %245 in 0 : vector<1x4x128xf32>, vector<1x4x128xf32>, vector<1x4x128xf32>, vector<1x4x128xf32> -> vector<4x4x128xf32>
    %247 = arith.truncf %246 : vector<4x4x128xf32> to vector<4x4x128xbf16>
    %c0_189 = arith.constant 0 : index
    %c0_190 = arith.constant 0 : index
    %c0_191 = arith.constant 0 : index
    %c0_192 = arith.constant 0 : index
    %248 = vector.load %arg5[%c0_189, %c0_190, %c0_191, %c0_192] : memref<1x4x4x128xbf16, #tpu.memory_space<vmem>>, vector<1x4x4x128xbf16>
    %249 = vector.shape_cast %248 : vector<1x4x4x128xbf16> to vector<4x4x128xbf16>
    %250 = vector.shape_cast %247 : vector<4x4x128xbf16> to vector<1x4x4x128xbf16>
    tpu.vector_store %arg5[%c0_189, %c0_190, %c0_191, %c0_192], %250 {strides = array<i32>} : memref<1x4x4x128xbf16, #tpu.memory_space<vmem>>, vector<1x4x4x128xbf16>,
    return
  }
  func.func @transform_0(%arg0: i32, %arg1: i32) -> (i32, i32, i32, i32) {
    %c0_i32 = arith.constant 0 : i32
    %c0_i32_0 = arith.constant 0 : i32
    %c0_i32_1 = arith.constant 0 : i32
    %c0_i32_2 = arith.constant 0 : i32
    return %arg0, %c0_i32, %c0_i32_0, %c0_i32_1 : i32, i32, i32, i32
  }
  func.func @transform_1(%arg0: i32, %arg1: i32) -> (i32, i32, i32) {
    %c0_i32 = arith.constant 0 : i32
    %c0_i32_0 = arith.constant 0 : i32
    %c0_i32_1 = arith.constant 0 : i32
    %c0_i32_2 = arith.constant 0 : i32
    return %c0_i32, %c0_i32_0, %c0_i32_1 : i32, i32, i32
  }
  func.func @transform_2(%arg0: i32, %arg1: i32) -> (i32, i32) {
    %c0_i32 = arith.constant 0 : i32
    %c0_i32_0 = arith.constant 0 : i32
    %c0_i32_1 = arith.constant 0 : i32
    return %c0_i32, %c0_i32_0 : i32, i32
  }
  func.func @transform_3(%arg0: i32, %arg1: i32) -> (i32, i32, i32, i32) {
    %c0_i32 = arith.constant 0 : i32
    %c0_i32_0 = arith.constant 0 : i32
    %c0_i32_1 = arith.constant 0 : i32
    return %arg0, %arg1, %c0_i32, %c0_i32_0 : i32, i32, i32, i32
  }
}

module attributes {stable_mosaic.version = 11 : i64} {
  func.func @_down_conv_kernel(%arg0: i32, %arg1: i32, %arg2: memref<1x2x2x512xbf16, #tpu.memory_space<vmem>>, %arg3: memref<3x384x128xbf16, #tpu.memory_space<vmem>>, %arg4: memref<1x128xf32, #tpu.memory_space<vmem>>, %arg5: memref<1x1x1x128xbf16, #tpu.memory_space<vmem>>) attributes {dimension_semantics = [#tpu.dimension_semantics<parallel>, #tpu.dimension_semantics<parallel>], iteration_bounds = array<i64: 2, 1>, scalar_prefetch = 0 : i64, scratch_operands = 0 : i64, tpu.core_type = #tpu.core_type<tc>, window_params = [{transform_indices = @transform_0, window_bounds = array<i64: 1, 2, 2, 512>}, {pipeline_mode = #tpu.pipeline_mode<synchronous>, transform_indices = @transform_1, window_bounds = array<i64: 3, 384, 128>}, {pipeline_mode = #tpu.pipeline_mode<synchronous>, transform_indices = @transform_2, window_bounds = array<i64: 1, 128>}, {transform_indices = @transform_3, window_bounds = array<i64: 1, 1, 1, 128>}]} {
    %c1_i32 = arith.constant 1 : i32
    %0 = arith.muli %c1_i32, %arg1 : i32
    %1 = tpu.assume_multiple %0, 1 : i32
    %cst = arith.constant 0.000000e+00 : f32
    %2 = vector.broadcast %cst : f32 to vector<1x128xf32>
    %c0_i32 = arith.constant 0 : i32
    %3 = arith.addi %1, %c0_i32 : i32
    %c0_i32_0 = arith.constant 0 : i32
    %4 = arith.addi %3, %c0_i32_0 : i32
    %c0 = arith.constant 0 : index
    %5 = arith.index_cast %4 : i32 to index
    %c0_1 = arith.constant 0 : index
    %c0_2 = arith.constant 0 : index
    %6 = vector.load %arg2[%c0, %5, %c0_1, %c0_2] : memref<1x2x2x512xbf16, #tpu.memory_space<vmem>>, vector<1x1x1x128xbf16>
    %7 = vector.shape_cast %6 : vector<1x1x1x128xbf16> to vector<1x1x128xbf16>
    %c0_3 = arith.constant 0 : index
    %8 = arith.index_cast %4 : i32 to index
    %c0_4 = arith.constant 0 : index
    %c128 = arith.constant 128 : index
    %9 = vector.load %arg2[%c0_3, %8, %c0_4, %c128] : memref<1x2x2x512xbf16, #tpu.memory_space<vmem>>, vector<1x1x1x128xbf16>
    %10 = vector.shape_cast %9 : vector<1x1x1x128xbf16> to vector<1x1x128xbf16>
    %c0_5 = arith.constant 0 : index
    %11 = arith.index_cast %4 : i32 to index
    %c1 = arith.constant 1 : index
    %c0_6 = arith.constant 0 : index
    %12 = vector.load %arg2[%c0_5, %11, %c1, %c0_6] : memref<1x2x2x512xbf16, #tpu.memory_space<vmem>>, vector<1x1x1x128xbf16>
    %13 = vector.shape_cast %12 : vector<1x1x1x128xbf16> to vector<1x1x128xbf16>
    %14 = tpu.concatenate %7, %10, %13 in 2 : vector<1x1x128xbf16>, vector<1x1x128xbf16>, vector<1x1x128xbf16> -> vector<1x1x384xbf16>
    %15 = vector.shape_cast %14 : vector<1x1x384xbf16> to vector<1x384xbf16>
    %c0_7 = arith.constant 0 : index
    %c0_8 = arith.constant 0 : index
    %c0_9 = arith.constant 0 : index
    %16 = vector.load %arg3[%c0_7, %c0_8, %c0_9] : memref<3x384x128xbf16, #tpu.memory_space<vmem>>, vector<1x384x128xbf16>
    %17 = vector.shape_cast %16 : vector<1x384x128xbf16> to vector<384x128xbf16>
    %cst_10 = arith.constant dense<0.000000e+00> : vector<1x128xf32>
    %18 = tpu.matmul %15, %17, %cst_10 {dimension_numbers = #tpu.dot_dimension_numbers<[1], [0], [0], [1], [0, 0, 1, 1], [], []>} : vector<1x384xbf16>, vector<384x128xbf16>, vector<1x128xf32> -> vector<1x128xf32>
    %19 = arith.addf %2, %18 : vector<1x128xf32>
    %c0_i32_11 = arith.constant 0 : i32
    %20 = arith.addi %1, %c0_i32_11 : i32
    %c0_i32_12 = arith.constant 0 : i32
    %21 = arith.addi %20, %c0_i32_12 : i32
    %c0_13 = arith.constant 0 : index
    %22 = arith.index_cast %21 : i32 to index
    %c0_14 = arith.constant 0 : index
    %c256 = arith.constant 256 : index
    %23 = vector.load %arg2[%c0_13, %22, %c0_14, %c256] : memref<1x2x2x512xbf16, #tpu.memory_space<vmem>>, vector<1x1x1x128xbf16>
    %24 = vector.shape_cast %23 : vector<1x1x1x128xbf16> to vector<1x1x128xbf16>
    %c0_15 = arith.constant 0 : index
    %25 = arith.index_cast %21 : i32 to index
    %c0_16 = arith.constant 0 : index
    %c384 = arith.constant 384 : index
    %26 = vector.load %arg2[%c0_15, %25, %c0_16, %c384] : memref<1x2x2x512xbf16, #tpu.memory_space<vmem>>, vector<1x1x1x128xbf16>
    %27 = vector.shape_cast %26 : vector<1x1x1x128xbf16> to vector<1x1x128xbf16>
    %c0_17 = arith.constant 0 : index
    %28 = arith.index_cast %21 : i32 to index
    %c1_18 = arith.constant 1 : index
    %c256_19 = arith.constant 256 : index
    %29 = vector.load %arg2[%c0_17, %28, %c1_18, %c256_19] : memref<1x2x2x512xbf16, #tpu.memory_space<vmem>>, vector<1x1x1x128xbf16>
    %30 = vector.shape_cast %29 : vector<1x1x1x128xbf16> to vector<1x1x128xbf16>
    %31 = tpu.concatenate %24, %27, %30 in 2 : vector<1x1x128xbf16>, vector<1x1x128xbf16>, vector<1x1x128xbf16> -> vector<1x1x384xbf16>
    %32 = vector.shape_cast %31 : vector<1x1x384xbf16> to vector<1x384xbf16>
    %c1_20 = arith.constant 1 : index
    %c0_21 = arith.constant 0 : index
    %c0_22 = arith.constant 0 : index
    %33 = vector.load %arg3[%c1_20, %c0_21, %c0_22] : memref<3x384x128xbf16, #tpu.memory_space<vmem>>, vector<1x384x128xbf16>
    %34 = vector.shape_cast %33 : vector<1x384x128xbf16> to vector<384x128xbf16>
    %cst_23 = arith.constant dense<0.000000e+00> : vector<1x128xf32>
    %35 = tpu.matmul %32, %34, %cst_23 {dimension_numbers = #tpu.dot_dimension_numbers<[1], [0], [0], [1], [0, 0, 1, 1], [], []>} : vector<1x384xbf16>, vector<384x128xbf16>, vector<1x128xf32> -> vector<1x128xf32>
    %36 = arith.addf %19, %35 : vector<1x128xf32>
    %c0_i32_24 = arith.constant 0 : i32
    %37 = arith.addi %1, %c0_i32_24 : i32
    %c1_i32_25 = arith.constant 1 : i32
    %38 = arith.addi %37, %c1_i32_25 : i32
    %c0_26 = arith.constant 0 : index
    %39 = arith.index_cast %38 : i32 to index
    %c0_27 = arith.constant 0 : index
    %c0_28 = arith.constant 0 : index
    %40 = vector.load %arg2[%c0_26, %39, %c0_27, %c0_28] : memref<1x2x2x512xbf16, #tpu.memory_space<vmem>>, vector<1x1x1x128xbf16>
    %41 = vector.shape_cast %40 : vector<1x1x1x128xbf16> to vector<1x1x128xbf16>
    %c0_29 = arith.constant 0 : index
    %42 = arith.index_cast %38 : i32 to index
    %c0_30 = arith.constant 0 : index
    %c128_31 = arith.constant 128 : index
    %43 = vector.load %arg2[%c0_29, %42, %c0_30, %c128_31] : memref<1x2x2x512xbf16, #tpu.memory_space<vmem>>, vector<1x1x1x128xbf16>
    %44 = vector.shape_cast %43 : vector<1x1x1x128xbf16> to vector<1x1x128xbf16>
    %c0_32 = arith.constant 0 : index
    %45 = arith.index_cast %38 : i32 to index
    %c1_33 = arith.constant 1 : index
    %c0_34 = arith.constant 0 : index
    %46 = vector.load %arg2[%c0_32, %45, %c1_33, %c0_34] : memref<1x2x2x512xbf16, #tpu.memory_space<vmem>>, vector<1x1x1x128xbf16>
    %47 = vector.shape_cast %46 : vector<1x1x1x128xbf16> to vector<1x1x128xbf16>
    %48 = tpu.concatenate %41, %44, %47 in 2 : vector<1x1x128xbf16>, vector<1x1x128xbf16>, vector<1x1x128xbf16> -> vector<1x1x384xbf16>
    %49 = vector.shape_cast %48 : vector<1x1x384xbf16> to vector<1x384xbf16>
    %c2 = arith.constant 2 : index
    %c0_35 = arith.constant 0 : index
    %c0_36 = arith.constant 0 : index
    %50 = vector.load %arg3[%c2, %c0_35, %c0_36] : memref<3x384x128xbf16, #tpu.memory_space<vmem>>, vector<1x384x128xbf16>
    %51 = vector.shape_cast %50 : vector<1x384x128xbf16> to vector<384x128xbf16>
    %cst_37 = arith.constant dense<0.000000e+00> : vector<1x128xf32>
    %52 = tpu.matmul %49, %51, %cst_37 {dimension_numbers = #tpu.dot_dimension_numbers<[1], [0], [0], [1], [0, 0, 1, 1], [], []>} : vector<1x384xbf16>, vector<384x128xbf16>, vector<1x128xf32> -> vector<1x128xf32>
    %53 = arith.addf %36, %52 : vector<1x128xf32>
    %c0_38 = arith.constant 0 : index
    %c0_39 = arith.constant 0 : index
    %54 = vector.load %arg4[%c0_38, %c0_39] : memref<1x128xf32, #tpu.memory_space<vmem>>, vector<1x128xf32>
    %55 = arith.addf %53, %54 : vector<1x128xf32>
    %cst_40 = arith.constant 0.000000e+00 : f32
    %56 = vector.broadcast %cst_40 : f32 to vector<1x128xf32>
    %57 = arith.cmpf oge, %55, %56 : vector<1x128xf32>
    %cst_41 = arith.constant 0.00999999977 : f32
    %58 = vector.broadcast %cst_41 : f32 to vector<1x128xf32>
    %59 = arith.mulf %58, %55 : vector<1x128xf32>
    %60 = arith.select %57, %55, %59 : vector<1x128xi1>, vector<1x128xf32>
    %61 = vector.shape_cast %60 : vector<1x128xf32> to vector<1x1x128xf32>
    %62 = arith.truncf %61 : vector<1x1x128xf32> to vector<1x1x128xbf16>
    %c0_42 = arith.constant 0 : index
    %c0_43 = arith.constant 0 : index
    %c0_44 = arith.constant 0 : index
    %c0_45 = arith.constant 0 : index
    %63 = vector.load %arg5[%c0_42, %c0_43, %c0_44, %c0_45] : memref<1x1x1x128xbf16, #tpu.memory_space<vmem>>, vector<1x1x1x128xbf16>
    %64 = vector.shape_cast %63 : vector<1x1x1x128xbf16> to vector<1x1x128xbf16>
    %65 = vector.shape_cast %62 : vector<1x1x128xbf16> to vector<1x1x1x128xbf16>
    tpu.vector_store %arg5[%c0_42, %c0_43, %c0_44, %c0_45], %65 {strides = array<i32>} : memref<1x1x1x128xbf16, #tpu.memory_space<vmem>>, vector<1x1x1x128xbf16>,
    return
  }
  func.func @transform_0(%arg0: i32, %arg1: i32) -> (i32, i32, i32, i32) {
    %c0_i32 = arith.constant 0 : i32
    %c0_i32_0 = arith.constant 0 : i32
    %c0_i32_1 = arith.constant 0 : i32
    %c0_i32_2 = arith.constant 0 : i32
    return %arg0, %c0_i32, %c0_i32_0, %c0_i32_1 : i32, i32, i32, i32
  }
  func.func @transform_1(%arg0: i32, %arg1: i32) -> (i32, i32, i32) {
    %c0_i32 = arith.constant 0 : i32
    %c0_i32_0 = arith.constant 0 : i32
    %c0_i32_1 = arith.constant 0 : i32
    %c0_i32_2 = arith.constant 0 : i32
    return %c0_i32, %c0_i32_0, %c0_i32_1 : i32, i32, i32
  }
  func.func @transform_2(%arg0: i32, %arg1: i32) -> (i32, i32) {
    %c0_i32 = arith.constant 0 : i32
    %c0_i32_0 = arith.constant 0 : i32
    %c0_i32_1 = arith.constant 0 : i32
    return %c0_i32, %c0_i32_0 : i32, i32
  }
  func.func @transform_3(%arg0: i32, %arg1: i32) -> (i32, i32, i32, i32) {
    %c0_i32 = arith.constant 0 : i32
    %c0_i32_0 = arith.constant 0 : i32
    %c0_i32_1 = arith.constant 0 : i32
    return %arg0, %arg1, %c0_i32, %c0_i32_0 : i32, i32, i32, i32
  }
}

module attributes {stable_mosaic.version = 11 : i64} {
  func.func @_down_conv_kernel(%arg0: i32, %arg1: i32, %arg2: memref<1x3x3x512xbf16, #tpu.memory_space<vmem>>, %arg3: memref<3x384x128xbf16, #tpu.memory_space<vmem>>, %arg4: memref<1x128xf32, #tpu.memory_space<vmem>>, %arg5: memref<1x2x2x128xbf16, #tpu.memory_space<vmem>>) attributes {dimension_semantics = [#tpu.dimension_semantics<parallel>, #tpu.dimension_semantics<parallel>], iteration_bounds = array<i64: 2, 1>, scalar_prefetch = 0 : i64, scratch_operands = 0 : i64, tpu.core_type = #tpu.core_type<tc>, window_params = [{transform_indices = @transform_0, window_bounds = array<i64: 1, 3, 3, 512>}, {pipeline_mode = #tpu.pipeline_mode<synchronous>, transform_indices = @transform_1, window_bounds = array<i64: 3, 384, 128>}, {pipeline_mode = #tpu.pipeline_mode<synchronous>, transform_indices = @transform_2, window_bounds = array<i64: 1, 128>}, {transform_indices = @transform_3, window_bounds = array<i64: 1, 2, 2, 128>}]} {
    %c2_i32 = arith.constant 2 : i32
    %0 = arith.muli %c2_i32, %arg1 : i32
    %1 = tpu.assume_multiple %0, 2 : i32
    %cst = arith.constant 0.000000e+00 : f32
    %2 = vector.broadcast %cst : f32 to vector<2x128xf32>
    %c0_i32 = arith.constant 0 : i32
    %3 = arith.addi %1, %c0_i32 : i32
    %c0_i32_0 = arith.constant 0 : i32
    %4 = arith.addi %3, %c0_i32_0 : i32
    %c0 = arith.constant 0 : index
    %5 = arith.index_cast %4 : i32 to index
    %c0_1 = arith.constant 0 : index
    %c0_2 = arith.constant 0 : index
    %6 = vector.load %arg2[%c0, %5, %c0_1, %c0_2] : memref<1x3x3x512xbf16, #tpu.memory_space<vmem>>, vector<1x1x2x128xbf16>
    %7 = vector.shape_cast %6 : vector<1x1x2x128xbf16> to vector<1x2x128xbf16>
    %c0_3 = arith.constant 0 : index
    %8 = arith.index_cast %4 : i32 to index
    %c0_4 = arith.constant 0 : index
    %c128 = arith.constant 128 : index
    %9 = vector.load %arg2[%c0_3, %8, %c0_4, %c128] : memref<1x3x3x512xbf16, #tpu.memory_space<vmem>>, vector<1x1x2x128xbf16>
    %10 = vector.shape_cast %9 : vector<1x1x2x128xbf16> to vector<1x2x128xbf16>
    %c0_5 = arith.constant 0 : index
    %11 = arith.index_cast %4 : i32 to index
    %c1 = arith.constant 1 : index
    %c0_6 = arith.constant 0 : index
    %12 = vector.load %arg2[%c0_5, %11, %c1, %c0_6] : memref<1x3x3x512xbf16, #tpu.memory_space<vmem>>, vector<1x1x2x128xbf16>
    %13 = vector.shape_cast %12 : vector<1x1x2x128xbf16> to vector<1x2x128xbf16>
    %14 = tpu.concatenate %7, %10, %13 in 2 : vector<1x2x128xbf16>, vector<1x2x128xbf16>, vector<1x2x128xbf16> -> vector<1x2x384xbf16>
    %15 = vector.shape_cast %14 : vector<1x2x384xbf16> to vector<2x384xbf16>
    %c0_7 = arith.constant 0 : index
    %c0_8 = arith.constant 0 : index
    %c0_9 = arith.constant 0 : index
    %16 = vector.load %arg3[%c0_7, %c0_8, %c0_9] : memref<3x384x128xbf16, #tpu.memory_space<vmem>>, vector<1x384x128xbf16>
    %17 = vector.shape_cast %16 : vector<1x384x128xbf16> to vector<384x128xbf16>
    %cst_10 = arith.constant dense<0.000000e+00> : vector<2x128xf32>
    %18 = tpu.matmul %15, %17, %cst_10 {dimension_numbers = #tpu.dot_dimension_numbers<[1], [0], [0], [1], [0, 0, 1, 1], [], []>} : vector<2x384xbf16>, vector<384x128xbf16>, vector<2x128xf32> -> vector<2x128xf32>
    %19 = arith.addf %2, %18 : vector<2x128xf32>
    %c0_i32_11 = arith.constant 0 : i32
    %20 = arith.addi %1, %c0_i32_11 : i32
    %c0_i32_12 = arith.constant 0 : i32
    %21 = arith.addi %20, %c0_i32_12 : i32
    %c0_13 = arith.constant 0 : index
    %22 = arith.index_cast %21 : i32 to index
    %c0_14 = arith.constant 0 : index
    %c256 = arith.constant 256 : index
    %23 = vector.load %arg2[%c0_13, %22, %c0_14, %c256] : memref<1x3x3x512xbf16, #tpu.memory_space<vmem>>, vector<1x1x2x128xbf16>
    %24 = vector.shape_cast %23 : vector<1x1x2x128xbf16> to vector<1x2x128xbf16>
    %c0_15 = arith.constant 0 : index
    %25 = arith.index_cast %21 : i32 to index
    %c0_16 = arith.constant 0 : index
    %c384 = arith.constant 384 : index
    %26 = vector.load %arg2[%c0_15, %25, %c0_16, %c384] : memref<1x3x3x512xbf16, #tpu.memory_space<vmem>>, vector<1x1x2x128xbf16>
    %27 = vector.shape_cast %26 : vector<1x1x2x128xbf16> to vector<1x2x128xbf16>
    %c0_17 = arith.constant 0 : index
    %28 = arith.index_cast %21 : i32 to index
    %c1_18 = arith.constant 1 : index
    %c256_19 = arith.constant 256 : index
    %29 = vector.load %arg2[%c0_17, %28, %c1_18, %c256_19] : memref<1x3x3x512xbf16, #tpu.memory_space<vmem>>, vector<1x1x2x128xbf16>
    %30 = vector.shape_cast %29 : vector<1x1x2x128xbf16> to vector<1x2x128xbf16>
    %31 = tpu.concatenate %24, %27, %30 in 2 : vector<1x2x128xbf16>, vector<1x2x128xbf16>, vector<1x2x128xbf16> -> vector<1x2x384xbf16>
    %32 = vector.shape_cast %31 : vector<1x2x384xbf16> to vector<2x384xbf16>
    %c1_20 = arith.constant 1 : index
    %c0_21 = arith.constant 0 : index
    %c0_22 = arith.constant 0 : index
    %33 = vector.load %arg3[%c1_20, %c0_21, %c0_22] : memref<3x384x128xbf16, #tpu.memory_space<vmem>>, vector<1x384x128xbf16>
    %34 = vector.shape_cast %33 : vector<1x384x128xbf16> to vector<384x128xbf16>
    %cst_23 = arith.constant dense<0.000000e+00> : vector<2x128xf32>
    %35 = tpu.matmul %32, %34, %cst_23 {dimension_numbers = #tpu.dot_dimension_numbers<[1], [0], [0], [1], [0, 0, 1, 1], [], []>} : vector<2x384xbf16>, vector<384x128xbf16>, vector<2x128xf32> -> vector<2x128xf32>
    %36 = arith.addf %19, %35 : vector<2x128xf32>
    %c0_i32_24 = arith.constant 0 : i32
    %37 = arith.addi %1, %c0_i32_24 : i32
    %c1_i32 = arith.constant 1 : i32
    %38 = arith.addi %37, %c1_i32 : i32
    %c0_25 = arith.constant 0 : index
    %39 = arith.index_cast %38 : i32 to index
    %c0_26 = arith.constant 0 : index
    %c0_27 = arith.constant 0 : index
    %40 = vector.load %arg2[%c0_25, %39, %c0_26, %c0_27] : memref<1x3x3x512xbf16, #tpu.memory_space<vmem>>, vector<1x1x2x128xbf16>
    %41 = vector.shape_cast %40 : vector<1x1x2x128xbf16> to vector<1x2x128xbf16>
    %c0_28 = arith.constant 0 : index
    %42 = arith.index_cast %38 : i32 to index
    %c0_29 = arith.constant 0 : index
    %c128_30 = arith.constant 128 : index
    %43 = vector.load %arg2[%c0_28, %42, %c0_29, %c128_30] : memref<1x3x3x512xbf16, #tpu.memory_space<vmem>>, vector<1x1x2x128xbf16>
    %44 = vector.shape_cast %43 : vector<1x1x2x128xbf16> to vector<1x2x128xbf16>
    %c0_31 = arith.constant 0 : index
    %45 = arith.index_cast %38 : i32 to index
    %c1_32 = arith.constant 1 : index
    %c0_33 = arith.constant 0 : index
    %46 = vector.load %arg2[%c0_31, %45, %c1_32, %c0_33] : memref<1x3x3x512xbf16, #tpu.memory_space<vmem>>, vector<1x1x2x128xbf16>
    %47 = vector.shape_cast %46 : vector<1x1x2x128xbf16> to vector<1x2x128xbf16>
    %48 = tpu.concatenate %41, %44, %47 in 2 : vector<1x2x128xbf16>, vector<1x2x128xbf16>, vector<1x2x128xbf16> -> vector<1x2x384xbf16>
    %49 = vector.shape_cast %48 : vector<1x2x384xbf16> to vector<2x384xbf16>
    %c2 = arith.constant 2 : index
    %c0_34 = arith.constant 0 : index
    %c0_35 = arith.constant 0 : index
    %50 = vector.load %arg3[%c2, %c0_34, %c0_35] : memref<3x384x128xbf16, #tpu.memory_space<vmem>>, vector<1x384x128xbf16>
    %51 = vector.shape_cast %50 : vector<1x384x128xbf16> to vector<384x128xbf16>
    %cst_36 = arith.constant dense<0.000000e+00> : vector<2x128xf32>
    %52 = tpu.matmul %49, %51, %cst_36 {dimension_numbers = #tpu.dot_dimension_numbers<[1], [0], [0], [1], [0, 0, 1, 1], [], []>} : vector<2x384xbf16>, vector<384x128xbf16>, vector<2x128xf32> -> vector<2x128xf32>
    %53 = arith.addf %36, %52 : vector<2x128xf32>
    %c0_37 = arith.constant 0 : index
    %c0_38 = arith.constant 0 : index
    %54 = vector.load %arg4[%c0_37, %c0_38] : memref<1x128xf32, #tpu.memory_space<vmem>>, vector<1x128xf32>
    %55 = vector.broadcast %54 : vector<1x128xf32> to vector<2x128xf32>
    %56 = arith.addf %53, %55 : vector<2x128xf32>
    %cst_39 = arith.constant 0.000000e+00 : f32
    %57 = vector.broadcast %cst_39 : f32 to vector<2x128xf32>
    %58 = arith.cmpf oge, %56, %57 : vector<2x128xf32>
    %cst_40 = arith.constant 0.00999999977 : f32
    %59 = vector.broadcast %cst_40 : f32 to vector<2x128xf32>
    %60 = arith.mulf %59, %56 : vector<2x128xf32>
    %61 = arith.select %58, %56, %60 : vector<2x128xi1>, vector<2x128xf32>
    %62 = vector.shape_cast %61 : vector<2x128xf32> to vector<1x2x128xf32>
    %cst_41 = arith.constant 0.000000e+00 : f32
    %63 = vector.broadcast %cst_41 : f32 to vector<2x128xf32>
    %c1_i32_42 = arith.constant 1 : i32
    %64 = arith.addi %1, %c1_i32_42 : i32
    %c0_i32_43 = arith.constant 0 : i32
    %65 = arith.addi %64, %c0_i32_43 : i32
    %c0_44 = arith.constant 0 : index
    %66 = arith.index_cast %65 : i32 to index
    %c0_45 = arith.constant 0 : index
    %c0_46 = arith.constant 0 : index
    %67 = vector.load %arg2[%c0_44, %66, %c0_45, %c0_46] : memref<1x3x3x512xbf16, #tpu.memory_space<vmem>>, vector<1x1x2x128xbf16>
    %68 = vector.shape_cast %67 : vector<1x1x2x128xbf16> to vector<1x2x128xbf16>
    %c0_47 = arith.constant 0 : index
    %69 = arith.index_cast %65 : i32 to index
    %c0_48 = arith.constant 0 : index
    %c128_49 = arith.constant 128 : index
    %70 = vector.load %arg2[%c0_47, %69, %c0_48, %c128_49] : memref<1x3x3x512xbf16, #tpu.memory_space<vmem>>, vector<1x1x2x128xbf16>
    %71 = vector.shape_cast %70 : vector<1x1x2x128xbf16> to vector<1x2x128xbf16>
    %c0_50 = arith.constant 0 : index
    %72 = arith.index_cast %65 : i32 to index
    %c1_51 = arith.constant 1 : index
    %c0_52 = arith.constant 0 : index
    %73 = vector.load %arg2[%c0_50, %72, %c1_51, %c0_52] : memref<1x3x3x512xbf16, #tpu.memory_space<vmem>>, vector<1x1x2x128xbf16>
    %74 = vector.shape_cast %73 : vector<1x1x2x128xbf16> to vector<1x2x128xbf16>
    %75 = tpu.concatenate %68, %71, %74 in 2 : vector<1x2x128xbf16>, vector<1x2x128xbf16>, vector<1x2x128xbf16> -> vector<1x2x384xbf16>
    %76 = vector.shape_cast %75 : vector<1x2x384xbf16> to vector<2x384xbf16>
    %c0_53 = arith.constant 0 : index
    %c0_54 = arith.constant 0 : index
    %c0_55 = arith.constant 0 : index
    %77 = vector.load %arg3[%c0_53, %c0_54, %c0_55] : memref<3x384x128xbf16, #tpu.memory_space<vmem>>, vector<1x384x128xbf16>
    %78 = vector.shape_cast %77 : vector<1x384x128xbf16> to vector<384x128xbf16>
    %cst_56 = arith.constant dense<0.000000e+00> : vector<2x128xf32>
    %79 = tpu.matmul %76, %78, %cst_56 {dimension_numbers = #tpu.dot_dimension_numbers<[1], [0], [0], [1], [0, 0, 1, 1], [], []>} : vector<2x384xbf16>, vector<384x128xbf16>, vector<2x128xf32> -> vector<2x128xf32>
    %80 = arith.addf %63, %79 : vector<2x128xf32>
    %c1_i32_57 = arith.constant 1 : i32
    %81 = arith.addi %1, %c1_i32_57 : i32
    %c0_i32_58 = arith.constant 0 : i32
    %82 = arith.addi %81, %c0_i32_58 : i32
    %c0_59 = arith.constant 0 : index
    %83 = arith.index_cast %82 : i32 to index
    %c0_60 = arith.constant 0 : index
    %c256_61 = arith.constant 256 : index
    %84 = vector.load %arg2[%c0_59, %83, %c0_60, %c256_61] : memref<1x3x3x512xbf16, #tpu.memory_space<vmem>>, vector<1x1x2x128xbf16>
    %85 = vector.shape_cast %84 : vector<1x1x2x128xbf16> to vector<1x2x128xbf16>
    %c0_62 = arith.constant 0 : index
    %86 = arith.index_cast %82 : i32 to index
    %c0_63 = arith.constant 0 : index
    %c384_64 = arith.constant 384 : index
    %87 = vector.load %arg2[%c0_62, %86, %c0_63, %c384_64] : memref<1x3x3x512xbf16, #tpu.memory_space<vmem>>, vector<1x1x2x128xbf16>
    %88 = vector.shape_cast %87 : vector<1x1x2x128xbf16> to vector<1x2x128xbf16>
    %c0_65 = arith.constant 0 : index
    %89 = arith.index_cast %82 : i32 to index
    %c1_66 = arith.constant 1 : index
    %c256_67 = arith.constant 256 : index
    %90 = vector.load %arg2[%c0_65, %89, %c1_66, %c256_67] : memref<1x3x3x512xbf16, #tpu.memory_space<vmem>>, vector<1x1x2x128xbf16>
    %91 = vector.shape_cast %90 : vector<1x1x2x128xbf16> to vector<1x2x128xbf16>
    %92 = tpu.concatenate %85, %88, %91 in 2 : vector<1x2x128xbf16>, vector<1x2x128xbf16>, vector<1x2x128xbf16> -> vector<1x2x384xbf16>
    %93 = vector.shape_cast %92 : vector<1x2x384xbf16> to vector<2x384xbf16>
    %c1_68 = arith.constant 1 : index
    %c0_69 = arith.constant 0 : index
    %c0_70 = arith.constant 0 : index
    %94 = vector.load %arg3[%c1_68, %c0_69, %c0_70] : memref<3x384x128xbf16, #tpu.memory_space<vmem>>, vector<1x384x128xbf16>
    %95 = vector.shape_cast %94 : vector<1x384x128xbf16> to vector<384x128xbf16>
    %cst_71 = arith.constant dense<0.000000e+00> : vector<2x128xf32>
    %96 = tpu.matmul %93, %95, %cst_71 {dimension_numbers = #tpu.dot_dimension_numbers<[1], [0], [0], [1], [0, 0, 1, 1], [], []>} : vector<2x384xbf16>, vector<384x128xbf16>, vector<2x128xf32> -> vector<2x128xf32>
    %97 = arith.addf %80, %96 : vector<2x128xf32>
    %c1_i32_72 = arith.constant 1 : i32
    %98 = arith.addi %1, %c1_i32_72 : i32
    %c1_i32_73 = arith.constant 1 : i32
    %99 = arith.addi %98, %c1_i32_73 : i32
    %c0_74 = arith.constant 0 : index
    %100 = arith.index_cast %99 : i32 to index
    %c0_75 = arith.constant 0 : index
    %c0_76 = arith.constant 0 : index
    %101 = vector.load %arg2[%c0_74, %100, %c0_75, %c0_76] : memref<1x3x3x512xbf16, #tpu.memory_space<vmem>>, vector<1x1x2x128xbf16>
    %102 = vector.shape_cast %101 : vector<1x1x2x128xbf16> to vector<1x2x128xbf16>
    %c0_77 = arith.constant 0 : index
    %103 = arith.index_cast %99 : i32 to index
    %c0_78 = arith.constant 0 : index
    %c128_79 = arith.constant 128 : index
    %104 = vector.load %arg2[%c0_77, %103, %c0_78, %c128_79] : memref<1x3x3x512xbf16, #tpu.memory_space<vmem>>, vector<1x1x2x128xbf16>
    %105 = vector.shape_cast %104 : vector<1x1x2x128xbf16> to vector<1x2x128xbf16>
    %c0_80 = arith.constant 0 : index
    %106 = arith.index_cast %99 : i32 to index
    %c1_81 = arith.constant 1 : index
    %c0_82 = arith.constant 0 : index
    %107 = vector.load %arg2[%c0_80, %106, %c1_81, %c0_82] : memref<1x3x3x512xbf16, #tpu.memory_space<vmem>>, vector<1x1x2x128xbf16>
    %108 = vector.shape_cast %107 : vector<1x1x2x128xbf16> to vector<1x2x128xbf16>
    %109 = tpu.concatenate %102, %105, %108 in 2 : vector<1x2x128xbf16>, vector<1x2x128xbf16>, vector<1x2x128xbf16> -> vector<1x2x384xbf16>
    %110 = vector.shape_cast %109 : vector<1x2x384xbf16> to vector<2x384xbf16>
    %c2_83 = arith.constant 2 : index
    %c0_84 = arith.constant 0 : index
    %c0_85 = arith.constant 0 : index
    %111 = vector.load %arg3[%c2_83, %c0_84, %c0_85] : memref<3x384x128xbf16, #tpu.memory_space<vmem>>, vector<1x384x128xbf16>
    %112 = vector.shape_cast %111 : vector<1x384x128xbf16> to vector<384x128xbf16>
    %cst_86 = arith.constant dense<0.000000e+00> : vector<2x128xf32>
    %113 = tpu.matmul %110, %112, %cst_86 {dimension_numbers = #tpu.dot_dimension_numbers<[1], [0], [0], [1], [0, 0, 1, 1], [], []>} : vector<2x384xbf16>, vector<384x128xbf16>, vector<2x128xf32> -> vector<2x128xf32>
    %114 = arith.addf %97, %113 : vector<2x128xf32>
    %c0_87 = arith.constant 0 : index
    %c0_88 = arith.constant 0 : index
    %115 = vector.load %arg4[%c0_87, %c0_88] : memref<1x128xf32, #tpu.memory_space<vmem>>, vector<1x128xf32>
    %116 = vector.broadcast %115 : vector<1x128xf32> to vector<2x128xf32>
    %117 = arith.addf %114, %116 : vector<2x128xf32>
    %cst_89 = arith.constant 0.000000e+00 : f32
    %118 = vector.broadcast %cst_89 : f32 to vector<2x128xf32>
    %119 = arith.cmpf oge, %117, %118 : vector<2x128xf32>
    %cst_90 = arith.constant 0.00999999977 : f32
    %120 = vector.broadcast %cst_90 : f32 to vector<2x128xf32>
    %121 = arith.mulf %120, %117 : vector<2x128xf32>
    %122 = arith.select %119, %117, %121 : vector<2x128xi1>, vector<2x128xf32>
    %123 = vector.shape_cast %122 : vector<2x128xf32> to vector<1x2x128xf32>
    %124 = tpu.concatenate %62, %123 in 0 : vector<1x2x128xf32>, vector<1x2x128xf32> -> vector<2x2x128xf32>
    %125 = arith.truncf %124 : vector<2x2x128xf32> to vector<2x2x128xbf16>
    %c0_91 = arith.constant 0 : index
    %c0_92 = arith.constant 0 : index
    %c0_93 = arith.constant 0 : index
    %c0_94 = arith.constant 0 : index
    %126 = vector.load %arg5[%c0_91, %c0_92, %c0_93, %c0_94] : memref<1x2x2x128xbf16, #tpu.memory_space<vmem>>, vector<1x2x2x128xbf16>
    %127 = vector.shape_cast %126 : vector<1x2x2x128xbf16> to vector<2x2x128xbf16>
    %128 = vector.shape_cast %125 : vector<2x2x128xbf16> to vector<1x2x2x128xbf16>
    tpu.vector_store %arg5[%c0_91, %c0_92, %c0_93, %c0_94], %128 {strides = array<i32>} : memref<1x2x2x128xbf16, #tpu.memory_space<vmem>>, vector<1x2x2x128xbf16>,
    return
  }
  func.func @transform_0(%arg0: i32, %arg1: i32) -> (i32, i32, i32, i32) {
    %c0_i32 = arith.constant 0 : i32
    %c0_i32_0 = arith.constant 0 : i32
    %c0_i32_1 = arith.constant 0 : i32
    %c0_i32_2 = arith.constant 0 : i32
    return %arg0, %c0_i32, %c0_i32_0, %c0_i32_1 : i32, i32, i32, i32
  }
  func.func @transform_1(%arg0: i32, %arg1: i32) -> (i32, i32, i32) {
    %c0_i32 = arith.constant 0 : i32
    %c0_i32_0 = arith.constant 0 : i32
    %c0_i32_1 = arith.constant 0 : i32
    %c0_i32_2 = arith.constant 0 : i32
    return %c0_i32, %c0_i32_0, %c0_i32_1 : i32, i32, i32
  }
  func.func @transform_2(%arg0: i32, %arg1: i32) -> (i32, i32) {
    %c0_i32 = arith.constant 0 : i32
    %c0_i32_0 = arith.constant 0 : i32
    %c0_i32_1 = arith.constant 0 : i32
    return %c0_i32, %c0_i32_0 : i32, i32
  }
  func.func @transform_3(%arg0: i32, %arg1: i32) -> (i32, i32, i32, i32) {
    %c0_i32 = arith.constant 0 : i32
    %c0_i32_0 = arith.constant 0 : i32
    %c0_i32_1 = arith.constant 0 : i32
    return %arg0, %arg1, %c0_i32, %c0_i32_0 : i32, i32, i32, i32
  }
}

module attributes {stable_mosaic.version = 11 : i64} {
  func.func @_res_block_kernel(%arg0: i32, %arg1: memref<1x1x1x128xbf16, #tpu.memory_space<vmem>>, %arg2: memref<3x384x128xbf16, #tpu.memory_space<vmem>>, %arg3: memref<1x128xf32, #tpu.memory_space<vmem>>, %arg4: memref<3x384x128xbf16, #tpu.memory_space<vmem>>, %arg5: memref<1x128xf32, #tpu.memory_space<vmem>>, %arg6: memref<1x1x1x128xbf16, #tpu.memory_space<vmem>>, %arg7: memref<3x3x128xbf16, #tpu.memory_space<vmem>>, %arg8: memref<3x3x128xbf16, #tpu.memory_space<vmem>>) attributes {dimension_semantics = [#tpu.dimension_semantics<parallel>], iteration_bounds = array<i64: 2>, scalar_prefetch = 0 : i64, scratch_operands = 2 : i64, tpu.core_type = #tpu.core_type<tc>, window_params = [{transform_indices = @transform_0, window_bounds = array<i64: 1, 1, 1, 128>}, {pipeline_mode = #tpu.pipeline_mode<synchronous>, transform_indices = @transform_1, window_bounds = array<i64: 3, 384, 128>}, {pipeline_mode = #tpu.pipeline_mode<synchronous>, transform_indices = @transform_2, window_bounds = array<i64: 1, 128>}, {pipeline_mode = #tpu.pipeline_mode<synchronous>, transform_indices = @transform_3, window_bounds = array<i64: 3, 384, 128>}, {pipeline_mode = #tpu.pipeline_mode<synchronous>, transform_indices = @transform_4, window_bounds = array<i64: 1, 128>}, {transform_indices = @transform_5, window_bounds = array<i64: 1, 1, 1, 128>}]} {
    %cst = arith.constant 0.000000e+00 : bf16
    %0 = vector.broadcast %cst : bf16 to vector<3x3x128xbf16>
    %c0 = arith.constant 0 : index
    %c0_0 = arith.constant 0 : index
    %c0_1 = arith.constant 0 : index
    %1 = vector.load %arg7[%c0, %c0_0, %c0_1] : memref<3x3x128xbf16, #tpu.memory_space<vmem>>, vector<3x3x128xbf16>
    tpu.vector_store %arg7[%c0, %c0_0, %c0_1], %0 {strides = array<i32>} : memref<3x3x128xbf16, #tpu.memory_space<vmem>>, vector<3x3x128xbf16>,
    %c0_2 = arith.constant 0 : index
    %c0_3 = arith.constant 0 : index
    %c0_4 = arith.constant 0 : index
    %c0_5 = arith.constant 0 : index
    %2 = vector.load %arg1[%c0_2, %c0_3, %c0_4, %c0_5] : memref<1x1x1x128xbf16, #tpu.memory_space<vmem>>, vector<1x1x1x128xbf16>
    %3 = vector.shape_cast %2 : vector<1x1x1x128xbf16> to vector<1x1x128xbf16>
    %c1 = arith.constant 1 : index
    %c1_6 = arith.constant 1 : index
    %c0_7 = arith.constant 0 : index
    %4 = vector.load %arg7[%c1, %c1_6, %c0_7] : memref<3x3x128xbf16, #tpu.memory_space<vmem>>, vector<1x1x128xbf16>
    tpu.vector_store %arg7[%c1, %c1_6, %c0_7], %3 {strides = array<i32>} : memref<3x3x128xbf16, #tpu.memory_space<vmem>>, vector<1x1x128xbf16>,
    %cst_8 = arith.constant 0.000000e+00 : f32
    %5 = vector.broadcast %cst_8 : f32 to vector<1x128xf32>
    %c0_9 = arith.constant 0 : index
    %c0_10 = arith.constant 0 : index
    %c0_11 = arith.constant 0 : index
    %6 = vector.load %arg7[%c0_9, %c0_10, %c0_11] : memref<3x3x128xbf16, #tpu.memory_space<vmem>>, vector<1x1x128xbf16>
    %c0_12 = arith.constant 0 : index
    %c1_13 = arith.constant 1 : index
    %c0_14 = arith.constant 0 : index
    %7 = vector.load %arg7[%c0_12, %c1_13, %c0_14] : memref<3x3x128xbf16, #tpu.memory_space<vmem>>, vector<1x1x128xbf16>
    %c0_15 = arith.constant 0 : index
    %c2 = arith.constant 2 : index
    %c0_16 = arith.constant 0 : index
    %8 = vector.load %arg7[%c0_15, %c2, %c0_16] : memref<3x3x128xbf16, #tpu.memory_space<vmem>>, vector<1x1x128xbf16>
    %9 = tpu.concatenate %6, %7, %8 in 2 : vector<1x1x128xbf16>, vector<1x1x128xbf16>, vector<1x1x128xbf16> -> vector<1x1x384xbf16>
    %10 = vector.shape_cast %9 : vector<1x1x384xbf16> to vector<1x384xbf16>
    %c0_17 = arith.constant 0 : index
    %c0_18 = arith.constant 0 : index
    %c0_19 = arith.constant 0 : index
    %11 = vector.load %arg2[%c0_17, %c0_18, %c0_19] : memref<3x384x128xbf16, #tpu.memory_space<vmem>>, vector<1x384x128xbf16>
    %12 = vector.shape_cast %11 : vector<1x384x128xbf16> to vector<384x128xbf16>
    %cst_20 = arith.constant dense<0.000000e+00> : vector<1x128xf32>
    %13 = tpu.matmul %10, %12, %cst_20 {dimension_numbers = #tpu.dot_dimension_numbers<[1], [0], [0], [1], [0, 0, 1, 1], [], []>} : vector<1x384xbf16>, vector<384x128xbf16>, vector<1x128xf32> -> vector<1x128xf32>
    %14 = arith.addf %5, %13 : vector<1x128xf32>
    %c1_21 = arith.constant 1 : index
    %c0_22 = arith.constant 0 : index
    %c0_23 = arith.constant 0 : index
    %15 = vector.load %arg7[%c1_21, %c0_22, %c0_23] : memref<3x3x128xbf16, #tpu.memory_space<vmem>>, vector<1x1x128xbf16>
    %c1_24 = arith.constant 1 : index
    %c1_25 = arith.constant 1 : index
    %c0_26 = arith.constant 0 : index
    %16 = vector.load %arg7[%c1_24, %c1_25, %c0_26] : memref<3x3x128xbf16, #tpu.memory_space<vmem>>, vector<1x1x128xbf16>
    %c1_27 = arith.constant 1 : index
    %c2_28 = arith.constant 2 : index
    %c0_29 = arith.constant 0 : index
    %17 = vector.load %arg7[%c1_27, %c2_28, %c0_29] : memref<3x3x128xbf16, #tpu.memory_space<vmem>>, vector<1x1x128xbf16>
    %18 = tpu.concatenate %15, %16, %17 in 2 : vector<1x1x128xbf16>, vector<1x1x128xbf16>, vector<1x1x128xbf16> -> vector<1x1x384xbf16>
    %19 = vector.shape_cast %18 : vector<1x1x384xbf16> to vector<1x384xbf16>
    %c1_30 = arith.constant 1 : index
    %c0_31 = arith.constant 0 : index
    %c0_32 = arith.constant 0 : index
    %20 = vector.load %arg2[%c1_30, %c0_31, %c0_32] : memref<3x384x128xbf16, #tpu.memory_space<vmem>>, vector<1x384x128xbf16>
    %21 = vector.shape_cast %20 : vector<1x384x128xbf16> to vector<384x128xbf16>
    %cst_33 = arith.constant dense<0.000000e+00> : vector<1x128xf32>
    %22 = tpu.matmul %19, %21, %cst_33 {dimension_numbers = #tpu.dot_dimension_numbers<[1], [0], [0], [1], [0, 0, 1, 1], [], []>} : vector<1x384xbf16>, vector<384x128xbf16>, vector<1x128xf32> -> vector<1x128xf32>
    %23 = arith.addf %14, %22 : vector<1x128xf32>
    %c2_34 = arith.constant 2 : index
    %c0_35 = arith.constant 0 : index
    %c0_36 = arith.constant 0 : index
    %24 = vector.load %arg7[%c2_34, %c0_35, %c0_36] : memref<3x3x128xbf16, #tpu.memory_space<vmem>>, vector<1x1x128xbf16>
    %c2_37 = arith.constant 2 : index
    %c1_38 = arith.constant 1 : index
    %c0_39 = arith.constant 0 : index
    %25 = vector.load %arg7[%c2_37, %c1_38, %c0_39] : memref<3x3x128xbf16, #tpu.memory_space<vmem>>, vector<1x1x128xbf16>
    %c2_40 = arith.constant 2 : index
    %c2_41 = arith.constant 2 : index
    %c0_42 = arith.constant 0 : index
    %26 = vector.load %arg7[%c2_40, %c2_41, %c0_42] : memref<3x3x128xbf16, #tpu.memory_space<vmem>>, vector<1x1x128xbf16>
    %27 = tpu.concatenate %24, %25, %26 in 2 : vector<1x1x128xbf16>, vector<1x1x128xbf16>, vector<1x1x128xbf16> -> vector<1x1x384xbf16>
    %28 = vector.shape_cast %27 : vector<1x1x384xbf16> to vector<1x384xbf16>
    %c2_43 = arith.constant 2 : index
    %c0_44 = arith.constant 0 : index
    %c0_45 = arith.constant 0 : index
    %29 = vector.load %arg2[%c2_43, %c0_44, %c0_45] : memref<3x384x128xbf16, #tpu.memory_space<vmem>>, vector<1x384x128xbf16>
    %30 = vector.shape_cast %29 : vector<1x384x128xbf16> to vector<384x128xbf16>
    %cst_46 = arith.constant dense<0.000000e+00> : vector<1x128xf32>
    %31 = tpu.matmul %28, %30, %cst_46 {dimension_numbers = #tpu.dot_dimension_numbers<[1], [0], [0], [1], [0, 0, 1, 1], [], []>} : vector<1x384xbf16>, vector<384x128xbf16>, vector<1x128xf32> -> vector<1x128xf32>
    %32 = arith.addf %23, %31 : vector<1x128xf32>
    %c0_47 = arith.constant 0 : index
    %c0_48 = arith.constant 0 : index
    %33 = vector.load %arg3[%c0_47, %c0_48] : memref<1x128xf32, #tpu.memory_space<vmem>>, vector<1x128xf32>
    %34 = arith.addf %32, %33 : vector<1x128xf32>
    %cst_49 = arith.constant 0.000000e+00 : f32
    %35 = vector.broadcast %cst_49 : f32 to vector<1x128xf32>
    %36 = arith.cmpf oge, %34, %35 : vector<1x128xf32>
    %cst_50 = arith.constant 0.00999999977 : f32
    %37 = vector.broadcast %cst_50 : f32 to vector<1x128xf32>
    %38 = arith.mulf %37, %34 : vector<1x128xf32>
    %39 = arith.select %36, %34, %38 : vector<1x128xi1>, vector<1x128xf32>
    %40 = vector.shape_cast %39 : vector<1x128xf32> to vector<1x1x128xf32>
    %cst_51 = arith.constant 0.000000e+00 : bf16
    %41 = vector.broadcast %cst_51 : bf16 to vector<3x3x128xbf16>
    %c0_52 = arith.constant 0 : index
    %c0_53 = arith.constant 0 : index
    %c0_54 = arith.constant 0 : index
    %42 = vector.load %arg8[%c0_52, %c0_53, %c0_54] : memref<3x3x128xbf16, #tpu.memory_space<vmem>>, vector<3x3x128xbf16>
    tpu.vector_store %arg8[%c0_52, %c0_53, %c0_54], %41 {strides = array<i32>} : memref<3x3x128xbf16, #tpu.memory_space<vmem>>, vector<3x3x128xbf16>,
    %43 = arith.truncf %40 : vector<1x1x128xf32> to vector<1x1x128xbf16>
    %c1_55 = arith.constant 1 : index
    %c1_56 = arith.constant 1 : index
    %c0_57 = arith.constant 0 : index
    %44 = vector.load %arg8[%c1_55, %c1_56, %c0_57] : memref<3x3x128xbf16, #tpu.memory_space<vmem>>, vector<1x1x128xbf16>
    tpu.vector_store %arg8[%c1_55, %c1_56, %c0_57], %43 {strides = array<i32>} : memref<3x3x128xbf16, #tpu.memory_space<vmem>>, vector<1x1x128xbf16>,
    %cst_58 = arith.constant 0.000000e+00 : f32
    %45 = vector.broadcast %cst_58 : f32 to vector<1x128xf32>
    %c0_59 = arith.constant 0 : index
    %c0_60 = arith.constant 0 : index
    %c0_61 = arith.constant 0 : index
    %46 = vector.load %arg8[%c0_59, %c0_60, %c0_61] : memref<3x3x128xbf16, #tpu.memory_space<vmem>>, vector<1x1x128xbf16>
    %c0_62 = arith.constant 0 : index
    %c1_63 = arith.constant 1 : index
    %c0_64 = arith.constant 0 : index
    %47 = vector.load %arg8[%c0_62, %c1_63, %c0_64] : memref<3x3x128xbf16, #tpu.memory_space<vmem>>, vector<1x1x128xbf16>
    %c0_65 = arith.constant 0 : index
    %c2_66 = arith.constant 2 : index
    %c0_67 = arith.constant 0 : index
    %48 = vector.load %arg8[%c0_65, %c2_66, %c0_67] : memref<3x3x128xbf16, #tpu.memory_space<vmem>>, vector<1x1x128xbf16>
    %49 = tpu.concatenate %46, %47, %48 in 2 : vector<1x1x128xbf16>, vector<1x1x128xbf16>, vector<1x1x128xbf16> -> vector<1x1x384xbf16>
    %50 = vector.shape_cast %49 : vector<1x1x384xbf16> to vector<1x384xbf16>
    %c0_68 = arith.constant 0 : index
    %c0_69 = arith.constant 0 : index
    %c0_70 = arith.constant 0 : index
    %51 = vector.load %arg4[%c0_68, %c0_69, %c0_70] : memref<3x384x128xbf16, #tpu.memory_space<vmem>>, vector<1x384x128xbf16>
    %52 = vector.shape_cast %51 : vector<1x384x128xbf16> to vector<384x128xbf16>
    %cst_71 = arith.constant dense<0.000000e+00> : vector<1x128xf32>
    %53 = tpu.matmul %50, %52, %cst_71 {dimension_numbers = #tpu.dot_dimension_numbers<[1], [0], [0], [1], [0, 0, 1, 1], [], []>} : vector<1x384xbf16>, vector<384x128xbf16>, vector<1x128xf32> -> vector<1x128xf32>
    %54 = arith.addf %45, %53 : vector<1x128xf32>
    %c1_72 = arith.constant 1 : index
    %c0_73 = arith.constant 0 : index
    %c0_74 = arith.constant 0 : index
    %55 = vector.load %arg8[%c1_72, %c0_73, %c0_74] : memref<3x3x128xbf16, #tpu.memory_space<vmem>>, vector<1x1x128xbf16>
    %c1_75 = arith.constant 1 : index
    %c1_76 = arith.constant 1 : index
    %c0_77 = arith.constant 0 : index
    %56 = vector.load %arg8[%c1_75, %c1_76, %c0_77] : memref<3x3x128xbf16, #tpu.memory_space<vmem>>, vector<1x1x128xbf16>
    %c1_78 = arith.constant 1 : index
    %c2_79 = arith.constant 2 : index
    %c0_80 = arith.constant 0 : index
    %57 = vector.load %arg8[%c1_78, %c2_79, %c0_80] : memref<3x3x128xbf16, #tpu.memory_space<vmem>>, vector<1x1x128xbf16>
    %58 = tpu.concatenate %55, %56, %57 in 2 : vector<1x1x128xbf16>, vector<1x1x128xbf16>, vector<1x1x128xbf16> -> vector<1x1x384xbf16>
    %59 = vector.shape_cast %58 : vector<1x1x384xbf16> to vector<1x384xbf16>
    %c1_81 = arith.constant 1 : index
    %c0_82 = arith.constant 0 : index
    %c0_83 = arith.constant 0 : index
    %60 = vector.load %arg4[%c1_81, %c0_82, %c0_83] : memref<3x384x128xbf16, #tpu.memory_space<vmem>>, vector<1x384x128xbf16>
    %61 = vector.shape_cast %60 : vector<1x384x128xbf16> to vector<384x128xbf16>
    %cst_84 = arith.constant dense<0.000000e+00> : vector<1x128xf32>
    %62 = tpu.matmul %59, %61, %cst_84 {dimension_numbers = #tpu.dot_dimension_numbers<[1], [0], [0], [1], [0, 0, 1, 1], [], []>} : vector<1x384xbf16>, vector<384x128xbf16>, vector<1x128xf32> -> vector<1x128xf32>
    %63 = arith.addf %54, %62 : vector<1x128xf32>
    %c2_85 = arith.constant 2 : index
    %c0_86 = arith.constant 0 : index
    %c0_87 = arith.constant 0 : index
    %64 = vector.load %arg8[%c2_85, %c0_86, %c0_87] : memref<3x3x128xbf16, #tpu.memory_space<vmem>>, vector<1x1x128xbf16>
    %c2_88 = arith.constant 2 : index
    %c1_89 = arith.constant 1 : index
    %c0_90 = arith.constant 0 : index
    %65 = vector.load %arg8[%c2_88, %c1_89, %c0_90] : memref<3x3x128xbf16, #tpu.memory_space<vmem>>, vector<1x1x128xbf16>
    %c2_91 = arith.constant 2 : index
    %c2_92 = arith.constant 2 : index
    %c0_93 = arith.constant 0 : index
    %66 = vector.load %arg8[%c2_91, %c2_92, %c0_93] : memref<3x3x128xbf16, #tpu.memory_space<vmem>>, vector<1x1x128xbf16>
    %67 = tpu.concatenate %64, %65, %66 in 2 : vector<1x1x128xbf16>, vector<1x1x128xbf16>, vector<1x1x128xbf16> -> vector<1x1x384xbf16>
    %68 = vector.shape_cast %67 : vector<1x1x384xbf16> to vector<1x384xbf16>
    %c2_94 = arith.constant 2 : index
    %c0_95 = arith.constant 0 : index
    %c0_96 = arith.constant 0 : index
    %69 = vector.load %arg4[%c2_94, %c0_95, %c0_96] : memref<3x384x128xbf16, #tpu.memory_space<vmem>>, vector<1x384x128xbf16>
    %70 = vector.shape_cast %69 : vector<1x384x128xbf16> to vector<384x128xbf16>
    %cst_97 = arith.constant dense<0.000000e+00> : vector<1x128xf32>
    %71 = tpu.matmul %68, %70, %cst_97 {dimension_numbers = #tpu.dot_dimension_numbers<[1], [0], [0], [1], [0, 0, 1, 1], [], []>} : vector<1x384xbf16>, vector<384x128xbf16>, vector<1x128xf32> -> vector<1x128xf32>
    %72 = arith.addf %63, %71 : vector<1x128xf32>
    %c0_98 = arith.constant 0 : index
    %c0_99 = arith.constant 0 : index
    %73 = vector.load %arg5[%c0_98, %c0_99] : memref<1x128xf32, #tpu.memory_space<vmem>>, vector<1x128xf32>
    %74 = arith.addf %72, %73 : vector<1x128xf32>
    %75 = vector.shape_cast %74 : vector<1x128xf32> to vector<1x1x128xf32>
    %c0_100 = arith.constant 0 : index
    %c0_101 = arith.constant 0 : index
    %c0_102 = arith.constant 0 : index
    %c0_103 = arith.constant 0 : index
    %76 = vector.load %arg1[%c0_100, %c0_101, %c0_102, %c0_103] : memref<1x1x1x128xbf16, #tpu.memory_space<vmem>>, vector<1x1x1x128xbf16>
    %77 = vector.shape_cast %76 : vector<1x1x1x128xbf16> to vector<1x1x128xbf16>
    %78 = arith.extf %77 : vector<1x1x128xbf16> to vector<1x1x128xf32>
    %79 = arith.addf %75, %78 : vector<1x1x128xf32>
    %80 = arith.truncf %79 : vector<1x1x128xf32> to vector<1x1x128xbf16>
    %c0_104 = arith.constant 0 : index
    %c0_105 = arith.constant 0 : index
    %c0_106 = arith.constant 0 : index
    %c0_107 = arith.constant 0 : index
    %81 = vector.load %arg6[%c0_104, %c0_105, %c0_106, %c0_107] : memref<1x1x1x128xbf16, #tpu.memory_space<vmem>>, vector<1x1x1x128xbf16>
    %82 = vector.shape_cast %81 : vector<1x1x1x128xbf16> to vector<1x1x128xbf16>
    %83 = vector.shape_cast %80 : vector<1x1x128xbf16> to vector<1x1x1x128xbf16>
    tpu.vector_store %arg6[%c0_104, %c0_105, %c0_106, %c0_107], %83 {strides = array<i32>} : memref<1x1x1x128xbf16, #tpu.memory_space<vmem>>, vector<1x1x1x128xbf16>,
    return
  }
  func.func @transform_0(%arg0: i32) -> (i32, i32, i32, i32) {
    %c0_i32 = arith.constant 0 : i32
    %c0_i32_0 = arith.constant 0 : i32
    %c0_i32_1 = arith.constant 0 : i32
    %c0_i32_2 = arith.constant 0 : i32
    return %arg0, %c0_i32, %c0_i32_0, %c0_i32_1 : i32, i32, i32, i32
  }
  func.func @transform_1(%arg0: i32) -> (i32, i32, i32) {
    %c0_i32 = arith.constant 0 : i32
    %c0_i32_0 = arith.constant 0 : i32
    %c0_i32_1 = arith.constant 0 : i32
    %c0_i32_2 = arith.constant 0 : i32
    return %c0_i32, %c0_i32_0, %c0_i32_1 : i32, i32, i32
  }
  func.func @transform_2(%arg0: i32) -> (i32, i32) {
    %c0_i32 = arith.constant 0 : i32
    %c0_i32_0 = arith.constant 0 : i32
    %c0_i32_1 = arith.constant 0 : i32
    return %c0_i32, %c0_i32_0 : i32, i32
  }
  func.func @transform_3(%arg0: i32) -> (i32, i32, i32) {
    %c0_i32 = arith.constant 0 : i32
    %c0_i32_0 = arith.constant 0 : i32
    %c0_i32_1 = arith.constant 0 : i32
    %c0_i32_2 = arith.constant 0 : i32
    return %c0_i32, %c0_i32_0, %c0_i32_1 : i32, i32, i32
  }
  func.func @transform_4(%arg0: i32) -> (i32, i32) {
    %c0_i32 = arith.constant 0 : i32
    %c0_i32_0 = arith.constant 0 : i32
    %c0_i32_1 = arith.constant 0 : i32
    return %c0_i32, %c0_i32_0 : i32, i32
  }
  func.func @transform_5(%arg0: i32) -> (i32, i32, i32, i32) {
    %c0_i32 = arith.constant 0 : i32
    %c0_i32_0 = arith.constant 0 : i32
    %c0_i32_1 = arith.constant 0 : i32
    %c0_i32_2 = arith.constant 0 : i32
    return %arg0, %c0_i32, %c0_i32_0, %c0_i32_1 : i32, i32, i32, i32
  }
}

module attributes {stable_mosaic.version = 11 : i64} {
  func.func @_res_final_kernel(%arg0: i32, %arg1: memref<1x1x1x128xbf16, #tpu.memory_space<vmem>>, %arg2: memref<3x384x128xbf16, #tpu.memory_space<vmem>>, %arg3: memref<1x128xf32, #tpu.memory_space<vmem>>, %arg4: memref<3x384x128xbf16, #tpu.memory_space<vmem>>, %arg5: memref<1x128xf32, #tpu.memory_space<vmem>>, %arg6: memref<3x384x128xbf16, #tpu.memory_space<vmem>>, %arg7: memref<1x128xf32, #tpu.memory_space<vmem>>, %arg8: memref<1x1x1x128xbf16, #tpu.memory_space<vmem>>, %arg9: memref<1x1x1x128xbf16, #tpu.memory_space<vmem>>, %arg10: memref<3x3x128xbf16, #tpu.memory_space<vmem>>, %arg11: memref<3x3x128xbf16, #tpu.memory_space<vmem>>) attributes {dimension_semantics = [#tpu.dimension_semantics<parallel>], iteration_bounds = array<i64: 2>, scalar_prefetch = 0 : i64, scratch_operands = 2 : i64, tpu.core_type = #tpu.core_type<tc>, window_params = [{transform_indices = @transform_0, window_bounds = array<i64: 1, 1, 1, 128>}, {pipeline_mode = #tpu.pipeline_mode<synchronous>, transform_indices = @transform_1, window_bounds = array<i64: 3, 384, 128>}, {pipeline_mode = #tpu.pipeline_mode<synchronous>, transform_indices = @transform_2, window_bounds = array<i64: 1, 128>}, {pipeline_mode = #tpu.pipeline_mode<synchronous>, transform_indices = @transform_3, window_bounds = array<i64: 3, 384, 128>}, {pipeline_mode = #tpu.pipeline_mode<synchronous>, transform_indices = @transform_4, window_bounds = array<i64: 1, 128>}, {pipeline_mode = #tpu.pipeline_mode<synchronous>, transform_indices = @transform_5, window_bounds = array<i64: 3, 384, 128>}, {pipeline_mode = #tpu.pipeline_mode<synchronous>, transform_indices = @transform_6, window_bounds = array<i64: 1, 128>}, {transform_indices = @transform_7, window_bounds = array<i64: 1, 1, 1, 128>}, {transform_indices = @transform_8, window_bounds = array<i64: 1, 1, 1, 128>}]} {
    %cst = arith.constant 0.000000e+00 : bf16
    %0 = vector.broadcast %cst : bf16 to vector<3x3x128xbf16>
    %c0 = arith.constant 0 : index
    %c0_0 = arith.constant 0 : index
    %c0_1 = arith.constant 0 : index
    %1 = vector.load %arg10[%c0, %c0_0, %c0_1] : memref<3x3x128xbf16, #tpu.memory_space<vmem>>, vector<3x3x128xbf16>
    tpu.vector_store %arg10[%c0, %c0_0, %c0_1], %0 {strides = array<i32>} : memref<3x3x128xbf16, #tpu.memory_space<vmem>>, vector<3x3x128xbf16>,
    %c0_2 = arith.constant 0 : index
    %c0_3 = arith.constant 0 : index
    %c0_4 = arith.constant 0 : index
    %c0_5 = arith.constant 0 : index
    %2 = vector.load %arg1[%c0_2, %c0_3, %c0_4, %c0_5] : memref<1x1x1x128xbf16, #tpu.memory_space<vmem>>, vector<1x1x1x128xbf16>
    %3 = vector.shape_cast %2 : vector<1x1x1x128xbf16> to vector<1x1x128xbf16>
    %c1 = arith.constant 1 : index
    %c1_6 = arith.constant 1 : index
    %c0_7 = arith.constant 0 : index
    %4 = vector.load %arg10[%c1, %c1_6, %c0_7] : memref<3x3x128xbf16, #tpu.memory_space<vmem>>, vector<1x1x128xbf16>
    tpu.vector_store %arg10[%c1, %c1_6, %c0_7], %3 {strides = array<i32>} : memref<3x3x128xbf16, #tpu.memory_space<vmem>>, vector<1x1x128xbf16>,
    %cst_8 = arith.constant 0.000000e+00 : f32
    %5 = vector.broadcast %cst_8 : f32 to vector<1x128xf32>
    %c0_9 = arith.constant 0 : index
    %c0_10 = arith.constant 0 : index
    %c0_11 = arith.constant 0 : index
    %6 = vector.load %arg10[%c0_9, %c0_10, %c0_11] : memref<3x3x128xbf16, #tpu.memory_space<vmem>>, vector<1x1x128xbf16>
    %c0_12 = arith.constant 0 : index
    %c1_13 = arith.constant 1 : index
    %c0_14 = arith.constant 0 : index
    %7 = vector.load %arg10[%c0_12, %c1_13, %c0_14] : memref<3x3x128xbf16, #tpu.memory_space<vmem>>, vector<1x1x128xbf16>
    %c0_15 = arith.constant 0 : index
    %c2 = arith.constant 2 : index
    %c0_16 = arith.constant 0 : index
    %8 = vector.load %arg10[%c0_15, %c2, %c0_16] : memref<3x3x128xbf16, #tpu.memory_space<vmem>>, vector<1x1x128xbf16>
    %9 = tpu.concatenate %6, %7, %8 in 2 : vector<1x1x128xbf16>, vector<1x1x128xbf16>, vector<1x1x128xbf16> -> vector<1x1x384xbf16>
    %10 = vector.shape_cast %9 : vector<1x1x384xbf16> to vector<1x384xbf16>
    %c0_17 = arith.constant 0 : index
    %c0_18 = arith.constant 0 : index
    %c0_19 = arith.constant 0 : index
    %11 = vector.load %arg2[%c0_17, %c0_18, %c0_19] : memref<3x384x128xbf16, #tpu.memory_space<vmem>>, vector<1x384x128xbf16>
    %12 = vector.shape_cast %11 : vector<1x384x128xbf16> to vector<384x128xbf16>
    %cst_20 = arith.constant dense<0.000000e+00> : vector<1x128xf32>
    %13 = tpu.matmul %10, %12, %cst_20 {dimension_numbers = #tpu.dot_dimension_numbers<[1], [0], [0], [1], [0, 0, 1, 1], [], []>} : vector<1x384xbf16>, vector<384x128xbf16>, vector<1x128xf32> -> vector<1x128xf32>
    %14 = arith.addf %5, %13 : vector<1x128xf32>
    %c1_21 = arith.constant 1 : index
    %c0_22 = arith.constant 0 : index
    %c0_23 = arith.constant 0 : index
    %15 = vector.load %arg10[%c1_21, %c0_22, %c0_23] : memref<3x3x128xbf16, #tpu.memory_space<vmem>>, vector<1x1x128xbf16>
    %c1_24 = arith.constant 1 : index
    %c1_25 = arith.constant 1 : index
    %c0_26 = arith.constant 0 : index
    %16 = vector.load %arg10[%c1_24, %c1_25, %c0_26] : memref<3x3x128xbf16, #tpu.memory_space<vmem>>, vector<1x1x128xbf16>
    %c1_27 = arith.constant 1 : index
    %c2_28 = arith.constant 2 : index
    %c0_29 = arith.constant 0 : index
    %17 = vector.load %arg10[%c1_27, %c2_28, %c0_29] : memref<3x3x128xbf16, #tpu.memory_space<vmem>>, vector<1x1x128xbf16>
    %18 = tpu.concatenate %15, %16, %17 in 2 : vector<1x1x128xbf16>, vector<1x1x128xbf16>, vector<1x1x128xbf16> -> vector<1x1x384xbf16>
    %19 = vector.shape_cast %18 : vector<1x1x384xbf16> to vector<1x384xbf16>
    %c1_30 = arith.constant 1 : index
    %c0_31 = arith.constant 0 : index
    %c0_32 = arith.constant 0 : index
    %20 = vector.load %arg2[%c1_30, %c0_31, %c0_32] : memref<3x384x128xbf16, #tpu.memory_space<vmem>>, vector<1x384x128xbf16>
    %21 = vector.shape_cast %20 : vector<1x384x128xbf16> to vector<384x128xbf16>
    %cst_33 = arith.constant dense<0.000000e+00> : vector<1x128xf32>
    %22 = tpu.matmul %19, %21, %cst_33 {dimension_numbers = #tpu.dot_dimension_numbers<[1], [0], [0], [1], [0, 0, 1, 1], [], []>} : vector<1x384xbf16>, vector<384x128xbf16>, vector<1x128xf32> -> vector<1x128xf32>
    %23 = arith.addf %14, %22 : vector<1x128xf32>
    %c2_34 = arith.constant 2 : index
    %c0_35 = arith.constant 0 : index
    %c0_36 = arith.constant 0 : index
    %24 = vector.load %arg10[%c2_34, %c0_35, %c0_36] : memref<3x3x128xbf16, #tpu.memory_space<vmem>>, vector<1x1x128xbf16>
    %c2_37 = arith.constant 2 : index
    %c1_38 = arith.constant 1 : index
    %c0_39 = arith.constant 0 : index
    %25 = vector.load %arg10[%c2_37, %c1_38, %c0_39] : memref<3x3x128xbf16, #tpu.memory_space<vmem>>, vector<1x1x128xbf16>
    %c2_40 = arith.constant 2 : index
    %c2_41 = arith.constant 2 : index
    %c0_42 = arith.constant 0 : index
    %26 = vector.load %arg10[%c2_40, %c2_41, %c0_42] : memref<3x3x128xbf16, #tpu.memory_space<vmem>>, vector<1x1x128xbf16>
    %27 = tpu.concatenate %24, %25, %26 in 2 : vector<1x1x128xbf16>, vector<1x1x128xbf16>, vector<1x1x128xbf16> -> vector<1x1x384xbf16>
    %28 = vector.shape_cast %27 : vector<1x1x384xbf16> to vector<1x384xbf16>
    %c2_43 = arith.constant 2 : index
    %c0_44 = arith.constant 0 : index
    %c0_45 = arith.constant 0 : index
    %29 = vector.load %arg2[%c2_43, %c0_44, %c0_45] : memref<3x384x128xbf16, #tpu.memory_space<vmem>>, vector<1x384x128xbf16>
    %30 = vector.shape_cast %29 : vector<1x384x128xbf16> to vector<384x128xbf16>
    %cst_46 = arith.constant dense<0.000000e+00> : vector<1x128xf32>
    %31 = tpu.matmul %28, %30, %cst_46 {dimension_numbers = #tpu.dot_dimension_numbers<[1], [0], [0], [1], [0, 0, 1, 1], [], []>} : vector<1x384xbf16>, vector<384x128xbf16>, vector<1x128xf32> -> vector<1x128xf32>
    %32 = arith.addf %23, %31 : vector<1x128xf32>
    %c0_47 = arith.constant 0 : index
    %c0_48 = arith.constant 0 : index
    %33 = vector.load %arg3[%c0_47, %c0_48] : memref<1x128xf32, #tpu.memory_space<vmem>>, vector<1x128xf32>
    %34 = arith.addf %32, %33 : vector<1x128xf32>
    %cst_49 = arith.constant 0.000000e+00 : f32
    %35 = vector.broadcast %cst_49 : f32 to vector<1x128xf32>
    %36 = arith.cmpf oge, %34, %35 : vector<1x128xf32>
    %cst_50 = arith.constant 0.00999999977 : f32
    %37 = vector.broadcast %cst_50 : f32 to vector<1x128xf32>
    %38 = arith.mulf %37, %34 : vector<1x128xf32>
    %39 = arith.select %36, %34, %38 : vector<1x128xi1>, vector<1x128xf32>
    %40 = vector.shape_cast %39 : vector<1x128xf32> to vector<1x1x128xf32>
    %cst_51 = arith.constant 0.000000e+00 : bf16
    %41 = vector.broadcast %cst_51 : bf16 to vector<3x3x128xbf16>
    %c0_52 = arith.constant 0 : index
    %c0_53 = arith.constant 0 : index
    %c0_54 = arith.constant 0 : index
    %42 = vector.load %arg11[%c0_52, %c0_53, %c0_54] : memref<3x3x128xbf16, #tpu.memory_space<vmem>>, vector<3x3x128xbf16>
    tpu.vector_store %arg11[%c0_52, %c0_53, %c0_54], %41 {strides = array<i32>} : memref<3x3x128xbf16, #tpu.memory_space<vmem>>, vector<3x3x128xbf16>,
    %43 = arith.truncf %40 : vector<1x1x128xf32> to vector<1x1x128xbf16>
    %c1_55 = arith.constant 1 : index
    %c1_56 = arith.constant 1 : index
    %c0_57 = arith.constant 0 : index
    %44 = vector.load %arg11[%c1_55, %c1_56, %c0_57] : memref<3x3x128xbf16, #tpu.memory_space<vmem>>, vector<1x1x128xbf16>
    tpu.vector_store %arg11[%c1_55, %c1_56, %c0_57], %43 {strides = array<i32>} : memref<3x3x128xbf16, #tpu.memory_space<vmem>>, vector<1x1x128xbf16>,
    %cst_58 = arith.constant 0.000000e+00 : f32
    %45 = vector.broadcast %cst_58 : f32 to vector<1x128xf32>
    %c0_59 = arith.constant 0 : index
    %c0_60 = arith.constant 0 : index
    %c0_61 = arith.constant 0 : index
    %46 = vector.load %arg11[%c0_59, %c0_60, %c0_61] : memref<3x3x128xbf16, #tpu.memory_space<vmem>>, vector<1x1x128xbf16>
    %c0_62 = arith.constant 0 : index
    %c1_63 = arith.constant 1 : index
    %c0_64 = arith.constant 0 : index
    %47 = vector.load %arg11[%c0_62, %c1_63, %c0_64] : memref<3x3x128xbf16, #tpu.memory_space<vmem>>, vector<1x1x128xbf16>
    %c0_65 = arith.constant 0 : index
    %c2_66 = arith.constant 2 : index
    %c0_67 = arith.constant 0 : index
    %48 = vector.load %arg11[%c0_65, %c2_66, %c0_67] : memref<3x3x128xbf16, #tpu.memory_space<vmem>>, vector<1x1x128xbf16>
    %49 = tpu.concatenate %46, %47, %48 in 2 : vector<1x1x128xbf16>, vector<1x1x128xbf16>, vector<1x1x128xbf16> -> vector<1x1x384xbf16>
    %50 = vector.shape_cast %49 : vector<1x1x384xbf16> to vector<1x384xbf16>
    %c0_68 = arith.constant 0 : index
    %c0_69 = arith.constant 0 : index
    %c0_70 = arith.constant 0 : index
    %51 = vector.load %arg4[%c0_68, %c0_69, %c0_70] : memref<3x384x128xbf16, #tpu.memory_space<vmem>>, vector<1x384x128xbf16>
    %52 = vector.shape_cast %51 : vector<1x384x128xbf16> to vector<384x128xbf16>
    %cst_71 = arith.constant dense<0.000000e+00> : vector<1x128xf32>
    %53 = tpu.matmul %50, %52, %cst_71 {dimension_numbers = #tpu.dot_dimension_numbers<[1], [0], [0], [1], [0, 0, 1, 1], [], []>} : vector<1x384xbf16>, vector<384x128xbf16>, vector<1x128xf32> -> vector<1x128xf32>
    %54 = arith.addf %45, %53 : vector<1x128xf32>
    %c1_72 = arith.constant 1 : index
    %c0_73 = arith.constant 0 : index
    %c0_74 = arith.constant 0 : index
    %55 = vector.load %arg11[%c1_72, %c0_73, %c0_74] : memref<3x3x128xbf16, #tpu.memory_space<vmem>>, vector<1x1x128xbf16>
    %c1_75 = arith.constant 1 : index
    %c1_76 = arith.constant 1 : index
    %c0_77 = arith.constant 0 : index
    %56 = vector.load %arg11[%c1_75, %c1_76, %c0_77] : memref<3x3x128xbf16, #tpu.memory_space<vmem>>, vector<1x1x128xbf16>
    %c1_78 = arith.constant 1 : index
    %c2_79 = arith.constant 2 : index
    %c0_80 = arith.constant 0 : index
    %57 = vector.load %arg11[%c1_78, %c2_79, %c0_80] : memref<3x3x128xbf16, #tpu.memory_space<vmem>>, vector<1x1x128xbf16>
    %58 = tpu.concatenate %55, %56, %57 in 2 : vector<1x1x128xbf16>, vector<1x1x128xbf16>, vector<1x1x128xbf16> -> vector<1x1x384xbf16>
    %59 = vector.shape_cast %58 : vector<1x1x384xbf16> to vector<1x384xbf16>
    %c1_81 = arith.constant 1 : index
    %c0_82 = arith.constant 0 : index
    %c0_83 = arith.constant 0 : index
    %60 = vector.load %arg4[%c1_81, %c0_82, %c0_83] : memref<3x384x128xbf16, #tpu.memory_space<vmem>>, vector<1x384x128xbf16>
    %61 = vector.shape_cast %60 : vector<1x384x128xbf16> to vector<384x128xbf16>
    %cst_84 = arith.constant dense<0.000000e+00> : vector<1x128xf32>
    %62 = tpu.matmul %59, %61, %cst_84 {dimension_numbers = #tpu.dot_dimension_numbers<[1], [0], [0], [1], [0, 0, 1, 1], [], []>} : vector<1x384xbf16>, vector<384x128xbf16>, vector<1x128xf32> -> vector<1x128xf32>
    %63 = arith.addf %54, %62 : vector<1x128xf32>
    %c2_85 = arith.constant 2 : index
    %c0_86 = arith.constant 0 : index
    %c0_87 = arith.constant 0 : index
    %64 = vector.load %arg11[%c2_85, %c0_86, %c0_87] : memref<3x3x128xbf16, #tpu.memory_space<vmem>>, vector<1x1x128xbf16>
    %c2_88 = arith.constant 2 : index
    %c1_89 = arith.constant 1 : index
    %c0_90 = arith.constant 0 : index
    %65 = vector.load %arg11[%c2_88, %c1_89, %c0_90] : memref<3x3x128xbf16, #tpu.memory_space<vmem>>, vector<1x1x128xbf16>
    %c2_91 = arith.constant 2 : index
    %c2_92 = arith.constant 2 : index
    %c0_93 = arith.constant 0 : index
    %66 = vector.load %arg11[%c2_91, %c2_92, %c0_93] : memref<3x3x128xbf16, #tpu.memory_space<vmem>>, vector<1x1x128xbf16>
    %67 = tpu.concatenate %64, %65, %66 in 2 : vector<1x1x128xbf16>, vector<1x1x128xbf16>, vector<1x1x128xbf16> -> vector<1x1x384xbf16>
    %68 = vector.shape_cast %67 : vector<1x1x384xbf16> to vector<1x384xbf16>
    %c2_94 = arith.constant 2 : index
    %c0_95 = arith.constant 0 : index
    %c0_96 = arith.constant 0 : index
    %69 = vector.load %arg4[%c2_94, %c0_95, %c0_96] : memref<3x384x128xbf16, #tpu.memory_space<vmem>>, vector<1x384x128xbf16>
    %70 = vector.shape_cast %69 : vector<1x384x128xbf16> to vector<384x128xbf16>
    %cst_97 = arith.constant dense<0.000000e+00> : vector<1x128xf32>
    %71 = tpu.matmul %68, %70, %cst_97 {dimension_numbers = #tpu.dot_dimension_numbers<[1], [0], [0], [1], [0, 0, 1, 1], [], []>} : vector<1x384xbf16>, vector<384x128xbf16>, vector<1x128xf32> -> vector<1x128xf32>
    %72 = arith.addf %63, %71 : vector<1x128xf32>
    %c0_98 = arith.constant 0 : index
    %c0_99 = arith.constant 0 : index
    %73 = vector.load %arg5[%c0_98, %c0_99] : memref<1x128xf32, #tpu.memory_space<vmem>>, vector<1x128xf32>
    %74 = arith.addf %72, %73 : vector<1x128xf32>
    %75 = vector.shape_cast %74 : vector<1x128xf32> to vector<1x1x128xf32>
    %c0_100 = arith.constant 0 : index
    %c0_101 = arith.constant 0 : index
    %c0_102 = arith.constant 0 : index
    %c0_103 = arith.constant 0 : index
    %76 = vector.load %arg1[%c0_100, %c0_101, %c0_102, %c0_103] : memref<1x1x1x128xbf16, #tpu.memory_space<vmem>>, vector<1x1x1x128xbf16>
    %77 = vector.shape_cast %76 : vector<1x1x1x128xbf16> to vector<1x1x128xbf16>
    %78 = arith.extf %77 : vector<1x1x128xbf16> to vector<1x1x128xf32>
    %79 = arith.addf %75, %78 : vector<1x1x128xf32>
    %80 = arith.truncf %79 : vector<1x1x128xf32> to vector<1x1x128xbf16>
    %c0_104 = arith.constant 0 : index
    %c0_105 = arith.constant 0 : index
    %c0_106 = arith.constant 0 : index
    %c0_107 = arith.constant 0 : index
    %81 = vector.load %arg8[%c0_104, %c0_105, %c0_106, %c0_107] : memref<1x1x1x128xbf16, #tpu.memory_space<vmem>>, vector<1x1x1x128xbf16>
    %82 = vector.shape_cast %81 : vector<1x1x1x128xbf16> to vector<1x1x128xbf16>
    %83 = vector.shape_cast %80 : vector<1x1x128xbf16> to vector<1x1x1x128xbf16>
    tpu.vector_store %arg8[%c0_104, %c0_105, %c0_106, %c0_107], %83 {strides = array<i32>} : memref<1x1x1x128xbf16, #tpu.memory_space<vmem>>, vector<1x1x1x128xbf16>,
    %84 = arith.truncf %79 : vector<1x1x128xf32> to vector<1x1x128xbf16>
    %c1_108 = arith.constant 1 : index
    %c1_109 = arith.constant 1 : index
    %c0_110 = arith.constant 0 : index
    %85 = vector.load %arg11[%c1_108, %c1_109, %c0_110] : memref<3x3x128xbf16, #tpu.memory_space<vmem>>, vector<1x1x128xbf16>
    tpu.vector_store %arg11[%c1_108, %c1_109, %c0_110], %84 {strides = array<i32>} : memref<3x3x128xbf16, #tpu.memory_space<vmem>>, vector<1x1x128xbf16>,
    %cst_111 = arith.constant 0.000000e+00 : f32
    %86 = vector.broadcast %cst_111 : f32 to vector<1x128xf32>
    %c0_112 = arith.constant 0 : index
    %c0_113 = arith.constant 0 : index
    %c0_114 = arith.constant 0 : index
    %87 = vector.load %arg11[%c0_112, %c0_113, %c0_114] : memref<3x3x128xbf16, #tpu.memory_space<vmem>>, vector<1x1x128xbf16>
    %c0_115 = arith.constant 0 : index
    %c1_116 = arith.constant 1 : index
    %c0_117 = arith.constant 0 : index
    %88 = vector.load %arg11[%c0_115, %c1_116, %c0_117] : memref<3x3x128xbf16, #tpu.memory_space<vmem>>, vector<1x1x128xbf16>
    %c0_118 = arith.constant 0 : index
    %c2_119 = arith.constant 2 : index
    %c0_120 = arith.constant 0 : index
    %89 = vector.load %arg11[%c0_118, %c2_119, %c0_120] : memref<3x3x128xbf16, #tpu.memory_space<vmem>>, vector<1x1x128xbf16>
    %90 = tpu.concatenate %87, %88, %89 in 2 : vector<1x1x128xbf16>, vector<1x1x128xbf16>, vector<1x1x128xbf16> -> vector<1x1x384xbf16>
    %91 = vector.shape_cast %90 : vector<1x1x384xbf16> to vector<1x384xbf16>
    %c0_121 = arith.constant 0 : index
    %c0_122 = arith.constant 0 : index
    %c0_123 = arith.constant 0 : index
    %92 = vector.load %arg6[%c0_121, %c0_122, %c0_123] : memref<3x384x128xbf16, #tpu.memory_space<vmem>>, vector<1x384x128xbf16>
    %93 = vector.shape_cast %92 : vector<1x384x128xbf16> to vector<384x128xbf16>
    %cst_124 = arith.constant dense<0.000000e+00> : vector<1x128xf32>
    %94 = tpu.matmul %91, %93, %cst_124 {dimension_numbers = #tpu.dot_dimension_numbers<[1], [0], [0], [1], [0, 0, 1, 1], [], []>} : vector<1x384xbf16>, vector<384x128xbf16>, vector<1x128xf32> -> vector<1x128xf32>
    %95 = arith.addf %86, %94 : vector<1x128xf32>
    %c1_125 = arith.constant 1 : index
    %c0_126 = arith.constant 0 : index
    %c0_127 = arith.constant 0 : index
    %96 = vector.load %arg11[%c1_125, %c0_126, %c0_127] : memref<3x3x128xbf16, #tpu.memory_space<vmem>>, vector<1x1x128xbf16>
    %c1_128 = arith.constant 1 : index
    %c1_129 = arith.constant 1 : index
    %c0_130 = arith.constant 0 : index
    %97 = vector.load %arg11[%c1_128, %c1_129, %c0_130] : memref<3x3x128xbf16, #tpu.memory_space<vmem>>, vector<1x1x128xbf16>
    %c1_131 = arith.constant 1 : index
    %c2_132 = arith.constant 2 : index
    %c0_133 = arith.constant 0 : index
    %98 = vector.load %arg11[%c1_131, %c2_132, %c0_133] : memref<3x3x128xbf16, #tpu.memory_space<vmem>>, vector<1x1x128xbf16>
    %99 = tpu.concatenate %96, %97, %98 in 2 : vector<1x1x128xbf16>, vector<1x1x128xbf16>, vector<1x1x128xbf16> -> vector<1x1x384xbf16>
    %100 = vector.shape_cast %99 : vector<1x1x384xbf16> to vector<1x384xbf16>
    %c1_134 = arith.constant 1 : index
    %c0_135 = arith.constant 0 : index
    %c0_136 = arith.constant 0 : index
    %101 = vector.load %arg6[%c1_134, %c0_135, %c0_136] : memref<3x384x128xbf16, #tpu.memory_space<vmem>>, vector<1x384x128xbf16>
    %102 = vector.shape_cast %101 : vector<1x384x128xbf16> to vector<384x128xbf16>
    %cst_137 = arith.constant dense<0.000000e+00> : vector<1x128xf32>
    %103 = tpu.matmul %100, %102, %cst_137 {dimension_numbers = #tpu.dot_dimension_numbers<[1], [0], [0], [1], [0, 0, 1, 1], [], []>} : vector<1x384xbf16>, vector<384x128xbf16>, vector<1x128xf32> -> vector<1x128xf32>
    %104 = arith.addf %95, %103 : vector<1x128xf32>
    %c2_138 = arith.constant 2 : index
    %c0_139 = arith.constant 0 : index
    %c0_140 = arith.constant 0 : index
    %105 = vector.load %arg11[%c2_138, %c0_139, %c0_140] : memref<3x3x128xbf16, #tpu.memory_space<vmem>>, vector<1x1x128xbf16>
    %c2_141 = arith.constant 2 : index
    %c1_142 = arith.constant 1 : index
    %c0_143 = arith.constant 0 : index
    %106 = vector.load %arg11[%c2_141, %c1_142, %c0_143] : memref<3x3x128xbf16, #tpu.memory_space<vmem>>, vector<1x1x128xbf16>
    %c2_144 = arith.constant 2 : index
    %c2_145 = arith.constant 2 : index
    %c0_146 = arith.constant 0 : index
    %107 = vector.load %arg11[%c2_144, %c2_145, %c0_146] : memref<3x3x128xbf16, #tpu.memory_space<vmem>>, vector<1x1x128xbf16>
    %108 = tpu.concatenate %105, %106, %107 in 2 : vector<1x1x128xbf16>, vector<1x1x128xbf16>, vector<1x1x128xbf16> -> vector<1x1x384xbf16>
    %109 = vector.shape_cast %108 : vector<1x1x384xbf16> to vector<1x384xbf16>
    %c2_147 = arith.constant 2 : index
    %c0_148 = arith.constant 0 : index
    %c0_149 = arith.constant 0 : index
    %110 = vector.load %arg6[%c2_147, %c0_148, %c0_149] : memref<3x384x128xbf16, #tpu.memory_space<vmem>>, vector<1x384x128xbf16>
    %111 = vector.shape_cast %110 : vector<1x384x128xbf16> to vector<384x128xbf16>
    %cst_150 = arith.constant dense<0.000000e+00> : vector<1x128xf32>
    %112 = tpu.matmul %109, %111, %cst_150 {dimension_numbers = #tpu.dot_dimension_numbers<[1], [0], [0], [1], [0, 0, 1, 1], [], []>} : vector<1x384xbf16>, vector<384x128xbf16>, vector<1x128xf32> -> vector<1x128xf32>
    %113 = arith.addf %104, %112 : vector<1x128xf32>
    %c0_151 = arith.constant 0 : index
    %c0_152 = arith.constant 0 : index
    %114 = vector.load %arg7[%c0_151, %c0_152] : memref<1x128xf32, #tpu.memory_space<vmem>>, vector<1x128xf32>
    %115 = arith.addf %113, %114 : vector<1x128xf32>
    %116 = vector.shape_cast %115 : vector<1x128xf32> to vector<1x1x128xf32>
    %117 = arith.truncf %116 : vector<1x1x128xf32> to vector<1x1x128xbf16>
    %c0_153 = arith.constant 0 : index
    %c0_154 = arith.constant 0 : index
    %c0_155 = arith.constant 0 : index
    %c0_156 = arith.constant 0 : index
    %118 = vector.load %arg9[%c0_153, %c0_154, %c0_155, %c0_156] : memref<1x1x1x128xbf16, #tpu.memory_space<vmem>>, vector<1x1x1x128xbf16>
    %119 = vector.shape_cast %118 : vector<1x1x1x128xbf16> to vector<1x1x128xbf16>
    %120 = vector.shape_cast %117 : vector<1x1x128xbf16> to vector<1x1x1x128xbf16>
    tpu.vector_store %arg9[%c0_153, %c0_154, %c0_155, %c0_156], %120 {strides = array<i32>} : memref<1x1x1x128xbf16, #tpu.memory_space<vmem>>, vector<1x1x1x128xbf16>,
    return
  }
  func.func @transform_0(%arg0: i32) -> (i32, i32, i32, i32) {
    %c0_i32 = arith.constant 0 : i32
    %c0_i32_0 = arith.constant 0 : i32
    %c0_i32_1 = arith.constant 0 : i32
    %c0_i32_2 = arith.constant 0 : i32
    return %arg0, %c0_i32, %c0_i32_0, %c0_i32_1 : i32, i32, i32, i32
  }
  func.func @transform_1(%arg0: i32) -> (i32, i32, i32) {
    %c0_i32 = arith.constant 0 : i32
    %c0_i32_0 = arith.constant 0 : i32
    %c0_i32_1 = arith.constant 0 : i32
    %c0_i32_2 = arith.constant 0 : i32
    return %c0_i32, %c0_i32_0, %c0_i32_1 : i32, i32, i32
  }
  func.func @transform_2(%arg0: i32) -> (i32, i32) {
    %c0_i32 = arith.constant 0 : i32
    %c0_i32_0 = arith.constant 0 : i32
    %c0_i32_1 = arith.constant 0 : i32
    return %c0_i32, %c0_i32_0 : i32, i32
  }
  func.func @transform_3(%arg0: i32) -> (i32, i32, i32) {
    %c0_i32 = arith.constant 0 : i32
    %c0_i32_0 = arith.constant 0 : i32
    %c0_i32_1 = arith.constant 0 : i32
    %c0_i32_2 = arith.constant 0 : i32
    return %c0_i32, %c0_i32_0, %c0_i32_1 : i32, i32, i32
  }
  func.func @transform_4(%arg0: i32) -> (i32, i32) {
    %c0_i32 = arith.constant 0 : i32
    %c0_i32_0 = arith.constant 0 : i32
    %c0_i32_1 = arith.constant 0 : i32
    return %c0_i32, %c0_i32_0 : i32, i32
  }
  func.func @transform_5(%arg0: i32) -> (i32, i32, i32) {
    %c0_i32 = arith.constant 0 : i32
    %c0_i32_0 = arith.constant 0 : i32
    %c0_i32_1 = arith.constant 0 : i32
    %c0_i32_2 = arith.constant 0 : i32
    return %c0_i32, %c0_i32_0, %c0_i32_1 : i32, i32, i32
  }
  func.func @transform_6(%arg0: i32) -> (i32, i32) {
    %c0_i32 = arith.constant 0 : i32
    %c0_i32_0 = arith.constant 0 : i32
    %c0_i32_1 = arith.constant 0 : i32
    return %c0_i32, %c0_i32_0 : i32, i32
  }
  func.func @transform_7(%arg0: i32) -> (i32, i32, i32, i32) {
    %c0_i32 = arith.constant 0 : i32
    %c0_i32_0 = arith.constant 0 : i32
    %c0_i32_1 = arith.constant 0 : i32
    %c0_i32_2 = arith.constant 0 : i32
    return %arg0, %c0_i32, %c0_i32_0, %c0_i32_1 : i32, i32, i32, i32
  }
  func.func @transform_8(%arg0: i32) -> (i32, i32, i32, i32) {
    %c0_i32 = arith.constant 0 : i32
    %c0_i32_0 = arith.constant 0 : i32
    %c0_i32_1 = arith.constant 0 : i32
    %c0_i32_2 = arith.constant 0 : i32
    return %arg0, %c0_i32, %c0_i32_0, %c0_i32_1 : i32, i32, i32, i32
  }
}

</mosaic_0001>

<llo_original>
// kernel: _lambda_.7
$region0: #{_lambda_.7}
  #allocation0 [shape = 'u32[]', space=smem, size = 0x4, offset = 0x4, fixed_abs, tag = 'smem constant byte address 0x4 - core index']
  #allocation1 [shape = 'u32[72,128]{1,0:T(1,128)}', space=vmem, size = 0x9000, scoped, tag = 'internal scratch']
  %s0 = inlined_call_operand.vmem [shape: bf16[2,9,9,12], index: 0, kind: input, shape index: {}]
  %s1 = inlined_call_operand.vmem [shape: bf16[3,3,12,128], index: 1, kind: input, shape index: {}]
  %s2 = inlined_call_operand.vmem [shape: f32[1,128], index: 2, kind: input, shape index: {}]
  %s3 = inlined_call_operand.vmem [shape: bf16[2,8,8,128], index: 3, kind: output, shape index: {}]
  %s4 = sld [smem:[#allocation0]]
  $region45: #{_lambda_.7} parent=0
    _
  %s6 = ssub.s32 1, %s4
  %s7 = scalar_select 0, %s6, %s4
  loop: start=0, step=1, limit=4
  $region2: #{_lambda_.7} parent=0 // loop_pre_header
    _
  $region3: #{_lambda_.7} parent=0 // loop_header
    %s9 = sphi 0, %s13
    %p10 = scmp.ge.s32.totalorder %s9, 4
    %s16 = sphi 0, %s28
    %s17 = sphi 0, %s24
    %s18 = sphi 0, %s16
    %s19 = sphi 0, %s17
    %s20 = sphi 0, %s18
    %s21 = sphi 0, %s19
    %s31 = sphi 0, %s33
    %s34 = sphi 0, %s31
    %s35 = sphi 0, %s34
    %s51 = sphi 0, %s35
    %s55 = sphi 0, %s55
    %s57 = sphi 0, %s55
    %s58 = sphi 0, %s57
    %s72 = sphi 0, %s58
    %s76 = sphi 0, %s76
    %s78 = sphi 0, %s76
    %s79 = sphi 0, %s78
    %s93 = sphi 0, %s79
    %s101 = sphi 0, %s103
    %s104 = sphi 0, %s101
    %s105 = sphi 0, %s104
    %s121 = sphi 0, %s105
  $region4: #{_lambda_.7} parent=0 // loop_header_branch
    %12 = sbr.rel (%p10) target = $region8
  $region5: #{_lambda_.7} parent=0 // loop_body
    %s14 = ssub.s32 %s9, 1
    %s15 = ssub.s32 %s9, 2
    %s22 = sadd.s32 1, %s17
    %p23 = scmp.ge.s32.totalorder %s22, 1
    %s24 = scalar_select %p23, 0, %s22
    %s25 = sadd.s32 1, %s16
    %s26 = scalar_select %p23, %s25, %s16
    %p27 = scmp.ge.s32.totalorder %s26, 2
    %s28 = scalar_select %p27, 0, %s26
    %s29 = ssub.s32 %s16, %s28
    %p30 = scmp.eq.s32.totalorder %s29, 0
    %s32 = sadd.s32 %s31, 1
    %s33 = scalar_select %p30, %s31, %s32
    %p36 = pneg %p30
    %p37 = scmp.eq.s32.totalorder %s9, 1
    %p38 = por %p36, %p37
    %p39 = scmp.ne.s32.totalorder %s31, %s34
    %p40 = scmp.eq.s32.totalorder %s9, 0
    %p41 = por %p39, %p40
    %p42 = scmp.ne.s32.totalorder %s31, %s34
    %p43 = scmp.eq.s32.totalorder %s14, 1
    %p44 = por %p42, %p43
    %p45 = scmp.ne.s32.totalorder %s34, %s35
    %p46 = scmp.eq.s32.totalorder %s14, 0
    %p47 = por %p45, %p46
    %p48 = scmp.ne.s32.totalorder %s34, %s35
    %p49 = scmp.eq.s32.totalorder %s15, 1
    %p50 = por %p48, %p49
    %p52 = scmp.ne.s32.totalorder %s35, %s51
    %p53 = scmp.eq.s32.totalorder %s15, 0
    %p54 = por %p52, %p53
    %s56 = sadd.s32 %s55, 1
    %p59 = scmp.eq.s32.totalorder %s9, 1
    %p60 = scmp.ne.s32.totalorder %s55, %s57
    %p61 = scmp.eq.s32.totalorder %s9, 0
    %p62 = por %p60, %p61
    %p63 = scmp.ne.s32.totalorder %s55, %s57
    %p64 = scmp.eq.s32.totalorder %s14, 1
    %p65 = por %p63, %p64
    %p66 = scmp.ne.s32.totalorder %s57, %s58
    %p67 = scmp.eq.s32.totalorder %s14, 0
    %p68 = por %p66, %p67
    %p69 = scmp.ne.s32.totalorder %s57, %s58
    %p70 = scmp.eq.s32.totalorder %s15, 1
    %p71 = por %p69, %p70
    %p73 = scmp.ne.s32.totalorder %s58, %s72
    %p74 = scmp.eq.s32.totalorder %s15, 0
    %p75 = por %p73, %p74
    %s77 = sadd.s32 %s76, 1
    %p80 = scmp.eq.s32.totalorder %s9, 1
    %p81 = scmp.ne.s32.totalorder %s76, %s78
    %p82 = scmp.eq.s32.totalorder %s9, 0
    %p83 = por %p81, %p82
    %p84 = scmp.ne.s32.totalorder %s76, %s78
    %p85 = scmp.eq.s32.totalorder %s14, 1
    %p86 = por %p84, %p85
    %p87 = scmp.ne.s32.totalorder %s78, %s79
    %p88 = scmp.eq.s32.totalorder %s14, 0
    %p89 = por %p87, %p88
    %p90 = scmp.ne.s32.totalorder %s78, %s79
    %p91 = scmp.eq.s32.totalorder %s15, 1
    %p92 = por %p90, %p91
    %p94 = scmp.ne.s32.totalorder %s79, %s93
    %p95 = scmp.eq.s32.totalorder %s15, 0
    %p96 = por %p94, %p95
    %s97 = ssub.s32 %s16, %s28
    %s98 = ssub.s32 %s17, %s24
    %s99 = sor.u32 %s97, %s98
    %p100 = scmp.eq.s32.totalorder %s99, 0
    %s102 = sadd.s32 %s101, 1
    %s103 = scalar_select %p100, %s101, %s102
    %p106 = pneg %p100
    %p107 = scmp.eq.s32.totalorder %s9, 1
    %p108 = por %p106, %p107
    %p109 = scmp.ne.s32.totalorder %s101, %s104
    %p110 = scmp.eq.s32.totalorder %s9, 0
    %p111 = por %p109, %p110
    %p112 = scmp.ne.s32.totalorder %s101, %s104
    %p113 = scmp.eq.s32.totalorder %s14, 1
    %p114 = por %p112, %p113
    %p115 = scmp.ne.s32.totalorder %s104, %s105
    %p116 = scmp.eq.s32.totalorder %s14, 0
    %p117 = por %p115, %p116
    %p118 = scmp.ne.s32.totalorder %s104, %s105
    %p119 = scmp.eq.s32.totalorder %s15, 1
    %p120 = por %p118, %p119
    %p122 = scmp.ne.s32.totalorder %s105, %s121
    %p123 = scmp.eq.s32.totalorder %s15, 0
    %p124 = por %p122, %p123
    %p125 = scmp.le.s32.totalorder 1, %s9
    %p126 = scmp.lt.s32.totalorder %s9, 3
    %p127 = pnand %p125, %p126
    %p128 = pneg %p127
    // Predicated region
    $region9: #{_lambda_.7} parent=5 // pred_check
      _
    $region10: #{_lambda_.7} parent=5 // pred_check_branch
      %130 = sbr.rel (%p127) target = $region12
    $region11: #{_lambda_.7} parent=5 // pred_region
      %s131 = ssub.s32 %s9, 1
      // Predicated region
      $region13: #{_lambda_.7} parent=11 // pred_check
        %p132 = pneg %p68
      $region14: #{_lambda_.7} parent=11 // pred_check_branch
        %134 = sbr.rel (%p132) target = $region16
      $region15: #{_lambda_.7} parent=11 // pred_region
        _
      $region16: #{_lambda_.7} parent=11 // pred_fallthru
        _
      // Predicated region
      $region17: #{_lambda_.7} parent=11 // pred_check
        %p135 = pneg %p89
      $region18: #{_lambda_.7} parent=11 // pred_check_branch
        %137 = sbr.rel (%p135) target = $region20
      $region19: #{_lambda_.7} parent=11 // pred_region
        _
      $region20: #{_lambda_.7} parent=11 // pred_fallthru
        _
    $region12: #{_lambda_.7} parent=5 // pred_fallthru
      _
    %p138 = scmp.lt.s32.totalorder %s9, 2
    // Predicated region
    $region21: #{_lambda_.7} parent=5 // pred_check
      %p139 = pneg %p138
    $region22: #{_lambda_.7} parent=5 // pred_check_branch
      %141 = sbr.rel (%p139) target = $region24
    $region23: #{_lambda_.7} parent=5 // pred_region
      // Predicated region
      $region25: #{_lambda_.7} parent=23 // pred_check
        %p142 = pneg %p41
      $region26: #{_lambda_.7} parent=23 // pred_check_branch
        %144 = sbr.rel (%p142) target = $region28
      $region27: #{_lambda_.7} parent=23 // pred_region
        %p145 = scmp.lt.s32.totalorder %s16, 1
        %s146 = scalar_select %p145, %s16, 1
        %s147 = smul.addr %s146, 18
        %s148 = smul.addr %s147, 4
        %s149 = scalar_lea.vmem %s0, %s148
      $region28: #{_lambda_.7} parent=23 // pred_fallthru
        _
    $region24: #{_lambda_.7} parent=5 // pred_fallthru
      _
    %p150 = scmp.le.s32.totalorder 1, %s9
    %p151 = scmp.lt.s32.totalorder %s9, 3
    %p152 = pnand %p150, %p151
    %p153 = pneg %p152
    // Predicated region
    $region29: #{_lambda_.7} parent=5 // pred_check
      _
    $region30: #{_lambda_.7} parent=5 // pred_check_branch
      %155 = sbr.rel (%p152) target = $region32
    $region31: #{_lambda_.7} parent=5 // pred_region
      %s156 = ssub.s32 %s9, 1
      %p157 = scmp.lt.s32.totalorder %s18, 1
      %s158 = scalar_select %p157, %s18, 1
      %s159 = smul.addr %s158, 18
      %s160 = smul.addr %s159, 4
      %s161 = scalar_lea.vmem %s0, %s160
      %p162 = pneg %p47
      %p163 = pneg %p44
      %p164 = pneg %p68
      %p165 = pneg %p65
      %p166 = pneg %p89
      %p167 = pneg %p86
      %p168 = pneg %p117
      %p169 = pneg %p114
      %s170 = smul.u32 8, %s19
      %p171 = scmp.lt.s32.totalorder %s18, 1
      %s172 = scalar_select %p171, %s18, 1
      %p173 = scmp.lt.s32.totalorder %s170, 7
      %s174 = scalar_select %p173, %s170, 7
      %s175 = smul.addr %s172, 8
      %s176 = sadd.s32 %s174, %s175
      %s177 = smul.addr %s176, 4
      %s178 = scalar_lea.vmem %s3, %s177
      %p179 = scmp.lt.s32.totalorder %s18, 1
      %s180 = scalar_select %p179, %s18, 1
      %s181 = smul.addr %s180, 18
      %s182 = smul.addr %s181, 4
      %s183 = scalar_lea.vmem %s0, %s182
      %s184 = smul.u32 8, %s19
      %p185 = scmp.lt.s32.totalorder %s18, 1
      %s186 = scalar_select %p185, %s18, 1
      %p187 = scmp.lt.s32.totalorder %s184, 7
      %s188 = scalar_select %p187, %s184, 7
      %s189 = smul.addr %s186, 8
      %s190 = sadd.s32 %s188, %s189
      %s191 = smul.addr %s190, 4
      %s192 = scalar_lea.vmem %s3, %s191
      %s193 = smul.u32 8, %s19
      %s195 = smul.u32 %s19, 8
      %s196 = smul.u32 %s195, 2
      %s197 = smul.addr %s196, 4
      %s198 = scalar_lea.vmem %s183, %s197
      %v199 = vld [vmem:[%s198] sm:$0xf]
      %v200 = vld [vmem:[%s198 + $0x8] sm:$0xf]
      %v201 = vld [vmem:[%s198 + $0x10] sm:$0xf]
      %v202 = vld [vmem:[%s198 + $0x18] sm:$0xf]
      %v203 = vld [vmem:[%s198 + $0x20] sm:$0xf]
      %v204 = vld [vmem:[%s198 + $0x28] sm:$0xf]
      %v205 = vld [vmem:[%s198 + $0x30] sm:$0xf]
      %v206 = vld [vmem:[%s198 + $0x38] sm:$0xf]
      %v207 = vld [vmem:[%s198 + $0x4] sm:$0x1]
      %v208 = vld [vmem:[%s198 + $0xc] sm:$0x1]
      %v209 = vld [vmem:[%s198 + $0x14] sm:$0x1]
      %v210 = vld [vmem:[%s198 + $0x1c] sm:$0x1]
      %v211 = vld [vmem:[%s198 + $0x24] sm:$0x1]
      %v212 = vld [vmem:[%s198 + $0x2c] sm:$0x1]
      %v213 = vld [vmem:[%s198 + $0x34] sm:$0x1]
      %v214 = vld [vmem:[%s198 + $0x3c] sm:$0x1]
      %v215 = vld [vmem:[%s1] sm:$0xf]
      %v216 = vld [vmem:[%s1 + $0x4] sm:$0x3]
      %s217 = scalar_lea.vmem %s1, 8
      %v218 = vld [vmem:[%s217] sm:$0xf]
      %v219 = vld [vmem:[%s217 + $0x4] sm:$0x3]
      %v228 = vunpack.c.l.b16 %v199
      %v229 = vunpack.c.l.b16 %v200
      %v230 = vunpack.c.l.b16 %v201
      %v231 = vunpack.c.l.b16 %v202
      %v232 = vunpack.c.l.b16 %v203
      %v233 = vunpack.c.l.b16 %v204
      %v234 = vunpack.c.l.b16 %v205
      %v235 = vunpack.c.l.b16 %v206
      %v236 = vpack.c.b16 %v229, %v228
      %v237 = vpack.c.b16 %v231, %v230
      %v238 = vpack.c.b16 %v233, %v232
      %v239 = vpack.c.b16 %v235, %v234
      %v242 = vunpack.c.l.b16 %v218
      %v243 = vunpack.c.l.b16 %v219
      %v244 = vpack.c.b16 %v243, %v242
      %vm245 = vcmask 97280
      %v247 = vsel %vm245, %v236, 0
      %v250 = vsel %vm245, %v237, 0
      %v253 = vsel %vm245, %v238, 0
      %v256 = vsel %vm245, %v239, 0
      %vm258 = vcmask 1045504
      %v260 = vsel %vm258, %v244, 0
      %262 = vmatpush.bf16.msra.mxu0 0
      %263 = vmatpush.bf16.msra.mxu0 0
      %264 = vmatpush.bf16.msra.mxu0 0
      %265 = vmatpush.bf16.msra.mxu0 0
      %266 = vmatpush.bf16.msra.mxu0 0
      %267 = vmatpush.bf16.msra.mxu0 0
      %268 = vmatpush.bf16.msra.mxu0 0
      %269 = vmatpush.bf16.msra.mxu0 %v260
      %270 = vmatmul.bf16.gmra.mxu0 %v247
      %v271 = vpop.f32.mrf.mxu0
      %v272 = vadd.f32 0.0, %v271
      %v273 = vpop.f32.mrf.mxu0
      %v274 = vadd.f32 0.0, %v273
      %275 = vmatmul.bf16.gmra.mxu0 %v250
      %v276 = vpop.f32.mrf.mxu0
      %v277 = vadd.f32 0.0, %v276
      %v278 = vpop.f32.mrf.mxu0
      %v279 = vadd.f32 0.0, %v278
      %280 = vmatmul.bf16.gmra.mxu0 %v253
      %v281 = vpop.f32.mrf.mxu0
      %v282 = vadd.f32 0.0, %v281
      %v283 = vpop.f32.mrf.mxu0
      %v284 = vadd.f32 0.0, %v283
      %285 = vmatmul.bf16.gmra.mxu0 %v256
      %v286 = vpop.f32.mrf.mxu0
      %v287 = vadd.f32 0.0, %v286
      %v288 = vpop.f32.mrf.mxu0
      %v289 = vadd.f32 0.0, %v288
      %290 = vdwg.mxu0
      %v293 = vunpack.c.l.b16 %v215
      %v294 = vunpack.c.l.b16 %v216
      %v295 = vpack.c.b16 %v294, %v293
      %v297 = vsel %vm258, %v295, 0
      %299 = vmatpush.bf16.msra.mxu0 0
      %300 = vmatpush.bf16.msra.mxu0 0
      %301 = vmatpush.bf16.msra.mxu0 0
      %302 = vmatpush.bf16.msra.mxu0 0
      %303 = vmatpush.bf16.msra.mxu0 0
      %304 = vmatpush.bf16.msra.mxu0 0
      %305 = vmatpush.bf16.msra.mxu0 0
      %306 = vmatpush.bf16.msra.mxu0 %v297
      %307 = vmatmul.bf16.gmra.mxu0 %v247
      %v308 = vpop.f32.mrf.mxu0
      %v309 = vadd.f32 %v272, %v308
      %v310 = vpop.f32.mrf.mxu0
      %v311 = vadd.f32 %v274, %v310
      %312 = vmatmul.bf16.gmra.mxu0 %v250
      %v313 = vpop.f32.mrf.mxu0
      %v314 = vadd.f32 %v277, %v313
      %v315 = vpop.f32.mrf.mxu0
      %v316 = vadd.f32 %v279, %v315
      %317 = vmatmul.bf16.gmra.mxu0 %v253
      %v318 = vpop.f32.mrf.mxu0
      %v319 = vadd.f32 %v282, %v318
      %v320 = vpop.f32.mrf.mxu0
      %v321 = vadd.f32 %v284, %v320
      %322 = vmatmul.bf16.gmra.mxu0 %v256
      %v323 = vpop.f32.mrf.mxu0
      %v324 = vadd.f32 %v287, %v323
      %v325 = vpop.f32.mrf.mxu0
      %v326 = vadd.f32 %v289, %v325
      %327 = vdwg.mxu0
      %vm328 = vsmask.f32 3328
      %vm329 = vsmask.f32 7440
      %vm330 = vmor %vm328, %vm329
      %v332 = vshrl.u32 %v199, 16
      %v334 = vrot.slane %v332, 4
      %v335 = vshll.u32 %v199, 16
      %v337 = vrot.slane %v335, 5
      %v338 = vor.u32 %v334, %v337
      %v339 = vrot.slane %v338, 4
      %v341 = vshll.u32 %v207, 16
      %v343 = vrot.slane %v341, 5
      %v344 = vsel %vm330, %v339, %v343
      %v346 = vshrl.u32 %v200, 16
      %v348 = vrot.slane %v346, 4
      %v349 = vshll.u32 %v200, 16
      %v351 = vrot.slane %v349, 5
      %v352 = vor.u32 %v348, %v351
      %v353 = vrot.slane %v352, 4
      %v355 = vshll.u32 %v208, 16
      %v357 = vrot.slane %v355, 5
      %v358 = vsel %vm330, %v353, %v357
      %v360 = vshrl.u32 %v201, 16
      %v362 = vrot.slane %v360, 4
      %v363 = vshll.u32 %v201, 16
      %v365 = vrot.slane %v363, 5
      %v366 = vor.u32 %v362, %v365
      %v367 = vrot.slane %v366, 4
      %v369 = vshll.u32 %v209, 16
      %v371 = vrot.slane %v369, 5
      %v372 = vsel %vm330, %v367, %v371
      %v374 = vshrl.u32 %v202, 16
      %v376 = vrot.slane %v374, 4
      %v377 = vshll.u32 %v202, 16
      %v379 = vrot.slane %v377, 5
      %v380 = vor.u32 %v376, %v379
      %v381 = vrot.slane %v380, 4
      %v383 = vshll.u32 %v210, 16
      %v385 = vrot.slane %v383, 5
      %v386 = vsel %vm330, %v381, %v385
      %v388 = vshrl.u32 %v203, 16
      %v390 = vrot.slane %v388, 4
      %v391 = vshll.u32 %v203, 16
      %v393 = vrot.slane %v391, 5
      %v394 = vor.u32 %v390, %v393
      %v395 = vrot.slane %v394, 4
      %v397 = vshll.u32 %v211, 16
      %v399 = vrot.slane %v397, 5
      %v400 = vsel %vm330, %v395, %v399
      %v402 = vshrl.u32 %v204, 16
      %v404 = vrot.slane %v402, 4
      %v405 = vshll.u32 %v204, 16
      %v407 = vrot.slane %v405, 5
      %v408 = vor.u32 %v404, %v407
      %v409 = vrot.slane %v408, 4
      %v411 = vshll.u32 %v212, 16
      %v413 = vrot.slane %v411, 5
      %v414 = vsel %vm330, %v409, %v413
      %v416 = vshrl.u32 %v205, 16
      %v418 = vrot.slane %v416, 4
      %v419 = vshll.u32 %v205, 16
      %v421 = vrot.slane %v419, 5
      %v422 = vor.u32 %v418, %v421
      %v423 = vrot.slane %v422, 4
      %v425 = vshll.u32 %v213, 16
      %v427 = vrot.slane %v425, 5
      %v428 = vsel %vm330, %v423, %v427
      %v430 = vshrl.u32 %v206, 16
      %v432 = vrot.slane %v430, 4
      %v433 = vshll.u32 %v206, 16
      %v435 = vrot.slane %v433, 5
      %v436 = vor.u32 %v432, %v435
      %v437 = vrot.slane %v436, 4
      %v439 = vshll.u32 %v214, 16
      %v441 = vrot.slane %v439, 5
      %v442 = vsel %vm330, %v437, %v441
      %s443 = scalar_lea.vmem %s1, 16
      %v444 = vld [vmem:[%s443] sm:$0xf]
      %v445 = vld [vmem:[%s443 + $0x4] sm:$0x3]
      %v446 = vunpack.c.l.b16 %v344
      %v447 = vunpack.c.l.b16 %v358
      %v448 = vunpack.c.l.b16 %v372
      %v449 = vunpack.c.l.b16 %v386
      %v450 = vunpack.c.l.b16 %v400
      %v451 = vunpack.c.l.b16 %v414
      %v452 = vunpack.c.l.b16 %v428
      %v453 = vunpack.c.l.b16 %v442
      %v454 = vpack.c.b16 %v447, %v446
      %v455 = vpack.c.b16 %v449, %v448
      %v456 = vpack.c.b16 %v451, %v450
      %v457 = vpack.c.b16 %v453, %v452
      %v460 = vunpack.c.l.b16 %v444
      %v461 = vunpack.c.l.b16 %v445
      %v462 = vpack.c.b16 %v461, %v460
      %v464 = vsel %vm245, %v454, 0
      %v467 = vsel %vm245, %v455, 0
      %v470 = vsel %vm245, %v456, 0
      %v473 = vsel %vm245, %v457, 0
      %v476 = vsel %vm258, %v462, 0
      %478 = vmatpush.bf16.msra.mxu0 0
      %479 = vmatpush.bf16.msra.mxu0 0
      %480 = vmatpush.bf16.msra.mxu0 0
      %481 = vmatpush.bf16.msra.mxu0 0
      %482 = vmatpush.bf16.msra.mxu0 0
      %483 = vmatpush.bf16.msra.mxu0 0
      %484 = vmatpush.bf16.msra.mxu0 0
      %485 = vmatpush.bf16.msra.mxu0 %v476
      %486 = vmatmul.bf16.gmra.mxu0 %v464
      %v487 = vpop.f32.mrf.mxu0
      %v488 = vadd.f32 0.0, %v487
      %v489 = vpop.f32.mrf.mxu0
      %v490 = vadd.f32 0.0, %v489
      %491 = vmatmul.bf16.gmra.mxu0 %v467
      %v492 = vpop.f32.mrf.mxu0
      %v493 = vadd.f32 0.0, %v492
      %v494 = vpop.f32.mrf.mxu0
      %v495 = vadd.f32 0.0, %v494
      %496 = vmatmul.bf16.gmra.mxu0 %v470
      %v497 = vpop.f32.mrf.mxu0
      %v498 = vadd.f32 0.0, %v497
      %v499 = vpop.f32.mrf.mxu0
      %v500 = vadd.f32 0.0, %v499
      %501 = vmatmul.bf16.gmra.mxu0 %v473
      %v502 = vpop.f32.mrf.mxu0
      %v503 = vadd.f32 0.0, %v502
      %v504 = vpop.f32.mrf.mxu0
      %v505 = vadd.f32 0.0, %v504
      %506 = vdwg.mxu0
      %v507 = vadd.f32 %v309, %v488
      %v508 = vadd.f32 %v311, %v490
      %v509 = vadd.f32 %v314, %v493
      %v510 = vadd.f32 %v316, %v495
      %v511 = vadd.f32 %v319, %v498
      %v512 = vadd.f32 %v321, %v500
      %v513 = vadd.f32 %v324, %v503
      %v514 = vadd.f32 %v326, %v505
      %s515 = scalar_lea.vmem %s1, 24
      %v516 = vld [vmem:[%s515] sm:$0xf]
      %v517 = vld [vmem:[%s515 + $0x4] sm:$0x3]
      %v520 = vunpack.c.l.b16 %v516
      %v521 = vunpack.c.l.b16 %v517
      %v522 = vpack.c.b16 %v521, %v520
      %v524 = vsel %vm258, %v522, 0
      %526 = vmatpush.bf16.msra.mxu0 0
      %527 = vmatpush.bf16.msra.mxu0 0
      %528 = vmatpush.bf16.msra.mxu0 0
      %529 = vmatpush.bf16.msra.mxu0 0
      %530 = vmatpush.bf16.msra.mxu0 0
      %531 = vmatpush.bf16.msra.mxu0 0
      %532 = vmatpush.bf16.msra.mxu0 0
      %533 = vmatpush.bf16.msra.mxu0 %v524
      %534 = vmatmul.bf16.gmra.mxu0 %v247
      %v535 = vpop.f32.mrf.mxu0
      %v536 = vadd.f32 0.0, %v535
      %v537 = vpop.f32.mrf.mxu0
      %v538 = vadd.f32 0.0, %v537
      %539 = vmatmul.bf16.gmra.mxu0 %v250
      %v540 = vpop.f32.mrf.mxu0
      %v541 = vadd.f32 0.0, %v540
      %v542 = vpop.f32.mrf.mxu0
      %v543 = vadd.f32 0.0, %v542
      %544 = vmatmul.bf16.gmra.mxu0 %v253
      %v545 = vpop.f32.mrf.mxu0
      %v546 = vadd.f32 0.0, %v545
      %v547 = vpop.f32.mrf.mxu0
      %v548 = vadd.f32 0.0, %v547
      %549 = vmatmul.bf16.gmra.mxu0 %v256
      %v550 = vpop.f32.mrf.mxu0
      %v551 = vadd.f32 0.0, %v550
      %v552 = vpop.f32.mrf.mxu0
      %v553 = vadd.f32 0.0, %v552
      %554 = vdwg.mxu0
      %v555 = vadd.f32 %v507, %v536
      %v556 = vadd.f32 %v508, %v538
      %v557 = vadd.f32 %v509, %v541
      %v558 = vadd.f32 %v510, %v543
      %v559 = vadd.f32 %v511, %v546
      %v560 = vadd.f32 %v512, %v548
      %v561 = vadd.f32 %v513, %v551
      %v562 = vadd.f32 %v514, %v553
      %s563 = scalar_lea.vmem %s1, 32
      %v564 = vld [vmem:[%s563] sm:$0xf]
      %v565 = vld [vmem:[%s563 + $0x4] sm:$0x3]
      %v568 = vunpack.c.l.b16 %v564
      %v569 = vunpack.c.l.b16 %v565
      %v570 = vpack.c.b16 %v569, %v568
      %v572 = vsel %vm258, %v570, 0
      %574 = vmatpush.bf16.msra.mxu0 0
      %575 = vmatpush.bf16.msra.mxu0 0
      %576 = vmatpush.bf16.msra.mxu0 0
      %577 = vmatpush.bf16.msra.mxu0 0
      %578 = vmatpush.bf16.msra.mxu0 0
      %579 = vmatpush.bf16.msra.mxu0 0
      %580 = vmatpush.bf16.msra.mxu0 0
      %581 = vmatpush.bf16.msra.mxu0 %v572
      %582 = vmatmul.bf16.gmra.mxu0 %v247
      %v583 = vpop.f32.mrf.mxu0
      %v584 = vadd.f32 0.0, %v583
      %v585 = vpop.f32.mrf.mxu0
      %v586 = vadd.f32 0.0, %v585
      %587 = vmatmul.bf16.gmra.mxu0 %v250
      %v588 = vpop.f32.mrf.mxu0
      %v589 = vadd.f32 0.0, %v588
      %v590 = vpop.f32.mrf.mxu0
      %v591 = vadd.f32 0.0, %v590
      %592 = vmatmul.bf16.gmra.mxu0 %v253
      %v593 = vpop.f32.mrf.mxu0
      %v594 = vadd.f32 0.0, %v593
      %v595 = vpop.f32.mrf.mxu0
      %v596 = vadd.f32 0.0, %v595
      %597 = vmatmul.bf16.gmra.mxu0 %v256
      %v598 = vpop.f32.mrf.mxu0
      %v599 = vadd.f32 0.0, %v598
      %v600 = vpop.f32.mrf.mxu0
      %v601 = vadd.f32 0.0, %v600
      %602 = vdwg.mxu0
      %v603 = vadd.f32 %v555, %v584
      %v604 = vadd.f32 %v556, %v586
      %v605 = vadd.f32 %v557, %v589
      %v606 = vadd.f32 %v558, %v591
      %v607 = vadd.f32 %v559, %v594
      %v608 = vadd.f32 %v560, %v596
      %v609 = vadd.f32 %v561, %v599
      %v610 = vadd.f32 %v562, %v601
      %s611 = scalar_lea.vmem %s1, 40
      %v612 = vld [vmem:[%s611] sm:$0xf]
      %v613 = vld [vmem:[%s611 + $0x4] sm:$0x3]
      %v616 = vunpack.c.l.b16 %v612
      %v617 = vunpack.c.l.b16 %v613
      %v618 = vpack.c.b16 %v617, %v616
      %v620 = vsel %vm258, %v618, 0
      %622 = vmatpush.bf16.msra.mxu0 0
      %623 = vmatpush.bf16.msra.mxu0 0
      %624 = vmatpush.bf16.msra.mxu0 0
      %625 = vmatpush.bf16.msra.mxu0 0
      %626 = vmatpush.bf16.msra.mxu0 0
      %627 = vmatpush.bf16.msra.mxu0 0
      %628 = vmatpush.bf16.msra.mxu0 0
      %629 = vmatpush.bf16.msra.mxu0 %v620
      %630 = vmatmul.bf16.gmra.mxu0 %v464
      %v631 = vpop.f32.mrf.mxu0
      %v632 = vadd.f32 0.0, %v631
      %v633 = vpop.f32.mrf.mxu0
      %v634 = vadd.f32 0.0, %v633
      %635 = vmatmul.bf16.gmra.mxu0 %v467
      %v636 = vpop.f32.mrf.mxu0
      %v637 = vadd.f32 0.0, %v636
      %v638 = vpop.f32.mrf.mxu0
      %v639 = vadd.f32 0.0, %v638
      %640 = vmatmul.bf16.gmra.mxu0 %v470
      %v641 = vpop.f32.mrf.mxu0
      %v642 = vadd.f32 0.0, %v641
      %v643 = vpop.f32.mrf.mxu0
      %v644 = vadd.f32 0.0, %v643
      %645 = vmatmul.bf16.gmra.mxu0 %v473
      %v646 = vpop.f32.mrf.mxu0
      %v647 = vadd.f32 0.0, %v646
      %v648 = vpop.f32.mrf.mxu0
      %v649 = vadd.f32 0.0, %v648
      %650 = vdwg.mxu0
      %v651 = vadd.f32 %v603, %v632
      %v652 = vadd.f32 %v604, %v634
      %v653 = vadd.f32 %v605, %v637
      %v654 = vadd.f32 %v606, %v639
      %v655 = vadd.f32 %v607, %v642
      %v656 = vadd.f32 %v608, %v644
      %v657 = vadd.f32 %v609, %v647
      %v658 = vadd.f32 %v610, %v649
      %s659 = sadd.s32 %s195, 1
      %s660 = smul.u32 %s659, 2
      %s661 = smul.addr %s660, 4
      %s662 = scalar_lea.vmem %s183, %s661
      %v663 = vld [vmem:[%s662] sm:$0xf]
      %v664 = vld [vmem:[%s662 + $0x8] sm:$0xf]
      %v665 = vld [vmem:[%s662 + $0x10] sm:$0xf]
      %v666 = vld [vmem:[%s662 + $0x18] sm:$0xf]
      %v667 = vld [vmem:[%s662 + $0x20] sm:$0xf]
      %v668 = vld [vmem:[%s662 + $0x28] sm:$0xf]
      %v669 = vld [vmem:[%s662 + $0x30] sm:$0xf]
      %v670 = vld [vmem:[%s662 + $0x38] sm:$0xf]
      %v671 = vld [vmem:[%s662 + $0x4] sm:$0x1]
      %v672 = vld [vmem:[%s662 + $0xc] sm:$0x1]
      %v673 = vld [vmem:[%s662 + $0x14] sm:$0x1]
      %v674 = vld [vmem:[%s662 + $0x1c] sm:$0x1]
      %v675 = vld [vmem:[%s662 + $0x24] sm:$0x1]
      %v676 = vld [vmem:[%s662 + $0x2c] sm:$0x1]
      %v677 = vld [vmem:[%s662 + $0x34] sm:$0x1]
      %v678 = vld [vmem:[%s662 + $0x3c] sm:$0x1]
      %s679 = scalar_lea.vmem %s1, 48
      %v680 = vld [vmem:[%s679] sm:$0xf]
      %v681 = vld [vmem:[%s679 + $0x4] sm:$0x3]
      %v690 = vunpack.c.l.b16 %v663
      %v691 = vunpack.c.l.b16 %v664
      %v692 = vunpack.c.l.b16 %v665
      %v693 = vunpack.c.l.b16 %v666
      %v694 = vunpack.c.l.b16 %v667
      %v695 = vunpack.c.l.b16 %v668
      %v696 = vunpack.c.l.b16 %v669
      %v697 = vunpack.c.l.b16 %v670
      %v698 = vpack.c.b16 %v691, %v690
      %v699 = vpack.c.b16 %v693, %v692
      %v700 = vpack.c.b16 %v695, %v694
      %v701 = vpack.c.b16 %v697, %v696
      %v704 = vunpack.c.l.b16 %v680
      %v705 = vunpack.c.l.b16 %v681
      %v706 = vpack.c.b16 %v705, %v704
      %v708 = vsel %vm245, %v698, 0
      %v711 = vsel %vm245, %v699, 0
      %v714 = vsel %vm245, %v700, 0
      %v717 = vsel %vm245, %v701, 0
      %v720 = vsel %vm258, %v706, 0
      %722 = vmatpush.bf16.msra.mxu0 0
      %723 = vmatpush.bf16.msra.mxu0 0
      %724 = vmatpush.bf16.msra.mxu0 0
      %725 = vmatpush.bf16.msra.mxu0 0
      %726 = vmatpush.bf16.msra.mxu0 0
      %727 = vmatpush.bf16.msra.mxu0 0
      %728 = vmatpush.bf16.msra.mxu0 0
      %729 = vmatpush.bf16.msra.mxu0 %v720
      %730 = vmatmul.bf16.gmra.mxu0 %v708
      %v731 = vpop.f32.mrf.mxu0
      %v732 = vadd.f32 0.0, %v731
      %v733 = vpop.f32.mrf.mxu0
      %v734 = vadd.f32 0.0, %v733
      %735 = vmatmul.bf16.gmra.mxu0 %v711
      %v736 = vpop.f32.mrf.mxu0
      %v737 = vadd.f32 0.0, %v736
      %v738 = vpop.f32.mrf.mxu0
      %v739 = vadd.f32 0.0, %v738
      %740 = vmatmul.bf16.gmra.mxu0 %v714
      %v741 = vpop.f32.mrf.mxu0
      %v742 = vadd.f32 0.0, %v741
      %v743 = vpop.f32.mrf.mxu0
      %v744 = vadd.f32 0.0, %v743
      %745 = vmatmul.bf16.gmra.mxu0 %v717
      %v746 = vpop.f32.mrf.mxu0
      %v747 = vadd.f32 0.0, %v746
      %v748 = vpop.f32.mrf.mxu0
      %v749 = vadd.f32 0.0, %v748
      %750 = vdwg.mxu0
      %v751 = vadd.f32 %v651, %v732
      %v752 = vadd.f32 %v652, %v734
      %v753 = vadd.f32 %v653, %v737
      %v754 = vadd.f32 %v654, %v739
      %v755 = vadd.f32 %v655, %v742
      %v756 = vadd.f32 %v656, %v744
      %v757 = vadd.f32 %v657, %v747
      %v758 = vadd.f32 %v658, %v749
      %s759 = scalar_lea.vmem %s1, 56
      %v760 = vld [vmem:[%s759] sm:$0xf]
      %v761 = vld [vmem:[%s759 + $0x4] sm:$0x3]
      %v764 = vunpack.c.l.b16 %v760
      %v765 = vunpack.c.l.b16 %v761
      %v766 = vpack.c.b16 %v765, %v764
      %v768 = vsel %vm258, %v766, 0
      %770 = vmatpush.bf16.msra.mxu0 0
      %771 = vmatpush.bf16.msra.mxu0 0
      %772 = vmatpush.bf16.msra.mxu0 0
      %773 = vmatpush.bf16.msra.mxu0 0
      %774 = vmatpush.bf16.msra.mxu0 0
      %775 = vmatpush.bf16.msra.mxu0 0
      %776 = vmatpush.bf16.msra.mxu0 0
      %777 = vmatpush.bf16.msra.mxu0 %v768
      %778 = vmatmul.bf16.gmra.mxu0 %v708
      %v779 = vpop.f32.mrf.mxu0
      %v780 = vadd.f32 0.0, %v779
      %v781 = vpop.f32.mrf.mxu0
      %v782 = vadd.f32 0.0, %v781
      %783 = vmatmul.bf16.gmra.mxu0 %v711
      %v784 = vpop.f32.mrf.mxu0
      %v785 = vadd.f32 0.0, %v784
      %v786 = vpop.f32.mrf.mxu0
      %v787 = vadd.f32 0.0, %v786
      %788 = vmatmul.bf16.gmra.mxu0 %v714
      %v789 = vpop.f32.mrf.mxu0
      %v790 = vadd.f32 0.0, %v789
      %v791 = vpop.f32.mrf.mxu0
      %v792 = vadd.f32 0.0, %v791
      %793 = vmatmul.bf16.gmra.mxu0 %v717
      %v794 = vpop.f32.mrf.mxu0
      %v795 = vadd.f32 0.0, %v794
      %v796 = vpop.f32.mrf.mxu0
      %v797 = vadd.f32 0.0, %v796
      %798 = vdwg.mxu0
      %v799 = vadd.f32 %v751, %v780
      %v800 = vadd.f32 %v752, %v782
      %v801 = vadd.f32 %v753, %v785
      %v802 = vadd.f32 %v754, %v787
      %v803 = vadd.f32 %v755, %v790
      %v804 = vadd.f32 %v756, %v792
      %v805 = vadd.f32 %v757, %v795
      %v806 = vadd.f32 %v758, %v797
      %v808 = vshrl.u32 %v663, 16
      %v810 = vrot.slane %v808, 4
      %v811 = vshll.u32 %v663, 16
      %v813 = vrot.slane %v811, 5
      %v814 = vor.u32 %v810, %v813
      %v815 = vrot.slane %v814, 4
      %v817 = vshll.u32 %v671, 16
      %v819 = vrot.slane %v817, 5
      %v820 = vsel %vm330, %v815, %v819
      %v822 = vshrl.u32 %v664, 16
      %v824 = vrot.slane %v822, 4
      %v825 = vshll.u32 %v664, 16
      %v827 = vrot.slane %v825, 5
      %v828 = vor.u32 %v824, %v827
      %v829 = vrot.slane %v828, 4
      %v831 = vshll.u32 %v672, 16
      %v833 = vrot.slane %v831, 5
      %v834 = vsel %vm330, %v829, %v833
      %v836 = vshrl.u32 %v665, 16
      %v838 = vrot.slane %v836, 4
      %v839 = vshll.u32 %v665, 16
      %v841 = vrot.slane %v839, 5
      %v842 = vor.u32 %v838, %v841
      %v843 = vrot.slane %v842, 4
      %v845 = vshll.u32 %v673, 16
      %v847 = vrot.slane %v845, 5
      %v848 = vsel %vm330, %v843, %v847
      %v850 = vshrl.u32 %v666, 16
      %v852 = vrot.slane %v850, 4
      %v853 = vshll.u32 %v666, 16
      %v855 = vrot.slane %v853, 5
      %v856 = vor.u32 %v852, %v855
      %v857 = vrot.slane %v856, 4
      %v859 = vshll.u32 %v674, 16
      %v861 = vrot.slane %v859, 5
      %v862 = vsel %vm330, %v857, %v861
      %v864 = vshrl.u32 %v667, 16
      %v866 = vrot.slane %v864, 4
      %v867 = vshll.u32 %v667, 16
      %v869 = vrot.slane %v867, 5
      %v870 = vor.u32 %v866, %v869
      %v871 = vrot.slane %v870, 4
      %v873 = vshll.u32 %v675, 16
      %v875 = vrot.slane %v873, 5
      %v876 = vsel %vm330, %v871, %v875
      %v878 = vshrl.u32 %v668, 16
      %v880 = vrot.slane %v878, 4
      %v881 = vshll.u32 %v668, 16
      %v883 = vrot.slane %v881, 5
      %v884 = vor.u32 %v880, %v883
      %v885 = vrot.slane %v884, 4
      %v887 = vshll.u32 %v676, 16
      %v889 = vrot.slane %v887, 5
      %v890 = vsel %vm330, %v885, %v889
      %v892 = vshrl.u32 %v669, 16
      %v894 = vrot.slane %v892, 4
      %v895 = vshll.u32 %v669, 16
      %v897 = vrot.slane %v895, 5
      %v898 = vor.u32 %v894, %v897
      %v899 = vrot.slane %v898, 4
      %v901 = vshll.u32 %v677, 16
      %v903 = vrot.slane %v901, 5
      %v904 = vsel %vm330, %v899, %v903
      %v906 = vshrl.u32 %v670, 16
      %v908 = vrot.slane %v906, 4
      %v909 = vshll.u32 %v670, 16
      %v911 = vrot.slane %v909, 5
      %v912 = vor.u32 %v908, %v911
      %v913 = vrot.slane %v912, 4
      %v915 = vshll.u32 %v678, 16
      %v917 = vrot.slane %v915, 5
      %v918 = vsel %vm330, %v913, %v917
      %s919 = scalar_lea.vmem %s1, 64
      %v920 = vld [vmem:[%s919] sm:$0xf]
      %v921 = vld [vmem:[%s919 + $0x4] sm:$0x3]
      %v922 = vunpack.c.l.b16 %v820
      %v923 = vunpack.c.l.b16 %v834
      %v924 = vunpack.c.l.b16 %v848
      %v925 = vunpack.c.l.b16 %v862
      %v926 = vunpack.c.l.b16 %v876
      %v927 = vunpack.c.l.b16 %v890
      %v928 = vunpack.c.l.b16 %v904
      %v929 = vunpack.c.l.b16 %v918
      %v930 = vpack.c.b16 %v923, %v922
      %v931 = vpack.c.b16 %v925, %v924
      %v932 = vpack.c.b16 %v927, %v926
      %v933 = vpack.c.b16 %v929, %v928
      %v936 = vunpack.c.l.b16 %v920
      %v937 = vunpack.c.l.b16 %v921
      %v938 = vpack.c.b16 %v937, %v936
      %v940 = vsel %vm245, %v930, 0
      %v943 = vsel %vm245, %v931, 0
      %v946 = vsel %vm245, %v932, 0
      %v949 = vsel %vm245, %v933, 0
      %v952 = vsel %vm258, %v938, 0
      %954 = vmatpush.bf16.msra.mxu0 0
      %955 = vmatpush.bf16.msra.mxu0 0
      %956 = vmatpush.bf16.msra.mxu0 0
      %957 = vmatpush.bf16.msra.mxu0 0
      %958 = vmatpush.bf16.msra.mxu0 0
      %959 = vmatpush.bf16.msra.mxu0 0
      %960 = vmatpush.bf16.msra.mxu0 0
      %961 = vmatpush.bf16.msra.mxu0 %v952
      %962 = vmatmul.bf16.gmra.mxu0 %v940
      %v963 = vpop.f32.mrf.mxu0
      %v964 = vadd.f32 0.0, %v963
      %v965 = vpop.f32.mrf.mxu0
      %v966 = vadd.f32 0.0, %v965
      %967 = vmatmul.bf16.gmra.mxu0 %v943
      %v968 = vpop.f32.mrf.mxu0
      %v969 = vadd.f32 0.0, %v968
      %v970 = vpop.f32.mrf.mxu0
      %v971 = vadd.f32 0.0, %v970
      %972 = vmatmul.bf16.gmra.mxu0 %v946
      %v973 = vpop.f32.mrf.mxu0
      %v974 = vadd.f32 0.0, %v973
      %v975 = vpop.f32.mrf.mxu0
      %v976 = vadd.f32 0.0, %v975
      %977 = vmatmul.bf16.gmra.mxu0 %v949
      %v978 = vpop.f32.mrf.mxu0
      %v979 = vadd.f32 0.0, %v978
      %v980 = vpop.f32.mrf.mxu0
      %v981 = vadd.f32 0.0, %v980
      %982 = vdwg.mxu0
      %v983 = vadd.f32 %v799, %v964
      %v984 = vadd.f32 %v800, %v966
      %v985 = vadd.f32 %v801, %v969
      %v986 = vadd.f32 %v802, %v971
      %v987 = vadd.f32 %v803, %v974
      %v988 = vadd.f32 %v804, %v976
      %v989 = vadd.f32 %v805, %v979
      %v990 = vadd.f32 %v806, %v981
      %v991 = vld [vmem:[%s2] sm:$0x1]
      %v993 = vperm.slane %v991, 0
      %v995 = vadd.f32 %v983, %v993
      %v996 = vadd.f32 %v984, %v993
      %v997 = vadd.f32 %v985, %v993
      %v998 = vadd.f32 %v986, %v993
      %v999 = vadd.f32 %v987, %v993
      %v1000 = vadd.f32 %v988, %v993
      %v1001 = vadd.f32 %v989, %v993
      %v1002 = vadd.f32 %v990, %v993
      %vm1003 = vcmp.ge.f32.partialorder %v995, 0.0
      %vm1004 = vcmp.ge.f32.partialorder %v996, 0.0
      %vm1005 = vcmp.ge.f32.partialorder %v997, 0.0
      %vm1006 = vcmp.ge.f32.partialorder %v998, 0.0
      %vm1007 = vcmp.ge.f32.partialorder %v999, 0.0
      %vm1008 = vcmp.ge.f32.partialorder %v1000, 0.0
      %vm1009 = vcmp.ge.f32.partialorder %v1001, 0.0
      %vm1010 = vcmp.ge.f32.partialorder %v1002, 0.0
      %v1011 = vmul.f32 %v995, 0.01
      %v1012 = vmul.f32 %v996, 0.01
      %v1013 = vmul.f32 %v997, 0.01
      %v1014 = vmul.f32 %v998, 0.01
      %v1015 = vmul.f32 %v999, 0.01
      %v1016 = vmul.f32 %v1000, 0.01
      %v1017 = vmul.f32 %v1001, 0.01
      %v1018 = vmul.f32 %v1002, 0.01
      %v1019 = vsel %vm1003, %v995, %v1011
      %v1020 = vsel %vm1004, %v996, %v1012
      %v1021 = vsel %vm1005, %v997, %v1013
      %v1022 = vsel %vm1006, %v998, %v1014
      %v1023 = vsel %vm1007, %v999, %v1015
      %v1024 = vsel %vm1008, %v1000, %v1016
      %v1025 = vsel %vm1009, %v1001, %v1017
      %v1026 = vsel %vm1010, %v1002, %v1018
      %v1027 = vpack.c.bf16 %v1019, %v1019
      %v1028 = vpack.c.bf16 %v1020, %v1020
      %v1029 = vpack.c.bf16 %v1021, %v1021
      %v1030 = vpack.c.bf16 %v1022, %v1022
      %v1031 = vpack.c.bf16 %v1023, %v1023
      %v1032 = vpack.c.bf16 %v1024, %v1024
      %v1033 = vpack.c.bf16 %v1025, %v1025
      %v1034 = vpack.c.bf16 %v1026, %v1026
      %1035 = vst [vmem:[%s192] sm:$0xf] %v1027
      %1036 = vst [vmem:[%s192 + $0x4] sm:$0xf] %v1028
      %1037 = vst [vmem:[%s192 + $0x8] sm:$0xf] %v1029
      %1038 = vst [vmem:[%s192 + $0xc] sm:$0xf] %v1030
      %1039 = vst [vmem:[%s192 + $0x10] sm:$0xf] %v1031
      %1040 = vst [vmem:[%s192 + $0x14] sm:$0xf] %v1032
      %1041 = vst [vmem:[%s192 + $0x18] sm:$0xf] %v1033
      %1042 = vst [vmem:[%s192 + $0x1c] sm:$0xf] %v1034
      %s1043 = smul.u32 8, %s19
      %p1044 = scmp.lt.s32.totalorder %s18, 1
      %s1045 = scalar_select %p1044, %s18, 1
      %p1046 = scmp.lt.s32.totalorder %s1043, 7
      %s1047 = scalar_select %p1046, %s1043, 7
      %s1048 = smul.addr %s1045, 8
      %s1049 = sadd.s32 %s1047, %s1048
      %s1050 = smul.addr %s1049, 4
      %s1051 = scalar_lea.vmem %s3, %s1050
      // Predicated region
      $region33: #{_lambda_.7} parent=31 // pred_check
        %p1052 = pneg %p114
      $region34: #{_lambda_.7} parent=31 // pred_check_branch
        %1054 = sbr.rel (%p1052) target = $region36
      $region35: #{_lambda_.7} parent=31 // pred_region
        %s1055 = smul.u32 8, %s19
      $region36: #{_lambda_.7} parent=31 // pred_fallthru
        _
    $region32: #{_lambda_.7} parent=5 // pred_fallthru
      _
    %p1056 = scmp.le.s32.totalorder 2, %s9
    // Predicated region
    $region37: #{_lambda_.7} parent=5 // pred_check
      %p1057 = pneg %p1056
    $region38: #{_lambda_.7} parent=5 // pred_check_branch
      %1059 = sbr.rel (%p1057) target = $region40
    $region39: #{_lambda_.7} parent=5 // pred_region
      %s1060 = ssub.s32 %s9, 2
      // Predicated region
      $region41: #{_lambda_.7} parent=39 // pred_check
        %p1061 = pneg %p120
      $region42: #{_lambda_.7} parent=39 // pred_check_branch
        %1063 = sbr.rel (%p1061) target = $region44
      $region43: #{_lambda_.7} parent=39 // pred_region
        %s1064 = smul.u32 8, %s21
        %p1065 = scmp.lt.s32.totalorder %s20, 1
        %s1066 = scalar_select %p1065, %s20, 1
        %p1067 = scmp.lt.s32.totalorder %s1064, 7
        %s1068 = scalar_select %p1067, %s1064, 7
        %s1069 = smul.addr %s1066, 8
        %s1070 = sadd.s32 %s1068, %s1069
        %s1071 = smul.addr %s1070, 4
        %s1072 = scalar_lea.vmem %s3, %s1071
      $region44: #{_lambda_.7} parent=39 // pred_fallthru
        _
    $region40: #{_lambda_.7} parent=5 // pred_fallthru
      _
  $region6: #{_lambda_.7} parent=0 // loop_footer
    %s13 = sadd.s32 1, %s9
  $region7: #{_lambda_.7} parent=0 // loop_footer_branch
    %8 = sbr.rel target = $region3
  $region8: #{_lambda_.7} parent=0 // loop_exit
    _

// kernel: _lambda_.8
$region0: #{_lambda_.8}
  #allocation0 [shape = 'u32[]', space=smem, size = 0x4, offset = 0x4, fixed_abs, tag = 'smem constant byte address 0x4 - core index']
  #allocation1 [shape = 'u32[72,128]{1,0:T(1,128)}', space=vmem, size = 0x9000, scoped, tag = 'internal scratch']
  %s0 = inlined_call_operand.vmem [shape: bf16[2,5,5,512], index: 0, kind: input, shape index: {}]
  %s1 = inlined_call_operand.vmem [shape: bf16[3,384,128], index: 1, kind: input, shape index: {}]
  %s2 = inlined_call_operand.vmem [shape: f32[1,128], index: 2, kind: input, shape index: {}]
  %s3 = inlined_call_operand.vmem [shape: bf16[2,4,4,128], index: 3, kind: output, shape index: {}]
  %s4 = sld [smem:[#allocation0]]
  $region45: #{_lambda_.8} parent=0
    _
  %s6 = ssub.s32 1, %s4
  %s7 = scalar_select 0, %s6, %s4
  loop: start=0, step=1, limit=4
  $region2: #{_lambda_.8} parent=0 // loop_pre_header
    _
  $region3: #{_lambda_.8} parent=0 // loop_header
    %s9 = sphi 0, %s13
    %p10 = scmp.ge.s32.totalorder %s9, 4
    %s16 = sphi 0, %s28
    %s17 = sphi 0, %s24
    %s18 = sphi 0, %s16
    %s19 = sphi 0, %s17
    %s20 = sphi 0, %s18
    %s21 = sphi 0, %s19
    %s31 = sphi 0, %s33
    %s34 = sphi 0, %s31
    %s35 = sphi 0, %s34
    %s51 = sphi 0, %s35
    %s55 = sphi 0, %s55
    %s57 = sphi 0, %s55
    %s58 = sphi 0, %s57
    %s72 = sphi 0, %s58
    %s76 = sphi 0, %s76
    %s78 = sphi 0, %s76
    %s79 = sphi 0, %s78
    %s93 = sphi 0, %s79
    %s101 = sphi 0, %s103
    %s104 = sphi 0, %s101
    %s105 = sphi 0, %s104
    %s121 = sphi 0, %s105
  $region4: #{_lambda_.8} parent=0 // loop_header_branch
    %12 = sbr.rel (%p10) target = $region8
  $region5: #{_lambda_.8} parent=0 // loop_body
    %s14 = ssub.s32 %s9, 1
    %s15 = ssub.s32 %s9, 2
    %s22 = sadd.s32 1, %s17
    %p23 = scmp.ge.s32.totalorder %s22, 1
    %s24 = scalar_select %p23, 0, %s22
    %s25 = sadd.s32 1, %s16
    %s26 = scalar_select %p23, %s25, %s16
    %p27 = scmp.ge.s32.totalorder %s26, 2
    %s28 = scalar_select %p27, 0, %s26
    %s29 = ssub.s32 %s16, %s28
    %p30 = scmp.eq.s32.totalorder %s29, 0
    %s32 = sadd.s32 %s31, 1
    %s33 = scalar_select %p30, %s31, %s32
    %p36 = pneg %p30
    %p37 = scmp.eq.s32.totalorder %s9, 1
    %p38 = por %p36, %p37
    %p39 = scmp.ne.s32.totalorder %s31, %s34
    %p40 = scmp.eq.s32.totalorder %s9, 0
    %p41 = por %p39, %p40
    %p42 = scmp.ne.s32.totalorder %s31, %s34
    %p43 = scmp.eq.s32.totalorder %s14, 1
    %p44 = por %p42, %p43
    %p45 = scmp.ne.s32.totalorder %s34, %s35
    %p46 = scmp.eq.s32.totalorder %s14, 0
    %p47 = por %p45, %p46
    %p48 = scmp.ne.s32.totalorder %s34, %s35
    %p49 = scmp.eq.s32.totalorder %s15, 1
    %p50 = por %p48, %p49
    %p52 = scmp.ne.s32.totalorder %s35, %s51
    %p53 = scmp.eq.s32.totalorder %s15, 0
    %p54 = por %p52, %p53
    %s56 = sadd.s32 %s55, 1
    %p59 = scmp.eq.s32.totalorder %s9, 1
    %p60 = scmp.ne.s32.totalorder %s55, %s57
    %p61 = scmp.eq.s32.totalorder %s9, 0
    %p62 = por %p60, %p61
    %p63 = scmp.ne.s32.totalorder %s55, %s57
    %p64 = scmp.eq.s32.totalorder %s14, 1
    %p65 = por %p63, %p64
    %p66 = scmp.ne.s32.totalorder %s57, %s58
    %p67 = scmp.eq.s32.totalorder %s14, 0
    %p68 = por %p66, %p67
    %p69 = scmp.ne.s32.totalorder %s57, %s58
    %p70 = scmp.eq.s32.totalorder %s15, 1
    %p71 = por %p69, %p70
    %p73 = scmp.ne.s32.totalorder %s58, %s72
    %p74 = scmp.eq.s32.totalorder %s15, 0
    %p75 = por %p73, %p74
    %s77 = sadd.s32 %s76, 1
    %p80 = scmp.eq.s32.totalorder %s9, 1
    %p81 = scmp.ne.s32.totalorder %s76, %s78
    %p82 = scmp.eq.s32.totalorder %s9, 0
    %p83 = por %p81, %p82
    %p84 = scmp.ne.s32.totalorder %s76, %s78
    %p85 = scmp.eq.s32.totalorder %s14, 1
    %p86 = por %p84, %p85
    %p87 = scmp.ne.s32.totalorder %s78, %s79
    %p88 = scmp.eq.s32.totalorder %s14, 0
    %p89 = por %p87, %p88
    %p90 = scmp.ne.s32.totalorder %s78, %s79
    %p91 = scmp.eq.s32.totalorder %s15, 1
    %p92 = por %p90, %p91
    %p94 = scmp.ne.s32.totalorder %s79, %s93
    %p95 = scmp.eq.s32.totalorder %s15, 0
    %p96 = por %p94, %p95
    %s97 = ssub.s32 %s16, %s28
    %s98 = ssub.s32 %s17, %s24
    %s99 = sor.u32 %s97, %s98
    %p100 = scmp.eq.s32.totalorder %s99, 0
    %s102 = sadd.s32 %s101, 1
    %s103 = scalar_select %p100, %s101, %s102
    %p106 = pneg %p100
    %p107 = scmp.eq.s32.totalorder %s9, 1
    %p108 = por %p106, %p107
    %p109 = scmp.ne.s32.totalorder %s101, %s104
    %p110 = scmp.eq.s32.totalorder %s9, 0
    %p111 = por %p109, %p110
    %p112 = scmp.ne.s32.totalorder %s101, %s104
    %p113 = scmp.eq.s32.totalorder %s14, 1
    %p114 = por %p112, %p113
    %p115 = scmp.ne.s32.totalorder %s104, %s105
    %p116 = scmp.eq.s32.totalorder %s14, 0
    %p117 = por %p115, %p116
    %p118 = scmp.ne.s32.totalorder %s104, %s105
    %p119 = scmp.eq.s32.totalorder %s15, 1
    %p120 = por %p118, %p119
    %p122 = scmp.ne.s32.totalorder %s105, %s121
    %p123 = scmp.eq.s32.totalorder %s15, 0
    %p124 = por %p122, %p123
    %p125 = scmp.le.s32.totalorder 1, %s9
    %p126 = scmp.lt.s32.totalorder %s9, 3
    %p127 = pnand %p125, %p126
    %p128 = pneg %p127
    // Predicated region
    $region9: #{_lambda_.8} parent=5 // pred_check
      _
    $region10: #{_lambda_.8} parent=5 // pred_check_branch
      %130 = sbr.rel (%p127) target = $region12
    $region11: #{_lambda_.8} parent=5 // pred_region
      %s131 = ssub.s32 %s9, 1
      // Predicated region
      $region13: #{_lambda_.8} parent=11 // pred_check
        %p132 = pneg %p68
      $region14: #{_lambda_.8} parent=11 // pred_check_branch
        %134 = sbr.rel (%p132) target = $region16
      $region15: #{_lambda_.8} parent=11 // pred_region
        _
      $region16: #{_lambda_.8} parent=11 // pred_fallthru
        _
      // Predicated region
      $region17: #{_lambda_.8} parent=11 // pred_check
        %p135 = pneg %p89
      $region18: #{_lambda_.8} parent=11 // pred_check_branch
        %137 = sbr.rel (%p135) target = $region20
      $region19: #{_lambda_.8} parent=11 // pred_region
        _
      $region20: #{_lambda_.8} parent=11 // pred_fallthru
        _
    $region12: #{_lambda_.8} parent=5 // pred_fallthru
      _
    %p138 = scmp.lt.s32.totalorder %s9, 2
    // Predicated region
    $region21: #{_lambda_.8} parent=5 // pred_check
      %p139 = pneg %p138
    $region22: #{_lambda_.8} parent=5 // pred_check_branch
      %141 = sbr.rel (%p139) target = $region24
    $region23: #{_lambda_.8} parent=5 // pred_region
      // Predicated region
      $region25: #{_lambda_.8} parent=23 // pred_check
        %p142 = pneg %p41
      $region26: #{_lambda_.8} parent=23 // pred_check_branch
        %144 = sbr.rel (%p142) target = $region28
      $region27: #{_lambda_.8} parent=23 // pred_region
        %p145 = scmp.lt.s32.totalorder %s16, 1
        %s146 = scalar_select %p145, %s16, 1
        %s147 = smul.addr %s146, 20
        %s148 = smul.addr %s147, 4
        %s149 = scalar_lea.vmem %s0, %s148
      $region28: #{_lambda_.8} parent=23 // pred_fallthru
        _
    $region24: #{_lambda_.8} parent=5 // pred_fallthru
      _
    %p150 = scmp.le.s32.totalorder 1, %s9
    %p151 = scmp.lt.s32.totalorder %s9, 3
    %p152 = pnand %p150, %p151
    %p153 = pneg %p152
    // Predicated region
    $region29: #{_lambda_.8} parent=5 // pred_check
      _
    $region30: #{_lambda_.8} parent=5 // pred_check_branch
      %155 = sbr.rel (%p152) target = $region32
    $region31: #{_lambda_.8} parent=5 // pred_region
      %s156 = ssub.s32 %s9, 1
      %p157 = scmp.lt.s32.totalorder %s18, 1
      %s158 = scalar_select %p157, %s18, 1
      %s159 = smul.addr %s158, 20
      %s160 = smul.addr %s159, 4
      %s161 = scalar_lea.vmem %s0, %s160
      %p162 = pneg %p47
      %p163 = pneg %p44
      %p164 = pneg %p68
      %p165 = pneg %p65
      %p166 = pneg %p89
      %p167 = pneg %p86
      %p168 = pneg %p117
      %p169 = pneg %p114
      %s170 = smul.u32 4, %s19
      %p171 = scmp.lt.s32.totalorder %s18, 1
      %s172 = scalar_select %p171, %s18, 1
      %p173 = scmp.lt.s32.totalorder %s170, 3
      %s174 = scalar_select %p173, %s170, 3
      %s175 = smul.addr %s172, 4
      %s176 = sadd.s32 %s174, %s175
      %s177 = smul.addr %s176, 2
      %s178 = scalar_lea.vmem %s3, %s177
      %p179 = scmp.lt.s32.totalorder %s18, 1
      %s180 = scalar_select %p179, %s18, 1
      %s181 = smul.addr %s180, 20
      %s182 = smul.addr %s181, 4
      %s183 = scalar_lea.vmem %s0, %s182
      %s184 = smul.u32 4, %s19
      %p185 = scmp.lt.s32.totalorder %s18, 1
      %s186 = scalar_select %p185, %s18, 1
      %p187 = scmp.lt.s32.totalorder %s184, 3
      %s188 = scalar_select %p187, %s184, 3
      %s189 = smul.addr %s186, 4
      %s190 = sadd.s32 %s188, %s189
      %s191 = smul.addr %s190, 2
      %s192 = scalar_lea.vmem %s3, %s191
      %s193 = smul.u32 4, %s19
      %s194 = smul.u32 %s19, 4
      %s195 = smul.u32 %s194, 4
      %s196 = smul.addr %s195, 4
      %s197 = scalar_lea.vmem %s183, %s196
      %v198 = vld [vmem:[%s197] sm:$0x3]
      %v199 = vld [vmem:[%s197 + $0x4] sm:$0x3]
      %v200 = vld [vmem:[%s197] sm:$0x7]
      %v202 = vunpack.c.l.b16 %v200
      %v203 = vpack.c.b16 %v202, %v202
      %v205 = vshrl.u32 %v203, 16
      %v207 = vshll.u32 %v203, 16
      %v209 = vrot.slane %v207, 1
      %v210 = vor.u32 %v205, %v209
      %v212 = vld [vmem:[%s1] sm:$0xf]
      %v213 = vld [vmem:[%s1 + $0x4] sm:$0xf]
      %v214 = vld [vmem:[%s1 + $0x8] sm:$0xf]
      %v215 = vld [vmem:[%s1 + $0xc] sm:$0xf]
      %v216 = vld [vmem:[%s1 + $0x10] sm:$0xf]
      %v217 = vld [vmem:[%s1 + $0x14] sm:$0xf]
      %v218 = vld [vmem:[%s1 + $0x18] sm:$0xf]
      %v219 = vld [vmem:[%s1 + $0x1c] sm:$0xf]
      %v220 = vld [vmem:[%s1 + $0x20] sm:$0xf]
      %v221 = vld [vmem:[%s1 + $0x24] sm:$0xf]
      %v222 = vld [vmem:[%s1 + $0x28] sm:$0xf]
      %v223 = vld [vmem:[%s1 + $0x2c] sm:$0xf]
      %v224 = vld [vmem:[%s1 + $0x30] sm:$0xf]
      %v225 = vld [vmem:[%s1 + $0x34] sm:$0xf]
      %v226 = vld [vmem:[%s1 + $0x38] sm:$0xf]
      %v227 = vld [vmem:[%s1 + $0x3c] sm:$0xf]
      %v228 = vld [vmem:[%s1 + $0x40] sm:$0xf]
      %v229 = vld [vmem:[%s1 + $0x44] sm:$0xf]
      %v230 = vld [vmem:[%s1 + $0x48] sm:$0xf]
      %v231 = vld [vmem:[%s1 + $0x4c] sm:$0xf]
      %v232 = vld [vmem:[%s1 + $0x50] sm:$0xf]
      %v233 = vld [vmem:[%s1 + $0x54] sm:$0xf]
      %v234 = vld [vmem:[%s1 + $0x58] sm:$0xf]
      %v235 = vld [vmem:[%s1 + $0x5c] sm:$0xf]
      %v236 = vld [vmem:[%s1 + $0x60] sm:$0xf]
      %v237 = vld [vmem:[%s1 + $0x64] sm:$0xf]
      %v238 = vld [vmem:[%s1 + $0x68] sm:$0xf]
      %v239 = vld [vmem:[%s1 + $0x6c] sm:$0xf]
      %v240 = vld [vmem:[%s1 + $0x70] sm:$0xf]
      %v241 = vld [vmem:[%s1 + $0x74] sm:$0xf]
      %v242 = vld [vmem:[%s1 + $0x78] sm:$0xf]
      %v243 = vld [vmem:[%s1 + $0x7c] sm:$0xf]
      %v244 = vld [vmem:[%s1 + $0x80] sm:$0xf]
      %v245 = vld [vmem:[%s1 + $0x84] sm:$0xf]
      %v246 = vld [vmem:[%s1 + $0x88] sm:$0xf]
      %v247 = vld [vmem:[%s1 + $0x8c] sm:$0xf]
      %v248 = vld [vmem:[%s1 + $0x90] sm:$0xf]
      %v249 = vld [vmem:[%s1 + $0x94] sm:$0xf]
      %v250 = vld [vmem:[%s1 + $0x98] sm:$0xf]
      %v251 = vld [vmem:[%s1 + $0x9c] sm:$0xf]
      %v252 = vld [vmem:[%s1 + $0xa0] sm:$0xf]
      %v253 = vld [vmem:[%s1 + $0xa4] sm:$0xf]
      %v254 = vld [vmem:[%s1 + $0xa8] sm:$0xf]
      %v255 = vld [vmem:[%s1 + $0xac] sm:$0xf]
      %v256 = vld [vmem:[%s1 + $0xb0] sm:$0xf]
      %v257 = vld [vmem:[%s1 + $0xb4] sm:$0xf]
      %v258 = vld [vmem:[%s1 + $0xb8] sm:$0xf]
      %v259 = vld [vmem:[%s1 + $0xbc] sm:$0xf]
      %v260 = vld [vmem:[%s197 + $0x8] sm:$0x3]
      %v261 = vld [vmem:[%s197 + $0xc] sm:$0x3]
      %v262 = vld [vmem:[%s197 + $0x8] sm:$0x7]
      %v264 = vunpack.c.l.b16 %v262
      %v265 = vpack.c.b16 %v264, %v264
      %v267 = vshrl.u32 %v265, 16
      %v269 = vshll.u32 %v265, 16
      %v271 = vrot.slane %v269, 1
      %v272 = vor.u32 %v267, %v271
      %s274 = scalar_lea.vmem %s1, 192
      %v275 = vld [vmem:[%s274] sm:$0xf]
      %v276 = vld [vmem:[%s274 + $0x4] sm:$0xf]
      %v277 = vld [vmem:[%s274 + $0x8] sm:$0xf]
      %v278 = vld [vmem:[%s274 + $0xc] sm:$0xf]
      %v279 = vld [vmem:[%s274 + $0x10] sm:$0xf]
      %v280 = vld [vmem:[%s274 + $0x14] sm:$0xf]
      %v281 = vld [vmem:[%s274 + $0x18] sm:$0xf]
      %v282 = vld [vmem:[%s274 + $0x1c] sm:$0xf]
      %v283 = vld [vmem:[%s274 + $0x20] sm:$0xf]
      %v284 = vld [vmem:[%s274 + $0x24] sm:$0xf]
      %v285 = vld [vmem:[%s274 + $0x28] sm:$0xf]
      %v286 = vld [vmem:[%s274 + $0x2c] sm:$0xf]
      %v287 = vld [vmem:[%s274 + $0x30] sm:$0xf]
      %v288 = vld [vmem:[%s274 + $0x34] sm:$0xf]
      %v289 = vld [vmem:[%s274 + $0x38] sm:$0xf]
      %v290 = vld [vmem:[%s274 + $0x3c] sm:$0xf]
      %v291 = vld [vmem:[%s274 + $0x40] sm:$0xf]
      %v292 = vld [vmem:[%s274 + $0x44] sm:$0xf]
      %v293 = vld [vmem:[%s274 + $0x48] sm:$0xf]
      %v294 = vld [vmem:[%s274 + $0x4c] sm:$0xf]
      %v295 = vld [vmem:[%s274 + $0x50] sm:$0xf]
      %v296 = vld [vmem:[%s274 + $0x54] sm:$0xf]
      %v297 = vld [vmem:[%s274 + $0x58] sm:$0xf]
      %v298 = vld [vmem:[%s274 + $0x5c] sm:$0xf]
      %v299 = vld [vmem:[%s274 + $0x60] sm:$0xf]
      %v300 = vld [vmem:[%s274 + $0x64] sm:$0xf]
      %v301 = vld [vmem:[%s274 + $0x68] sm:$0xf]
      %v302 = vld [vmem:[%s274 + $0x6c] sm:$0xf]
      %v303 = vld [vmem:[%s274 + $0x70] sm:$0xf]
      %v304 = vld [vmem:[%s274 + $0x74] sm:$0xf]
      %v305 = vld [vmem:[%s274 + $0x78] sm:$0xf]
      %v306 = vld [vmem:[%s274 + $0x7c] sm:$0xf]
      %v307 = vld [vmem:[%s274 + $0x80] sm:$0xf]
      %v308 = vld [vmem:[%s274 + $0x84] sm:$0xf]
      %v309 = vld [vmem:[%s274 + $0x88] sm:$0xf]
      %v310 = vld [vmem:[%s274 + $0x8c] sm:$0xf]
      %v311 = vld [vmem:[%s274 + $0x90] sm:$0xf]
      %v312 = vld [vmem:[%s274 + $0x94] sm:$0xf]
      %v313 = vld [vmem:[%s274 + $0x98] sm:$0xf]
      %v314 = vld [vmem:[%s274 + $0x9c] sm:$0xf]
      %v315 = vld [vmem:[%s274 + $0xa0] sm:$0xf]
      %v316 = vld [vmem:[%s274 + $0xa4] sm:$0xf]
      %v317 = vld [vmem:[%s274 + $0xa8] sm:$0xf]
      %v318 = vld [vmem:[%s274 + $0xac] sm:$0xf]
      %v319 = vld [vmem:[%s274 + $0xb0] sm:$0xf]
      %v320 = vld [vmem:[%s274 + $0xb4] sm:$0xf]
      %v321 = vld [vmem:[%s274 + $0xb8] sm:$0xf]
      %v322 = vld [vmem:[%s274 + $0xbc] sm:$0xf]
      %v371 = vunpack.c.l.b16 %v275
      %v372 = vunpack.c.l.b16 %v276
      %v373 = vunpack.c.l.b16 %v277
      %v374 = vunpack.c.l.b16 %v278
      %v375 = vunpack.c.l.b16 %v279
      %v376 = vunpack.c.l.b16 %v280
      %v377 = vunpack.c.l.b16 %v281
      %v378 = vunpack.c.l.b16 %v282
      %v379 = vunpack.c.l.b16 %v283
      %v380 = vunpack.c.l.b16 %v284
      %v381 = vunpack.c.l.b16 %v285
      %v382 = vunpack.c.l.b16 %v286
      %v383 = vunpack.c.l.b16 %v287
      %v384 = vunpack.c.l.b16 %v288
      %v385 = vunpack.c.l.b16 %v289
      %v386 = vunpack.c.l.b16 %v290
      %v387 = vunpack.c.l.b16 %v291
      %v388 = vunpack.c.l.b16 %v292
      %v389 = vunpack.c.l.b16 %v293
      %v390 = vunpack.c.l.b16 %v294
      %v391 = vunpack.c.l.b16 %v295
      %v392 = vunpack.c.l.b16 %v296
      %v393 = vunpack.c.l.b16 %v297
      %v394 = vunpack.c.l.b16 %v298
      %v395 = vunpack.c.l.b16 %v299
      %v396 = vunpack.c.l.b16 %v300
      %v397 = vunpack.c.l.b16 %v301
      %v398 = vunpack.c.l.b16 %v302
      %v399 = vunpack.c.l.b16 %v303
      %v400 = vunpack.c.l.b16 %v304
      %v401 = vunpack.c.l.b16 %v305
      %v402 = vunpack.c.l.b16 %v306
      %v403 = vunpack.c.l.b16 %v307
      %v404 = vunpack.c.l.b16 %v308
      %v405 = vunpack.c.l.b16 %v309
      %v406 = vunpack.c.l.b16 %v310
      %v407 = vunpack.c.l.b16 %v311
      %v408 = vunpack.c.l.b16 %v312
      %v409 = vunpack.c.l.b16 %v313
      %v410 = vunpack.c.l.b16 %v314
      %v411 = vunpack.c.l.b16 %v315
      %v412 = vunpack.c.l.b16 %v316
      %v413 = vunpack.c.l.b16 %v317
      %v414 = vunpack.c.l.b16 %v318
      %v415 = vunpack.c.l.b16 %v319
      %v416 = vunpack.c.l.b16 %v320
      %v417 = vunpack.c.l.b16 %v321
      %v418 = vunpack.c.l.b16 %v322
      %v419 = vpack.c.b16 %v372, %v371
      %v420 = vpack.c.b16 %v374, %v373
      %v421 = vpack.c.b16 %v376, %v375
      %v422 = vpack.c.b16 %v378, %v377
      %v423 = vpack.c.b16 %v380, %v379
      %v424 = vpack.c.b16 %v382, %v381
      %v425 = vpack.c.b16 %v384, %v383
      %v426 = vpack.c.b16 %v386, %v385
      %v427 = vpack.c.b16 %v388, %v387
      %v428 = vpack.c.b16 %v390, %v389
      %v429 = vpack.c.b16 %v392, %v391
      %v430 = vpack.c.b16 %v394, %v393
      %v431 = vpack.c.b16 %v396, %v395
      %v432 = vpack.c.b16 %v398, %v397
      %v433 = vpack.c.b16 %v400, %v399
      %v434 = vpack.c.b16 %v402, %v401
      %v435 = vpack.c.b16 %v404, %v403
      %v436 = vpack.c.b16 %v406, %v405
      %v437 = vpack.c.b16 %v408, %v407
      %v438 = vpack.c.b16 %v410, %v409
      %v439 = vpack.c.b16 %v412, %v411
      %v440 = vpack.c.b16 %v414, %v413
      %v441 = vpack.c.b16 %v416, %v415
      %v442 = vpack.c.b16 %v418, %v417
      %467 = vmatpush.bf16.msra.mxu0 %v426
      %468 = vmatpush.bf16.msra.mxu0 %v425
      %469 = vmatpush.bf16.msra.mxu0 %v424
      %470 = vmatpush.bf16.msra.mxu0 %v423
      %471 = vmatpush.bf16.msra.mxu0 %v422
      %472 = vmatpush.bf16.msra.mxu0 %v421
      %473 = vmatpush.bf16.msra.mxu0 %v420
      %474 = vmatpush.bf16.msra.mxu0 %v419
      %475 = vmatmul.bf16.gmra.mxu0 %v260
      %v476 = vpop.f32.mrf.mxu0
      %v477 = vadd.f32 0.0, %v476
      %v478 = vpop.f32.mrf.mxu0
      %479 = vdwg.mxu0
      %480 = vmatpush.bf16.msra.mxu0 %v434
      %481 = vmatpush.bf16.msra.mxu0 %v433
      %482 = vmatpush.bf16.msra.mxu0 %v432
      %483 = vmatpush.bf16.msra.mxu0 %v431
      %484 = vmatpush.bf16.msra.mxu0 %v430
      %485 = vmatpush.bf16.msra.mxu0 %v429
      %486 = vmatpush.bf16.msra.mxu0 %v428
      %487 = vmatpush.bf16.msra.mxu0 %v427
      %488 = vmatmul.bf16.gmra.mxu0 %v261
      %v489 = vpop.f32.mrf.mxu0
      %v490 = vadd.f32 %v477, %v489
      %v491 = vpop.f32.mrf.mxu0
      %492 = vdwg.mxu0
      %493 = vmatpush.bf16.msra.mxu0 %v442
      %494 = vmatpush.bf16.msra.mxu0 %v441
      %495 = vmatpush.bf16.msra.mxu0 %v440
      %496 = vmatpush.bf16.msra.mxu0 %v439
      %497 = vmatpush.bf16.msra.mxu0 %v438
      %498 = vmatpush.bf16.msra.mxu0 %v437
      %499 = vmatpush.bf16.msra.mxu0 %v436
      %500 = vmatpush.bf16.msra.mxu0 %v435
      %501 = vmatmul.bf16.gmra.mxu0 %v272
      %v502 = vpop.f32.mrf.mxu0
      %v503 = vadd.f32 %v490, %v502
      %v504 = vpop.f32.mrf.mxu0
      %505 = vdwg.mxu0
      %v554 = vunpack.c.l.b16 %v212
      %v555 = vunpack.c.l.b16 %v213
      %v556 = vunpack.c.l.b16 %v214
      %v557 = vunpack.c.l.b16 %v215
      %v558 = vunpack.c.l.b16 %v216
      %v559 = vunpack.c.l.b16 %v217
      %v560 = vunpack.c.l.b16 %v218
      %v561 = vunpack.c.l.b16 %v219
      %v562 = vunpack.c.l.b16 %v220
      %v563 = vunpack.c.l.b16 %v221
      %v564 = vunpack.c.l.b16 %v222
      %v565 = vunpack.c.l.b16 %v223
      %v566 = vunpack.c.l.b16 %v224
      %v567 = vunpack.c.l.b16 %v225
      %v568 = vunpack.c.l.b16 %v226
      %v569 = vunpack.c.l.b16 %v227
      %v570 = vunpack.c.l.b16 %v228
      %v571 = vunpack.c.l.b16 %v229
      %v572 = vunpack.c.l.b16 %v230
      %v573 = vunpack.c.l.b16 %v231
      %v574 = vunpack.c.l.b16 %v232
      %v575 = vunpack.c.l.b16 %v233
      %v576 = vunpack.c.l.b16 %v234
      %v577 = vunpack.c.l.b16 %v235
      %v578 = vunpack.c.l.b16 %v236
      %v579 = vunpack.c.l.b16 %v237
      %v580 = vunpack.c.l.b16 %v238
      %v581 = vunpack.c.l.b16 %v239
      %v582 = vunpack.c.l.b16 %v240
      %v583 = vunpack.c.l.b16 %v241
      %v584 = vunpack.c.l.b16 %v242
      %v585 = vunpack.c.l.b16 %v243
      %v586 = vunpack.c.l.b16 %v244
      %v587 = vunpack.c.l.b16 %v245
      %v588 = vunpack.c.l.b16 %v246
      %v589 = vunpack.c.l.b16 %v247
      %v590 = vunpack.c.l.b16 %v248
      %v591 = vunpack.c.l.b16 %v249
      %v592 = vunpack.c.l.b16 %v250
      %v593 = vunpack.c.l.b16 %v251
      %v594 = vunpack.c.l.b16 %v252
      %v595 = vunpack.c.l.b16 %v253
      %v596 = vunpack.c.l.b16 %v254
      %v597 = vunpack.c.l.b16 %v255
      %v598 = vunpack.c.l.b16 %v256
      %v599 = vunpack.c.l.b16 %v257
      %v600 = vunpack.c.l.b16 %v258
      %v601 = vunpack.c.l.b16 %v259
      %v602 = vpack.c.b16 %v555, %v554
      %v603 = vpack.c.b16 %v557, %v556
      %v604 = vpack.c.b16 %v559, %v558
      %v605 = vpack.c.b16 %v561, %v560
      %v606 = vpack.c.b16 %v563, %v562
      %v607 = vpack.c.b16 %v565, %v564
      %v608 = vpack.c.b16 %v567, %v566
      %v609 = vpack.c.b16 %v569, %v568
      %v610 = vpack.c.b16 %v571, %v570
      %v611 = vpack.c.b16 %v573, %v572
      %v612 = vpack.c.b16 %v575, %v574
      %v613 = vpack.c.b16 %v577, %v576
      %v614 = vpack.c.b16 %v579, %v578
      %v615 = vpack.c.b16 %v581, %v580
      %v616 = vpack.c.b16 %v583, %v582
      %v617 = vpack.c.b16 %v585, %v584
      %v618 = vpack.c.b16 %v587, %v586
      %v619 = vpack.c.b16 %v589, %v588
      %v620 = vpack.c.b16 %v591, %v590
      %v621 = vpack.c.b16 %v593, %v592
      %v622 = vpack.c.b16 %v595, %v594
      %v623 = vpack.c.b16 %v597, %v596
      %v624 = vpack.c.b16 %v599, %v598
      %v625 = vpack.c.b16 %v601, %v600
      %650 = vmatpush.bf16.msra.mxu0 %v609
      %651 = vmatpush.bf16.msra.mxu0 %v608
      %652 = vmatpush.bf16.msra.mxu0 %v607
      %653 = vmatpush.bf16.msra.mxu0 %v606
      %654 = vmatpush.bf16.msra.mxu0 %v605
      %655 = vmatpush.bf16.msra.mxu0 %v604
      %656 = vmatpush.bf16.msra.mxu0 %v603
      %657 = vmatpush.bf16.msra.mxu0 %v602
      %658 = vmatmul.bf16.gmra.mxu0 %v198
      %v659 = vpop.f32.mrf.mxu0
      %v660 = vadd.f32 %v503, %v659
      %v661 = vpop.f32.mrf.mxu0
      %662 = vdwg.mxu0
      %663 = vmatpush.bf16.msra.mxu0 %v617
      %664 = vmatpush.bf16.msra.mxu0 %v616
      %665 = vmatpush.bf16.msra.mxu0 %v615
      %666 = vmatpush.bf16.msra.mxu0 %v614
      %667 = vmatpush.bf16.msra.mxu0 %v613
      %668 = vmatpush.bf16.msra.mxu0 %v612
      %669 = vmatpush.bf16.msra.mxu0 %v611
      %670 = vmatpush.bf16.msra.mxu0 %v610
      %671 = vmatmul.bf16.gmra.mxu0 %v199
      %v672 = vpop.f32.mrf.mxu0
      %v673 = vadd.f32 %v660, %v672
      %v674 = vpop.f32.mrf.mxu0
      %675 = vdwg.mxu0
      %676 = vmatpush.bf16.msra.mxu0 %v625
      %677 = vmatpush.bf16.msra.mxu0 %v624
      %678 = vmatpush.bf16.msra.mxu0 %v623
      %679 = vmatpush.bf16.msra.mxu0 %v622
      %680 = vmatpush.bf16.msra.mxu0 %v621
      %681 = vmatpush.bf16.msra.mxu0 %v620
      %682 = vmatpush.bf16.msra.mxu0 %v619
      %683 = vmatpush.bf16.msra.mxu0 %v618
      %684 = vmatmul.bf16.gmra.mxu0 %v210
      %v685 = vpop.f32.mrf.mxu0
      %v686 = vadd.f32 %v673, %v685
      %v687 = vpop.f32.mrf.mxu0
      %688 = vdwg.mxu0
      %s689 = sadd.s32 %s194, 1
      %s690 = smul.u32 %s689, 4
      %s691 = smul.addr %s690, 4
      %s692 = scalar_lea.vmem %s183, %s691
      %v693 = vld [vmem:[%s692] sm:$0x3]
      %v694 = vld [vmem:[%s692 + $0x4] sm:$0x3]
      %v695 = vld [vmem:[%s692] sm:$0x7]
      %v697 = vunpack.c.l.b16 %v695
      %v698 = vpack.c.b16 %v697, %v697
      %v700 = vshrl.u32 %v698, 16
      %v702 = vshll.u32 %v698, 16
      %v704 = vrot.slane %v702, 1
      %v705 = vor.u32 %v700, %v704
      %s707 = scalar_lea.vmem %s1, 384
      %v708 = vld [vmem:[%s707] sm:$0xf]
      %v709 = vld [vmem:[%s707 + $0x4] sm:$0xf]
      %v710 = vld [vmem:[%s707 + $0x8] sm:$0xf]
      %v711 = vld [vmem:[%s707 + $0xc] sm:$0xf]
      %v712 = vld [vmem:[%s707 + $0x10] sm:$0xf]
      %v713 = vld [vmem:[%s707 + $0x14] sm:$0xf]
      %v714 = vld [vmem:[%s707 + $0x18] sm:$0xf]
      %v715 = vld [vmem:[%s707 + $0x1c] sm:$0xf]
      %v716 = vld [vmem:[%s707 + $0x20] sm:$0xf]
      %v717 = vld [vmem:[%s707 + $0x24] sm:$0xf]
      %v718 = vld [vmem:[%s707 + $0x28] sm:$0xf]
      %v719 = vld [vmem:[%s707 + $0x2c] sm:$0xf]
      %v720 = vld [vmem:[%s707 + $0x30] sm:$0xf]
      %v721 = vld [vmem:[%s707 + $0x34] sm:$0xf]
      %v722 = vld [vmem:[%s707 + $0x38] sm:$0xf]
      %v723 = vld [vmem:[%s707 + $0x3c] sm:$0xf]
      %v724 = vld [vmem:[%s707 + $0x40] sm:$0xf]
      %v725 = vld [vmem:[%s707 + $0x44] sm:$0xf]
      %v726 = vld [vmem:[%s707 + $0x48] sm:$0xf]
      %v727 = vld [vmem:[%s707 + $0x4c] sm:$0xf]
      %v728 = vld [vmem:[%s707 + $0x50] sm:$0xf]
      %v729 = vld [vmem:[%s707 + $0x54] sm:$0xf]
      %v730 = vld [vmem:[%s707 + $0x58] sm:$0xf]
      %v731 = vld [vmem:[%s707 + $0x5c] sm:$0xf]
      %v732 = vld [vmem:[%s707 + $0x60] sm:$0xf]
      %v733 = vld [vmem:[%s707 + $0x64] sm:$0xf]
      %v734 = vld [vmem:[%s707 + $0x68] sm:$0xf]
      %v735 = vld [vmem:[%s707 + $0x6c] sm:$0xf]
      %v736 = vld [vmem:[%s707 + $0x70] sm:$0xf]
      %v737 = vld [vmem:[%s707 + $0x74] sm:$0xf]
      %v738 = vld [vmem:[%s707 + $0x78] sm:$0xf]
      %v739 = vld [vmem:[%s707 + $0x7c] sm:$0xf]
      %v740 = vld [vmem:[%s707 + $0x80] sm:$0xf]
      %v741 = vld [vmem:[%s707 + $0x84] sm:$0xf]
      %v742 = vld [vmem:[%s707 + $0x88] sm:$0xf]
      %v743 = vld [vmem:[%s707 + $0x8c] sm:$0xf]
      %v744 = vld [vmem:[%s707 + $0x90] sm:$0xf]
      %v745 = vld [vmem:[%s707 + $0x94] sm:$0xf]
      %v746 = vld [vmem:[%s707 + $0x98] sm:$0xf]
      %v747 = vld [vmem:[%s707 + $0x9c] sm:$0xf]
      %v748 = vld [vmem:[%s707 + $0xa0] sm:$0xf]
      %v749 = vld [vmem:[%s707 + $0xa4] sm:$0xf]
      %v750 = vld [vmem:[%s707 + $0xa8] sm:$0xf]
      %v751 = vld [vmem:[%s707 + $0xac] sm:$0xf]
      %v752 = vld [vmem:[%s707 + $0xb0] sm:$0xf]
      %v753 = vld [vmem:[%s707 + $0xb4] sm:$0xf]
      %v754 = vld [vmem:[%s707 + $0xb8] sm:$0xf]
      %v755 = vld [vmem:[%s707 + $0xbc] sm:$0xf]
      %v804 = vunpack.c.l.b16 %v708
      %v805 = vunpack.c.l.b16 %v709
      %v806 = vunpack.c.l.b16 %v710
      %v807 = vunpack.c.l.b16 %v711
      %v808 = vunpack.c.l.b16 %v712
      %v809 = vunpack.c.l.b16 %v713
      %v810 = vunpack.c.l.b16 %v714
      %v811 = vunpack.c.l.b16 %v715
      %v812 = vunpack.c.l.b16 %v716
      %v813 = vunpack.c.l.b16 %v717
      %v814 = vunpack.c.l.b16 %v718
      %v815 = vunpack.c.l.b16 %v719
      %v816 = vunpack.c.l.b16 %v720
      %v817 = vunpack.c.l.b16 %v721
      %v818 = vunpack.c.l.b16 %v722
      %v819 = vunpack.c.l.b16 %v723
      %v820 = vunpack.c.l.b16 %v724
      %v821 = vunpack.c.l.b16 %v725
      %v822 = vunpack.c.l.b16 %v726
      %v823 = vunpack.c.l.b16 %v727
      %v824 = vunpack.c.l.b16 %v728
      %v825 = vunpack.c.l.b16 %v729
      %v826 = vunpack.c.l.b16 %v730
      %v827 = vunpack.c.l.b16 %v731
      %v828 = vunpack.c.l.b16 %v732
      %v829 = vunpack.c.l.b16 %v733
      %v830 = vunpack.c.l.b16 %v734
      %v831 = vunpack.c.l.b16 %v735
      %v832 = vunpack.c.l.b16 %v736
      %v833 = vunpack.c.l.b16 %v737
      %v834 = vunpack.c.l.b16 %v738
      %v835 = vunpack.c.l.b16 %v739
      %v836 = vunpack.c.l.b16 %v740
      %v837 = vunpack.c.l.b16 %v741
      %v838 = vunpack.c.l.b16 %v742
      %v839 = vunpack.c.l.b16 %v743
      %v840 = vunpack.c.l.b16 %v744
      %v841 = vunpack.c.l.b16 %v745
      %v842 = vunpack.c.l.b16 %v746
      %v843 = vunpack.c.l.b16 %v747
      %v844 = vunpack.c.l.b16 %v748
      %v845 = vunpack.c.l.b16 %v749
      %v846 = vunpack.c.l.b16 %v750
      %v847 = vunpack.c.l.b16 %v751
      %v848 = vunpack.c.l.b16 %v752
      %v849 = vunpack.c.l.b16 %v753
      %v850 = vunpack.c.l.b16 %v754
      %v851 = vunpack.c.l.b16 %v755
      %v852 = vpack.c.b16 %v805, %v804
      %v853 = vpack.c.b16 %v807, %v806
      %v854 = vpack.c.b16 %v809, %v808
      %v855 = vpack.c.b16 %v811, %v810
      %v856 = vpack.c.b16 %v813, %v812
      %v857 = vpack.c.b16 %v815, %v814
      %v858 = vpack.c.b16 %v817, %v816
      %v859 = vpack.c.b16 %v819, %v818
      %v860 = vpack.c.b16 %v821, %v820
      %v861 = vpack.c.b16 %v823, %v822
      %v862 = vpack.c.b16 %v825, %v824
      %v863 = vpack.c.b16 %v827, %v826
      %v864 = vpack.c.b16 %v829, %v828
      %v865 = vpack.c.b16 %v831, %v830
      %v866 = vpack.c.b16 %v833, %v832
      %v867 = vpack.c.b16 %v835, %v834
      %v868 = vpack.c.b16 %v837, %v836
      %v869 = vpack.c.b16 %v839, %v838
      %v870 = vpack.c.b16 %v841, %v840
      %v871 = vpack.c.b16 %v843, %v842
      %v872 = vpack.c.b16 %v845, %v844
      %v873 = vpack.c.b16 %v847, %v846
      %v874 = vpack.c.b16 %v849, %v848
      %v875 = vpack.c.b16 %v851, %v850
      %900 = vmatpush.bf16.msra.mxu0 %v859
      %901 = vmatpush.bf16.msra.mxu0 %v858
      %902 = vmatpush.bf16.msra.mxu0 %v857
      %903 = vmatpush.bf16.msra.mxu0 %v856
      %904 = vmatpush.bf16.msra.mxu0 %v855
      %905 = vmatpush.bf16.msra.mxu0 %v854
      %906 = vmatpush.bf16.msra.mxu0 %v853
      %907 = vmatpush.bf16.msra.mxu0 %v852
      %908 = vmatmul.bf16.gmra.mxu0 %v693
      %v909 = vpop.f32.mrf.mxu0
      %v910 = vadd.f32 0.0, %v909
      %v911 = vpop.f32.mrf.mxu0
      %912 = vdwg.mxu0
      %913 = vmatpush.bf16.msra.mxu0 %v867
      %914 = vmatpush.bf16.msra.mxu0 %v866
      %915 = vmatpush.bf16.msra.mxu0 %v865
      %916 = vmatpush.bf16.msra.mxu0 %v864
      %917 = vmatpush.bf16.msra.mxu0 %v863
      %918 = vmatpush.bf16.msra.mxu0 %v862
      %919 = vmatpush.bf16.msra.mxu0 %v861
      %920 = vmatpush.bf16.msra.mxu0 %v860
      %921 = vmatmul.bf16.gmra.mxu0 %v694
      %v922 = vpop.f32.mrf.mxu0
      %v923 = vadd.f32 %v910, %v922
      %v924 = vpop.f32.mrf.mxu0
      %925 = vdwg.mxu0
      %926 = vmatpush.bf16.msra.mxu0 %v875
      %927 = vmatpush.bf16.msra.mxu0 %v874
      %928 = vmatpush.bf16.msra.mxu0 %v873
      %929 = vmatpush.bf16.msra.mxu0 %v872
      %930 = vmatpush.bf16.msra.mxu0 %v871
      %931 = vmatpush.bf16.msra.mxu0 %v870
      %932 = vmatpush.bf16.msra.mxu0 %v869
      %933 = vmatpush.bf16.msra.mxu0 %v868
      %934 = vmatmul.bf16.gmra.mxu0 %v705
      %v935 = vpop.f32.mrf.mxu0
      %v936 = vadd.f32 %v923, %v935
      %v937 = vpop.f32.mrf.mxu0
      %938 = vdwg.mxu0
      %v939 = vadd.f32 %v686, %v936
      %v940 = vld [vmem:[%s2] sm:$0x1]
      %v942 = vperm.slane %v940, 0
      %v944 = vadd.f32 %v939, %v942
      %vm945 = vcmp.ge.f32.partialorder %v944, 0.0
      %v946 = vmul.f32 %v944, 0.01
      %v947 = vsel %vm945, %v944, %v946
      %v948 = vld [vmem:[%s692 + $0x8] sm:$0x3]
      %v949 = vld [vmem:[%s692 + $0xc] sm:$0x3]
      %v950 = vld [vmem:[%s692 + $0x8] sm:$0x7]
      %v952 = vunpack.c.l.b16 %v950
      %v953 = vpack.c.b16 %v952, %v952
      %v955 = vshrl.u32 %v953, 16
      %v957 = vshll.u32 %v953, 16
      %v959 = vrot.slane %v957, 1
      %v960 = vor.u32 %v955, %v959
      %962 = vmatpush.bf16.msra.mxu0 %v426
      %963 = vmatpush.bf16.msra.mxu0 %v425
      %964 = vmatpush.bf16.msra.mxu0 %v424
      %965 = vmatpush.bf16.msra.mxu0 %v423
      %966 = vmatpush.bf16.msra.mxu0 %v422
      %967 = vmatpush.bf16.msra.mxu0 %v421
      %968 = vmatpush.bf16.msra.mxu0 %v420
      %969 = vmatpush.bf16.msra.mxu0 %v419
      %970 = vmatmul.bf16.gmra.mxu0 %v948
      %v971 = vpop.f32.mrf.mxu0
      %v972 = vadd.f32 0.0, %v971
      %v973 = vpop.f32.mrf.mxu0
      %974 = vdwg.mxu0
      %975 = vmatpush.bf16.msra.mxu0 %v434
      %976 = vmatpush.bf16.msra.mxu0 %v433
      %977 = vmatpush.bf16.msra.mxu0 %v432
      %978 = vmatpush.bf16.msra.mxu0 %v431
      %979 = vmatpush.bf16.msra.mxu0 %v430
      %980 = vmatpush.bf16.msra.mxu0 %v429
      %981 = vmatpush.bf16.msra.mxu0 %v428
      %982 = vmatpush.bf16.msra.mxu0 %v427
      %983 = vmatmul.bf16.gmra.mxu0 %v949
      %v984 = vpop.f32.mrf.mxu0
      %v985 = vadd.f32 %v972, %v984
      %v986 = vpop.f32.mrf.mxu0
      %987 = vdwg.mxu0
      %988 = vmatpush.bf16.msra.mxu0 %v442
      %989 = vmatpush.bf16.msra.mxu0 %v441
      %990 = vmatpush.bf16.msra.mxu0 %v440
      %991 = vmatpush.bf16.msra.mxu0 %v439
      %992 = vmatpush.bf16.msra.mxu0 %v438
      %993 = vmatpush.bf16.msra.mxu0 %v437
      %994 = vmatpush.bf16.msra.mxu0 %v436
      %995 = vmatpush.bf16.msra.mxu0 %v435
      %996 = vmatmul.bf16.gmra.mxu0 %v960
      %v997 = vpop.f32.mrf.mxu0
      %v998 = vadd.f32 %v985, %v997
      %v999 = vpop.f32.mrf.mxu0
      %1000 = vdwg.mxu0
      %1001 = vmatpush.bf16.msra.mxu0 %v609
      %1002 = vmatpush.bf16.msra.mxu0 %v608
      %1003 = vmatpush.bf16.msra.mxu0 %v607
      %1004 = vmatpush.bf16.msra.mxu0 %v606
      %1005 = vmatpush.bf16.msra.mxu0 %v605
      %1006 = vmatpush.bf16.msra.mxu0 %v604
      %1007 = vmatpush.bf16.msra.mxu0 %v603
      %1008 = vmatpush.bf16.msra.mxu0 %v602
      %1009 = vmatmul.bf16.gmra.mxu0 %v693
      %v1010 = vpop.f32.mrf.mxu0
      %v1011 = vadd.f32 %v998, %v1010
      %v1012 = vpop.f32.mrf.mxu0
      %1013 = vdwg.mxu0
      %1014 = vmatpush.bf16.msra.mxu0 %v617
      %1015 = vmatpush.bf16.msra.mxu0 %v616
      %1016 = vmatpush.bf16.msra.mxu0 %v615
      %1017 = vmatpush.bf16.msra.mxu0 %v614
      %1018 = vmatpush.bf16.msra.mxu0 %v613
      %1019 = vmatpush.bf16.msra.mxu0 %v612
      %1020 = vmatpush.bf16.msra.mxu0 %v611
      %1021 = vmatpush.bf16.msra.mxu0 %v610
      %1022 = vmatmul.bf16.gmra.mxu0 %v694
      %v1023 = vpop.f32.mrf.mxu0
      %v1024 = vadd.f32 %v1011, %v1023
      %v1025 = vpop.f32.mrf.mxu0
      %1026 = vdwg.mxu0
      %1027 = vmatpush.bf16.msra.mxu0 %v625
      %1028 = vmatpush.bf16.msra.mxu0 %v624
      %1029 = vmatpush.bf16.msra.mxu0 %v623
      %1030 = vmatpush.bf16.msra.mxu0 %v622
      %1031 = vmatpush.bf16.msra.mxu0 %v621
      %1032 = vmatpush.bf16.msra.mxu0 %v620
      %1033 = vmatpush.bf16.msra.mxu0 %v619
      %1034 = vmatpush.bf16.msra.mxu0 %v618
      %1035 = vmatmul.bf16.gmra.mxu0 %v705
      %v1036 = vpop.f32.mrf.mxu0
      %v1037 = vadd.f32 %v1024, %v1036
      %v1038 = vpop.f32.mrf.mxu0
      %1039 = vdwg.mxu0
      %s1040 = sadd.s32 %s194, 2
      %s1041 = smul.u32 %s1040, 4
      %s1042 = smul.addr %s1041, 4
      %s1043 = scalar_lea.vmem %s183, %s1042
      %v1044 = vld [vmem:[%s1043] sm:$0x3]
      %v1045 = vld [vmem:[%s1043 + $0x4] sm:$0x3]
      %v1046 = vld [vmem:[%s1043] sm:$0x7]
      %v1048 = vunpack.c.l.b16 %v1046
      %v1049 = vpack.c.b16 %v1048, %v1048
      %v1051 = vshrl.u32 %v1049, 16
      %v1053 = vshll.u32 %v1049, 16
      %v1055 = vrot.slane %v1053, 1
      %v1056 = vor.u32 %v1051, %v1055
      %1058 = vmatpush.bf16.msra.mxu0 %v859
      %1059 = vmatpush.bf16.msra.mxu0 %v858
      %1060 = vmatpush.bf16.msra.mxu0 %v857
      %1061 = vmatpush.bf16.msra.mxu0 %v856
      %1062 = vmatpush.bf16.msra.mxu0 %v855
      %1063 = vmatpush.bf16.msra.mxu0 %v854
      %1064 = vmatpush.bf16.msra.mxu0 %v853
      %1065 = vmatpush.bf16.msra.mxu0 %v852
      %1066 = vmatmul.bf16.gmra.mxu0 %v1044
      %v1067 = vpop.f32.mrf.mxu0
      %v1068 = vadd.f32 0.0, %v1067
      %v1069 = vpop.f32.mrf.mxu0
      %1070 = vdwg.mxu0
      %1071 = vmatpush.bf16.msra.mxu0 %v867
      %1072 = vmatpush.bf16.msra.mxu0 %v866
      %1073 = vmatpush.bf16.msra.mxu0 %v865
      %1074 = vmatpush.bf16.msra.mxu0 %v864
      %1075 = vmatpush.bf16.msra.mxu0 %v863
      %1076 = vmatpush.bf16.msra.mxu0 %v862
      %1077 = vmatpush.bf16.msra.mxu0 %v861
      %1078 = vmatpush.bf16.msra.mxu0 %v860
      %1079 = vmatmul.bf16.gmra.mxu0 %v1045
      %v1080 = vpop.f32.mrf.mxu0
      %v1081 = vadd.f32 %v1068, %v1080
      %v1082 = vpop.f32.mrf.mxu0
      %1083 = vdwg.mxu0
      %1084 = vmatpush.bf16.msra.mxu0 %v875
      %1085 = vmatpush.bf16.msra.mxu0 %v874
      %1086 = vmatpush.bf16.msra.mxu0 %v873
      %1087 = vmatpush.bf16.msra.mxu0 %v872
      %1088 = vmatpush.bf16.msra.mxu0 %v871
      %1089 = vmatpush.bf16.msra.mxu0 %v870
      %1090 = vmatpush.bf16.msra.mxu0 %v869
      %1091 = vmatpush.bf16.msra.mxu0 %v868
      %1092 = vmatmul.bf16.gmra.mxu0 %v1056
      %v1093 = vpop.f32.mrf.mxu0
      %v1094 = vadd.f32 %v1081, %v1093
      %v1095 = vpop.f32.mrf.mxu0
      %1096 = vdwg.mxu0
      %v1097 = vadd.f32 %v1037, %v1094
      %v1098 = vadd.f32 %v1097, %v942
      %vm1099 = vcmp.ge.f32.partialorder %v1098, 0.0
      %v1100 = vmul.f32 %v1098, 0.01
      %v1101 = vsel %vm1099, %v1098, %v1100
      %v1102 = vld [vmem:[%s1043 + $0x8] sm:$0x3]
      %v1103 = vld [vmem:[%s1043 + $0xc] sm:$0x3]
      %v1104 = vld [vmem:[%s1043 + $0x8] sm:$0x7]
      %v1106 = vunpack.c.l.b16 %v1104
      %v1107 = vpack.c.b16 %v1106, %v1106
      %v1109 = vshrl.u32 %v1107, 16
      %v1111 = vshll.u32 %v1107, 16
      %v1113 = vrot.slane %v1111, 1
      %v1114 = vor.u32 %v1109, %v1113
      %1116 = vmatpush.bf16.msra.mxu0 %v426
      %1117 = vmatpush.bf16.msra.mxu0 %v425
      %1118 = vmatpush.bf16.msra.mxu0 %v424
      %1119 = vmatpush.bf16.msra.mxu0 %v423
      %1120 = vmatpush.bf16.msra.mxu0 %v422
      %1121 = vmatpush.bf16.msra.mxu0 %v421
      %1122 = vmatpush.bf16.msra.mxu0 %v420
      %1123 = vmatpush.bf16.msra.mxu0 %v419
      %1124 = vmatmul.bf16.gmra.mxu0 %v1102
      %v1125 = vpop.f32.mrf.mxu0
      %v1126 = vadd.f32 0.0, %v1125
      %v1127 = vpop.f32.mrf.mxu0
      %1128 = vdwg.mxu0
      %1129 = vmatpush.bf16.msra.mxu0 %v434
      %1130 = vmatpush.bf16.msra.mxu0 %v433
      %1131 = vmatpush.bf16.msra.mxu0 %v432
      %1132 = vmatpush.bf16.msra.mxu0 %v431
      %1133 = vmatpush.bf16.msra.mxu0 %v430
      %1134 = vmatpush.bf16.msra.mxu0 %v429
      %1135 = vmatpush.bf16.msra.mxu0 %v428
      %1136 = vmatpush.bf16.msra.mxu0 %v427
      %1137 = vmatmul.bf16.gmra.mxu0 %v1103
      %v1138 = vpop.f32.mrf.mxu0
      %v1139 = vadd.f32 %v1126, %v1138
      %v1140 = vpop.f32.mrf.mxu0
      %1141 = vdwg.mxu0
      %1142 = vmatpush.bf16.msra.mxu0 %v442
      %1143 = vmatpush.bf16.msra.mxu0 %v441
      %1144 = vmatpush.bf16.msra.mxu0 %v440
      %1145 = vmatpush.bf16.msra.mxu0 %v439
      %1146 = vmatpush.bf16.msra.mxu0 %v438
      %1147 = vmatpush.bf16.msra.mxu0 %v437
      %1148 = vmatpush.bf16.msra.mxu0 %v436
      %1149 = vmatpush.bf16.msra.mxu0 %v435
      %1150 = vmatmul.bf16.gmra.mxu0 %v1114
      %v1151 = vpop.f32.mrf.mxu0
      %v1152 = vadd.f32 %v1139, %v1151
      %v1153 = vpop.f32.mrf.mxu0
      %1154 = vdwg.mxu0
      %1155 = vmatpush.bf16.msra.mxu0 %v609
      %1156 = vmatpush.bf16.msra.mxu0 %v608
      %1157 = vmatpush.bf16.msra.mxu0 %v607
      %1158 = vmatpush.bf16.msra.mxu0 %v606
      %1159 = vmatpush.bf16.msra.mxu0 %v605
      %1160 = vmatpush.bf16.msra.mxu0 %v604
      %1161 = vmatpush.bf16.msra.mxu0 %v603
      %1162 = vmatpush.bf16.msra.mxu0 %v602
      %1163 = vmatmul.bf16.gmra.mxu0 %v1044
      %v1164 = vpop.f32.mrf.mxu0
      %v1165 = vadd.f32 %v1152, %v1164
      %v1166 = vpop.f32.mrf.mxu0
      %1167 = vdwg.mxu0
      %1168 = vmatpush.bf16.msra.mxu0 %v617
      %1169 = vmatpush.bf16.msra.mxu0 %v616
      %1170 = vmatpush.bf16.msra.mxu0 %v615
      %1171 = vmatpush.bf16.msra.mxu0 %v614
      %1172 = vmatpush.bf16.msra.mxu0 %v613
      %1173 = vmatpush.bf16.msra.mxu0 %v612
      %1174 = vmatpush.bf16.msra.mxu0 %v611
      %1175 = vmatpush.bf16.msra.mxu0 %v610
      %1176 = vmatmul.bf16.gmra.mxu0 %v1045
      %v1177 = vpop.f32.mrf.mxu0
      %v1178 = vadd.f32 %v1165, %v1177
      %v1179 = vpop.f32.mrf.mxu0
      %1180 = vdwg.mxu0
      %1181 = vmatpush.bf16.msra.mxu0 %v625
      %1182 = vmatpush.bf16.msra.mxu0 %v624
      %1183 = vmatpush.bf16.msra.mxu0 %v623
      %1184 = vmatpush.bf16.msra.mxu0 %v622
      %1185 = vmatpush.bf16.msra.mxu0 %v621
      %1186 = vmatpush.bf16.msra.mxu0 %v620
      %1187 = vmatpush.bf16.msra.mxu0 %v619
      %1188 = vmatpush.bf16.msra.mxu0 %v618
      %1189 = vmatmul.bf16.gmra.mxu0 %v1056
      %v1190 = vpop.f32.mrf.mxu0
      %v1191 = vadd.f32 %v1178, %v1190
      %v1192 = vpop.f32.mrf.mxu0
      %1193 = vdwg.mxu0
      %s1194 = sadd.s32 %s194, 3
      %s1195 = smul.u32 %s1194, 4
      %s1196 = smul.addr %s1195, 4
      %s1197 = scalar_lea.vmem %s183, %s1196
      %v1198 = vld [vmem:[%s1197] sm:$0x3]
      %v1199 = vld [vmem:[%s1197 + $0x4] sm:$0x3]
      %v1200 = vld [vmem:[%s1197] sm:$0x7]
      %v1202 = vunpack.c.l.b16 %v1200
      %v1203 = vpack.c.b16 %v1202, %v1202
      %v1205 = vshrl.u32 %v1203, 16
      %v1207 = vshll.u32 %v1203, 16
      %v1209 = vrot.slane %v1207, 1
      %v1210 = vor.u32 %v1205, %v1209
      %1212 = vmatpush.bf16.msra.mxu0 %v859
      %1213 = vmatpush.bf16.msra.mxu0 %v858
      %1214 = vmatpush.bf16.msra.mxu0 %v857
      %1215 = vmatpush.bf16.msra.mxu0 %v856
      %1216 = vmatpush.bf16.msra.mxu0 %v855
      %1217 = vmatpush.bf16.msra.mxu0 %v854
      %1218 = vmatpush.bf16.msra.mxu0 %v853
      %1219 = vmatpush.bf16.msra.mxu0 %v852
      %1220 = vmatmul.bf16.gmra.mxu0 %v1198
      %v1221 = vpop.f32.mrf.mxu0
      %v1222 = vadd.f32 0.0, %v1221
      %v1223 = vpop.f32.mrf.mxu0
      %1224 = vdwg.mxu0
      %1225 = vmatpush.bf16.msra.mxu0 %v867
      %1226 = vmatpush.bf16.msra.mxu0 %v866
      %1227 = vmatpush.bf16.msra.mxu0 %v865
      %1228 = vmatpush.bf16.msra.mxu0 %v864
      %1229 = vmatpush.bf16.msra.mxu0 %v863
      %1230 = vmatpush.bf16.msra.mxu0 %v862
      %1231 = vmatpush.bf16.msra.mxu0 %v861
      %1232 = vmatpush.bf16.msra.mxu0 %v860
      %1233 = vmatmul.bf16.gmra.mxu0 %v1199
      %v1234 = vpop.f32.mrf.mxu0
      %v1235 = vadd.f32 %v1222, %v1234
      %v1236 = vpop.f32.mrf.mxu0
      %1237 = vdwg.mxu0
      %1238 = vmatpush.bf16.msra.mxu0 %v875
      %1239 = vmatpush.bf16.msra.mxu0 %v874
      %1240 = vmatpush.bf16.msra.mxu0 %v873
      %1241 = vmatpush.bf16.msra.mxu0 %v872
      %1242 = vmatpush.bf16.msra.mxu0 %v871
      %1243 = vmatpush.bf16.msra.mxu0 %v870
      %1244 = vmatpush.bf16.msra.mxu0 %v869
      %1245 = vmatpush.bf16.msra.mxu0 %v868
      %1246 = vmatmul.bf16.gmra.mxu0 %v1210
      %v1247 = vpop.f32.mrf.mxu0
      %v1248 = vadd.f32 %v1235, %v1247
      %v1249 = vpop.f32.mrf.mxu0
      %1250 = vdwg.mxu0
      %v1251 = vadd.f32 %v1191, %v1248
      %v1252 = vadd.f32 %v1251, %v942
      %vm1253 = vcmp.ge.f32.partialorder %v1252, 0.0
      %v1254 = vmul.f32 %v1252, 0.01
      %v1255 = vsel %vm1253, %v1252, %v1254
      %v1256 = vld [vmem:[%s1197 + $0x8] sm:$0x3]
      %v1257 = vld [vmem:[%s1197 + $0xc] sm:$0x3]
      %v1258 = vld [vmem:[%s1197 + $0x8] sm:$0x7]
      %v1260 = vunpack.c.l.b16 %v1258
      %v1261 = vpack.c.b16 %v1260, %v1260
      %v1263 = vshrl.u32 %v1261, 16
      %v1265 = vshll.u32 %v1261, 16
      %v1267 = vrot.slane %v1265, 1
      %v1268 = vor.u32 %v1263, %v1267
      %1270 = vmatpush.bf16.msra.mxu0 %v426
      %1271 = vmatpush.bf16.msra.mxu0 %v425
      %1272 = vmatpush.bf16.msra.mxu0 %v424
      %1273 = vmatpush.bf16.msra.mxu0 %v423
      %1274 = vmatpush.bf16.msra.mxu0 %v422
      %1275 = vmatpush.bf16.msra.mxu0 %v421
      %1276 = vmatpush.bf16.msra.mxu0 %v420
      %1277 = vmatpush.bf16.msra.mxu0 %v419
      %1278 = vmatmul.bf16.gmra.mxu0 %v1256
      %v1279 = vpop.f32.mrf.mxu0
      %v1280 = vadd.f32 0.0, %v1279
      %v1281 = vpop.f32.mrf.mxu0
      %1282 = vdwg.mxu0
      %1283 = vmatpush.bf16.msra.mxu0 %v434
      %1284 = vmatpush.bf16.msra.mxu0 %v433
      %1285 = vmatpush.bf16.msra.mxu0 %v432
      %1286 = vmatpush.bf16.msra.mxu0 %v431
      %1287 = vmatpush.bf16.msra.mxu0 %v430
      %1288 = vmatpush.bf16.msra.mxu0 %v429
      %1289 = vmatpush.bf16.msra.mxu0 %v428
      %1290 = vmatpush.bf16.msra.mxu0 %v427
      %1291 = vmatmul.bf16.gmra.mxu0 %v1257
      %v1292 = vpop.f32.mrf.mxu0
      %v1293 = vadd.f32 %v1280, %v1292
      %v1294 = vpop.f32.mrf.mxu0
      %1295 = vdwg.mxu0
      %1296 = vmatpush.bf16.msra.mxu0 %v442
      %1297 = vmatpush.bf16.msra.mxu0 %v441
      %1298 = vmatpush.bf16.msra.mxu0 %v440
      %1299 = vmatpush.bf16.msra.mxu0 %v439
      %1300 = vmatpush.bf16.msra.mxu0 %v438
      %1301 = vmatpush.bf16.msra.mxu0 %v437
      %1302 = vmatpush.bf16.msra.mxu0 %v436
      %1303 = vmatpush.bf16.msra.mxu0 %v435
      %1304 = vmatmul.bf16.gmra.mxu0 %v1268
      %v1305 = vpop.f32.mrf.mxu0
      %v1306 = vadd.f32 %v1293, %v1305
      %v1307 = vpop.f32.mrf.mxu0
      %1308 = vdwg.mxu0
      %1309 = vmatpush.bf16.msra.mxu0 %v609
      %1310 = vmatpush.bf16.msra.mxu0 %v608
      %1311 = vmatpush.bf16.msra.mxu0 %v607
      %1312 = vmatpush.bf16.msra.mxu0 %v606
      %1313 = vmatpush.bf16.msra.mxu0 %v605
      %1314 = vmatpush.bf16.msra.mxu0 %v604
      %1315 = vmatpush.bf16.msra.mxu0 %v603
      %1316 = vmatpush.bf16.msra.mxu0 %v602
      %1317 = vmatmul.bf16.gmra.mxu0 %v1198
      %v1318 = vpop.f32.mrf.mxu0
      %v1319 = vadd.f32 %v1306, %v1318
      %v1320 = vpop.f32.mrf.mxu0
      %1321 = vdwg.mxu0
      %1322 = vmatpush.bf16.msra.mxu0 %v617
      %1323 = vmatpush.bf16.msra.mxu0 %v616
      %1324 = vmatpush.bf16.msra.mxu0 %v615
      %1325 = vmatpush.bf16.msra.mxu0 %v614
      %1326 = vmatpush.bf16.msra.mxu0 %v613
      %1327 = vmatpush.bf16.msra.mxu0 %v612
      %1328 = vmatpush.bf16.msra.mxu0 %v611
      %1329 = vmatpush.bf16.msra.mxu0 %v610
      %1330 = vmatmul.bf16.gmra.mxu0 %v1199
      %v1331 = vpop.f32.mrf.mxu0
      %v1332 = vadd.f32 %v1319, %v1331
      %v1333 = vpop.f32.mrf.mxu0
      %1334 = vdwg.mxu0
      %1335 = vmatpush.bf16.msra.mxu0 %v625
      %1336 = vmatpush.bf16.msra.mxu0 %v624
      %1337 = vmatpush.bf16.msra.mxu0 %v623
      %1338 = vmatpush.bf16.msra.mxu0 %v622
      %1339 = vmatpush.bf16.msra.mxu0 %v621
      %1340 = vmatpush.bf16.msra.mxu0 %v620
      %1341 = vmatpush.bf16.msra.mxu0 %v619
      %1342 = vmatpush.bf16.msra.mxu0 %v618
      %1343 = vmatmul.bf16.gmra.mxu0 %v1210
      %v1344 = vpop.f32.mrf.mxu0
      %v1345 = vadd.f32 %v1332, %v1344
      %v1346 = vpop.f32.mrf.mxu0
      %1347 = vdwg.mxu0
      %s1348 = sadd.s32 %s194, 4
      %s1349 = smul.u32 %s1348, 4
      %s1350 = smul.addr %s1349, 4
      %s1351 = scalar_lea.vmem %s183, %s1350
      %v1352 = vld [vmem:[%s1351] sm:$0x3]
      %v1353 = vld [vmem:[%s1351 + $0x4] sm:$0x3]
      %v1354 = vld [vmem:[%s1351] sm:$0x7]
      %v1356 = vunpack.c.l.b16 %v1354
      %v1357 = vpack.c.b16 %v1356, %v1356
      %v1359 = vshrl.u32 %v1357, 16
      %v1361 = vshll.u32 %v1357, 16
      %v1363 = vrot.slane %v1361, 1
      %v1364 = vor.u32 %v1359, %v1363
      %1366 = vmatpush.bf16.msra.mxu0 %v859
      %1367 = vmatpush.bf16.msra.mxu0 %v858
      %1368 = vmatpush.bf16.msra.mxu0 %v857
      %1369 = vmatpush.bf16.msra.mxu0 %v856
      %1370 = vmatpush.bf16.msra.mxu0 %v855
      %1371 = vmatpush.bf16.msra.mxu0 %v854
      %1372 = vmatpush.bf16.msra.mxu0 %v853
      %1373 = vmatpush.bf16.msra.mxu0 %v852
      %1374 = vmatmul.bf16.gmra.mxu0 %v1352
      %v1375 = vpop.f32.mrf.mxu0
      %v1376 = vadd.f32 0.0, %v1375
      %v1377 = vpop.f32.mrf.mxu0
      %1378 = vdwg.mxu0
      %1379 = vmatpush.bf16.msra.mxu0 %v867
      %1380 = vmatpush.bf16.msra.mxu0 %v866
      %1381 = vmatpush.bf16.msra.mxu0 %v865
      %1382 = vmatpush.bf16.msra.mxu0 %v864
      %1383 = vmatpush.bf16.msra.mxu0 %v863
      %1384 = vmatpush.bf16.msra.mxu0 %v862
      %1385 = vmatpush.bf16.msra.mxu0 %v861
      %1386 = vmatpush.bf16.msra.mxu0 %v860
      %1387 = vmatmul.bf16.gmra.mxu0 %v1353
      %v1388 = vpop.f32.mrf.mxu0
      %v1389 = vadd.f32 %v1376, %v1388
      %v1390 = vpop.f32.mrf.mxu0
      %1391 = vdwg.mxu0
      %1392 = vmatpush.bf16.msra.mxu0 %v875
      %1393 = vmatpush.bf16.msra.mxu0 %v874
      %1394 = vmatpush.bf16.msra.mxu0 %v873
      %1395 = vmatpush.bf16.msra.mxu0 %v872
      %1396 = vmatpush.bf16.msra.mxu0 %v871
      %1397 = vmatpush.bf16.msra.mxu0 %v870
      %1398 = vmatpush.bf16.msra.mxu0 %v869
      %1399 = vmatpush.bf16.msra.mxu0 %v868
      %1400 = vmatmul.bf16.gmra.mxu0 %v1364
      %v1401 = vpop.f32.mrf.mxu0
      %v1402 = vadd.f32 %v1389, %v1401
      %v1403 = vpop.f32.mrf.mxu0
      %1404 = vdwg.mxu0
      %v1405 = vadd.f32 %v1345, %v1402
      %v1406 = vadd.f32 %v1405, %v942
      %vm1407 = vcmp.ge.f32.partialorder %v1406, 0.0
      %v1408 = vmul.f32 %v1406, 0.01
      %v1409 = vsel %vm1407, %v1406, %v1408
      %v1410 = vpack.c.bf16 %v947, %v947
      %v1411 = vpack.c.bf16 %v1101, %v1101
      %v1412 = vpack.c.bf16 %v1255, %v1255
      %v1413 = vpack.c.bf16 %v1409, %v1409
      %1414 = vst [vmem:[%s192] sm:$0x3] %v1410
      %1415 = vst [vmem:[%s192 + $0x2] sm:$0x3] %v1411
      %1416 = vst [vmem:[%s192 + $0x4] sm:$0x3] %v1412
      %1417 = vst [vmem:[%s192 + $0x6] sm:$0x3] %v1413
      %s1418 = smul.u32 4, %s19
      %p1419 = scmp.lt.s32.totalorder %s18, 1
      %s1420 = scalar_select %p1419, %s18, 1
      %p1421 = scmp.lt.s32.totalorder %s1418, 3
      %s1422 = scalar_select %p1421, %s1418, 3
      %s1423 = smul.addr %s1420, 4
      %s1424 = sadd.s32 %s1422, %s1423
      %s1425 = smul.addr %s1424, 2
      %s1426 = scalar_lea.vmem %s3, %s1425
      // Predicated region
      $region33: #{_lambda_.8} parent=31 // pred_check
        %p1427 = pneg %p114
      $region34: #{_lambda_.8} parent=31 // pred_check_branch
        %1429 = sbr.rel (%p1427) target = $region36
      $region35: #{_lambda_.8} parent=31 // pred_region
        %s1430 = smul.u32 4, %s19
      $region36: #{_lambda_.8} parent=31 // pred_fallthru
        _
    $region32: #{_lambda_.8} parent=5 // pred_fallthru
      _
    %p1431 = scmp.le.s32.totalorder 2, %s9
    // Predicated region
    $region37: #{_lambda_.8} parent=5 // pred_check
      %p1432 = pneg %p1431
    $region38: #{_lambda_.8} parent=5 // pred_check_branch
      %1434 = sbr.rel (%p1432) target = $region40
    $region39: #{_lambda_.8} parent=5 // pred_region
      %s1435 = ssub.s32 %s9, 2
      // Predicated region
      $region41: #{_lambda_.8} parent=39 // pred_check
        %p1436 = pneg %p120
      $region42: #{_lambda_.8} parent=39 // pred_check_branch
        %1438 = sbr.rel (%p1436) target = $region44
      $region43: #{_lambda_.8} parent=39 // pred_region
        %s1439 = smul.u32 4, %s21
        %p1440 = scmp.lt.s32.totalorder %s20, 1
        %s1441 = scalar_select %p1440, %s20, 1
        %p1442 = scmp.lt.s32.totalorder %s1439, 3
        %s1443 = scalar_select %p1442, %s1439, 3
        %s1444 = smul.addr %s1441, 4
        %s1445 = sadd.s32 %s1443, %s1444
        %s1446 = smul.addr %s1445, 2
        %s1447 = scalar_lea.vmem %s3, %s1446
      $region44: #{_lambda_.8} parent=39 // pred_fallthru
        _
    $region40: #{_lambda_.8} parent=5 // pred_fallthru
      _
  $region6: #{_lambda_.8} parent=0 // loop_footer
    %s13 = sadd.s32 1, %s9
  $region7: #{_lambda_.8} parent=0 // loop_footer_branch
    %8 = sbr.rel target = $region3
  $region8: #{_lambda_.8} parent=0 // loop_exit
    _

// kernel: _lambda_.10
$region0: #{_lambda_.10}
  #allocation0 [shape = 'u32[]', space=smem, size = 0x4, offset = 0x4, fixed_abs, tag = 'smem constant byte address 0x4 - core index']
  #allocation1 [shape = 'u32[72,128]{1,0:T(1,128)}', space=vmem, size = 0x9000, scoped, tag = 'internal scratch']
  %s0 = inlined_call_operand.vmem [shape: bf16[2,2,2,512], index: 0, kind: input, shape index: {}]
  %s1 = inlined_call_operand.vmem [shape: bf16[3,384,128], index: 1, kind: input, shape index: {}]
  %s2 = inlined_call_operand.vmem [shape: f32[1,128], index: 2, kind: input, shape index: {}]
  %s3 = inlined_call_operand.vmem [shape: bf16[2,1,1,128], index: 3, kind: output, shape index: {}]
  %s4 = sld [smem:[#allocation0]]
  $region45: #{_lambda_.10} parent=0
    _
  %s6 = ssub.s32 1, %s4
  %s7 = scalar_select 0, %s6, %s4
  loop: start=0, step=1, limit=4
  $region2: #{_lambda_.10} parent=0 // loop_pre_header
    _
  $region3: #{_lambda_.10} parent=0 // loop_header
    %s9 = sphi 0, %s13
    %p10 = scmp.ge.s32.totalorder %s9, 4
    %s16 = sphi 0, %s28
    %s17 = sphi 0, %s24
    %s18 = sphi 0, %s16
    %s19 = sphi 0, %s17
    %s20 = sphi 0, %s18
    %s21 = sphi 0, %s19
    %s31 = sphi 0, %s33
    %s34 = sphi 0, %s31
    %s35 = sphi 0, %s34
    %s51 = sphi 0, %s35
    %s55 = sphi 0, %s55
    %s57 = sphi 0, %s55
    %s58 = sphi 0, %s57
    %s72 = sphi 0, %s58
    %s76 = sphi 0, %s76
    %s78 = sphi 0, %s76
    %s79 = sphi 0, %s78
    %s93 = sphi 0, %s79
    %s101 = sphi 0, %s103
    %s104 = sphi 0, %s101
    %s105 = sphi 0, %s104
    %s121 = sphi 0, %s105
  $region4: #{_lambda_.10} parent=0 // loop_header_branch
    %12 = sbr.rel (%p10) target = $region8
  $region5: #{_lambda_.10} parent=0 // loop_body
    %s14 = ssub.s32 %s9, 1
    %s15 = ssub.s32 %s9, 2
    %s22 = sadd.s32 1, %s17
    %p23 = scmp.ge.s32.totalorder %s22, 1
    %s24 = scalar_select %p23, 0, %s22
    %s25 = sadd.s32 1, %s16
    %s26 = scalar_select %p23, %s25, %s16
    %p27 = scmp.ge.s32.totalorder %s26, 2
    %s28 = scalar_select %p27, 0, %s26
    %s29 = ssub.s32 %s16, %s28
    %p30 = scmp.eq.s32.totalorder %s29, 0
    %s32 = sadd.s32 %s31, 1
    %s33 = scalar_select %p30, %s31, %s32
    %p36 = pneg %p30
    %p37 = scmp.eq.s32.totalorder %s9, 1
    %p38 = por %p36, %p37
    %p39 = scmp.ne.s32.totalorder %s31, %s34
    %p40 = scmp.eq.s32.totalorder %s9, 0
    %p41 = por %p39, %p40
    %p42 = scmp.ne.s32.totalorder %s31, %s34
    %p43 = scmp.eq.s32.totalorder %s14, 1
    %p44 = por %p42, %p43
    %p45 = scmp.ne.s32.totalorder %s34, %s35
    %p46 = scmp.eq.s32.totalorder %s14, 0
    %p47 = por %p45, %p46
    %p48 = scmp.ne.s32.totalorder %s34, %s35
    %p49 = scmp.eq.s32.totalorder %s15, 1
    %p50 = por %p48, %p49
    %p52 = scmp.ne.s32.totalorder %s35, %s51
    %p53 = scmp.eq.s32.totalorder %s15, 0
    %p54 = por %p52, %p53
    %s56 = sadd.s32 %s55, 1
    %p59 = scmp.eq.s32.totalorder %s9, 1
    %p60 = scmp.ne.s32.totalorder %s55, %s57
    %p61 = scmp.eq.s32.totalorder %s9, 0
    %p62 = por %p60, %p61
    %p63 = scmp.ne.s32.totalorder %s55, %s57
    %p64 = scmp.eq.s32.totalorder %s14, 1
    %p65 = por %p63, %p64
    %p66 = scmp.ne.s32.totalorder %s57, %s58
    %p67 = scmp.eq.s32.totalorder %s14, 0
    %p68 = por %p66, %p67
    %p69 = scmp.ne.s32.totalorder %s57, %s58
    %p70 = scmp.eq.s32.totalorder %s15, 1
    %p71 = por %p69, %p70
    %p73 = scmp.ne.s32.totalorder %s58, %s72
    %p74 = scmp.eq.s32.totalorder %s15, 0
    %p75 = por %p73, %p74
    %s77 = sadd.s32 %s76, 1
    %p80 = scmp.eq.s32.totalorder %s9, 1
    %p81 = scmp.ne.s32.totalorder %s76, %s78
    %p82 = scmp.eq.s32.totalorder %s9, 0
    %p83 = por %p81, %p82
    %p84 = scmp.ne.s32.totalorder %s76, %s78
    %p85 = scmp.eq.s32.totalorder %s14, 1
    %p86 = por %p84, %p85
    %p87 = scmp.ne.s32.totalorder %s78, %s79
    %p88 = scmp.eq.s32.totalorder %s14, 0
    %p89 = por %p87, %p88
    %p90 = scmp.ne.s32.totalorder %s78, %s79
    %p91 = scmp.eq.s32.totalorder %s15, 1
    %p92 = por %p90, %p91
    %p94 = scmp.ne.s32.totalorder %s79, %s93
    %p95 = scmp.eq.s32.totalorder %s15, 0
    %p96 = por %p94, %p95
    %s97 = ssub.s32 %s16, %s28
    %s98 = ssub.s32 %s17, %s24
    %s99 = sor.u32 %s97, %s98
    %p100 = scmp.eq.s32.totalorder %s99, 0
    %s102 = sadd.s32 %s101, 1
    %s103 = scalar_select %p100, %s101, %s102
    %p106 = pneg %p100
    %p107 = scmp.eq.s32.totalorder %s9, 1
    %p108 = por %p106, %p107
    %p109 = scmp.ne.s32.totalorder %s101, %s104
    %p110 = scmp.eq.s32.totalorder %s9, 0
    %p111 = por %p109, %p110
    %p112 = scmp.ne.s32.totalorder %s101, %s104
    %p113 = scmp.eq.s32.totalorder %s14, 1
    %p114 = por %p112, %p113
    %p115 = scmp.ne.s32.totalorder %s104, %s105
    %p116 = scmp.eq.s32.totalorder %s14, 0
    %p117 = por %p115, %p116
    %p118 = scmp.ne.s32.totalorder %s104, %s105
    %p119 = scmp.eq.s32.totalorder %s15, 1
    %p120 = por %p118, %p119
    %p122 = scmp.ne.s32.totalorder %s105, %s121
    %p123 = scmp.eq.s32.totalorder %s15, 0
    %p124 = por %p122, %p123
    %p125 = scmp.le.s32.totalorder 1, %s9
    %p126 = scmp.lt.s32.totalorder %s9, 3
    %p127 = pnand %p125, %p126
    %p128 = pneg %p127
    // Predicated region
    $region9: #{_lambda_.10} parent=5 // pred_check
      _
    $region10: #{_lambda_.10} parent=5 // pred_check_branch
      %130 = sbr.rel (%p127) target = $region12
    $region11: #{_lambda_.10} parent=5 // pred_region
      %s131 = ssub.s32 %s9, 1
      // Predicated region
      $region13: #{_lambda_.10} parent=11 // pred_check
        %p132 = pneg %p68
      $region14: #{_lambda_.10} parent=11 // pred_check_branch
        %134 = sbr.rel (%p132) target = $region16
      $region15: #{_lambda_.10} parent=11 // pred_region
        _
      $region16: #{_lambda_.10} parent=11 // pred_fallthru
        _
      // Predicated region
      $region17: #{_lambda_.10} parent=11 // pred_check
        %p135 = pneg %p89
      $region18: #{_lambda_.10} parent=11 // pred_check_branch
        %137 = sbr.rel (%p135) target = $region20
      $region19: #{_lambda_.10} parent=11 // pred_region
        _
      $region20: #{_lambda_.10} parent=11 // pred_fallthru
        _
    $region12: #{_lambda_.10} parent=5 // pred_fallthru
      _
    %p138 = scmp.lt.s32.totalorder %s9, 2
    // Predicated region
    $region21: #{_lambda_.10} parent=5 // pred_check
      %p139 = pneg %p138
    $region22: #{_lambda_.10} parent=5 // pred_check_branch
      %141 = sbr.rel (%p139) target = $region24
    $region23: #{_lambda_.10} parent=5 // pred_region
      // Predicated region
      $region25: #{_lambda_.10} parent=23 // pred_check
        %p142 = pneg %p41
      $region26: #{_lambda_.10} parent=23 // pred_check_branch
        %144 = sbr.rel (%p142) target = $region28
      $region27: #{_lambda_.10} parent=23 // pred_region
        %p145 = scmp.lt.s32.totalorder %s16, 1
        %s146 = scalar_select %p145, %s16, 1
        %s147 = smul.addr %s146, 8
        %s148 = scalar_lea.vmem %s0, %s147
      $region28: #{_lambda_.10} parent=23 // pred_fallthru
        _
    $region24: #{_lambda_.10} parent=5 // pred_fallthru
      _
    %p149 = scmp.le.s32.totalorder 1, %s9
    %p150 = scmp.lt.s32.totalorder %s9, 3
    %p151 = pnand %p149, %p150
    %p152 = pneg %p151
    // Predicated region
    $region29: #{_lambda_.10} parent=5 // pred_check
      _
    $region30: #{_lambda_.10} parent=5 // pred_check_branch
      %154 = sbr.rel (%p151) target = $region32
    $region31: #{_lambda_.10} parent=5 // pred_region
      %s155 = ssub.s32 %s9, 1
      %p156 = scmp.lt.s32.totalorder %s18, 1
      %s157 = scalar_select %p156, %s18, 1
      %s158 = smul.addr %s157, 8
      %s159 = scalar_lea.vmem %s0, %s158
      %p160 = pneg %p47
      %p161 = pneg %p44
      %p162 = pneg %p68
      %p163 = pneg %p65
      %p164 = pneg %p89
      %p165 = pneg %p86
      %p166 = pneg %p117
      %p167 = pneg %p114
      %p168 = scmp.lt.s32.totalorder %s18, 1
      %s169 = scalar_select %p168, %s18, 1
      %p170 = scmp.lt.s32.totalorder %s19, 0
      %s171 = scalar_select %p170, %s19, 0
      %s172 = sadd.s32 %s171, %s169
      %s173 = scalar_lea.vmem %s3, %s172
      %p174 = scmp.lt.s32.totalorder %s18, 1
      %s175 = scalar_select %p174, %s18, 1
      %s176 = smul.addr %s175, 8
      %s177 = scalar_lea.vmem %s0, %s176
      %p178 = scmp.lt.s32.totalorder %s18, 1
      %s179 = scalar_select %p178, %s18, 1
      %p180 = scmp.lt.s32.totalorder %s19, 0
      %s181 = scalar_select %p180, %s19, 0
      %s182 = sadd.s32 %s181, %s179
      %s183 = scalar_lea.vmem %s3, %s182
      %s184 = smul.u32 %s19, 4
      %s185 = scalar_lea.vmem %s177, %s184
      %v186 = vld [vmem:[%s185] sm:$0x1]
      %v187 = vld [vmem:[%s185 + $0x1] sm:$0x1]
      %189 = vst [vmem:[#allocation1] ss:$9 sm:$0xff] %v186
      %v190 = vld [vmem:[#allocation1] sm:$0xff]
      %v191 = vshrl.u32 %v190, 16
      %v194 = vld [vmem:[%s1] sm:$0xf]
      %v195 = vld [vmem:[%s1 + $0x4] sm:$0xf]
      %v196 = vld [vmem:[%s1 + $0x8] sm:$0xf]
      %v197 = vld [vmem:[%s1 + $0xc] sm:$0xf]
      %v198 = vld [vmem:[%s1 + $0x10] sm:$0xf]
      %v199 = vld [vmem:[%s1 + $0x14] sm:$0xf]
      %v200 = vld [vmem:[%s1 + $0x18] sm:$0xf]
      %v201 = vld [vmem:[%s1 + $0x1c] sm:$0xf]
      %v202 = vld [vmem:[%s1 + $0x20] sm:$0xf]
      %v203 = vld [vmem:[%s1 + $0x24] sm:$0xf]
      %v204 = vld [vmem:[%s1 + $0x28] sm:$0xf]
      %v205 = vld [vmem:[%s1 + $0x2c] sm:$0xf]
      %v206 = vld [vmem:[%s1 + $0x30] sm:$0xf]
      %v207 = vld [vmem:[%s1 + $0x34] sm:$0xf]
      %v208 = vld [vmem:[%s1 + $0x38] sm:$0xf]
      %v209 = vld [vmem:[%s1 + $0x3c] sm:$0xf]
      %v210 = vld [vmem:[%s1 + $0x40] sm:$0xf]
      %v211 = vld [vmem:[%s1 + $0x44] sm:$0xf]
      %v212 = vld [vmem:[%s1 + $0x48] sm:$0xf]
      %v213 = vld [vmem:[%s1 + $0x4c] sm:$0xf]
      %v214 = vld [vmem:[%s1 + $0x50] sm:$0xf]
      %v215 = vld [vmem:[%s1 + $0x54] sm:$0xf]
      %v216 = vld [vmem:[%s1 + $0x58] sm:$0xf]
      %v217 = vld [vmem:[%s1 + $0x5c] sm:$0xf]
      %v218 = vld [vmem:[%s1 + $0x60] sm:$0xf]
      %v219 = vld [vmem:[%s1 + $0x64] sm:$0xf]
      %v220 = vld [vmem:[%s1 + $0x68] sm:$0xf]
      %v221 = vld [vmem:[%s1 + $0x6c] sm:$0xf]
      %v222 = vld [vmem:[%s1 + $0x70] sm:$0xf]
      %v223 = vld [vmem:[%s1 + $0x74] sm:$0xf]
      %v224 = vld [vmem:[%s1 + $0x78] sm:$0xf]
      %v225 = vld [vmem:[%s1 + $0x7c] sm:$0xf]
      %v226 = vld [vmem:[%s1 + $0x80] sm:$0xf]
      %v227 = vld [vmem:[%s1 + $0x84] sm:$0xf]
      %v228 = vld [vmem:[%s1 + $0x88] sm:$0xf]
      %v229 = vld [vmem:[%s1 + $0x8c] sm:$0xf]
      %v230 = vld [vmem:[%s1 + $0x90] sm:$0xf]
      %v231 = vld [vmem:[%s1 + $0x94] sm:$0xf]
      %v232 = vld [vmem:[%s1 + $0x98] sm:$0xf]
      %v233 = vld [vmem:[%s1 + $0x9c] sm:$0xf]
      %v234 = vld [vmem:[%s1 + $0xa0] sm:$0xf]
      %v235 = vld [vmem:[%s1 + $0xa4] sm:$0xf]
      %v236 = vld [vmem:[%s1 + $0xa8] sm:$0xf]
      %v237 = vld [vmem:[%s1 + $0xac] sm:$0xf]
      %v238 = vld [vmem:[%s1 + $0xb0] sm:$0xf]
      %v239 = vld [vmem:[%s1 + $0xb4] sm:$0xf]
      %v240 = vld [vmem:[%s1 + $0xb8] sm:$0xf]
      %v241 = vld [vmem:[%s1 + $0xbc] sm:$0xf]
      %v242 = vld [vmem:[%s185 + $0x2] sm:$0x1]
      %v243 = vld [vmem:[%s185 + $0x3] sm:$0x1]
      %245 = vst [vmem:[#allocation1] ss:$9 sm:$0xff] %v242
      %v246 = vld [vmem:[#allocation1] sm:$0xff]
      %v247 = vshrl.u32 %v246, 16
      %s250 = scalar_lea.vmem %s1, 192
      %v251 = vld [vmem:[%s250] sm:$0xf]
      %v252 = vld [vmem:[%s250 + $0x4] sm:$0xf]
      %v253 = vld [vmem:[%s250 + $0x8] sm:$0xf]
      %v254 = vld [vmem:[%s250 + $0xc] sm:$0xf]
      %v255 = vld [vmem:[%s250 + $0x10] sm:$0xf]
      %v256 = vld [vmem:[%s250 + $0x14] sm:$0xf]
      %v257 = vld [vmem:[%s250 + $0x18] sm:$0xf]
      %v258 = vld [vmem:[%s250 + $0x1c] sm:$0xf]
      %v259 = vld [vmem:[%s250 + $0x20] sm:$0xf]
      %v260 = vld [vmem:[%s250 + $0x24] sm:$0xf]
      %v261 = vld [vmem:[%s250 + $0x28] sm:$0xf]
      %v262 = vld [vmem:[%s250 + $0x2c] sm:$0xf]
      %v263 = vld [vmem:[%s250 + $0x30] sm:$0xf]
      %v264 = vld [vmem:[%s250 + $0x34] sm:$0xf]
      %v265 = vld [vmem:[%s250 + $0x38] sm:$0xf]
      %v266 = vld [vmem:[%s250 + $0x3c] sm:$0xf]
      %v267 = vld [vmem:[%s250 + $0x40] sm:$0xf]
      %v268 = vld [vmem:[%s250 + $0x44] sm:$0xf]
      %v269 = vld [vmem:[%s250 + $0x48] sm:$0xf]
      %v270 = vld [vmem:[%s250 + $0x4c] sm:$0xf]
      %v271 = vld [vmem:[%s250 + $0x50] sm:$0xf]
      %v272 = vld [vmem:[%s250 + $0x54] sm:$0xf]
      %v273 = vld [vmem:[%s250 + $0x58] sm:$0xf]
      %v274 = vld [vmem:[%s250 + $0x5c] sm:$0xf]
      %v275 = vld [vmem:[%s250 + $0x60] sm:$0xf]
      %v276 = vld [vmem:[%s250 + $0x64] sm:$0xf]
      %v277 = vld [vmem:[%s250 + $0x68] sm:$0xf]
      %v278 = vld [vmem:[%s250 + $0x6c] sm:$0xf]
      %v279 = vld [vmem:[%s250 + $0x70] sm:$0xf]
      %v280 = vld [vmem:[%s250 + $0x74] sm:$0xf]
      %v281 = vld [vmem:[%s250 + $0x78] sm:$0xf]
      %v282 = vld [vmem:[%s250 + $0x7c] sm:$0xf]
      %v283 = vld [vmem:[%s250 + $0x80] sm:$0xf]
      %v284 = vld [vmem:[%s250 + $0x84] sm:$0xf]
      %v285 = vld [vmem:[%s250 + $0x88] sm:$0xf]
      %v286 = vld [vmem:[%s250 + $0x8c] sm:$0xf]
      %v287 = vld [vmem:[%s250 + $0x90] sm:$0xf]
      %v288 = vld [vmem:[%s250 + $0x94] sm:$0xf]
      %v289 = vld [vmem:[%s250 + $0x98] sm:$0xf]
      %v290 = vld [vmem:[%s250 + $0x9c] sm:$0xf]
      %v291 = vld [vmem:[%s250 + $0xa0] sm:$0xf]
      %v292 = vld [vmem:[%s250 + $0xa4] sm:$0xf]
      %v293 = vld [vmem:[%s250 + $0xa8] sm:$0xf]
      %v294 = vld [vmem:[%s250 + $0xac] sm:$0xf]
      %v295 = vld [vmem:[%s250 + $0xb0] sm:$0xf]
      %v296 = vld [vmem:[%s250 + $0xb4] sm:$0xf]
      %v297 = vld [vmem:[%s250 + $0xb8] sm:$0xf]
      %v298 = vld [vmem:[%s250 + $0xbc] sm:$0xf]
      %v347 = vunpack.c.l.b16 %v251
      %v348 = vunpack.c.l.b16 %v252
      %v349 = vunpack.c.l.b16 %v253
      %v350 = vunpack.c.l.b16 %v254
      %v351 = vunpack.c.l.b16 %v255
      %v352 = vunpack.c.l.b16 %v256
      %v353 = vunpack.c.l.b16 %v257
      %v354 = vunpack.c.l.b16 %v258
      %v355 = vunpack.c.l.b16 %v259
      %v356 = vunpack.c.l.b16 %v260
      %v357 = vunpack.c.l.b16 %v261
      %v358 = vunpack.c.l.b16 %v262
      %v359 = vunpack.c.l.b16 %v263
      %v360 = vunpack.c.l.b16 %v264
      %v361 = vunpack.c.l.b16 %v265
      %v362 = vunpack.c.l.b16 %v266
      %v363 = vunpack.c.l.b16 %v267
      %v364 = vunpack.c.l.b16 %v268
      %v365 = vunpack.c.l.b16 %v269
      %v366 = vunpack.c.l.b16 %v270
      %v367 = vunpack.c.l.b16 %v271
      %v368 = vunpack.c.l.b16 %v272
      %v369 = vunpack.c.l.b16 %v273
      %v370 = vunpack.c.l.b16 %v274
      %v371 = vunpack.c.l.b16 %v275
      %v372 = vunpack.c.l.b16 %v276
      %v373 = vunpack.c.l.b16 %v277
      %v374 = vunpack.c.l.b16 %v278
      %v375 = vunpack.c.l.b16 %v279
      %v376 = vunpack.c.l.b16 %v280
      %v377 = vunpack.c.l.b16 %v281
      %v378 = vunpack.c.l.b16 %v282
      %v379 = vunpack.c.l.b16 %v283
      %v380 = vunpack.c.l.b16 %v284
      %v381 = vunpack.c.l.b16 %v285
      %v382 = vunpack.c.l.b16 %v286
      %v383 = vunpack.c.l.b16 %v287
      %v384 = vunpack.c.l.b16 %v288
      %v385 = vunpack.c.l.b16 %v289
      %v386 = vunpack.c.l.b16 %v290
      %v387 = vunpack.c.l.b16 %v291
      %v388 = vunpack.c.l.b16 %v292
      %v389 = vunpack.c.l.b16 %v293
      %v390 = vunpack.c.l.b16 %v294
      %v391 = vunpack.c.l.b16 %v295
      %v392 = vunpack.c.l.b16 %v296
      %v393 = vunpack.c.l.b16 %v297
      %v394 = vunpack.c.l.b16 %v298
      %v395 = vpack.c.b16 %v348, %v347
      %v396 = vpack.c.b16 %v350, %v349
      %v397 = vpack.c.b16 %v352, %v351
      %v398 = vpack.c.b16 %v354, %v353
      %v399 = vpack.c.b16 %v356, %v355
      %v400 = vpack.c.b16 %v358, %v357
      %v401 = vpack.c.b16 %v360, %v359
      %v402 = vpack.c.b16 %v362, %v361
      %v403 = vpack.c.b16 %v364, %v363
      %v404 = vpack.c.b16 %v366, %v365
      %v405 = vpack.c.b16 %v368, %v367
      %v406 = vpack.c.b16 %v370, %v369
      %v407 = vpack.c.b16 %v372, %v371
      %v408 = vpack.c.b16 %v374, %v373
      %v409 = vpack.c.b16 %v376, %v375
      %v410 = vpack.c.b16 %v378, %v377
      %v411 = vpack.c.b16 %v380, %v379
      %v412 = vpack.c.b16 %v382, %v381
      %v413 = vpack.c.b16 %v384, %v383
      %v414 = vpack.c.b16 %v386, %v385
      %v415 = vpack.c.b16 %v388, %v387
      %v416 = vpack.c.b16 %v390, %v389
      %v417 = vpack.c.b16 %v392, %v391
      %v418 = vpack.c.b16 %v394, %v393
      %443 = vmatpush.bf16.msra.mxu0 %v402
      %444 = vmatpush.bf16.msra.mxu0 %v401
      %445 = vmatpush.bf16.msra.mxu0 %v400
      %446 = vmatpush.bf16.msra.mxu0 %v399
      %447 = vmatpush.bf16.msra.mxu0 %v398
      %448 = vmatpush.bf16.msra.mxu0 %v397
      %449 = vmatpush.bf16.msra.mxu0 %v396
      %450 = vmatpush.bf16.msra.mxu0 %v395
      %451 = vmatmul.bf16.gmra.mxu0 %v242
      %v452 = vpop.f32.mrf.mxu0
      %v453 = vadd.f32 0.0, %v452
      %v454 = vpop.f32.mrf.mxu0
      %455 = vdwg.mxu0
      %456 = vmatpush.bf16.msra.mxu0 %v410
      %457 = vmatpush.bf16.msra.mxu0 %v409
      %458 = vmatpush.bf16.msra.mxu0 %v408
      %459 = vmatpush.bf16.msra.mxu0 %v407
      %460 = vmatpush.bf16.msra.mxu0 %v406
      %461 = vmatpush.bf16.msra.mxu0 %v405
      %462 = vmatpush.bf16.msra.mxu0 %v404
      %463 = vmatpush.bf16.msra.mxu0 %v403
      %464 = vmatmul.bf16.gmra.mxu0 %v243
      %v465 = vpop.f32.mrf.mxu0
      %v466 = vadd.f32 %v453, %v465
      %v467 = vpop.f32.mrf.mxu0
      %468 = vdwg.mxu0
      %469 = vmatpush.bf16.msra.mxu0 %v418
      %470 = vmatpush.bf16.msra.mxu0 %v417
      %471 = vmatpush.bf16.msra.mxu0 %v416
      %472 = vmatpush.bf16.msra.mxu0 %v415
      %473 = vmatpush.bf16.msra.mxu0 %v414
      %474 = vmatpush.bf16.msra.mxu0 %v413
      %475 = vmatpush.bf16.msra.mxu0 %v412
      %476 = vmatpush.bf16.msra.mxu0 %v411
      %477 = vmatmul.bf16.gmra.mxu0 %v247
      %v478 = vpop.f32.mrf.mxu0
      %v479 = vadd.f32 %v466, %v478
      %v480 = vpop.f32.mrf.mxu0
      %481 = vdwg.mxu0
      %v530 = vunpack.c.l.b16 %v194
      %v531 = vunpack.c.l.b16 %v195
      %v532 = vunpack.c.l.b16 %v196
      %v533 = vunpack.c.l.b16 %v197
      %v534 = vunpack.c.l.b16 %v198
      %v535 = vunpack.c.l.b16 %v199
      %v536 = vunpack.c.l.b16 %v200
      %v537 = vunpack.c.l.b16 %v201
      %v538 = vunpack.c.l.b16 %v202
      %v539 = vunpack.c.l.b16 %v203
      %v540 = vunpack.c.l.b16 %v204
      %v541 = vunpack.c.l.b16 %v205
      %v542 = vunpack.c.l.b16 %v206
      %v543 = vunpack.c.l.b16 %v207
      %v544 = vunpack.c.l.b16 %v208
      %v545 = vunpack.c.l.b16 %v209
      %v546 = vunpack.c.l.b16 %v210
      %v547 = vunpack.c.l.b16 %v211
      %v548 = vunpack.c.l.b16 %v212
      %v549 = vunpack.c.l.b16 %v213
      %v550 = vunpack.c.l.b16 %v214
      %v551 = vunpack.c.l.b16 %v215
      %v552 = vunpack.c.l.b16 %v216
      %v553 = vunpack.c.l.b16 %v217
      %v554 = vunpack.c.l.b16 %v218
      %v555 = vunpack.c.l.b16 %v219
      %v556 = vunpack.c.l.b16 %v220
      %v557 = vunpack.c.l.b16 %v221
      %v558 = vunpack.c.l.b16 %v222
      %v559 = vunpack.c.l.b16 %v223
      %v560 = vunpack.c.l.b16 %v224
      %v561 = vunpack.c.l.b16 %v225
      %v562 = vunpack.c.l.b16 %v226
      %v563 = vunpack.c.l.b16 %v227
      %v564 = vunpack.c.l.b16 %v228
      %v565 = vunpack.c.l.b16 %v229
      %v566 = vunpack.c.l.b16 %v230
      %v567 = vunpack.c.l.b16 %v231
      %v568 = vunpack.c.l.b16 %v232
      %v569 = vunpack.c.l.b16 %v233
      %v570 = vunpack.c.l.b16 %v234
      %v571 = vunpack.c.l.b16 %v235
      %v572 = vunpack.c.l.b16 %v236
      %v573 = vunpack.c.l.b16 %v237
      %v574 = vunpack.c.l.b16 %v238
      %v575 = vunpack.c.l.b16 %v239
      %v576 = vunpack.c.l.b16 %v240
      %v577 = vunpack.c.l.b16 %v241
      %v578 = vpack.c.b16 %v531, %v530
      %v579 = vpack.c.b16 %v533, %v532
      %v580 = vpack.c.b16 %v535, %v534
      %v581 = vpack.c.b16 %v537, %v536
      %v582 = vpack.c.b16 %v539, %v538
      %v583 = vpack.c.b16 %v541, %v540
      %v584 = vpack.c.b16 %v543, %v542
      %v585 = vpack.c.b16 %v545, %v544
      %v586 = vpack.c.b16 %v547, %v546
      %v587 = vpack.c.b16 %v549, %v548
      %v588 = vpack.c.b16 %v551, %v550
      %v589 = vpack.c.b16 %v553, %v552
      %v590 = vpack.c.b16 %v555, %v554
      %v591 = vpack.c.b16 %v557, %v556
      %v592 = vpack.c.b16 %v559, %v558
      %v593 = vpack.c.b16 %v561, %v560
      %v594 = vpack.c.b16 %v563, %v562
      %v595 = vpack.c.b16 %v565, %v564
      %v596 = vpack.c.b16 %v567, %v566
      %v597 = vpack.c.b16 %v569, %v568
      %v598 = vpack.c.b16 %v571, %v570
      %v599 = vpack.c.b16 %v573, %v572
      %v600 = vpack.c.b16 %v575, %v574
      %v601 = vpack.c.b16 %v577, %v576
      %626 = vmatpush.bf16.msra.mxu0 %v585
      %627 = vmatpush.bf16.msra.mxu0 %v584
      %628 = vmatpush.bf16.msra.mxu0 %v583
      %629 = vmatpush.bf16.msra.mxu0 %v582
      %630 = vmatpush.bf16.msra.mxu0 %v581
      %631 = vmatpush.bf16.msra.mxu0 %v580
      %632 = vmatpush.bf16.msra.mxu0 %v579
      %633 = vmatpush.bf16.msra.mxu0 %v578
      %634 = vmatmul.bf16.gmra.mxu0 %v186
      %v635 = vpop.f32.mrf.mxu0
      %v636 = vadd.f32 %v479, %v635
      %v637 = vpop.f32.mrf.mxu0
      %638 = vdwg.mxu0
      %639 = vmatpush.bf16.msra.mxu0 %v593
      %640 = vmatpush.bf16.msra.mxu0 %v592
      %641 = vmatpush.bf16.msra.mxu0 %v591
      %642 = vmatpush.bf16.msra.mxu0 %v590
      %643 = vmatpush.bf16.msra.mxu0 %v589
      %644 = vmatpush.bf16.msra.mxu0 %v588
      %645 = vmatpush.bf16.msra.mxu0 %v587
      %646 = vmatpush.bf16.msra.mxu0 %v586
      %647 = vmatmul.bf16.gmra.mxu0 %v187
      %v648 = vpop.f32.mrf.mxu0
      %v649 = vadd.f32 %v636, %v648
      %v650 = vpop.f32.mrf.mxu0
      %651 = vdwg.mxu0
      %652 = vmatpush.bf16.msra.mxu0 %v601
      %653 = vmatpush.bf16.msra.mxu0 %v600
      %654 = vmatpush.bf16.msra.mxu0 %v599
      %655 = vmatpush.bf16.msra.mxu0 %v598
      %656 = vmatpush.bf16.msra.mxu0 %v597
      %657 = vmatpush.bf16.msra.mxu0 %v596
      %658 = vmatpush.bf16.msra.mxu0 %v595
      %659 = vmatpush.bf16.msra.mxu0 %v594
      %660 = vmatmul.bf16.gmra.mxu0 %v191
      %v661 = vpop.f32.mrf.mxu0
      %v662 = vadd.f32 %v649, %v661
      %v663 = vpop.f32.mrf.mxu0
      %664 = vdwg.mxu0
      %s665 = sadd.s32 %s19, 1
      %s666 = smul.u32 %s665, 4
      %s667 = scalar_lea.vmem %s177, %s666
      %v668 = vld [vmem:[%s667] sm:$0x1]
      %v669 = vld [vmem:[%s667 + $0x1] sm:$0x1]
      %671 = vst [vmem:[#allocation1] ss:$9 sm:$0xff] %v668
      %v672 = vld [vmem:[#allocation1] sm:$0xff]
      %v673 = vshrl.u32 %v672, 16
      %s676 = scalar_lea.vmem %s1, 384
      %v677 = vld [vmem:[%s676] sm:$0xf]
      %v678 = vld [vmem:[%s676 + $0x4] sm:$0xf]
      %v679 = vld [vmem:[%s676 + $0x8] sm:$0xf]
      %v680 = vld [vmem:[%s676 + $0xc] sm:$0xf]
      %v681 = vld [vmem:[%s676 + $0x10] sm:$0xf]
      %v682 = vld [vmem:[%s676 + $0x14] sm:$0xf]
      %v683 = vld [vmem:[%s676 + $0x18] sm:$0xf]
      %v684 = vld [vmem:[%s676 + $0x1c] sm:$0xf]
      %v685 = vld [vmem:[%s676 + $0x20] sm:$0xf]
      %v686 = vld [vmem:[%s676 + $0x24] sm:$0xf]
      %v687 = vld [vmem:[%s676 + $0x28] sm:$0xf]
      %v688 = vld [vmem:[%s676 + $0x2c] sm:$0xf]
      %v689 = vld [vmem:[%s676 + $0x30] sm:$0xf]
      %v690 = vld [vmem:[%s676 + $0x34] sm:$0xf]
      %v691 = vld [vmem:[%s676 + $0x38] sm:$0xf]
      %v692 = vld [vmem:[%s676 + $0x3c] sm:$0xf]
      %v693 = vld [vmem:[%s676 + $0x40] sm:$0xf]
      %v694 = vld [vmem:[%s676 + $0x44] sm:$0xf]
      %v695 = vld [vmem:[%s676 + $0x48] sm:$0xf]
      %v696 = vld [vmem:[%s676 + $0x4c] sm:$0xf]
      %v697 = vld [vmem:[%s676 + $0x50] sm:$0xf]
      %v698 = vld [vmem:[%s676 + $0x54] sm:$0xf]
      %v699 = vld [vmem:[%s676 + $0x58] sm:$0xf]
      %v700 = vld [vmem:[%s676 + $0x5c] sm:$0xf]
      %v701 = vld [vmem:[%s676 + $0x60] sm:$0xf]
      %v702 = vld [vmem:[%s676 + $0x64] sm:$0xf]
      %v703 = vld [vmem:[%s676 + $0x68] sm:$0xf]
      %v704 = vld [vmem:[%s676 + $0x6c] sm:$0xf]
      %v705 = vld [vmem:[%s676 + $0x70] sm:$0xf]
      %v706 = vld [vmem:[%s676 + $0x74] sm:$0xf]
      %v707 = vld [vmem:[%s676 + $0x78] sm:$0xf]
      %v708 = vld [vmem:[%s676 + $0x7c] sm:$0xf]
      %v709 = vld [vmem:[%s676 + $0x80] sm:$0xf]
      %v710 = vld [vmem:[%s676 + $0x84] sm:$0xf]
      %v711 = vld [vmem:[%s676 + $0x88] sm:$0xf]
      %v712 = vld [vmem:[%s676 + $0x8c] sm:$0xf]
      %v713 = vld [vmem:[%s676 + $0x90] sm:$0xf]
      %v714 = vld [vmem:[%s676 + $0x94] sm:$0xf]
      %v715 = vld [vmem:[%s676 + $0x98] sm:$0xf]
      %v716 = vld [vmem:[%s676 + $0x9c] sm:$0xf]
      %v717 = vld [vmem:[%s676 + $0xa0] sm:$0xf]
      %v718 = vld [vmem:[%s676 + $0xa4] sm:$0xf]
      %v719 = vld [vmem:[%s676 + $0xa8] sm:$0xf]
      %v720 = vld [vmem:[%s676 + $0xac] sm:$0xf]
      %v721 = vld [vmem:[%s676 + $0xb0] sm:$0xf]
      %v722 = vld [vmem:[%s676 + $0xb4] sm:$0xf]
      %v723 = vld [vmem:[%s676 + $0xb8] sm:$0xf]
      %v724 = vld [vmem:[%s676 + $0xbc] sm:$0xf]
      %v773 = vunpack.c.l.b16 %v677
      %v774 = vunpack.c.l.b16 %v678
      %v775 = vunpack.c.l.b16 %v679
      %v776 = vunpack.c.l.b16 %v680
      %v777 = vunpack.c.l.b16 %v681
      %v778 = vunpack.c.l.b16 %v682
      %v779 = vunpack.c.l.b16 %v683
      %v780 = vunpack.c.l.b16 %v684
      %v781 = vunpack.c.l.b16 %v685
      %v782 = vunpack.c.l.b16 %v686
      %v783 = vunpack.c.l.b16 %v687
      %v784 = vunpack.c.l.b16 %v688
      %v785 = vunpack.c.l.b16 %v689
      %v786 = vunpack.c.l.b16 %v690
      %v787 = vunpack.c.l.b16 %v691
      %v788 = vunpack.c.l.b16 %v692
      %v789 = vunpack.c.l.b16 %v693
      %v790 = vunpack.c.l.b16 %v694
      %v791 = vunpack.c.l.b16 %v695
      %v792 = vunpack.c.l.b16 %v696
      %v793 = vunpack.c.l.b16 %v697
      %v794 = vunpack.c.l.b16 %v698
      %v795 = vunpack.c.l.b16 %v699
      %v796 = vunpack.c.l.b16 %v700
      %v797 = vunpack.c.l.b16 %v701
      %v798 = vunpack.c.l.b16 %v702
      %v799 = vunpack.c.l.b16 %v703
      %v800 = vunpack.c.l.b16 %v704
      %v801 = vunpack.c.l.b16 %v705
      %v802 = vunpack.c.l.b16 %v706
      %v803 = vunpack.c.l.b16 %v707
      %v804 = vunpack.c.l.b16 %v708
      %v805 = vunpack.c.l.b16 %v709
      %v806 = vunpack.c.l.b16 %v710
      %v807 = vunpack.c.l.b16 %v711
      %v808 = vunpack.c.l.b16 %v712
      %v809 = vunpack.c.l.b16 %v713
      %v810 = vunpack.c.l.b16 %v714
      %v811 = vunpack.c.l.b16 %v715
      %v812 = vunpack.c.l.b16 %v716
      %v813 = vunpack.c.l.b16 %v717
      %v814 = vunpack.c.l.b16 %v718
      %v815 = vunpack.c.l.b16 %v719
      %v816 = vunpack.c.l.b16 %v720
      %v817 = vunpack.c.l.b16 %v721
      %v818 = vunpack.c.l.b16 %v722
      %v819 = vunpack.c.l.b16 %v723
      %v820 = vunpack.c.l.b16 %v724
      %v821 = vpack.c.b16 %v774, %v773
      %v822 = vpack.c.b16 %v776, %v775
      %v823 = vpack.c.b16 %v778, %v777
      %v824 = vpack.c.b16 %v780, %v779
      %v825 = vpack.c.b16 %v782, %v781
      %v826 = vpack.c.b16 %v784, %v783
      %v827 = vpack.c.b16 %v786, %v785
      %v828 = vpack.c.b16 %v788, %v787
      %v829 = vpack.c.b16 %v790, %v789
      %v830 = vpack.c.b16 %v792, %v791
      %v831 = vpack.c.b16 %v794, %v793
      %v832 = vpack.c.b16 %v796, %v795
      %v833 = vpack.c.b16 %v798, %v797
      %v834 = vpack.c.b16 %v800, %v799
      %v835 = vpack.c.b16 %v802, %v801
      %v836 = vpack.c.b16 %v804, %v803
      %v837 = vpack.c.b16 %v806, %v805
      %v838 = vpack.c.b16 %v808, %v807
      %v839 = vpack.c.b16 %v810, %v809
      %v840 = vpack.c.b16 %v812, %v811
      %v841 = vpack.c.b16 %v814, %v813
      %v842 = vpack.c.b16 %v816, %v815
      %v843 = vpack.c.b16 %v818, %v817
      %v844 = vpack.c.b16 %v820, %v819
      %869 = vmatpush.bf16.msra.mxu0 %v828
      %870 = vmatpush.bf16.msra.mxu0 %v827
      %871 = vmatpush.bf16.msra.mxu0 %v826
      %872 = vmatpush.bf16.msra.mxu0 %v825
      %873 = vmatpush.bf16.msra.mxu0 %v824
      %874 = vmatpush.bf16.msra.mxu0 %v823
      %875 = vmatpush.bf16.msra.mxu0 %v822
      %876 = vmatpush.bf16.msra.mxu0 %v821
      %877 = vmatmul.bf16.gmra.mxu0 %v668
      %v878 = vpop.f32.mrf.mxu0
      %v879 = vadd.f32 0.0, %v878
      %v880 = vpop.f32.mrf.mxu0
      %881 = vdwg.mxu0
      %882 = vmatpush.bf16.msra.mxu0 %v836
      %883 = vmatpush.bf16.msra.mxu0 %v835
      %884 = vmatpush.bf16.msra.mxu0 %v834
      %885 = vmatpush.bf16.msra.mxu0 %v833
      %886 = vmatpush.bf16.msra.mxu0 %v832
      %887 = vmatpush.bf16.msra.mxu0 %v831
      %888 = vmatpush.bf16.msra.mxu0 %v830
      %889 = vmatpush.bf16.msra.mxu0 %v829
      %890 = vmatmul.bf16.gmra.mxu0 %v669
      %v891 = vpop.f32.mrf.mxu0
      %v892 = vadd.f32 %v879, %v891
      %v893 = vpop.f32.mrf.mxu0
      %894 = vdwg.mxu0
      %895 = vmatpush.bf16.msra.mxu0 %v844
      %896 = vmatpush.bf16.msra.mxu0 %v843
      %897 = vmatpush.bf16.msra.mxu0 %v842
      %898 = vmatpush.bf16.msra.mxu0 %v841
      %899 = vmatpush.bf16.msra.mxu0 %v840
      %900 = vmatpush.bf16.msra.mxu0 %v839
      %901 = vmatpush.bf16.msra.mxu0 %v838
      %902 = vmatpush.bf16.msra.mxu0 %v837
      %903 = vmatmul.bf16.gmra.mxu0 %v673
      %v904 = vpop.f32.mrf.mxu0
      %v905 = vadd.f32 %v892, %v904
      %v906 = vpop.f32.mrf.mxu0
      %907 = vdwg.mxu0
      %v908 = vadd.f32 %v662, %v905
      %v909 = vld [vmem:[%s2] sm:$0x1]
      %v910 = vadd.f32 %v908, %v909
      %vm911 = vcmp.ge.f32.partialorder %v910, 0.0
      %v912 = vmul.f32 %v910, 0.01
      %v913 = vsel %vm911, %v910, %v912
      %v914 = vpack.c.bf16 %v913, %v913
      %vm915 = vcmask 1040384
      %vm916 = vsmask.f32 256
      %vm917 = vmand %vm915, %vm916
      %v918 = vld [vmem:[%s183] sm:$0x1]
      %v919 = vsel %vm917, %v914, %v918
      %920 = vst [vmem:[%s183] sm:$0x1] %v919
      %p921 = scmp.lt.s32.totalorder %s18, 1
      %s922 = scalar_select %p921, %s18, 1
      %p923 = scmp.lt.s32.totalorder %s19, 0
      %s924 = scalar_select %p923, %s19, 0
      %s925 = sadd.s32 %s924, %s922
      %s926 = scalar_lea.vmem %s3, %s925
      // Predicated region
      $region33: #{_lambda_.10} parent=31 // pred_check
        %p927 = pneg %p114
      $region34: #{_lambda_.10} parent=31 // pred_check_branch
        %929 = sbr.rel (%p927) target = $region36
      $region35: #{_lambda_.10} parent=31 // pred_region
        _
      $region36: #{_lambda_.10} parent=31 // pred_fallthru
        _
    $region32: #{_lambda_.10} parent=5 // pred_fallthru
      _
    %p930 = scmp.le.s32.totalorder 2, %s9
    // Predicated region
    $region37: #{_lambda_.10} parent=5 // pred_check
      %p931 = pneg %p930
    $region38: #{_lambda_.10} parent=5 // pred_check_branch
      %933 = sbr.rel (%p931) target = $region40
    $region39: #{_lambda_.10} parent=5 // pred_region
      %s934 = ssub.s32 %s9, 2
      // Predicated region
      $region41: #{_lambda_.10} parent=39 // pred_check
        %p935 = pneg %p120
      $region42: #{_lambda_.10} parent=39 // pred_check_branch
        %937 = sbr.rel (%p935) target = $region44
      $region43: #{_lambda_.10} parent=39 // pred_region
        %p938 = scmp.lt.s32.totalorder %s20, 1
        %s939 = scalar_select %p938, %s20, 1
        %p940 = scmp.lt.s32.totalorder %s21, 0
        %s941 = scalar_select %p940, %s21, 0
        %s942 = sadd.s32 %s941, %s939
        %s943 = scalar_lea.vmem %s3, %s942
      $region44: #{_lambda_.10} parent=39 // pred_fallthru
        _
    $region40: #{_lambda_.10} parent=5 // pred_fallthru
      _
  $region6: #{_lambda_.10} parent=0 // loop_footer
    %s13 = sadd.s32 1, %s9
  $region7: #{_lambda_.10} parent=0 // loop_footer_branch
    %8 = sbr.rel target = $region3
  $region8: #{_lambda_.10} parent=0 // loop_exit
    _

// kernel: _lambda_.9
$region0: #{_lambda_.9}
  #allocation0 [shape = 'u32[]', space=smem, size = 0x4, offset = 0x4, fixed_abs, tag = 'smem constant byte address 0x4 - core index']
  #allocation1 [shape = 'u32[72,128]{1,0:T(1,128)}', space=vmem, size = 0x9000, scoped, tag = 'internal scratch']
  %s0 = inlined_call_operand.vmem [shape: bf16[2,3,3,512], index: 0, kind: input, shape index: {}]
  %s1 = inlined_call_operand.vmem [shape: bf16[3,384,128], index: 1, kind: input, shape index: {}]
  %s2 = inlined_call_operand.vmem [shape: f32[1,128], index: 2, kind: input, shape index: {}]
  %s3 = inlined_call_operand.vmem [shape: bf16[2,2,2,128], index: 3, kind: output, shape index: {}]
  %s4 = sld [smem:[#allocation0]]
  $region45: #{_lambda_.9} parent=0
    _
  %s6 = ssub.s32 1, %s4
  %s7 = scalar_select 0, %s6, %s4
  loop: start=0, step=1, limit=4
  $region2: #{_lambda_.9} parent=0 // loop_pre_header
    _
  $region3: #{_lambda_.9} parent=0 // loop_header
    %s9 = sphi 0, %s13
    %p10 = scmp.ge.s32.totalorder %s9, 4
    %s16 = sphi 0, %s28
    %s17 = sphi 0, %s24
    %s18 = sphi 0, %s16
    %s19 = sphi 0, %s17
    %s20 = sphi 0, %s18
    %s21 = sphi 0, %s19
    %s31 = sphi 0, %s33
    %s34 = sphi 0, %s31
    %s35 = sphi 0, %s34
    %s51 = sphi 0, %s35
    %s55 = sphi 0, %s55
    %s57 = sphi 0, %s55
    %s58 = sphi 0, %s57
    %s72 = sphi 0, %s58
    %s76 = sphi 0, %s76
    %s78 = sphi 0, %s76
    %s79 = sphi 0, %s78
    %s93 = sphi 0, %s79
    %s101 = sphi 0, %s103
    %s104 = sphi 0, %s101
    %s105 = sphi 0, %s104
    %s121 = sphi 0, %s105
  $region4: #{_lambda_.9} parent=0 // loop_header_branch
    %12 = sbr.rel (%p10) target = $region8
  $region5: #{_lambda_.9} parent=0 // loop_body
    %s14 = ssub.s32 %s9, 1
    %s15 = ssub.s32 %s9, 2
    %s22 = sadd.s32 1, %s17
    %p23 = scmp.ge.s32.totalorder %s22, 1
    %s24 = scalar_select %p23, 0, %s22
    %s25 = sadd.s32 1, %s16
    %s26 = scalar_select %p23, %s25, %s16
    %p27 = scmp.ge.s32.totalorder %s26, 2
    %s28 = scalar_select %p27, 0, %s26
    %s29 = ssub.s32 %s16, %s28
    %p30 = scmp.eq.s32.totalorder %s29, 0
    %s32 = sadd.s32 %s31, 1
    %s33 = scalar_select %p30, %s31, %s32
    %p36 = pneg %p30
    %p37 = scmp.eq.s32.totalorder %s9, 1
    %p38 = por %p36, %p37
    %p39 = scmp.ne.s32.totalorder %s31, %s34
    %p40 = scmp.eq.s32.totalorder %s9, 0
    %p41 = por %p39, %p40
    %p42 = scmp.ne.s32.totalorder %s31, %s34
    %p43 = scmp.eq.s32.totalorder %s14, 1
    %p44 = por %p42, %p43
    %p45 = scmp.ne.s32.totalorder %s34, %s35
    %p46 = scmp.eq.s32.totalorder %s14, 0
    %p47 = por %p45, %p46
    %p48 = scmp.ne.s32.totalorder %s34, %s35
    %p49 = scmp.eq.s32.totalorder %s15, 1
    %p50 = por %p48, %p49
    %p52 = scmp.ne.s32.totalorder %s35, %s51
    %p53 = scmp.eq.s32.totalorder %s15, 0
    %p54 = por %p52, %p53
    %s56 = sadd.s32 %s55, 1
    %p59 = scmp.eq.s32.totalorder %s9, 1
    %p60 = scmp.ne.s32.totalorder %s55, %s57
    %p61 = scmp.eq.s32.totalorder %s9, 0
    %p62 = por %p60, %p61
    %p63 = scmp.ne.s32.totalorder %s55, %s57
    %p64 = scmp.eq.s32.totalorder %s14, 1
    %p65 = por %p63, %p64
    %p66 = scmp.ne.s32.totalorder %s57, %s58
    %p67 = scmp.eq.s32.totalorder %s14, 0
    %p68 = por %p66, %p67
    %p69 = scmp.ne.s32.totalorder %s57, %s58
    %p70 = scmp.eq.s32.totalorder %s15, 1
    %p71 = por %p69, %p70
    %p73 = scmp.ne.s32.totalorder %s58, %s72
    %p74 = scmp.eq.s32.totalorder %s15, 0
    %p75 = por %p73, %p74
    %s77 = sadd.s32 %s76, 1
    %p80 = scmp.eq.s32.totalorder %s9, 1
    %p81 = scmp.ne.s32.totalorder %s76, %s78
    %p82 = scmp.eq.s32.totalorder %s9, 0
    %p83 = por %p81, %p82
    %p84 = scmp.ne.s32.totalorder %s76, %s78
    %p85 = scmp.eq.s32.totalorder %s14, 1
    %p86 = por %p84, %p85
    %p87 = scmp.ne.s32.totalorder %s78, %s79
    %p88 = scmp.eq.s32.totalorder %s14, 0
    %p89 = por %p87, %p88
    %p90 = scmp.ne.s32.totalorder %s78, %s79
    %p91 = scmp.eq.s32.totalorder %s15, 1
    %p92 = por %p90, %p91
    %p94 = scmp.ne.s32.totalorder %s79, %s93
    %p95 = scmp.eq.s32.totalorder %s15, 0
    %p96 = por %p94, %p95
    %s97 = ssub.s32 %s16, %s28
    %s98 = ssub.s32 %s17, %s24
    %s99 = sor.u32 %s97, %s98
    %p100 = scmp.eq.s32.totalorder %s99, 0
    %s102 = sadd.s32 %s101, 1
    %s103 = scalar_select %p100, %s101, %s102
    %p106 = pneg %p100
    %p107 = scmp.eq.s32.totalorder %s9, 1
    %p108 = por %p106, %p107
    %p109 = scmp.ne.s32.totalorder %s101, %s104
    %p110 = scmp.eq.s32.totalorder %s9, 0
    %p111 = por %p109, %p110
    %p112 = scmp.ne.s32.totalorder %s101, %s104
    %p113 = scmp.eq.s32.totalorder %s14, 1
    %p114 = por %p112, %p113
    %p115 = scmp.ne.s32.totalorder %s104, %s105
    %p116 = scmp.eq.s32.totalorder %s14, 0
    %p117 = por %p115, %p116
    %p118 = scmp.ne.s32.totalorder %s104, %s105
    %p119 = scmp.eq.s32.totalorder %s15, 1
    %p120 = por %p118, %p119
    %p122 = scmp.ne.s32.totalorder %s105, %s121
    %p123 = scmp.eq.s32.totalorder %s15, 0
    %p124 = por %p122, %p123
    %p125 = scmp.le.s32.totalorder 1, %s9
    %p126 = scmp.lt.s32.totalorder %s9, 3
    %p127 = pnand %p125, %p126
    %p128 = pneg %p127
    // Predicated region
    $region9: #{_lambda_.9} parent=5 // pred_check
      _
    $region10: #{_lambda_.9} parent=5 // pred_check_branch
      %130 = sbr.rel (%p127) target = $region12
    $region11: #{_lambda_.9} parent=5 // pred_region
      %s131 = ssub.s32 %s9, 1
      // Predicated region
      $region13: #{_lambda_.9} parent=11 // pred_check
        %p132 = pneg %p68
      $region14: #{_lambda_.9} parent=11 // pred_check_branch
        %134 = sbr.rel (%p132) target = $region16
      $region15: #{_lambda_.9} parent=11 // pred_region
        _
      $region16: #{_lambda_.9} parent=11 // pred_fallthru
        _
      // Predicated region
      $region17: #{_lambda_.9} parent=11 // pred_check
        %p135 = pneg %p89
      $region18: #{_lambda_.9} parent=11 // pred_check_branch
        %137 = sbr.rel (%p135) target = $region20
      $region19: #{_lambda_.9} parent=11 // pred_region
        _
      $region20: #{_lambda_.9} parent=11 // pred_fallthru
        _
    $region12: #{_lambda_.9} parent=5 // pred_fallthru
      _
    %p138 = scmp.lt.s32.totalorder %s9, 2
    // Predicated region
    $region21: #{_lambda_.9} parent=5 // pred_check
      %p139 = pneg %p138
    $region22: #{_lambda_.9} parent=5 // pred_check_branch
      %141 = sbr.rel (%p139) target = $region24
    $region23: #{_lambda_.9} parent=5 // pred_region
      // Predicated region
      $region25: #{_lambda_.9} parent=23 // pred_check
        %p142 = pneg %p41
      $region26: #{_lambda_.9} parent=23 // pred_check_branch
        %144 = sbr.rel (%p142) target = $region28
      $region27: #{_lambda_.9} parent=23 // pred_region
        %p145 = scmp.lt.s32.totalorder %s16, 1
        %s146 = scalar_select %p145, %s16, 1
        %s147 = smul.addr %s146, 12
        %s148 = smul.addr %s147, 2
        %s149 = scalar_lea.vmem %s0, %s148
      $region28: #{_lambda_.9} parent=23 // pred_fallthru
        _
    $region24: #{_lambda_.9} parent=5 // pred_fallthru
      _
    %p150 = scmp.le.s32.totalorder 1, %s9
    %p151 = scmp.lt.s32.totalorder %s9, 3
    %p152 = pnand %p150, %p151
    %p153 = pneg %p152
    // Predicated region
    $region29: #{_lambda_.9} parent=5 // pred_check
      _
    $region30: #{_lambda_.9} parent=5 // pred_check_branch
      %155 = sbr.rel (%p152) target = $region32
    $region31: #{_lambda_.9} parent=5 // pred_region
      %s156 = ssub.s32 %s9, 1
      %p157 = scmp.lt.s32.totalorder %s18, 1
      %s158 = scalar_select %p157, %s18, 1
      %s159 = smul.addr %s158, 12
      %s160 = smul.addr %s159, 2
      %s161 = scalar_lea.vmem %s0, %s160
      %p162 = pneg %p47
      %p163 = pneg %p44
      %p164 = pneg %p68
      %p165 = pneg %p65
      %p166 = pneg %p89
      %p167 = pneg %p86
      %p168 = pneg %p117
      %p169 = pneg %p114
      %s170 = smul.u32 2, %s19
      %p171 = scmp.lt.s32.totalorder %s18, 1
      %s172 = scalar_select %p171, %s18, 1
      %p173 = scmp.lt.s32.totalorder %s170, 1
      %s174 = scalar_select %p173, %s170, 1
      %s175 = smul.addr %s172, 2
      %s176 = sadd.s32 %s174, %s175
      %s177 = scalar_lea.vmem %s3, %s176
      %p178 = scmp.lt.s32.totalorder %s18, 1
      %s179 = scalar_select %p178, %s18, 1
      %s180 = smul.addr %s179, 12
      %s181 = smul.addr %s180, 2
      %s182 = scalar_lea.vmem %s0, %s181
      %s183 = smul.u32 2, %s19
      %p184 = scmp.lt.s32.totalorder %s18, 1
      %s185 = scalar_select %p184, %s18, 1
      %p186 = scmp.lt.s32.totalorder %s183, 1
      %s187 = scalar_select %p186, %s183, 1
      %s188 = smul.addr %s185, 2
      %s189 = sadd.s32 %s187, %s188
      %s190 = scalar_lea.vmem %s3, %s189
      %s191 = smul.u32 2, %s19
      %s192 = smul.u32 %s19, 2
      %s193 = smul.u32 %s192, 4
      %s194 = smul.addr %s193, 2
      %s195 = scalar_lea.vmem %s182, %s194
      %v196 = vld [vmem:[%s195] sm:$0x1]
      %v197 = vld [vmem:[%s195 + $0x2] sm:$0x1]
      %v198 = vld [vmem:[%s195] sm:$0x3]
      %200 = vst [vmem:[#allocation1] ss:$4 sm:$0xff] %v198
      %v201 = vld.sshfl [vmem:[#allocation1] sm:$0xff pattern:$0x73625140]
      %v202 = vshrl.u32 %v201, 16
      %v204 = vshll.u32 %v201, 16
      %v206 = vrot.slane %v204, 1
      %v207 = vor.u32 %v202, %v206
      %v209 = vld [vmem:[%s1] sm:$0xf]
      %v210 = vld [vmem:[%s1 + $0x4] sm:$0xf]
      %v211 = vld [vmem:[%s1 + $0x8] sm:$0xf]
      %v212 = vld [vmem:[%s1 + $0xc] sm:$0xf]
      %v213 = vld [vmem:[%s1 + $0x10] sm:$0xf]
      %v214 = vld [vmem:[%s1 + $0x14] sm:$0xf]
      %v215 = vld [vmem:[%s1 + $0x18] sm:$0xf]
      %v216 = vld [vmem:[%s1 + $0x1c] sm:$0xf]
      %v217 = vld [vmem:[%s1 + $0x20] sm:$0xf]
      %v218 = vld [vmem:[%s1 + $0x24] sm:$0xf]
      %v219 = vld [vmem:[%s1 + $0x28] sm:$0xf]
      %v220 = vld [vmem:[%s1 + $0x2c] sm:$0xf]
      %v221 = vld [vmem:[%s1 + $0x30] sm:$0xf]
      %v222 = vld [vmem:[%s1 + $0x34] sm:$0xf]
      %v223 = vld [vmem:[%s1 + $0x38] sm:$0xf]
      %v224 = vld [vmem:[%s1 + $0x3c] sm:$0xf]
      %v225 = vld [vmem:[%s1 + $0x40] sm:$0xf]
      %v226 = vld [vmem:[%s1 + $0x44] sm:$0xf]
      %v227 = vld [vmem:[%s1 + $0x48] sm:$0xf]
      %v228 = vld [vmem:[%s1 + $0x4c] sm:$0xf]
      %v229 = vld [vmem:[%s1 + $0x50] sm:$0xf]
      %v230 = vld [vmem:[%s1 + $0x54] sm:$0xf]
      %v231 = vld [vmem:[%s1 + $0x58] sm:$0xf]
      %v232 = vld [vmem:[%s1 + $0x5c] sm:$0xf]
      %v233 = vld [vmem:[%s1 + $0x60] sm:$0xf]
      %v234 = vld [vmem:[%s1 + $0x64] sm:$0xf]
      %v235 = vld [vmem:[%s1 + $0x68] sm:$0xf]
      %v236 = vld [vmem:[%s1 + $0x6c] sm:$0xf]
      %v237 = vld [vmem:[%s1 + $0x70] sm:$0xf]
      %v238 = vld [vmem:[%s1 + $0x74] sm:$0xf]
      %v239 = vld [vmem:[%s1 + $0x78] sm:$0xf]
      %v240 = vld [vmem:[%s1 + $0x7c] sm:$0xf]
      %v241 = vld [vmem:[%s1 + $0x80] sm:$0xf]
      %v242 = vld [vmem:[%s1 + $0x84] sm:$0xf]
      %v243 = vld [vmem:[%s1 + $0x88] sm:$0xf]
      %v244 = vld [vmem:[%s1 + $0x8c] sm:$0xf]
      %v245 = vld [vmem:[%s1 + $0x90] sm:$0xf]
      %v246 = vld [vmem:[%s1 + $0x94] sm:$0xf]
      %v247 = vld [vmem:[%s1 + $0x98] sm:$0xf]
      %v248 = vld [vmem:[%s1 + $0x9c] sm:$0xf]
      %v249 = vld [vmem:[%s1 + $0xa0] sm:$0xf]
      %v250 = vld [vmem:[%s1 + $0xa4] sm:$0xf]
      %v251 = vld [vmem:[%s1 + $0xa8] sm:$0xf]
      %v252 = vld [vmem:[%s1 + $0xac] sm:$0xf]
      %v253 = vld [vmem:[%s1 + $0xb0] sm:$0xf]
      %v254 = vld [vmem:[%s1 + $0xb4] sm:$0xf]
      %v255 = vld [vmem:[%s1 + $0xb8] sm:$0xf]
      %v256 = vld [vmem:[%s1 + $0xbc] sm:$0xf]
      %v257 = vld [vmem:[%s195 + $0x4] sm:$0x1]
      %v258 = vld [vmem:[%s195 + $0x6] sm:$0x1]
      %v259 = vld [vmem:[%s195 + $0x4] sm:$0x3]
      %261 = vst [vmem:[#allocation1] ss:$4 sm:$0xff] %v259
      %v262 = vld.sshfl [vmem:[#allocation1] sm:$0xff pattern:$0x73625140]
      %v263 = vshrl.u32 %v262, 16
      %v265 = vshll.u32 %v262, 16
      %v267 = vrot.slane %v265, 1
      %v268 = vor.u32 %v263, %v267
      %s270 = scalar_lea.vmem %s1, 192
      %v271 = vld [vmem:[%s270] sm:$0xf]
      %v272 = vld [vmem:[%s270 + $0x4] sm:$0xf]
      %v273 = vld [vmem:[%s270 + $0x8] sm:$0xf]
      %v274 = vld [vmem:[%s270 + $0xc] sm:$0xf]
      %v275 = vld [vmem:[%s270 + $0x10] sm:$0xf]
      %v276 = vld [vmem:[%s270 + $0x14] sm:$0xf]
      %v277 = vld [vmem:[%s270 + $0x18] sm:$0xf]
      %v278 = vld [vmem:[%s270 + $0x1c] sm:$0xf]
      %v279 = vld [vmem:[%s270 + $0x20] sm:$0xf]
      %v280 = vld [vmem:[%s270 + $0x24] sm:$0xf]
      %v281 = vld [vmem:[%s270 + $0x28] sm:$0xf]
      %v282 = vld [vmem:[%s270 + $0x2c] sm:$0xf]
      %v283 = vld [vmem:[%s270 + $0x30] sm:$0xf]
      %v284 = vld [vmem:[%s270 + $0x34] sm:$0xf]
      %v285 = vld [vmem:[%s270 + $0x38] sm:$0xf]
      %v286 = vld [vmem:[%s270 + $0x3c] sm:$0xf]
      %v287 = vld [vmem:[%s270 + $0x40] sm:$0xf]
      %v288 = vld [vmem:[%s270 + $0x44] sm:$0xf]
      %v289 = vld [vmem:[%s270 + $0x48] sm:$0xf]
      %v290 = vld [vmem:[%s270 + $0x4c] sm:$0xf]
      %v291 = vld [vmem:[%s270 + $0x50] sm:$0xf]
      %v292 = vld [vmem:[%s270 + $0x54] sm:$0xf]
      %v293 = vld [vmem:[%s270 + $0x58] sm:$0xf]
      %v294 = vld [vmem:[%s270 + $0x5c] sm:$0xf]
      %v295 = vld [vmem:[%s270 + $0x60] sm:$0xf]
      %v296 = vld [vmem:[%s270 + $0x64] sm:$0xf]
      %v297 = vld [vmem:[%s270 + $0x68] sm:$0xf]
      %v298 = vld [vmem:[%s270 + $0x6c] sm:$0xf]
      %v299 = vld [vmem:[%s270 + $0x70] sm:$0xf]
      %v300 = vld [vmem:[%s270 + $0x74] sm:$0xf]
      %v301 = vld [vmem:[%s270 + $0x78] sm:$0xf]
      %v302 = vld [vmem:[%s270 + $0x7c] sm:$0xf]
      %v303 = vld [vmem:[%s270 + $0x80] sm:$0xf]
      %v304 = vld [vmem:[%s270 + $0x84] sm:$0xf]
      %v305 = vld [vmem:[%s270 + $0x88] sm:$0xf]
      %v306 = vld [vmem:[%s270 + $0x8c] sm:$0xf]
      %v307 = vld [vmem:[%s270 + $0x90] sm:$0xf]
      %v308 = vld [vmem:[%s270 + $0x94] sm:$0xf]
      %v309 = vld [vmem:[%s270 + $0x98] sm:$0xf]
      %v310 = vld [vmem:[%s270 + $0x9c] sm:$0xf]
      %v311 = vld [vmem:[%s270 + $0xa0] sm:$0xf]
      %v312 = vld [vmem:[%s270 + $0xa4] sm:$0xf]
      %v313 = vld [vmem:[%s270 + $0xa8] sm:$0xf]
      %v314 = vld [vmem:[%s270 + $0xac] sm:$0xf]
      %v315 = vld [vmem:[%s270 + $0xb0] sm:$0xf]
      %v316 = vld [vmem:[%s270 + $0xb4] sm:$0xf]
      %v317 = vld [vmem:[%s270 + $0xb8] sm:$0xf]
      %v318 = vld [vmem:[%s270 + $0xbc] sm:$0xf]
      %v367 = vunpack.c.l.b16 %v271
      %v368 = vunpack.c.l.b16 %v272
      %v369 = vunpack.c.l.b16 %v273
      %v370 = vunpack.c.l.b16 %v274
      %v371 = vunpack.c.l.b16 %v275
      %v372 = vunpack.c.l.b16 %v276
      %v373 = vunpack.c.l.b16 %v277
      %v374 = vunpack.c.l.b16 %v278
      %v375 = vunpack.c.l.b16 %v279
      %v376 = vunpack.c.l.b16 %v280
      %v377 = vunpack.c.l.b16 %v281
      %v378 = vunpack.c.l.b16 %v282
      %v379 = vunpack.c.l.b16 %v283
      %v380 = vunpack.c.l.b16 %v284
      %v381 = vunpack.c.l.b16 %v285
      %v382 = vunpack.c.l.b16 %v286
      %v383 = vunpack.c.l.b16 %v287
      %v384 = vunpack.c.l.b16 %v288
      %v385 = vunpack.c.l.b16 %v289
      %v386 = vunpack.c.l.b16 %v290
      %v387 = vunpack.c.l.b16 %v291
      %v388 = vunpack.c.l.b16 %v292
      %v389 = vunpack.c.l.b16 %v293
      %v390 = vunpack.c.l.b16 %v294
      %v391 = vunpack.c.l.b16 %v295
      %v392 = vunpack.c.l.b16 %v296
      %v393 = vunpack.c.l.b16 %v297
      %v394 = vunpack.c.l.b16 %v298
      %v395 = vunpack.c.l.b16 %v299
      %v396 = vunpack.c.l.b16 %v300
      %v397 = vunpack.c.l.b16 %v301
      %v398 = vunpack.c.l.b16 %v302
      %v399 = vunpack.c.l.b16 %v303
      %v400 = vunpack.c.l.b16 %v304
      %v401 = vunpack.c.l.b16 %v305
      %v402 = vunpack.c.l.b16 %v306
      %v403 = vunpack.c.l.b16 %v307
      %v404 = vunpack.c.l.b16 %v308
      %v405 = vunpack.c.l.b16 %v309
      %v406 = vunpack.c.l.b16 %v310
      %v407 = vunpack.c.l.b16 %v311
      %v408 = vunpack.c.l.b16 %v312
      %v409 = vunpack.c.l.b16 %v313
      %v410 = vunpack.c.l.b16 %v314
      %v411 = vunpack.c.l.b16 %v315
      %v412 = vunpack.c.l.b16 %v316
      %v413 = vunpack.c.l.b16 %v317
      %v414 = vunpack.c.l.b16 %v318
      %v415 = vpack.c.b16 %v368, %v367
      %v416 = vpack.c.b16 %v370, %v369
      %v417 = vpack.c.b16 %v372, %v371
      %v418 = vpack.c.b16 %v374, %v373
      %v419 = vpack.c.b16 %v376, %v375
      %v420 = vpack.c.b16 %v378, %v377
      %v421 = vpack.c.b16 %v380, %v379
      %v422 = vpack.c.b16 %v382, %v381
      %v423 = vpack.c.b16 %v384, %v383
      %v424 = vpack.c.b16 %v386, %v385
      %v425 = vpack.c.b16 %v388, %v387
      %v426 = vpack.c.b16 %v390, %v389
      %v427 = vpack.c.b16 %v392, %v391
      %v428 = vpack.c.b16 %v394, %v393
      %v429 = vpack.c.b16 %v396, %v395
      %v430 = vpack.c.b16 %v398, %v397
      %v431 = vpack.c.b16 %v400, %v399
      %v432 = vpack.c.b16 %v402, %v401
      %v433 = vpack.c.b16 %v404, %v403
      %v434 = vpack.c.b16 %v406, %v405
      %v435 = vpack.c.b16 %v408, %v407
      %v436 = vpack.c.b16 %v410, %v409
      %v437 = vpack.c.b16 %v412, %v411
      %v438 = vpack.c.b16 %v414, %v413
      %463 = vmatpush.bf16.msra.mxu0 %v422
      %464 = vmatpush.bf16.msra.mxu0 %v421
      %465 = vmatpush.bf16.msra.mxu0 %v420
      %466 = vmatpush.bf16.msra.mxu0 %v419
      %467 = vmatpush.bf16.msra.mxu0 %v418
      %468 = vmatpush.bf16.msra.mxu0 %v417
      %469 = vmatpush.bf16.msra.mxu0 %v416
      %470 = vmatpush.bf16.msra.mxu0 %v415
      %471 = vmatmul.bf16.gmra.mxu0 %v257
      %v472 = vpop.f32.mrf.mxu0
      %v473 = vadd.f32 0.0, %v472
      %v474 = vpop.f32.mrf.mxu0
      %475 = vdwg.mxu0
      %476 = vmatpush.bf16.msra.mxu0 %v430
      %477 = vmatpush.bf16.msra.mxu0 %v429
      %478 = vmatpush.bf16.msra.mxu0 %v428
      %479 = vmatpush.bf16.msra.mxu0 %v427
      %480 = vmatpush.bf16.msra.mxu0 %v426
      %481 = vmatpush.bf16.msra.mxu0 %v425
      %482 = vmatpush.bf16.msra.mxu0 %v424
      %483 = vmatpush.bf16.msra.mxu0 %v423
      %484 = vmatmul.bf16.gmra.mxu0 %v258
      %v485 = vpop.f32.mrf.mxu0
      %v486 = vadd.f32 %v473, %v485
      %v487 = vpop.f32.mrf.mxu0
      %488 = vdwg.mxu0
      %489 = vmatpush.bf16.msra.mxu0 %v438
      %490 = vmatpush.bf16.msra.mxu0 %v437
      %491 = vmatpush.bf16.msra.mxu0 %v436
      %492 = vmatpush.bf16.msra.mxu0 %v435
      %493 = vmatpush.bf16.msra.mxu0 %v434
      %494 = vmatpush.bf16.msra.mxu0 %v433
      %495 = vmatpush.bf16.msra.mxu0 %v432
      %496 = vmatpush.bf16.msra.mxu0 %v431
      %497 = vmatmul.bf16.gmra.mxu0 %v268
      %v498 = vpop.f32.mrf.mxu0
      %v499 = vadd.f32 %v486, %v498
      %v500 = vpop.f32.mrf.mxu0
      %501 = vdwg.mxu0
      %v550 = vunpack.c.l.b16 %v209
      %v551 = vunpack.c.l.b16 %v210
      %v552 = vunpack.c.l.b16 %v211
      %v553 = vunpack.c.l.b16 %v212
      %v554 = vunpack.c.l.b16 %v213
      %v555 = vunpack.c.l.b16 %v214
      %v556 = vunpack.c.l.b16 %v215
      %v557 = vunpack.c.l.b16 %v216
      %v558 = vunpack.c.l.b16 %v217
      %v559 = vunpack.c.l.b16 %v218
      %v560 = vunpack.c.l.b16 %v219
      %v561 = vunpack.c.l.b16 %v220
      %v562 = vunpack.c.l.b16 %v221
      %v563 = vunpack.c.l.b16 %v222
      %v564 = vunpack.c.l.b16 %v223
      %v565 = vunpack.c.l.b16 %v224
      %v566 = vunpack.c.l.b16 %v225
      %v567 = vunpack.c.l.b16 %v226
      %v568 = vunpack.c.l.b16 %v227
      %v569 = vunpack.c.l.b16 %v228
      %v570 = vunpack.c.l.b16 %v229
      %v571 = vunpack.c.l.b16 %v230
      %v572 = vunpack.c.l.b16 %v231
      %v573 = vunpack.c.l.b16 %v232
      %v574 = vunpack.c.l.b16 %v233
      %v575 = vunpack.c.l.b16 %v234
      %v576 = vunpack.c.l.b16 %v235
      %v577 = vunpack.c.l.b16 %v236
      %v578 = vunpack.c.l.b16 %v237
      %v579 = vunpack.c.l.b16 %v238
      %v580 = vunpack.c.l.b16 %v239
      %v581 = vunpack.c.l.b16 %v240
      %v582 = vunpack.c.l.b16 %v241
      %v583 = vunpack.c.l.b16 %v242
      %v584 = vunpack.c.l.b16 %v243
      %v585 = vunpack.c.l.b16 %v244
      %v586 = vunpack.c.l.b16 %v245
      %v587 = vunpack.c.l.b16 %v246
      %v588 = vunpack.c.l.b16 %v247
      %v589 = vunpack.c.l.b16 %v248
      %v590 = vunpack.c.l.b16 %v249
      %v591 = vunpack.c.l.b16 %v250
      %v592 = vunpack.c.l.b16 %v251
      %v593 = vunpack.c.l.b16 %v252
      %v594 = vunpack.c.l.b16 %v253
      %v595 = vunpack.c.l.b16 %v254
      %v596 = vunpack.c.l.b16 %v255
      %v597 = vunpack.c.l.b16 %v256
      %v598 = vpack.c.b16 %v551, %v550
      %v599 = vpack.c.b16 %v553, %v552
      %v600 = vpack.c.b16 %v555, %v554
      %v601 = vpack.c.b16 %v557, %v556
      %v602 = vpack.c.b16 %v559, %v558
      %v603 = vpack.c.b16 %v561, %v560
      %v604 = vpack.c.b16 %v563, %v562
      %v605 = vpack.c.b16 %v565, %v564
      %v606 = vpack.c.b16 %v567, %v566
      %v607 = vpack.c.b16 %v569, %v568
      %v608 = vpack.c.b16 %v571, %v570
      %v609 = vpack.c.b16 %v573, %v572
      %v610 = vpack.c.b16 %v575, %v574
      %v611 = vpack.c.b16 %v577, %v576
      %v612 = vpack.c.b16 %v579, %v578
      %v613 = vpack.c.b16 %v581, %v580
      %v614 = vpack.c.b16 %v583, %v582
      %v615 = vpack.c.b16 %v585, %v584
      %v616 = vpack.c.b16 %v587, %v586
      %v617 = vpack.c.b16 %v589, %v588
      %v618 = vpack.c.b16 %v591, %v590
      %v619 = vpack.c.b16 %v593, %v592
      %v620 = vpack.c.b16 %v595, %v594
      %v621 = vpack.c.b16 %v597, %v596
      %646 = vmatpush.bf16.msra.mxu0 %v605
      %647 = vmatpush.bf16.msra.mxu0 %v604
      %648 = vmatpush.bf16.msra.mxu0 %v603
      %649 = vmatpush.bf16.msra.mxu0 %v602
      %650 = vmatpush.bf16.msra.mxu0 %v601
      %651 = vmatpush.bf16.msra.mxu0 %v600
      %652 = vmatpush.bf16.msra.mxu0 %v599
      %653 = vmatpush.bf16.msra.mxu0 %v598
      %654 = vmatmul.bf16.gmra.mxu0 %v196
      %v655 = vpop.f32.mrf.mxu0
      %v656 = vadd.f32 %v499, %v655
      %v657 = vpop.f32.mrf.mxu0
      %658 = vdwg.mxu0
      %659 = vmatpush.bf16.msra.mxu0 %v613
      %660 = vmatpush.bf16.msra.mxu0 %v612
      %661 = vmatpush.bf16.msra.mxu0 %v611
      %662 = vmatpush.bf16.msra.mxu0 %v610
      %663 = vmatpush.bf16.msra.mxu0 %v609
      %664 = vmatpush.bf16.msra.mxu0 %v608
      %665 = vmatpush.bf16.msra.mxu0 %v607
      %666 = vmatpush.bf16.msra.mxu0 %v606
      %667 = vmatmul.bf16.gmra.mxu0 %v197
      %v668 = vpop.f32.mrf.mxu0
      %v669 = vadd.f32 %v656, %v668
      %v670 = vpop.f32.mrf.mxu0
      %671 = vdwg.mxu0
      %672 = vmatpush.bf16.msra.mxu0 %v621
      %673 = vmatpush.bf16.msra.mxu0 %v620
      %674 = vmatpush.bf16.msra.mxu0 %v619
      %675 = vmatpush.bf16.msra.mxu0 %v618
      %676 = vmatpush.bf16.msra.mxu0 %v617
      %677 = vmatpush.bf16.msra.mxu0 %v616
      %678 = vmatpush.bf16.msra.mxu0 %v615
      %679 = vmatpush.bf16.msra.mxu0 %v614
      %680 = vmatmul.bf16.gmra.mxu0 %v207
      %v681 = vpop.f32.mrf.mxu0
      %v682 = vadd.f32 %v669, %v681
      %v683 = vpop.f32.mrf.mxu0
      %684 = vdwg.mxu0
      %s685 = sadd.s32 %s192, 1
      %s686 = smul.u32 %s685, 4
      %s687 = smul.addr %s686, 2
      %s688 = scalar_lea.vmem %s182, %s687
      %v689 = vld [vmem:[%s688] sm:$0x1]
      %v690 = vld [vmem:[%s688 + $0x2] sm:$0x1]
      %v691 = vld [vmem:[%s688] sm:$0x3]
      %693 = vst [vmem:[#allocation1] ss:$4 sm:$0xff] %v691
      %v694 = vld.sshfl [vmem:[#allocation1] sm:$0xff pattern:$0x73625140]
      %v695 = vshrl.u32 %v694, 16
      %v697 = vshll.u32 %v694, 16
      %v699 = vrot.slane %v697, 1
      %v700 = vor.u32 %v695, %v699
      %s702 = scalar_lea.vmem %s1, 384
      %v703 = vld [vmem:[%s702] sm:$0xf]
      %v704 = vld [vmem:[%s702 + $0x4] sm:$0xf]
      %v705 = vld [vmem:[%s702 + $0x8] sm:$0xf]
      %v706 = vld [vmem:[%s702 + $0xc] sm:$0xf]
      %v707 = vld [vmem:[%s702 + $0x10] sm:$0xf]
      %v708 = vld [vmem:[%s702 + $0x14] sm:$0xf]
      %v709 = vld [vmem:[%s702 + $0x18] sm:$0xf]
      %v710 = vld [vmem:[%s702 + $0x1c] sm:$0xf]
      %v711 = vld [vmem:[%s702 + $0x20] sm:$0xf]
      %v712 = vld [vmem:[%s702 + $0x24] sm:$0xf]
      %v713 = vld [vmem:[%s702 + $0x28] sm:$0xf]
      %v714 = vld [vmem:[%s702 + $0x2c] sm:$0xf]
      %v715 = vld [vmem:[%s702 + $0x30] sm:$0xf]
      %v716 = vld [vmem:[%s702 + $0x34] sm:$0xf]
      %v717 = vld [vmem:[%s702 + $0x38] sm:$0xf]
      %v718 = vld [vmem:[%s702 + $0x3c] sm:$0xf]
      %v719 = vld [vmem:[%s702 + $0x40] sm:$0xf]
      %v720 = vld [vmem:[%s702 + $0x44] sm:$0xf]
      %v721 = vld [vmem:[%s702 + $0x48] sm:$0xf]
      %v722 = vld [vmem:[%s702 + $0x4c] sm:$0xf]
      %v723 = vld [vmem:[%s702 + $0x50] sm:$0xf]
      %v724 = vld [vmem:[%s702 + $0x54] sm:$0xf]
      %v725 = vld [vmem:[%s702 + $0x58] sm:$0xf]
      %v726 = vld [vmem:[%s702 + $0x5c] sm:$0xf]
      %v727 = vld [vmem:[%s702 + $0x60] sm:$0xf]
      %v728 = vld [vmem:[%s702 + $0x64] sm:$0xf]
      %v729 = vld [vmem:[%s702 + $0x68] sm:$0xf]
      %v730 = vld [vmem:[%s702 + $0x6c] sm:$0xf]
      %v731 = vld [vmem:[%s702 + $0x70] sm:$0xf]
      %v732 = vld [vmem:[%s702 + $0x74] sm:$0xf]
      %v733 = vld [vmem:[%s702 + $0x78] sm:$0xf]
      %v734 = vld [vmem:[%s702 + $0x7c] sm:$0xf]
      %v735 = vld [vmem:[%s702 + $0x80] sm:$0xf]
      %v736 = vld [vmem:[%s702 + $0x84] sm:$0xf]
      %v737 = vld [vmem:[%s702 + $0x88] sm:$0xf]
      %v738 = vld [vmem:[%s702 + $0x8c] sm:$0xf]
      %v739 = vld [vmem:[%s702 + $0x90] sm:$0xf]
      %v740 = vld [vmem:[%s702 + $0x94] sm:$0xf]
      %v741 = vld [vmem:[%s702 + $0x98] sm:$0xf]
      %v742 = vld [vmem:[%s702 + $0x9c] sm:$0xf]
      %v743 = vld [vmem:[%s702 + $0xa0] sm:$0xf]
      %v744 = vld [vmem:[%s702 + $0xa4] sm:$0xf]
      %v745 = vld [vmem:[%s702 + $0xa8] sm:$0xf]
      %v746 = vld [vmem:[%s702 + $0xac] sm:$0xf]
      %v747 = vld [vmem:[%s702 + $0xb0] sm:$0xf]
      %v748 = vld [vmem:[%s702 + $0xb4] sm:$0xf]
      %v749 = vld [vmem:[%s702 + $0xb8] sm:$0xf]
      %v750 = vld [vmem:[%s702 + $0xbc] sm:$0xf]
      %v799 = vunpack.c.l.b16 %v703
      %v800 = vunpack.c.l.b16 %v704
      %v801 = vunpack.c.l.b16 %v705
      %v802 = vunpack.c.l.b16 %v706
      %v803 = vunpack.c.l.b16 %v707
      %v804 = vunpack.c.l.b16 %v708
      %v805 = vunpack.c.l.b16 %v709
      %v806 = vunpack.c.l.b16 %v710
      %v807 = vunpack.c.l.b16 %v711
      %v808 = vunpack.c.l.b16 %v712
      %v809 = vunpack.c.l.b16 %v713
      %v810 = vunpack.c.l.b16 %v714
      %v811 = vunpack.c.l.b16 %v715
      %v812 = vunpack.c.l.b16 %v716
      %v813 = vunpack.c.l.b16 %v717
      %v814 = vunpack.c.l.b16 %v718
      %v815 = vunpack.c.l.b16 %v719
      %v816 = vunpack.c.l.b16 %v720
      %v817 = vunpack.c.l.b16 %v721
      %v818 = vunpack.c.l.b16 %v722
      %v819 = vunpack.c.l.b16 %v723
      %v820 = vunpack.c.l.b16 %v724
      %v821 = vunpack.c.l.b16 %v725
      %v822 = vunpack.c.l.b16 %v726
      %v823 = vunpack.c.l.b16 %v727
      %v824 = vunpack.c.l.b16 %v728
      %v825 = vunpack.c.l.b16 %v729
      %v826 = vunpack.c.l.b16 %v730
      %v827 = vunpack.c.l.b16 %v731
      %v828 = vunpack.c.l.b16 %v732
      %v829 = vunpack.c.l.b16 %v733
      %v830 = vunpack.c.l.b16 %v734
      %v831 = vunpack.c.l.b16 %v735
      %v832 = vunpack.c.l.b16 %v736
      %v833 = vunpack.c.l.b16 %v737
      %v834 = vunpack.c.l.b16 %v738
      %v835 = vunpack.c.l.b16 %v739
      %v836 = vunpack.c.l.b16 %v740
      %v837 = vunpack.c.l.b16 %v741
      %v838 = vunpack.c.l.b16 %v742
      %v839 = vunpack.c.l.b16 %v743
      %v840 = vunpack.c.l.b16 %v744
      %v841 = vunpack.c.l.b16 %v745
      %v842 = vunpack.c.l.b16 %v746
      %v843 = vunpack.c.l.b16 %v747
      %v844 = vunpack.c.l.b16 %v748
      %v845 = vunpack.c.l.b16 %v749
      %v846 = vunpack.c.l.b16 %v750
      %v847 = vpack.c.b16 %v800, %v799
      %v848 = vpack.c.b16 %v802, %v801
      %v849 = vpack.c.b16 %v804, %v803
      %v850 = vpack.c.b16 %v806, %v805
      %v851 = vpack.c.b16 %v808, %v807
      %v852 = vpack.c.b16 %v810, %v809
      %v853 = vpack.c.b16 %v812, %v811
      %v854 = vpack.c.b16 %v814, %v813
      %v855 = vpack.c.b16 %v816, %v815
      %v856 = vpack.c.b16 %v818, %v817
      %v857 = vpack.c.b16 %v820, %v819
      %v858 = vpack.c.b16 %v822, %v821
      %v859 = vpack.c.b16 %v824, %v823
      %v860 = vpack.c.b16 %v826, %v825
      %v861 = vpack.c.b16 %v828, %v827
      %v862 = vpack.c.b16 %v830, %v829
      %v863 = vpack.c.b16 %v832, %v831
      %v864 = vpack.c.b16 %v834, %v833
      %v865 = vpack.c.b16 %v836, %v835
      %v866 = vpack.c.b16 %v838, %v837
      %v867 = vpack.c.b16 %v840, %v839
      %v868 = vpack.c.b16 %v842, %v841
      %v869 = vpack.c.b16 %v844, %v843
      %v870 = vpack.c.b16 %v846, %v845
      %895 = vmatpush.bf16.msra.mxu0 %v854
      %896 = vmatpush.bf16.msra.mxu0 %v853
      %897 = vmatpush.bf16.msra.mxu0 %v852
      %898 = vmatpush.bf16.msra.mxu0 %v851
      %899 = vmatpush.bf16.msra.mxu0 %v850
      %900 = vmatpush.bf16.msra.mxu0 %v849
      %901 = vmatpush.bf16.msra.mxu0 %v848
      %902 = vmatpush.bf16.msra.mxu0 %v847
      %903 = vmatmul.bf16.gmra.mxu0 %v689
      %v904 = vpop.f32.mrf.mxu0
      %v905 = vadd.f32 0.0, %v904
      %v906 = vpop.f32.mrf.mxu0
      %907 = vdwg.mxu0
      %908 = vmatpush.bf16.msra.mxu0 %v862
      %909 = vmatpush.bf16.msra.mxu0 %v861
      %910 = vmatpush.bf16.msra.mxu0 %v860
      %911 = vmatpush.bf16.msra.mxu0 %v859
      %912 = vmatpush.bf16.msra.mxu0 %v858
      %913 = vmatpush.bf16.msra.mxu0 %v857
      %914 = vmatpush.bf16.msra.mxu0 %v856
      %915 = vmatpush.bf16.msra.mxu0 %v855
      %916 = vmatmul.bf16.gmra.mxu0 %v690
      %v917 = vpop.f32.mrf.mxu0
      %v918 = vadd.f32 %v905, %v917
      %v919 = vpop.f32.mrf.mxu0
      %920 = vdwg.mxu0
      %921 = vmatpush.bf16.msra.mxu0 %v870
      %922 = vmatpush.bf16.msra.mxu0 %v869
      %923 = vmatpush.bf16.msra.mxu0 %v868
      %924 = vmatpush.bf16.msra.mxu0 %v867
      %925 = vmatpush.bf16.msra.mxu0 %v866
      %926 = vmatpush.bf16.msra.mxu0 %v865
      %927 = vmatpush.bf16.msra.mxu0 %v864
      %928 = vmatpush.bf16.msra.mxu0 %v863
      %929 = vmatmul.bf16.gmra.mxu0 %v700
      %v930 = vpop.f32.mrf.mxu0
      %v931 = vadd.f32 %v918, %v930
      %v932 = vpop.f32.mrf.mxu0
      %933 = vdwg.mxu0
      %v934 = vadd.f32 %v682, %v931
      %v935 = vld [vmem:[%s2] sm:$0x1]
      %v937 = vperm.slane %v935, 0
      %v939 = vadd.f32 %v934, %v937
      %vm940 = vcmp.ge.f32.partialorder %v939, 0.0
      %v941 = vmul.f32 %v939, 0.01
      %v942 = vsel %vm940, %v939, %v941
      %v943 = vld [vmem:[%s688 + $0x4] sm:$0x1]
      %v944 = vld [vmem:[%s688 + $0x6] sm:$0x1]
      %v945 = vld [vmem:[%s688 + $0x4] sm:$0x3]
      %947 = vst [vmem:[#allocation1] ss:$4 sm:$0xff] %v945
      %v948 = vld.sshfl [vmem:[#allocation1] sm:$0xff pattern:$0x73625140]
      %v949 = vshrl.u32 %v948, 16
      %v951 = vshll.u32 %v948, 16
      %v953 = vrot.slane %v951, 1
      %v954 = vor.u32 %v949, %v953
      %956 = vmatpush.bf16.msra.mxu0 %v422
      %957 = vmatpush.bf16.msra.mxu0 %v421
      %958 = vmatpush.bf16.msra.mxu0 %v420
      %959 = vmatpush.bf16.msra.mxu0 %v419
      %960 = vmatpush.bf16.msra.mxu0 %v418
      %961 = vmatpush.bf16.msra.mxu0 %v417
      %962 = vmatpush.bf16.msra.mxu0 %v416
      %963 = vmatpush.bf16.msra.mxu0 %v415
      %964 = vmatmul.bf16.gmra.mxu0 %v943
      %v965 = vpop.f32.mrf.mxu0
      %v966 = vadd.f32 0.0, %v965
      %v967 = vpop.f32.mrf.mxu0
      %968 = vdwg.mxu0
      %969 = vmatpush.bf16.msra.mxu0 %v430
      %970 = vmatpush.bf16.msra.mxu0 %v429
      %971 = vmatpush.bf16.msra.mxu0 %v428
      %972 = vmatpush.bf16.msra.mxu0 %v427
      %973 = vmatpush.bf16.msra.mxu0 %v426
      %974 = vmatpush.bf16.msra.mxu0 %v425
      %975 = vmatpush.bf16.msra.mxu0 %v424
      %976 = vmatpush.bf16.msra.mxu0 %v423
      %977 = vmatmul.bf16.gmra.mxu0 %v944
      %v978 = vpop.f32.mrf.mxu0
      %v979 = vadd.f32 %v966, %v978
      %v980 = vpop.f32.mrf.mxu0
      %981 = vdwg.mxu0
      %982 = vmatpush.bf16.msra.mxu0 %v438
      %983 = vmatpush.bf16.msra.mxu0 %v437
      %984 = vmatpush.bf16.msra.mxu0 %v436
      %985 = vmatpush.bf16.msra.mxu0 %v435
      %986 = vmatpush.bf16.msra.mxu0 %v434
      %987 = vmatpush.bf16.msra.mxu0 %v433
      %988 = vmatpush.bf16.msra.mxu0 %v432
      %989 = vmatpush.bf16.msra.mxu0 %v431
      %990 = vmatmul.bf16.gmra.mxu0 %v954
      %v991 = vpop.f32.mrf.mxu0
      %v992 = vadd.f32 %v979, %v991
      %v993 = vpop.f32.mrf.mxu0
      %994 = vdwg.mxu0
      %995 = vmatpush.bf16.msra.mxu0 %v605
      %996 = vmatpush.bf16.msra.mxu0 %v604
      %997 = vmatpush.bf16.msra.mxu0 %v603
      %998 = vmatpush.bf16.msra.mxu0 %v602
      %999 = vmatpush.bf16.msra.mxu0 %v601
      %1000 = vmatpush.bf16.msra.mxu0 %v600
      %1001 = vmatpush.bf16.msra.mxu0 %v599
      %1002 = vmatpush.bf16.msra.mxu0 %v598
      %1003 = vmatmul.bf16.gmra.mxu0 %v689
      %v1004 = vpop.f32.mrf.mxu0
      %v1005 = vadd.f32 %v992, %v1004
      %v1006 = vpop.f32.mrf.mxu0
      %1007 = vdwg.mxu0
      %1008 = vmatpush.bf16.msra.mxu0 %v613
      %1009 = vmatpush.bf16.msra.mxu0 %v612
      %1010 = vmatpush.bf16.msra.mxu0 %v611
      %1011 = vmatpush.bf16.msra.mxu0 %v610
      %1012 = vmatpush.bf16.msra.mxu0 %v609
      %1013 = vmatpush.bf16.msra.mxu0 %v608
      %1014 = vmatpush.bf16.msra.mxu0 %v607
      %1015 = vmatpush.bf16.msra.mxu0 %v606
      %1016 = vmatmul.bf16.gmra.mxu0 %v690
      %v1017 = vpop.f32.mrf.mxu0
      %v1018 = vadd.f32 %v1005, %v1017
      %v1019 = vpop.f32.mrf.mxu0
      %1020 = vdwg.mxu0
      %1021 = vmatpush.bf16.msra.mxu0 %v621
      %1022 = vmatpush.bf16.msra.mxu0 %v620
      %1023 = vmatpush.bf16.msra.mxu0 %v619
      %1024 = vmatpush.bf16.msra.mxu0 %v618
      %1025 = vmatpush.bf16.msra.mxu0 %v617
      %1026 = vmatpush.bf16.msra.mxu0 %v616
      %1027 = vmatpush.bf16.msra.mxu0 %v615
      %1028 = vmatpush.bf16.msra.mxu0 %v614
      %1029 = vmatmul.bf16.gmra.mxu0 %v700
      %v1030 = vpop.f32.mrf.mxu0
      %v1031 = vadd.f32 %v1018, %v1030
      %v1032 = vpop.f32.mrf.mxu0
      %1033 = vdwg.mxu0
      %s1034 = sadd.s32 %s192, 2
      %s1035 = smul.u32 %s1034, 4
      %s1036 = smul.addr %s1035, 2
      %s1037 = scalar_lea.vmem %s182, %s1036
      %v1038 = vld [vmem:[%s1037] sm:$0x1]
      %v1039 = vld [vmem:[%s1037 + $0x2] sm:$0x1]
      %v1040 = vld [vmem:[%s1037] sm:$0x3]
      %1042 = vst [vmem:[#allocation1] ss:$4 sm:$0xff] %v1040
      %v1043 = vld.sshfl [vmem:[#allocation1] sm:$0xff pattern:$0x73625140]
      %v1044 = vshrl.u32 %v1043, 16
      %v1046 = vshll.u32 %v1043, 16
      %v1048 = vrot.slane %v1046, 1
      %v1049 = vor.u32 %v1044, %v1048
      %1051 = vmatpush.bf16.msra.mxu0 %v854
      %1052 = vmatpush.bf16.msra.mxu0 %v853
      %1053 = vmatpush.bf16.msra.mxu0 %v852
      %1054 = vmatpush.bf16.msra.mxu0 %v851
      %1055 = vmatpush.bf16.msra.mxu0 %v850
      %1056 = vmatpush.bf16.msra.mxu0 %v849
      %1057 = vmatpush.bf16.msra.mxu0 %v848
      %1058 = vmatpush.bf16.msra.mxu0 %v847
      %1059 = vmatmul.bf16.gmra.mxu0 %v1038
      %v1060 = vpop.f32.mrf.mxu0
      %v1061 = vadd.f32 0.0, %v1060
      %v1062 = vpop.f32.mrf.mxu0
      %1063 = vdwg.mxu0
      %1064 = vmatpush.bf16.msra.mxu0 %v862
      %1065 = vmatpush.bf16.msra.mxu0 %v861
      %1066 = vmatpush.bf16.msra.mxu0 %v860
      %1067 = vmatpush.bf16.msra.mxu0 %v859
      %1068 = vmatpush.bf16.msra.mxu0 %v858
      %1069 = vmatpush.bf16.msra.mxu0 %v857
      %1070 = vmatpush.bf16.msra.mxu0 %v856
      %1071 = vmatpush.bf16.msra.mxu0 %v855
      %1072 = vmatmul.bf16.gmra.mxu0 %v1039
      %v1073 = vpop.f32.mrf.mxu0
      %v1074 = vadd.f32 %v1061, %v1073
      %v1075 = vpop.f32.mrf.mxu0
      %1076 = vdwg.mxu0
      %1077 = vmatpush.bf16.msra.mxu0 %v870
      %1078 = vmatpush.bf16.msra.mxu0 %v869
      %1079 = vmatpush.bf16.msra.mxu0 %v868
      %1080 = vmatpush.bf16.msra.mxu0 %v867
      %1081 = vmatpush.bf16.msra.mxu0 %v866
      %1082 = vmatpush.bf16.msra.mxu0 %v865
      %1083 = vmatpush.bf16.msra.mxu0 %v864
      %1084 = vmatpush.bf16.msra.mxu0 %v863
      %1085 = vmatmul.bf16.gmra.mxu0 %v1049
      %v1086 = vpop.f32.mrf.mxu0
      %v1087 = vadd.f32 %v1074, %v1086
      %v1088 = vpop.f32.mrf.mxu0
      %1089 = vdwg.mxu0
      %v1090 = vadd.f32 %v1031, %v1087
      %v1091 = vadd.f32 %v1090, %v937
      %vm1092 = vcmp.ge.f32.partialorder %v1091, 0.0
      %v1093 = vmul.f32 %v1091, 0.01
      %v1094 = vsel %vm1092, %v1091, %v1093
      %v1095 = vpack.c.bf16 %v942, %v942
      %v1096 = vpack.c.bf16 %v1094, %v1094
      %1097 = vst [vmem:[%s190] sm:$0x1] %v1095
      %1098 = vst [vmem:[%s190 + $0x1] sm:$0x1] %v1096
      %s1099 = smul.u32 2, %s19
      %p1100 = scmp.lt.s32.totalorder %s18, 1
      %s1101 = scalar_select %p1100, %s18, 1
      %p1102 = scmp.lt.s32.totalorder %s1099, 1
      %s1103 = scalar_select %p1102, %s1099, 1
      %s1104 = smul.addr %s1101, 2
      %s1105 = sadd.s32 %s1103, %s1104
      %s1106 = scalar_lea.vmem %s3, %s1105
      // Predicated region
      $region33: #{_lambda_.9} parent=31 // pred_check
        %p1107 = pneg %p114
      $region34: #{_lambda_.9} parent=31 // pred_check_branch
        %1109 = sbr.rel (%p1107) target = $region36
      $region35: #{_lambda_.9} parent=31 // pred_region
        %s1110 = smul.u32 2, %s19
      $region36: #{_lambda_.9} parent=31 // pred_fallthru
        _
    $region32: #{_lambda_.9} parent=5 // pred_fallthru
      _
    %p1111 = scmp.le.s32.totalorder 2, %s9
    // Predicated region
    $region37: #{_lambda_.9} parent=5 // pred_check
      %p1112 = pneg %p1111
    $region38: #{_lambda_.9} parent=5 // pred_check_branch
      %1114 = sbr.rel (%p1112) target = $region40
    $region39: #{_lambda_.9} parent=5 // pred_region
      %s1115 = ssub.s32 %s9, 2
      // Predicated region
      $region41: #{_lambda_.9} parent=39 // pred_check
        %p1116 = pneg %p120
      $region42: #{_lambda_.9} parent=39 // pred_check_branch
        %1118 = sbr.rel (%p1116) target = $region44
      $region43: #{_lambda_.9} parent=39 // pred_region
        %s1119 = smul.u32 2, %s21
        %p1120 = scmp.lt.s32.totalorder %s20, 1
        %s1121 = scalar_select %p1120, %s20, 1
        %p1122 = scmp.lt.s32.totalorder %s1119, 1
        %s1123 = scalar_select %p1122, %s1119, 1
        %s1124 = smul.addr %s1121, 2
        %s1125 = sadd.s32 %s1123, %s1124
        %s1126 = scalar_lea.vmem %s3, %s1125
      $region44: #{_lambda_.9} parent=39 // pred_fallthru
        _
    $region40: #{_lambda_.9} parent=5 // pred_fallthru
      _
  $region6: #{_lambda_.9} parent=0 // loop_footer
    %s13 = sadd.s32 1, %s9
  $region7: #{_lambda_.9} parent=0 // loop_footer_branch
    %8 = sbr.rel target = $region3
  $region8: #{_lambda_.9} parent=0 // loop_exit
    _

// kernel: _lambda_.11
$region0: #{_lambda_.11}
  #allocation0 [shape = 'u32[]', space=smem, size = 0x4, offset = 0x4, fixed_abs, tag = 'smem constant byte address 0x4 - core index']
  #allocation1 [shape = 'u32[72,128]{1,0:T(1,128)}', space=vmem, size = 0x9000, scoped, tag = 'internal scratch']
  #allocation2 [shape = 'bf16[3,3,128]{2,1,0:T(4,128)(2,1)}', space=vmem, size = 0xc00, scoped, tag = 'scratch operand']
  #allocation3 [shape = 'bf16[3,3,128]{2,1,0:T(4,128)(2,1)}', space=vmem, size = 0xc00, scoped, tag = 'scratch operand']
  %s0 = inlined_call_operand.vmem [shape: bf16[2,1,1,128], index: 0, kind: input, shape index: {}]
  %s1 = inlined_call_operand.vmem [shape: bf16[3,384,128], index: 1, kind: input, shape index: {}]
  %s2 = inlined_call_operand.vmem [shape: f32[1,128], index: 2, kind: input, shape index: {}]
  %s3 = inlined_call_operand.vmem [shape: bf16[3,384,128], index: 3, kind: input, shape index: {}]
  %s4 = inlined_call_operand.vmem [shape: f32[1,128], index: 4, kind: input, shape index: {}]
  %s5 = inlined_call_operand.vmem [shape: bf16[2,1,1,128], index: 5, kind: output, shape index: {}]
  %s6 = sld [smem:[#allocation0]]
  $region53: #{_lambda_.11} parent=0
    _
  %s8 = ssub.s32 1, %s6
  %s9 = scalar_select 0, %s8, %s6
  loop: start=0, step=1, limit=4
  $region2: #{_lambda_.11} parent=0 // loop_pre_header
    _
  $region3: #{_lambda_.11} parent=0 // loop_header
    %s11 = sphi 0, %s15
    %p12 = scmp.ge.s32.totalorder %s11, 4
    %s21 = sphi 0, %s23
    %s24 = sphi 0, %s21
    %s25 = sphi 0, %s24
    %s41 = sphi 0, %s25
    %s45 = sphi 0, %s45
    %s47 = sphi 0, %s45
    %s48 = sphi 0, %s47
    %s62 = sphi 0, %s48
    %s66 = sphi 0, %s66
    %s68 = sphi 0, %s66
    %s69 = sphi 0, %s68
    %s83 = sphi 0, %s69
    %s87 = sphi 0, %s87
    %s89 = sphi 0, %s87
    %s90 = sphi 0, %s89
    %s104 = sphi 0, %s90
    %s108 = sphi 0, %s108
    %s110 = sphi 0, %s108
    %s111 = sphi 0, %s110
    %s125 = sphi 0, %s111
    %s131 = sphi 0, %s133
    %s134 = sphi 0, %s131
    %s135 = sphi 0, %s134
    %s151 = sphi 0, %s135
  $region4: #{_lambda_.11} parent=0 // loop_header_branch
    %14 = sbr.rel (%p12) target = $region8
  $region5: #{_lambda_.11} parent=0 // loop_body
    %s16 = ssub.s32 %s11, 1
    %s17 = ssub.s32 %s11, 2
    %s18 = sadd.s32 %s11, 1
    %s19 = ssub.s32 %s11, %s18
    %p20 = scmp.eq.s32.totalorder %s19, 0
    %s22 = sadd.s32 %s21, 1
    %s23 = scalar_select %p20, %s21, %s22
    %p26 = pneg %p20
    %p27 = scmp.eq.s32.totalorder %s11, 1
    %p28 = por %p26, %p27
    %p29 = scmp.ne.s32.totalorder %s21, %s24
    %p30 = scmp.eq.s32.totalorder %s11, 0
    %p31 = por %p29, %p30
    %p32 = scmp.ne.s32.totalorder %s21, %s24
    %p33 = scmp.eq.s32.totalorder %s16, 1
    %p34 = por %p32, %p33
    %p35 = scmp.ne.s32.totalorder %s24, %s25
    %p36 = scmp.eq.s32.totalorder %s16, 0
    %p37 = por %p35, %p36
    %p38 = scmp.ne.s32.totalorder %s24, %s25
    %p39 = scmp.eq.s32.totalorder %s17, 1
    %p40 = por %p38, %p39
    %p42 = scmp.ne.s32.totalorder %s25, %s41
    %p43 = scmp.eq.s32.totalorder %s17, 0
    %p44 = por %p42, %p43
    %s46 = sadd.s32 %s45, 1
    %p49 = scmp.eq.s32.totalorder %s11, 1
    %p50 = scmp.ne.s32.totalorder %s45, %s47
    %p51 = scmp.eq.s32.totalorder %s11, 0
    %p52 = por %p50, %p51
    %p53 = scmp.ne.s32.totalorder %s45, %s47
    %p54 = scmp.eq.s32.totalorder %s16, 1
    %p55 = por %p53, %p54
    %p56 = scmp.ne.s32.totalorder %s47, %s48
    %p57 = scmp.eq.s32.totalorder %s16, 0
    %p58 = por %p56, %p57
    %p59 = scmp.ne.s32.totalorder %s47, %s48
    %p60 = scmp.eq.s32.totalorder %s17, 1
    %p61 = por %p59, %p60
    %p63 = scmp.ne.s32.totalorder %s48, %s62
    %p64 = scmp.eq.s32.totalorder %s17, 0
    %p65 = por %p63, %p64
    %s67 = sadd.s32 %s66, 1
    %p70 = scmp.eq.s32.totalorder %s11, 1
    %p71 = scmp.ne.s32.totalorder %s66, %s68
    %p72 = scmp.eq.s32.totalorder %s11, 0
    %p73 = por %p71, %p72
    %p74 = scmp.ne.s32.totalorder %s66, %s68
    %p75 = scmp.eq.s32.totalorder %s16, 1
    %p76 = por %p74, %p75
    %p77 = scmp.ne.s32.totalorder %s68, %s69
    %p78 = scmp.eq.s32.totalorder %s16, 0
    %p79 = por %p77, %p78
    %p80 = scmp.ne.s32.totalorder %s68, %s69
    %p81 = scmp.eq.s32.totalorder %s17, 1
    %p82 = por %p80, %p81
    %p84 = scmp.ne.s32.totalorder %s69, %s83
    %p85 = scmp.eq.s32.totalorder %s17, 0
    %p86 = por %p84, %p85
    %s88 = sadd.s32 %s87, 1
    %p91 = scmp.eq.s32.totalorder %s11, 1
    %p92 = scmp.ne.s32.totalorder %s87, %s89
    %p93 = scmp.eq.s32.totalorder %s11, 0
    %p94 = por %p92, %p93
    %p95 = scmp.ne.s32.totalorder %s87, %s89
    %p96 = scmp.eq.s32.totalorder %s16, 1
    %p97 = por %p95, %p96
    %p98 = scmp.ne.s32.totalorder %s89, %s90
    %p99 = scmp.eq.s32.totalorder %s16, 0
    %p100 = por %p98, %p99
    %p101 = scmp.ne.s32.totalorder %s89, %s90
    %p102 = scmp.eq.s32.totalorder %s17, 1
    %p103 = por %p101, %p102
    %p105 = scmp.ne.s32.totalorder %s90, %s104
    %p106 = scmp.eq.s32.totalorder %s17, 0
    %p107 = por %p105, %p106
    %s109 = sadd.s32 %s108, 1
    %p112 = scmp.eq.s32.totalorder %s11, 1
    %p113 = scmp.ne.s32.totalorder %s108, %s110
    %p114 = scmp.eq.s32.totalorder %s11, 0
    %p115 = por %p113, %p114
    %p116 = scmp.ne.s32.totalorder %s108, %s110
    %p117 = scmp.eq.s32.totalorder %s16, 1
    %p118 = por %p116, %p117
    %p119 = scmp.ne.s32.totalorder %s110, %s111
    %p120 = scmp.eq.s32.totalorder %s16, 0
    %p121 = por %p119, %p120
    %p122 = scmp.ne.s32.totalorder %s110, %s111
    %p123 = scmp.eq.s32.totalorder %s17, 1
    %p124 = por %p122, %p123
    %p126 = scmp.ne.s32.totalorder %s111, %s125
    %p127 = scmp.eq.s32.totalorder %s17, 0
    %p128 = por %p126, %p127
    %s129 = ssub.s32 %s11, %s18
    %p130 = scmp.eq.s32.totalorder %s129, 0
    %s132 = sadd.s32 %s131, 1
    %s133 = scalar_select %p130, %s131, %s132
    %p136 = pneg %p130
    %p137 = scmp.eq.s32.totalorder %s11, 1
    %p138 = por %p136, %p137
    %p139 = scmp.ne.s32.totalorder %s131, %s134
    %p140 = scmp.eq.s32.totalorder %s11, 0
    %p141 = por %p139, %p140
    %p142 = scmp.ne.s32.totalorder %s131, %s134
    %p143 = scmp.eq.s32.totalorder %s16, 1
    %p144 = por %p142, %p143
    %p145 = scmp.ne.s32.totalorder %s134, %s135
    %p146 = scmp.eq.s32.totalorder %s16, 0
    %p147 = por %p145, %p146
    %p148 = scmp.ne.s32.totalorder %s134, %s135
    %p149 = scmp.eq.s32.totalorder %s17, 1
    %p150 = por %p148, %p149
    %p152 = scmp.ne.s32.totalorder %s135, %s151
    %p153 = scmp.eq.s32.totalorder %s17, 0
    %p154 = por %p152, %p153
    %p155 = scmp.le.s32.totalorder 1, %s11
    %p156 = scmp.lt.s32.totalorder %s11, 3
    %p157 = pnand %p155, %p156
    %p158 = pneg %p157
    // Predicated region
    $region9: #{_lambda_.11} parent=5 // pred_check
      _
    $region10: #{_lambda_.11} parent=5 // pred_check_branch
      %160 = sbr.rel (%p157) target = $region12
    $region11: #{_lambda_.11} parent=5 // pred_region
      %s161 = ssub.s32 %s11, 1
      // Predicated region
      $region13: #{_lambda_.11} parent=11 // pred_check
        %p162 = pneg %p58
      $region14: #{_lambda_.11} parent=11 // pred_check_branch
        %164 = sbr.rel (%p162) target = $region16
      $region15: #{_lambda_.11} parent=11 // pred_region
        _
      $region16: #{_lambda_.11} parent=11 // pred_fallthru
        _
      // Predicated region
      $region17: #{_lambda_.11} parent=11 // pred_check
        %p165 = pneg %p79
      $region18: #{_lambda_.11} parent=11 // pred_check_branch
        %167 = sbr.rel (%p165) target = $region20
      $region19: #{_lambda_.11} parent=11 // pred_region
        _
      $region20: #{_lambda_.11} parent=11 // pred_fallthru
        _
      // Predicated region
      $region21: #{_lambda_.11} parent=11 // pred_check
        %p168 = pneg %p100
      $region22: #{_lambda_.11} parent=11 // pred_check_branch
        %170 = sbr.rel (%p168) target = $region24
      $region23: #{_lambda_.11} parent=11 // pred_region
        _
      $region24: #{_lambda_.11} parent=11 // pred_fallthru
        _
      // Predicated region
      $region25: #{_lambda_.11} parent=11 // pred_check
        %p171 = pneg %p121
      $region26: #{_lambda_.11} parent=11 // pred_check_branch
        %173 = sbr.rel (%p171) target = $region28
      $region27: #{_lambda_.11} parent=11 // pred_region
        _
      $region28: #{_lambda_.11} parent=11 // pred_fallthru
        _
    $region12: #{_lambda_.11} parent=5 // pred_fallthru
      _
    %p174 = scmp.lt.s32.totalorder %s11, 2
    // Predicated region
    $region29: #{_lambda_.11} parent=5 // pred_check
      %p175 = pneg %p174
    $region30: #{_lambda_.11} parent=5 // pred_check_branch
      %177 = sbr.rel (%p175) target = $region32
    $region31: #{_lambda_.11} parent=5 // pred_region
      // Predicated region
      $region33: #{_lambda_.11} parent=31 // pred_check
        %p178 = pneg %p31
      $region34: #{_lambda_.11} parent=31 // pred_check_branch
        %180 = sbr.rel (%p178) target = $region36
      $region35: #{_lambda_.11} parent=31 // pred_region
        %p181 = scmp.lt.s32.totalorder %s11, 1
        %s182 = scalar_select %p181, %s11, 1
        %s183 = scalar_lea.vmem %s0, %s182
      $region36: #{_lambda_.11} parent=31 // pred_fallthru
        _
    $region32: #{_lambda_.11} parent=5 // pred_fallthru
      _
    %p184 = scmp.le.s32.totalorder 1, %s11
    %p185 = scmp.lt.s32.totalorder %s11, 3
    %p186 = pnand %p184, %p185
    %p187 = pneg %p186
    // Predicated region
    $region37: #{_lambda_.11} parent=5 // pred_check
      _
    $region38: #{_lambda_.11} parent=5 // pred_check_branch
      %189 = sbr.rel (%p186) target = $region40
    $region39: #{_lambda_.11} parent=5 // pred_region
      %s190 = ssub.s32 %s11, 1
      %p191 = scmp.lt.s32.totalorder %s16, 1
      %s192 = scalar_select %p191, %s16, 1
      %s193 = scalar_lea.vmem %s0, %s192
      %p194 = pneg %p37
      %p195 = pneg %p34
      %p196 = pneg %p58
      %p197 = pneg %p55
      %p198 = pneg %p79
      %p199 = pneg %p76
      %p200 = pneg %p100
      %p201 = pneg %p97
      %p202 = pneg %p121
      %p203 = pneg %p118
      %p204 = pneg %p147
      %p205 = pneg %p144
      %p206 = scmp.lt.s32.totalorder %s16, 1
      %s207 = scalar_select %p206, %s16, 1
      %s208 = scalar_lea.vmem %s5, %s207
      %p209 = scmp.lt.s32.totalorder %s16, 1
      %s210 = scalar_select %p209, %s16, 1
      %s211 = scalar_lea.vmem %s0, %s210
      %p212 = scmp.lt.s32.totalorder %s16, 1
      %s213 = scalar_select %p212, %s16, 1
      %s214 = scalar_lea.vmem %s5, %s213
      %vm216 = vcmask 1041408
      %vm217 = vsmask.f32 1280
      %vm218 = vmand %vm216, %vm217
      %v219 = vld [vmem:[#allocation2] sm:$0x3]
      %v220 = vsel %vm218, 0, %v219
      %221 = vst [vmem:[#allocation2] sm:$0x3] %v220
      %v222 = vld [vmem:[#allocation2 + $0x2] sm:$0x3]
      %v223 = vsel %vm218, 0, %v222
      %224 = vst [vmem:[#allocation2 + $0x2] sm:$0x3] %v223
      %v225 = vld [vmem:[#allocation2 + $0x4] sm:$0x3]
      %v226 = vsel %vm218, 0, %v225
      %227 = vst [vmem:[#allocation2 + $0x4] sm:$0x3] %v226
      %v228 = vld [vmem:[%s211] sm:$0x1]
      %230 = vst [vmem:[#allocation1] ss:$2 sm:$0xff] %v228
      %v231 = vld [vmem:[#allocation1] sm:$0xff]
      %v232 = vshll.u32 %v231, 16
      %s235 = scalar_lea.vmem [#allocation2], 2
      %vm236 = vcmask 1040384
      %vm237 = vsmask.f32 7938
      %vm238 = vmand %vm236, %vm237
      %v239 = vld [vmem:[%s235] sm:$0x1]
      %v240 = vsel %vm238, %v232, %v239
      %241 = vst [vmem:[%s235] sm:$0x1] %v240
      %v242 = vld [vmem:[#allocation2] sm:$0x1]
      %v243 = vld [vmem:[#allocation2] sm:$0x2]
      %245 = vst [vmem:[#allocation1] ss:$4 sm:$0xff] %v242
      %v246 = vld.sshfl [vmem:[#allocation1] sm:$0xff pattern:$0x73625140]
      %v247 = vshrl.u32 %v246, 16
      %251 = vst [vmem:[#allocation1] ss:$4 sm:$0xff] %v243
      %v252 = vld.sshfl [vmem:[#allocation1] sm:$0xff pattern:$0x73625140]
      %v254 = vrot.slane %v252, 1
      %v256 = vld [vmem:[%s1] sm:$0xf]
      %v257 = vld [vmem:[%s1 + $0x4] sm:$0xf]
      %v258 = vld [vmem:[%s1 + $0x8] sm:$0xf]
      %v259 = vld [vmem:[%s1 + $0xc] sm:$0xf]
      %v260 = vld [vmem:[%s1 + $0x10] sm:$0xf]
      %v261 = vld [vmem:[%s1 + $0x14] sm:$0xf]
      %v262 = vld [vmem:[%s1 + $0x18] sm:$0xf]
      %v263 = vld [vmem:[%s1 + $0x1c] sm:$0xf]
      %v264 = vld [vmem:[%s1 + $0x20] sm:$0xf]
      %v265 = vld [vmem:[%s1 + $0x24] sm:$0xf]
      %v266 = vld [vmem:[%s1 + $0x28] sm:$0xf]
      %v267 = vld [vmem:[%s1 + $0x2c] sm:$0xf]
      %v268 = vld [vmem:[%s1 + $0x30] sm:$0xf]
      %v269 = vld [vmem:[%s1 + $0x34] sm:$0xf]
      %v270 = vld [vmem:[%s1 + $0x38] sm:$0xf]
      %v271 = vld [vmem:[%s1 + $0x3c] sm:$0xf]
      %v272 = vld [vmem:[%s1 + $0x40] sm:$0xf]
      %v273 = vld [vmem:[%s1 + $0x44] sm:$0xf]
      %v274 = vld [vmem:[%s1 + $0x48] sm:$0xf]
      %v275 = vld [vmem:[%s1 + $0x4c] sm:$0xf]
      %v276 = vld [vmem:[%s1 + $0x50] sm:$0xf]
      %v277 = vld [vmem:[%s1 + $0x54] sm:$0xf]
      %v278 = vld [vmem:[%s1 + $0x58] sm:$0xf]
      %v279 = vld [vmem:[%s1 + $0x5c] sm:$0xf]
      %v280 = vld [vmem:[%s1 + $0x60] sm:$0xf]
      %v281 = vld [vmem:[%s1 + $0x64] sm:$0xf]
      %v282 = vld [vmem:[%s1 + $0x68] sm:$0xf]
      %v283 = vld [vmem:[%s1 + $0x6c] sm:$0xf]
      %v284 = vld [vmem:[%s1 + $0x70] sm:$0xf]
      %v285 = vld [vmem:[%s1 + $0x74] sm:$0xf]
      %v286 = vld [vmem:[%s1 + $0x78] sm:$0xf]
      %v287 = vld [vmem:[%s1 + $0x7c] sm:$0xf]
      %v288 = vld [vmem:[%s1 + $0x80] sm:$0xf]
      %v289 = vld [vmem:[%s1 + $0x84] sm:$0xf]
      %v290 = vld [vmem:[%s1 + $0x88] sm:$0xf]
      %v291 = vld [vmem:[%s1 + $0x8c] sm:$0xf]
      %v292 = vld [vmem:[%s1 + $0x90] sm:$0xf]
      %v293 = vld [vmem:[%s1 + $0x94] sm:$0xf]
      %v294 = vld [vmem:[%s1 + $0x98] sm:$0xf]
      %v295 = vld [vmem:[%s1 + $0x9c] sm:$0xf]
      %v296 = vld [vmem:[%s1 + $0xa0] sm:$0xf]
      %v297 = vld [vmem:[%s1 + $0xa4] sm:$0xf]
      %v298 = vld [vmem:[%s1 + $0xa8] sm:$0xf]
      %v299 = vld [vmem:[%s1 + $0xac] sm:$0xf]
      %v300 = vld [vmem:[%s1 + $0xb0] sm:$0xf]
      %v301 = vld [vmem:[%s1 + $0xb4] sm:$0xf]
      %v302 = vld [vmem:[%s1 + $0xb8] sm:$0xf]
      %v303 = vld [vmem:[%s1 + $0xbc] sm:$0xf]
      %v304 = vld [vmem:[%s235] sm:$0x1]
      %v305 = vld [vmem:[%s235] sm:$0x2]
      %307 = vst [vmem:[#allocation1] ss:$4 sm:$0xff] %v304
      %v308 = vld.sshfl [vmem:[#allocation1] sm:$0xff pattern:$0x73625140]
      %v309 = vshrl.u32 %v308, 16
      %313 = vst [vmem:[#allocation1] ss:$4 sm:$0xff] %v305
      %v314 = vld.sshfl [vmem:[#allocation1] sm:$0xff pattern:$0x73625140]
      %v316 = vrot.slane %v314, 1
      %s318 = scalar_lea.vmem %s1, 192
      %v319 = vld [vmem:[%s318] sm:$0xf]
      %v320 = vld [vmem:[%s318 + $0x4] sm:$0xf]
      %v321 = vld [vmem:[%s318 + $0x8] sm:$0xf]
      %v322 = vld [vmem:[%s318 + $0xc] sm:$0xf]
      %v323 = vld [vmem:[%s318 + $0x10] sm:$0xf]
      %v324 = vld [vmem:[%s318 + $0x14] sm:$0xf]
      %v325 = vld [vmem:[%s318 + $0x18] sm:$0xf]
      %v326 = vld [vmem:[%s318 + $0x1c] sm:$0xf]
      %v327 = vld [vmem:[%s318 + $0x20] sm:$0xf]
      %v328 = vld [vmem:[%s318 + $0x24] sm:$0xf]
      %v329 = vld [vmem:[%s318 + $0x28] sm:$0xf]
      %v330 = vld [vmem:[%s318 + $0x2c] sm:$0xf]
      %v331 = vld [vmem:[%s318 + $0x30] sm:$0xf]
      %v332 = vld [vmem:[%s318 + $0x34] sm:$0xf]
      %v333 = vld [vmem:[%s318 + $0x38] sm:$0xf]
      %v334 = vld [vmem:[%s318 + $0x3c] sm:$0xf]
      %v335 = vld [vmem:[%s318 + $0x40] sm:$0xf]
      %v336 = vld [vmem:[%s318 + $0x44] sm:$0xf]
      %v337 = vld [vmem:[%s318 + $0x48] sm:$0xf]
      %v338 = vld [vmem:[%s318 + $0x4c] sm:$0xf]
      %v339 = vld [vmem:[%s318 + $0x50] sm:$0xf]
      %v340 = vld [vmem:[%s318 + $0x54] sm:$0xf]
      %v341 = vld [vmem:[%s318 + $0x58] sm:$0xf]
      %v342 = vld [vmem:[%s318 + $0x5c] sm:$0xf]
      %v343 = vld [vmem:[%s318 + $0x60] sm:$0xf]
      %v344 = vld [vmem:[%s318 + $0x64] sm:$0xf]
      %v345 = vld [vmem:[%s318 + $0x68] sm:$0xf]
      %v346 = vld [vmem:[%s318 + $0x6c] sm:$0xf]
      %v347 = vld [vmem:[%s318 + $0x70] sm:$0xf]
      %v348 = vld [vmem:[%s318 + $0x74] sm:$0xf]
      %v349 = vld [vmem:[%s318 + $0x78] sm:$0xf]
      %v350 = vld [vmem:[%s318 + $0x7c] sm:$0xf]
      %v351 = vld [vmem:[%s318 + $0x80] sm:$0xf]
      %v352 = vld [vmem:[%s318 + $0x84] sm:$0xf]
      %v353 = vld [vmem:[%s318 + $0x88] sm:$0xf]
      %v354 = vld [vmem:[%s318 + $0x8c] sm:$0xf]
      %v355 = vld [vmem:[%s318 + $0x90] sm:$0xf]
      %v356 = vld [vmem:[%s318 + $0x94] sm:$0xf]
      %v357 = vld [vmem:[%s318 + $0x98] sm:$0xf]
      %v358 = vld [vmem:[%s318 + $0x9c] sm:$0xf]
      %v359 = vld [vmem:[%s318 + $0xa0] sm:$0xf]
      %v360 = vld [vmem:[%s318 + $0xa4] sm:$0xf]
      %v361 = vld [vmem:[%s318 + $0xa8] sm:$0xf]
      %v362 = vld [vmem:[%s318 + $0xac] sm:$0xf]
      %v363 = vld [vmem:[%s318 + $0xb0] sm:$0xf]
      %v364 = vld [vmem:[%s318 + $0xb4] sm:$0xf]
      %v365 = vld [vmem:[%s318 + $0xb8] sm:$0xf]
      %v366 = vld [vmem:[%s318 + $0xbc] sm:$0xf]
      %v415 = vunpack.c.l.b16 %v319
      %v416 = vunpack.c.l.b16 %v320
      %v417 = vunpack.c.l.b16 %v321
      %v418 = vunpack.c.l.b16 %v322
      %v419 = vunpack.c.l.b16 %v323
      %v420 = vunpack.c.l.b16 %v324
      %v421 = vunpack.c.l.b16 %v325
      %v422 = vunpack.c.l.b16 %v326
      %v423 = vunpack.c.l.b16 %v327
      %v424 = vunpack.c.l.b16 %v328
      %v425 = vunpack.c.l.b16 %v329
      %v426 = vunpack.c.l.b16 %v330
      %v427 = vunpack.c.l.b16 %v331
      %v428 = vunpack.c.l.b16 %v332
      %v429 = vunpack.c.l.b16 %v333
      %v430 = vunpack.c.l.b16 %v334
      %v431 = vunpack.c.l.b16 %v335
      %v432 = vunpack.c.l.b16 %v336
      %v433 = vunpack.c.l.b16 %v337
      %v434 = vunpack.c.l.b16 %v338
      %v435 = vunpack.c.l.b16 %v339
      %v436 = vunpack.c.l.b16 %v340
      %v437 = vunpack.c.l.b16 %v341
      %v438 = vunpack.c.l.b16 %v342
      %v439 = vunpack.c.l.b16 %v343
      %v440 = vunpack.c.l.b16 %v344
      %v441 = vunpack.c.l.b16 %v345
      %v442 = vunpack.c.l.b16 %v346
      %v443 = vunpack.c.l.b16 %v347
      %v444 = vunpack.c.l.b16 %v348
      %v445 = vunpack.c.l.b16 %v349
      %v446 = vunpack.c.l.b16 %v350
      %v447 = vunpack.c.l.b16 %v351
      %v448 = vunpack.c.l.b16 %v352
      %v449 = vunpack.c.l.b16 %v353
      %v450 = vunpack.c.l.b16 %v354
      %v451 = vunpack.c.l.b16 %v355
      %v452 = vunpack.c.l.b16 %v356
      %v453 = vunpack.c.l.b16 %v357
      %v454 = vunpack.c.l.b16 %v358
      %v455 = vunpack.c.l.b16 %v359
      %v456 = vunpack.c.l.b16 %v360
      %v457 = vunpack.c.l.b16 %v361
      %v458 = vunpack.c.l.b16 %v362
      %v459 = vunpack.c.l.b16 %v363
      %v460 = vunpack.c.l.b16 %v364
      %v461 = vunpack.c.l.b16 %v365
      %v462 = vunpack.c.l.b16 %v366
      %v463 = vpack.c.b16 %v416, %v415
      %v464 = vpack.c.b16 %v418, %v417
      %v465 = vpack.c.b16 %v420, %v419
      %v466 = vpack.c.b16 %v422, %v421
      %v467 = vpack.c.b16 %v424, %v423
      %v468 = vpack.c.b16 %v426, %v425
      %v469 = vpack.c.b16 %v428, %v427
      %v470 = vpack.c.b16 %v430, %v429
      %v471 = vpack.c.b16 %v432, %v431
      %v472 = vpack.c.b16 %v434, %v433
      %v473 = vpack.c.b16 %v436, %v435
      %v474 = vpack.c.b16 %v438, %v437
      %v475 = vpack.c.b16 %v440, %v439
      %v476 = vpack.c.b16 %v442, %v441
      %v477 = vpack.c.b16 %v444, %v443
      %v478 = vpack.c.b16 %v446, %v445
      %v479 = vpack.c.b16 %v448, %v447
      %v480 = vpack.c.b16 %v450, %v449
      %v481 = vpack.c.b16 %v452, %v451
      %v482 = vpack.c.b16 %v454, %v453
      %v483 = vpack.c.b16 %v456, %v455
      %v484 = vpack.c.b16 %v458, %v457
      %v485 = vpack.c.b16 %v460, %v459
      %v486 = vpack.c.b16 %v462, %v461
      %511 = vmatpush.bf16.msra.mxu0 %v470
      %512 = vmatpush.bf16.msra.mxu0 %v469
      %513 = vmatpush.bf16.msra.mxu0 %v468
      %514 = vmatpush.bf16.msra.mxu0 %v467
      %515 = vmatpush.bf16.msra.mxu0 %v466
      %516 = vmatpush.bf16.msra.mxu0 %v465
      %517 = vmatpush.bf16.msra.mxu0 %v464
      %518 = vmatpush.bf16.msra.mxu0 %v463
      %519 = vmatmul.bf16.gmra.mxu0 %v304
      %v520 = vpop.f32.mrf.mxu0
      %v521 = vadd.f32 0.0, %v520
      %v522 = vpop.f32.mrf.mxu0
      %523 = vdwg.mxu0
      %524 = vmatpush.bf16.msra.mxu0 %v478
      %525 = vmatpush.bf16.msra.mxu0 %v477
      %526 = vmatpush.bf16.msra.mxu0 %v476
      %527 = vmatpush.bf16.msra.mxu0 %v475
      %528 = vmatpush.bf16.msra.mxu0 %v474
      %529 = vmatpush.bf16.msra.mxu0 %v473
      %530 = vmatpush.bf16.msra.mxu0 %v472
      %531 = vmatpush.bf16.msra.mxu0 %v471
      %532 = vmatmul.bf16.gmra.mxu0 %v309
      %v533 = vpop.f32.mrf.mxu0
      %v534 = vadd.f32 %v521, %v533
      %v535 = vpop.f32.mrf.mxu0
      %536 = vdwg.mxu0
      %537 = vmatpush.bf16.msra.mxu0 %v486
      %538 = vmatpush.bf16.msra.mxu0 %v485
      %539 = vmatpush.bf16.msra.mxu0 %v484
      %540 = vmatpush.bf16.msra.mxu0 %v483
      %541 = vmatpush.bf16.msra.mxu0 %v482
      %542 = vmatpush.bf16.msra.mxu0 %v481
      %543 = vmatpush.bf16.msra.mxu0 %v480
      %544 = vmatpush.bf16.msra.mxu0 %v479
      %545 = vmatmul.bf16.gmra.mxu0 %v316
      %v546 = vpop.f32.mrf.mxu0
      %v547 = vadd.f32 %v534, %v546
      %v548 = vpop.f32.mrf.mxu0
      %549 = vdwg.mxu0
      %v598 = vunpack.c.l.b16 %v256
      %v599 = vunpack.c.l.b16 %v257
      %v600 = vunpack.c.l.b16 %v258
      %v601 = vunpack.c.l.b16 %v259
      %v602 = vunpack.c.l.b16 %v260
      %v603 = vunpack.c.l.b16 %v261
      %v604 = vunpack.c.l.b16 %v262
      %v605 = vunpack.c.l.b16 %v263
      %v606 = vunpack.c.l.b16 %v264
      %v607 = vunpack.c.l.b16 %v265
      %v608 = vunpack.c.l.b16 %v266
      %v609 = vunpack.c.l.b16 %v267
      %v610 = vunpack.c.l.b16 %v268
      %v611 = vunpack.c.l.b16 %v269
      %v612 = vunpack.c.l.b16 %v270
      %v613 = vunpack.c.l.b16 %v271
      %v614 = vunpack.c.l.b16 %v272
      %v615 = vunpack.c.l.b16 %v273
      %v616 = vunpack.c.l.b16 %v274
      %v617 = vunpack.c.l.b16 %v275
      %v618 = vunpack.c.l.b16 %v276
      %v619 = vunpack.c.l.b16 %v277
      %v620 = vunpack.c.l.b16 %v278
      %v621 = vunpack.c.l.b16 %v279
      %v622 = vunpack.c.l.b16 %v280
      %v623 = vunpack.c.l.b16 %v281
      %v624 = vunpack.c.l.b16 %v282
      %v625 = vunpack.c.l.b16 %v283
      %v626 = vunpack.c.l.b16 %v284
      %v627 = vunpack.c.l.b16 %v285
      %v628 = vunpack.c.l.b16 %v286
      %v629 = vunpack.c.l.b16 %v287
      %v630 = vunpack.c.l.b16 %v288
      %v631 = vunpack.c.l.b16 %v289
      %v632 = vunpack.c.l.b16 %v290
      %v633 = vunpack.c.l.b16 %v291
      %v634 = vunpack.c.l.b16 %v292
      %v635 = vunpack.c.l.b16 %v293
      %v636 = vunpack.c.l.b16 %v294
      %v637 = vunpack.c.l.b16 %v295
      %v638 = vunpack.c.l.b16 %v296
      %v639 = vunpack.c.l.b16 %v297
      %v640 = vunpack.c.l.b16 %v298
      %v641 = vunpack.c.l.b16 %v299
      %v642 = vunpack.c.l.b16 %v300
      %v643 = vunpack.c.l.b16 %v301
      %v644 = vunpack.c.l.b16 %v302
      %v645 = vunpack.c.l.b16 %v303
      %v646 = vpack.c.b16 %v599, %v598
      %v647 = vpack.c.b16 %v601, %v600
      %v648 = vpack.c.b16 %v603, %v602
      %v649 = vpack.c.b16 %v605, %v604
      %v650 = vpack.c.b16 %v607, %v606
      %v651 = vpack.c.b16 %v609, %v608
      %v652 = vpack.c.b16 %v611, %v610
      %v653 = vpack.c.b16 %v613, %v612
      %v654 = vpack.c.b16 %v615, %v614
      %v655 = vpack.c.b16 %v617, %v616
      %v656 = vpack.c.b16 %v619, %v618
      %v657 = vpack.c.b16 %v621, %v620
      %v658 = vpack.c.b16 %v623, %v622
      %v659 = vpack.c.b16 %v625, %v624
      %v660 = vpack.c.b16 %v627, %v626
      %v661 = vpack.c.b16 %v629, %v628
      %v662 = vpack.c.b16 %v631, %v630
      %v663 = vpack.c.b16 %v633, %v632
      %v664 = vpack.c.b16 %v635, %v634
      %v665 = vpack.c.b16 %v637, %v636
      %v666 = vpack.c.b16 %v639, %v638
      %v667 = vpack.c.b16 %v641, %v640
      %v668 = vpack.c.b16 %v643, %v642
      %v669 = vpack.c.b16 %v645, %v644
      %694 = vmatpush.bf16.msra.mxu0 %v653
      %695 = vmatpush.bf16.msra.mxu0 %v652
      %696 = vmatpush.bf16.msra.mxu0 %v651
      %697 = vmatpush.bf16.msra.mxu0 %v650
      %698 = vmatpush.bf16.msra.mxu0 %v649
      %699 = vmatpush.bf16.msra.mxu0 %v648
      %700 = vmatpush.bf16.msra.mxu0 %v647
      %701 = vmatpush.bf16.msra.mxu0 %v646
      %702 = vmatmul.bf16.gmra.mxu0 %v242
      %v703 = vpop.f32.mrf.mxu0
      %v704 = vadd.f32 %v547, %v703
      %v705 = vpop.f32.mrf.mxu0
      %706 = vdwg.mxu0
      %707 = vmatpush.bf16.msra.mxu0 %v661
      %708 = vmatpush.bf16.msra.mxu0 %v660
      %709 = vmatpush.bf16.msra.mxu0 %v659
      %710 = vmatpush.bf16.msra.mxu0 %v658
      %711 = vmatpush.bf16.msra.mxu0 %v657
      %712 = vmatpush.bf16.msra.mxu0 %v656
      %713 = vmatpush.bf16.msra.mxu0 %v655
      %714 = vmatpush.bf16.msra.mxu0 %v654
      %715 = vmatmul.bf16.gmra.mxu0 %v247
      %v716 = vpop.f32.mrf.mxu0
      %v717 = vadd.f32 %v704, %v716
      %v718 = vpop.f32.mrf.mxu0
      %719 = vdwg.mxu0
      %720 = vmatpush.bf16.msra.mxu0 %v669
      %721 = vmatpush.bf16.msra.mxu0 %v668
      %722 = vmatpush.bf16.msra.mxu0 %v667
      %723 = vmatpush.bf16.msra.mxu0 %v666
      %724 = vmatpush.bf16.msra.mxu0 %v665
      %725 = vmatpush.bf16.msra.mxu0 %v664
      %726 = vmatpush.bf16.msra.mxu0 %v663
      %727 = vmatpush.bf16.msra.mxu0 %v662
      %728 = vmatmul.bf16.gmra.mxu0 %v254
      %v729 = vpop.f32.mrf.mxu0
      %v730 = vadd.f32 %v717, %v729
      %v731 = vpop.f32.mrf.mxu0
      %732 = vdwg.mxu0
      %s733 = scalar_lea.vmem [#allocation2], 4
      %v734 = vld [vmem:[%s733] sm:$0x1]
      %v735 = vld [vmem:[%s733] sm:$0x2]
      %737 = vst [vmem:[#allocation1] ss:$4 sm:$0xff] %v734
      %v738 = vld.sshfl [vmem:[#allocation1] sm:$0xff pattern:$0x73625140]
      %v739 = vshrl.u32 %v738, 16
      %743 = vst [vmem:[#allocation1] ss:$4 sm:$0xff] %v735
      %v744 = vld.sshfl [vmem:[#allocation1] sm:$0xff pattern:$0x73625140]
      %v746 = vrot.slane %v744, 1
      %s748 = scalar_lea.vmem %s1, 384
      %v749 = vld [vmem:[%s748] sm:$0xf]
      %v750 = vld [vmem:[%s748 + $0x4] sm:$0xf]
      %v751 = vld [vmem:[%s748 + $0x8] sm:$0xf]
      %v752 = vld [vmem:[%s748 + $0xc] sm:$0xf]
      %v753 = vld [vmem:[%s748 + $0x10] sm:$0xf]
      %v754 = vld [vmem:[%s748 + $0x14] sm:$0xf]
      %v755 = vld [vmem:[%s748 + $0x18] sm:$0xf]
      %v756 = vld [vmem:[%s748 + $0x1c] sm:$0xf]
      %v757 = vld [vmem:[%s748 + $0x20] sm:$0xf]
      %v758 = vld [vmem:[%s748 + $0x24] sm:$0xf]
      %v759 = vld [vmem:[%s748 + $0x28] sm:$0xf]
      %v760 = vld [vmem:[%s748 + $0x2c] sm:$0xf]
      %v761 = vld [vmem:[%s748 + $0x30] sm:$0xf]
      %v762 = vld [vmem:[%s748 + $0x34] sm:$0xf]
      %v763 = vld [vmem:[%s748 + $0x38] sm:$0xf]
      %v764 = vld [vmem:[%s748 + $0x3c] sm:$0xf]
      %v765 = vld [vmem:[%s748 + $0x40] sm:$0xf]
      %v766 = vld [vmem:[%s748 + $0x44] sm:$0xf]
      %v767 = vld [vmem:[%s748 + $0x48] sm:$0xf]
      %v768 = vld [vmem:[%s748 + $0x4c] sm:$0xf]
      %v769 = vld [vmem:[%s748 + $0x50] sm:$0xf]
      %v770 = vld [vmem:[%s748 + $0x54] sm:$0xf]
      %v771 = vld [vmem:[%s748 + $0x58] sm:$0xf]
      %v772 = vld [vmem:[%s748 + $0x5c] sm:$0xf]
      %v773 = vld [vmem:[%s748 + $0x60] sm:$0xf]
      %v774 = vld [vmem:[%s748 + $0x64] sm:$0xf]
      %v775 = vld [vmem:[%s748 + $0x68] sm:$0xf]
      %v776 = vld [vmem:[%s748 + $0x6c] sm:$0xf]
      %v777 = vld [vmem:[%s748 + $0x70] sm:$0xf]
      %v778 = vld [vmem:[%s748 + $0x74] sm:$0xf]
      %v779 = vld [vmem:[%s748 + $0x78] sm:$0xf]
      %v780 = vld [vmem:[%s748 + $0x7c] sm:$0xf]
      %v781 = vld [vmem:[%s748 + $0x80] sm:$0xf]
      %v782 = vld [vmem:[%s748 + $0x84] sm:$0xf]
      %v783 = vld [vmem:[%s748 + $0x88] sm:$0xf]
      %v784 = vld [vmem:[%s748 + $0x8c] sm:$0xf]
      %v785 = vld [vmem:[%s748 + $0x90] sm:$0xf]
      %v786 = vld [vmem:[%s748 + $0x94] sm:$0xf]
      %v787 = vld [vmem:[%s748 + $0x98] sm:$0xf]
      %v788 = vld [vmem:[%s748 + $0x9c] sm:$0xf]
      %v789 = vld [vmem:[%s748 + $0xa0] sm:$0xf]
      %v790 = vld [vmem:[%s748 + $0xa4] sm:$0xf]
      %v791 = vld [vmem:[%s748 + $0xa8] sm:$0xf]
      %v792 = vld [vmem:[%s748 + $0xac] sm:$0xf]
      %v793 = vld [vmem:[%s748 + $0xb0] sm:$0xf]
      %v794 = vld [vmem:[%s748 + $0xb4] sm:$0xf]
      %v795 = vld [vmem:[%s748 + $0xb8] sm:$0xf]
      %v796 = vld [vmem:[%s748 + $0xbc] sm:$0xf]
      %v845 = vunpack.c.l.b16 %v749
      %v846 = vunpack.c.l.b16 %v750
      %v847 = vunpack.c.l.b16 %v751
      %v848 = vunpack.c.l.b16 %v752
      %v849 = vunpack.c.l.b16 %v753
      %v850 = vunpack.c.l.b16 %v754
      %v851 = vunpack.c.l.b16 %v755
      %v852 = vunpack.c.l.b16 %v756
      %v853 = vunpack.c.l.b16 %v757
      %v854 = vunpack.c.l.b16 %v758
      %v855 = vunpack.c.l.b16 %v759
      %v856 = vunpack.c.l.b16 %v760
      %v857 = vunpack.c.l.b16 %v761
      %v858 = vunpack.c.l.b16 %v762
      %v859 = vunpack.c.l.b16 %v763
      %v860 = vunpack.c.l.b16 %v764
      %v861 = vunpack.c.l.b16 %v765
      %v862 = vunpack.c.l.b16 %v766
      %v863 = vunpack.c.l.b16 %v767
      %v864 = vunpack.c.l.b16 %v768
      %v865 = vunpack.c.l.b16 %v769
      %v866 = vunpack.c.l.b16 %v770
      %v867 = vunpack.c.l.b16 %v771
      %v868 = vunpack.c.l.b16 %v772
      %v869 = vunpack.c.l.b16 %v773
      %v870 = vunpack.c.l.b16 %v774
      %v871 = vunpack.c.l.b16 %v775
      %v872 = vunpack.c.l.b16 %v776
      %v873 = vunpack.c.l.b16 %v777
      %v874 = vunpack.c.l.b16 %v778
      %v875 = vunpack.c.l.b16 %v779
      %v876 = vunpack.c.l.b16 %v780
      %v877 = vunpack.c.l.b16 %v781
      %v878 = vunpack.c.l.b16 %v782
      %v879 = vunpack.c.l.b16 %v783
      %v880 = vunpack.c.l.b16 %v784
      %v881 = vunpack.c.l.b16 %v785
      %v882 = vunpack.c.l.b16 %v786
      %v883 = vunpack.c.l.b16 %v787
      %v884 = vunpack.c.l.b16 %v788
      %v885 = vunpack.c.l.b16 %v789
      %v886 = vunpack.c.l.b16 %v790
      %v887 = vunpack.c.l.b16 %v791
      %v888 = vunpack.c.l.b16 %v792
      %v889 = vunpack.c.l.b16 %v793
      %v890 = vunpack.c.l.b16 %v794
      %v891 = vunpack.c.l.b16 %v795
      %v892 = vunpack.c.l.b16 %v796
      %v893 = vpack.c.b16 %v846, %v845
      %v894 = vpack.c.b16 %v848, %v847
      %v895 = vpack.c.b16 %v850, %v849
      %v896 = vpack.c.b16 %v852, %v851
      %v897 = vpack.c.b16 %v854, %v853
      %v898 = vpack.c.b16 %v856, %v855
      %v899 = vpack.c.b16 %v858, %v857
      %v900 = vpack.c.b16 %v860, %v859
      %v901 = vpack.c.b16 %v862, %v861
      %v902 = vpack.c.b16 %v864, %v863
      %v903 = vpack.c.b16 %v866, %v865
      %v904 = vpack.c.b16 %v868, %v867
      %v905 = vpack.c.b16 %v870, %v869
      %v906 = vpack.c.b16 %v872, %v871
      %v907 = vpack.c.b16 %v874, %v873
      %v908 = vpack.c.b16 %v876, %v875
      %v909 = vpack.c.b16 %v878, %v877
      %v910 = vpack.c.b16 %v880, %v879
      %v911 = vpack.c.b16 %v882, %v881
      %v912 = vpack.c.b16 %v884, %v883
      %v913 = vpack.c.b16 %v886, %v885
      %v914 = vpack.c.b16 %v888, %v887
      %v915 = vpack.c.b16 %v890, %v889
      %v916 = vpack.c.b16 %v892, %v891
      %941 = vmatpush.bf16.msra.mxu0 %v900
      %942 = vmatpush.bf16.msra.mxu0 %v899
      %943 = vmatpush.bf16.msra.mxu0 %v898
      %944 = vmatpush.bf16.msra.mxu0 %v897
      %945 = vmatpush.bf16.msra.mxu0 %v896
      %946 = vmatpush.bf16.msra.mxu0 %v895
      %947 = vmatpush.bf16.msra.mxu0 %v894
      %948 = vmatpush.bf16.msra.mxu0 %v893
      %949 = vmatmul.bf16.gmra.mxu0 %v734
      %v950 = vpop.f32.mrf.mxu0
      %v951 = vadd.f32 0.0, %v950
      %v952 = vpop.f32.mrf.mxu0
      %953 = vdwg.mxu0
      %954 = vmatpush.bf16.msra.mxu0 %v908
      %955 = vmatpush.bf16.msra.mxu0 %v907
      %956 = vmatpush.bf16.msra.mxu0 %v906
      %957 = vmatpush.bf16.msra.mxu0 %v905
      %958 = vmatpush.bf16.msra.mxu0 %v904
      %959 = vmatpush.bf16.msra.mxu0 %v903
      %960 = vmatpush.bf16.msra.mxu0 %v902
      %961 = vmatpush.bf16.msra.mxu0 %v901
      %962 = vmatmul.bf16.gmra.mxu0 %v739
      %v963 = vpop.f32.mrf.mxu0
      %v964 = vadd.f32 %v951, %v963
      %v965 = vpop.f32.mrf.mxu0
      %966 = vdwg.mxu0
      %967 = vmatpush.bf16.msra.mxu0 %v916
      %968 = vmatpush.bf16.msra.mxu0 %v915
      %969 = vmatpush.bf16.msra.mxu0 %v914
      %970 = vmatpush.bf16.msra.mxu0 %v913
      %971 = vmatpush.bf16.msra.mxu0 %v912
      %972 = vmatpush.bf16.msra.mxu0 %v911
      %973 = vmatpush.bf16.msra.mxu0 %v910
      %974 = vmatpush.bf16.msra.mxu0 %v909
      %975 = vmatmul.bf16.gmra.mxu0 %v746
      %v976 = vpop.f32.mrf.mxu0
      %v977 = vadd.f32 %v964, %v976
      %v978 = vpop.f32.mrf.mxu0
      %979 = vdwg.mxu0
      %v980 = vadd.f32 %v730, %v977
      %v981 = vld [vmem:[%s2] sm:$0x1]
      %v982 = vadd.f32 %v980, %v981
      %vm983 = vcmp.ge.f32.partialorder %v982, 0.0
      %v984 = vmul.f32 %v982, 0.01
      %v985 = vsel %vm983, %v982, %v984
      %v986 = vld [vmem:[#allocation3] sm:$0x3]
      %v987 = vsel %vm218, 0, %v986
      %988 = vst [vmem:[#allocation3] sm:$0x3] %v987
      %v989 = vld [vmem:[#allocation3 + $0x2] sm:$0x3]
      %v990 = vsel %vm218, 0, %v989
      %991 = vst [vmem:[#allocation3 + $0x2] sm:$0x3] %v990
      %v992 = vld [vmem:[#allocation3 + $0x4] sm:$0x3]
      %v993 = vsel %vm218, 0, %v992
      %994 = vst [vmem:[#allocation3 + $0x4] sm:$0x3] %v993
      %v995 = vpack.c.bf16 %v985, %v985
      %v997 = vrot.slane %v995, 2
      %vm998 = vcmask 1041408
      %v1001 = vsel %vm998, %v995, %v997
      %v1002 = vshll.u32 %v1001, 16
      %s1005 = scalar_lea.vmem [#allocation3], 2
      %v1006 = vld [vmem:[%s1005] sm:$0x1]
      %v1007 = vsel %vm238, %v1002, %v1006
      %1008 = vst [vmem:[%s1005] sm:$0x1] %v1007
      %v1009 = vld [vmem:[#allocation3] sm:$0x1]
      %v1010 = vld [vmem:[#allocation3] sm:$0x2]
      %1012 = vst [vmem:[#allocation1] ss:$4 sm:$0xff] %v1009
      %v1013 = vld.sshfl [vmem:[#allocation1] sm:$0xff pattern:$0x73625140]
      %v1014 = vshrl.u32 %v1013, 16
      %1018 = vst [vmem:[#allocation1] ss:$4 sm:$0xff] %v1010
      %v1019 = vld.sshfl [vmem:[#allocation1] sm:$0xff pattern:$0x73625140]
      %v1021 = vrot.slane %v1019, 1
      %v1023 = vld [vmem:[%s3] sm:$0xf]
      %v1024 = vld [vmem:[%s3 + $0x4] sm:$0xf]
      %v1025 = vld [vmem:[%s3 + $0x8] sm:$0xf]
      %v1026 = vld [vmem:[%s3 + $0xc] sm:$0xf]
      %v1027 = vld [vmem:[%s3 + $0x10] sm:$0xf]
      %v1028 = vld [vmem:[%s3 + $0x14] sm:$0xf]
      %v1029 = vld [vmem:[%s3 + $0x18] sm:$0xf]
      %v1030 = vld [vmem:[%s3 + $0x1c] sm:$0xf]
      %v1031 = vld [vmem:[%s3 + $0x20] sm:$0xf]
      %v1032 = vld [vmem:[%s3 + $0x24] sm:$0xf]
      %v1033 = vld [vmem:[%s3 + $0x28] sm:$0xf]
      %v1034 = vld [vmem:[%s3 + $0x2c] sm:$0xf]
      %v1035 = vld [vmem:[%s3 + $0x30] sm:$0xf]
      %v1036 = vld [vmem:[%s3 + $0x34] sm:$0xf]
      %v1037 = vld [vmem:[%s3 + $0x38] sm:$0xf]
      %v1038 = vld [vmem:[%s3 + $0x3c] sm:$0xf]
      %v1039 = vld [vmem:[%s3 + $0x40] sm:$0xf]
      %v1040 = vld [vmem:[%s3 + $0x44] sm:$0xf]
      %v1041 = vld [vmem:[%s3 + $0x48] sm:$0xf]
      %v1042 = vld [vmem:[%s3 + $0x4c] sm:$0xf]
      %v1043 = vld [vmem:[%s3 + $0x50] sm:$0xf]
      %v1044 = vld [vmem:[%s3 + $0x54] sm:$0xf]
      %v1045 = vld [vmem:[%s3 + $0x58] sm:$0xf]
      %v1046 = vld [vmem:[%s3 + $0x5c] sm:$0xf]
      %v1047 = vld [vmem:[%s3 + $0x60] sm:$0xf]
      %v1048 = vld [vmem:[%s3 + $0x64] sm:$0xf]
      %v1049 = vld [vmem:[%s3 + $0x68] sm:$0xf]
      %v1050 = vld [vmem:[%s3 + $0x6c] sm:$0xf]
      %v1051 = vld [vmem:[%s3 + $0x70] sm:$0xf]
      %v1052 = vld [vmem:[%s3 + $0x74] sm:$0xf]
      %v1053 = vld [vmem:[%s3 + $0x78] sm:$0xf]
      %v1054 = vld [vmem:[%s3 + $0x7c] sm:$0xf]
      %v1055 = vld [vmem:[%s3 + $0x80] sm:$0xf]
      %v1056 = vld [vmem:[%s3 + $0x84] sm:$0xf]
      %v1057 = vld [vmem:[%s3 + $0x88] sm:$0xf]
      %v1058 = vld [vmem:[%s3 + $0x8c] sm:$0xf]
      %v1059 = vld [vmem:[%s3 + $0x90] sm:$0xf]
      %v1060 = vld [vmem:[%s3 + $0x94] sm:$0xf]
      %v1061 = vld [vmem:[%s3 + $0x98] sm:$0xf]
      %v1062 = vld [vmem:[%s3 + $0x9c] sm:$0xf]
      %v1063 = vld [vmem:[%s3 + $0xa0] sm:$0xf]
      %v1064 = vld [vmem:[%s3 + $0xa4] sm:$0xf]
      %v1065 = vld [vmem:[%s3 + $0xa8] sm:$0xf]
      %v1066 = vld [vmem:[%s3 + $0xac] sm:$0xf]
      %v1067 = vld [vmem:[%s3 + $0xb0] sm:$0xf]
      %v1068 = vld [vmem:[%s3 + $0xb4] sm:$0xf]
      %v1069 = vld [vmem:[%s3 + $0xb8] sm:$0xf]
      %v1070 = vld [vmem:[%s3 + $0xbc] sm:$0xf]
      %v1071 = vld [vmem:[%s1005] sm:$0x1]
      %v1072 = vld [vmem:[%s1005] sm:$0x2]
      %1074 = vst [vmem:[#allocation1] ss:$4 sm:$0xff] %v1071
      %v1075 = vld.sshfl [vmem:[#allocation1] sm:$0xff pattern:$0x73625140]
      %v1076 = vshrl.u32 %v1075, 16
      %1080 = vst [vmem:[#allocation1] ss:$4 sm:$0xff] %v1072
      %v1081 = vld.sshfl [vmem:[#allocation1] sm:$0xff pattern:$0x73625140]
      %v1083 = vrot.slane %v1081, 1
      %s1085 = scalar_lea.vmem %s3, 192
      %v1086 = vld [vmem:[%s1085] sm:$0xf]
      %v1087 = vld [vmem:[%s1085 + $0x4] sm:$0xf]
      %v1088 = vld [vmem:[%s1085 + $0x8] sm:$0xf]
      %v1089 = vld [vmem:[%s1085 + $0xc] sm:$0xf]
      %v1090 = vld [vmem:[%s1085 + $0x10] sm:$0xf]
      %v1091 = vld [vmem:[%s1085 + $0x14] sm:$0xf]
      %v1092 = vld [vmem:[%s1085 + $0x18] sm:$0xf]
      %v1093 = vld [vmem:[%s1085 + $0x1c] sm:$0xf]
      %v1094 = vld [vmem:[%s1085 + $0x20] sm:$0xf]
      %v1095 = vld [vmem:[%s1085 + $0x24] sm:$0xf]
      %v1096 = vld [vmem:[%s1085 + $0x28] sm:$0xf]
      %v1097 = vld [vmem:[%s1085 + $0x2c] sm:$0xf]
      %v1098 = vld [vmem:[%s1085 + $0x30] sm:$0xf]
      %v1099 = vld [vmem:[%s1085 + $0x34] sm:$0xf]
      %v1100 = vld [vmem:[%s1085 + $0x38] sm:$0xf]
      %v1101 = vld [vmem:[%s1085 + $0x3c] sm:$0xf]
      %v1102 = vld [vmem:[%s1085 + $0x40] sm:$0xf]
      %v1103 = vld [vmem:[%s1085 + $0x44] sm:$0xf]
      %v1104 = vld [vmem:[%s1085 + $0x48] sm:$0xf]
      %v1105 = vld [vmem:[%s1085 + $0x4c] sm:$0xf]
      %v1106 = vld [vmem:[%s1085 + $0x50] sm:$0xf]
      %v1107 = vld [vmem:[%s1085 + $0x54] sm:$0xf]
      %v1108 = vld [vmem:[%s1085 + $0x58] sm:$0xf]
      %v1109 = vld [vmem:[%s1085 + $0x5c] sm:$0xf]
      %v1110 = vld [vmem:[%s1085 + $0x60] sm:$0xf]
      %v1111 = vld [vmem:[%s1085 + $0x64] sm:$0xf]
      %v1112 = vld [vmem:[%s1085 + $0x68] sm:$0xf]
      %v1113 = vld [vmem:[%s1085 + $0x6c] sm:$0xf]
      %v1114 = vld [vmem:[%s1085 + $0x70] sm:$0xf]
      %v1115 = vld [vmem:[%s1085 + $0x74] sm:$0xf]
      %v1116 = vld [vmem:[%s1085 + $0x78] sm:$0xf]
      %v1117 = vld [vmem:[%s1085 + $0x7c] sm:$0xf]
      %v1118 = vld [vmem:[%s1085 + $0x80] sm:$0xf]
      %v1119 = vld [vmem:[%s1085 + $0x84] sm:$0xf]
      %v1120 = vld [vmem:[%s1085 + $0x88] sm:$0xf]
      %v1121 = vld [vmem:[%s1085 + $0x8c] sm:$0xf]
      %v1122 = vld [vmem:[%s1085 + $0x90] sm:$0xf]
      %v1123 = vld [vmem:[%s1085 + $0x94] sm:$0xf]
      %v1124 = vld [vmem:[%s1085 + $0x98] sm:$0xf]
      %v1125 = vld [vmem:[%s1085 + $0x9c] sm:$0xf]
      %v1126 = vld [vmem:[%s1085 + $0xa0] sm:$0xf]
      %v1127 = vld [vmem:[%s1085 + $0xa4] sm:$0xf]
      %v1128 = vld [vmem:[%s1085 + $0xa8] sm:$0xf]
      %v1129 = vld [vmem:[%s1085 + $0xac] sm:$0xf]
      %v1130 = vld [vmem:[%s1085 + $0xb0] sm:$0xf]
      %v1131 = vld [vmem:[%s1085 + $0xb4] sm:$0xf]
      %v1132 = vld [vmem:[%s1085 + $0xb8] sm:$0xf]
      %v1133 = vld [vmem:[%s1085 + $0xbc] sm:$0xf]
      %v1182 = vunpack.c.l.b16 %v1086
      %v1183 = vunpack.c.l.b16 %v1087
      %v1184 = vunpack.c.l.b16 %v1088
      %v1185 = vunpack.c.l.b16 %v1089
      %v1186 = vunpack.c.l.b16 %v1090
      %v1187 = vunpack.c.l.b16 %v1091
      %v1188 = vunpack.c.l.b16 %v1092
      %v1189 = vunpack.c.l.b16 %v1093
      %v1190 = vunpack.c.l.b16 %v1094
      %v1191 = vunpack.c.l.b16 %v1095
      %v1192 = vunpack.c.l.b16 %v1096
      %v1193 = vunpack.c.l.b16 %v1097
      %v1194 = vunpack.c.l.b16 %v1098
      %v1195 = vunpack.c.l.b16 %v1099
      %v1196 = vunpack.c.l.b16 %v1100
      %v1197 = vunpack.c.l.b16 %v1101
      %v1198 = vunpack.c.l.b16 %v1102
      %v1199 = vunpack.c.l.b16 %v1103
      %v1200 = vunpack.c.l.b16 %v1104
      %v1201 = vunpack.c.l.b16 %v1105
      %v1202 = vunpack.c.l.b16 %v1106
      %v1203 = vunpack.c.l.b16 %v1107
      %v1204 = vunpack.c.l.b16 %v1108
      %v1205 = vunpack.c.l.b16 %v1109
      %v1206 = vunpack.c.l.b16 %v1110
      %v1207 = vunpack.c.l.b16 %v1111
      %v1208 = vunpack.c.l.b16 %v1112
      %v1209 = vunpack.c.l.b16 %v1113
      %v1210 = vunpack.c.l.b16 %v1114
      %v1211 = vunpack.c.l.b16 %v1115
      %v1212 = vunpack.c.l.b16 %v1116
      %v1213 = vunpack.c.l.b16 %v1117
      %v1214 = vunpack.c.l.b16 %v1118
      %v1215 = vunpack.c.l.b16 %v1119
      %v1216 = vunpack.c.l.b16 %v1120
      %v1217 = vunpack.c.l.b16 %v1121
      %v1218 = vunpack.c.l.b16 %v1122
      %v1219 = vunpack.c.l.b16 %v1123
      %v1220 = vunpack.c.l.b16 %v1124
      %v1221 = vunpack.c.l.b16 %v1125
      %v1222 = vunpack.c.l.b16 %v1126
      %v1223 = vunpack.c.l.b16 %v1127
      %v1224 = vunpack.c.l.b16 %v1128
      %v1225 = vunpack.c.l.b16 %v1129
      %v1226 = vunpack.c.l.b16 %v1130
      %v1227 = vunpack.c.l.b16 %v1131
      %v1228 = vunpack.c.l.b16 %v1132
      %v1229 = vunpack.c.l.b16 %v1133
      %v1230 = vpack.c.b16 %v1183, %v1182
      %v1231 = vpack.c.b16 %v1185, %v1184
      %v1232 = vpack.c.b16 %v1187, %v1186
      %v1233 = vpack.c.b16 %v1189, %v1188
      %v1234 = vpack.c.b16 %v1191, %v1190
      %v1235 = vpack.c.b16 %v1193, %v1192
      %v1236 = vpack.c.b16 %v1195, %v1194
      %v1237 = vpack.c.b16 %v1197, %v1196
      %v1238 = vpack.c.b16 %v1199, %v1198
      %v1239 = vpack.c.b16 %v1201, %v1200
      %v1240 = vpack.c.b16 %v1203, %v1202
      %v1241 = vpack.c.b16 %v1205, %v1204
      %v1242 = vpack.c.b16 %v1207, %v1206
      %v1243 = vpack.c.b16 %v1209, %v1208
      %v1244 = vpack.c.b16 %v1211, %v1210
      %v1245 = vpack.c.b16 %v1213, %v1212
      %v1246 = vpack.c.b16 %v1215, %v1214
      %v1247 = vpack.c.b16 %v1217, %v1216
      %v1248 = vpack.c.b16 %v1219, %v1218
      %v1249 = vpack.c.b16 %v1221, %v1220
      %v1250 = vpack.c.b16 %v1223, %v1222
      %v1251 = vpack.c.b16 %v1225, %v1224
      %v1252 = vpack.c.b16 %v1227, %v1226
      %v1253 = vpack.c.b16 %v1229, %v1228
      %1278 = vmatpush.bf16.msra.mxu0 %v1237
      %1279 = vmatpush.bf16.msra.mxu0 %v1236
      %1280 = vmatpush.bf16.msra.mxu0 %v1235
      %1281 = vmatpush.bf16.msra.mxu0 %v1234
      %1282 = vmatpush.bf16.msra.mxu0 %v1233
      %1283 = vmatpush.bf16.msra.mxu0 %v1232
      %1284 = vmatpush.bf16.msra.mxu0 %v1231
      %1285 = vmatpush.bf16.msra.mxu0 %v1230
      %1286 = vmatmul.bf16.gmra.mxu0 %v1071
      %v1287 = vpop.f32.mrf.mxu0
      %v1288 = vadd.f32 0.0, %v1287
      %v1289 = vpop.f32.mrf.mxu0
      %1290 = vdwg.mxu0
      %1291 = vmatpush.bf16.msra.mxu0 %v1245
      %1292 = vmatpush.bf16.msra.mxu0 %v1244
      %1293 = vmatpush.bf16.msra.mxu0 %v1243
      %1294 = vmatpush.bf16.msra.mxu0 %v1242
      %1295 = vmatpush.bf16.msra.mxu0 %v1241
      %1296 = vmatpush.bf16.msra.mxu0 %v1240
      %1297 = vmatpush.bf16.msra.mxu0 %v1239
      %1298 = vmatpush.bf16.msra.mxu0 %v1238
      %1299 = vmatmul.bf16.gmra.mxu0 %v1076
      %v1300 = vpop.f32.mrf.mxu0
      %v1301 = vadd.f32 %v1288, %v1300
      %v1302 = vpop.f32.mrf.mxu0
      %1303 = vdwg.mxu0
      %1304 = vmatpush.bf16.msra.mxu0 %v1253
      %1305 = vmatpush.bf16.msra.mxu0 %v1252
      %1306 = vmatpush.bf16.msra.mxu0 %v1251
      %1307 = vmatpush.bf16.msra.mxu0 %v1250
      %1308 = vmatpush.bf16.msra.mxu0 %v1249
      %1309 = vmatpush.bf16.msra.mxu0 %v1248
      %1310 = vmatpush.bf16.msra.mxu0 %v1247
      %1311 = vmatpush.bf16.msra.mxu0 %v1246
      %1312 = vmatmul.bf16.gmra.mxu0 %v1083
      %v1313 = vpop.f32.mrf.mxu0
      %v1314 = vadd.f32 %v1301, %v1313
      %v1315 = vpop.f32.mrf.mxu0
      %1316 = vdwg.mxu0
      %v1365 = vunpack.c.l.b16 %v1023
      %v1366 = vunpack.c.l.b16 %v1024
      %v1367 = vunpack.c.l.b16 %v1025
      %v1368 = vunpack.c.l.b16 %v1026
      %v1369 = vunpack.c.l.b16 %v1027
      %v1370 = vunpack.c.l.b16 %v1028
      %v1371 = vunpack.c.l.b16 %v1029
      %v1372 = vunpack.c.l.b16 %v1030
      %v1373 = vunpack.c.l.b16 %v1031
      %v1374 = vunpack.c.l.b16 %v1032
      %v1375 = vunpack.c.l.b16 %v1033
      %v1376 = vunpack.c.l.b16 %v1034
      %v1377 = vunpack.c.l.b16 %v1035
      %v1378 = vunpack.c.l.b16 %v1036
      %v1379 = vunpack.c.l.b16 %v1037
      %v1380 = vunpack.c.l.b16 %v1038
      %v1381 = vunpack.c.l.b16 %v1039
      %v1382 = vunpack.c.l.b16 %v1040
      %v1383 = vunpack.c.l.b16 %v1041
      %v1384 = vunpack.c.l.b16 %v1042
      %v1385 = vunpack.c.l.b16 %v1043
      %v1386 = vunpack.c.l.b16 %v1044
      %v1387 = vunpack.c.l.b16 %v1045
      %v1388 = vunpack.c.l.b16 %v1046
      %v1389 = vunpack.c.l.b16 %v1047
      %v1390 = vunpack.c.l.b16 %v1048
      %v1391 = vunpack.c.l.b16 %v1049
      %v1392 = vunpack.c.l.b16 %v1050
      %v1393 = vunpack.c.l.b16 %v1051
      %v1394 = vunpack.c.l.b16 %v1052
      %v1395 = vunpack.c.l.b16 %v1053
      %v1396 = vunpack.c.l.b16 %v1054
      %v1397 = vunpack.c.l.b16 %v1055
      %v1398 = vunpack.c.l.b16 %v1056
      %v1399 = vunpack.c.l.b16 %v1057
      %v1400 = vunpack.c.l.b16 %v1058
      %v1401 = vunpack.c.l.b16 %v1059
      %v1402 = vunpack.c.l.b16 %v1060
      %v1403 = vunpack.c.l.b16 %v1061
      %v1404 = vunpack.c.l.b16 %v1062
      %v1405 = vunpack.c.l.b16 %v1063
      %v1406 = vunpack.c.l.b16 %v1064
      %v1407 = vunpack.c.l.b16 %v1065
      %v1408 = vunpack.c.l.b16 %v1066
      %v1409 = vunpack.c.l.b16 %v1067
      %v1410 = vunpack.c.l.b16 %v1068
      %v1411 = vunpack.c.l.b16 %v1069
      %v1412 = vunpack.c.l.b16 %v1070
      %v1413 = vpack.c.b16 %v1366, %v1365
      %v1414 = vpack.c.b16 %v1368, %v1367
      %v1415 = vpack.c.b16 %v1370, %v1369
      %v1416 = vpack.c.b16 %v1372, %v1371
      %v1417 = vpack.c.b16 %v1374, %v1373
      %v1418 = vpack.c.b16 %v1376, %v1375
      %v1419 = vpack.c.b16 %v1378, %v1377
      %v1420 = vpack.c.b16 %v1380, %v1379
      %v1421 = vpack.c.b16 %v1382, %v1381
      %v1422 = vpack.c.b16 %v1384, %v1383
      %v1423 = vpack.c.b16 %v1386, %v1385
      %v1424 = vpack.c.b16 %v1388, %v1387
      %v1425 = vpack.c.b16 %v1390, %v1389
      %v1426 = vpack.c.b16 %v1392, %v1391
      %v1427 = vpack.c.b16 %v1394, %v1393
      %v1428 = vpack.c.b16 %v1396, %v1395
      %v1429 = vpack.c.b16 %v1398, %v1397
      %v1430 = vpack.c.b16 %v1400, %v1399
      %v1431 = vpack.c.b16 %v1402, %v1401
      %v1432 = vpack.c.b16 %v1404, %v1403
      %v1433 = vpack.c.b16 %v1406, %v1405
      %v1434 = vpack.c.b16 %v1408, %v1407
      %v1435 = vpack.c.b16 %v1410, %v1409
      %v1436 = vpack.c.b16 %v1412, %v1411
      %1461 = vmatpush.bf16.msra.mxu0 %v1420
      %1462 = vmatpush.bf16.msra.mxu0 %v1419
      %1463 = vmatpush.bf16.msra.mxu0 %v1418
      %1464 = vmatpush.bf16.msra.mxu0 %v1417
      %1465 = vmatpush.bf16.msra.mxu0 %v1416
      %1466 = vmatpush.bf16.msra.mxu0 %v1415
      %1467 = vmatpush.bf16.msra.mxu0 %v1414
      %1468 = vmatpush.bf16.msra.mxu0 %v1413
      %1469 = vmatmul.bf16.gmra.mxu0 %v1009
      %v1470 = vpop.f32.mrf.mxu0
      %v1471 = vadd.f32 %v1314, %v1470
      %v1472 = vpop.f32.mrf.mxu0
      %1473 = vdwg.mxu0
      %1474 = vmatpush.bf16.msra.mxu0 %v1428
      %1475 = vmatpush.bf16.msra.mxu0 %v1427
      %1476 = vmatpush.bf16.msra.mxu0 %v1426
      %1477 = vmatpush.bf16.msra.mxu0 %v1425
      %1478 = vmatpush.bf16.msra.mxu0 %v1424
      %1479 = vmatpush.bf16.msra.mxu0 %v1423
      %1480 = vmatpush.bf16.msra.mxu0 %v1422
      %1481 = vmatpush.bf16.msra.mxu0 %v1421
      %1482 = vmatmul.bf16.gmra.mxu0 %v1014
      %v1483 = vpop.f32.mrf.mxu0
      %v1484 = vadd.f32 %v1471, %v1483
      %v1485 = vpop.f32.mrf.mxu0
      %1486 = vdwg.mxu0
      %1487 = vmatpush.bf16.msra.mxu0 %v1436
      %1488 = vmatpush.bf16.msra.mxu0 %v1435
      %1489 = vmatpush.bf16.msra.mxu0 %v1434
      %1490 = vmatpush.bf16.msra.mxu0 %v1433
      %1491 = vmatpush.bf16.msra.mxu0 %v1432
      %1492 = vmatpush.bf16.msra.mxu0 %v1431
      %1493 = vmatpush.bf16.msra.mxu0 %v1430
      %1494 = vmatpush.bf16.msra.mxu0 %v1429
      %1495 = vmatmul.bf16.gmra.mxu0 %v1021
      %v1496 = vpop.f32.mrf.mxu0
      %v1497 = vadd.f32 %v1484, %v1496
      %v1498 = vpop.f32.mrf.mxu0
      %1499 = vdwg.mxu0
      %s1500 = scalar_lea.vmem [#allocation3], 4
      %v1501 = vld [vmem:[%s1500] sm:$0x1]
      %v1502 = vld [vmem:[%s1500] sm:$0x2]
      %1504 = vst [vmem:[#allocation1] ss:$4 sm:$0xff] %v1501
      %v1505 = vld.sshfl [vmem:[#allocation1] sm:$0xff pattern:$0x73625140]
      %v1506 = vshrl.u32 %v1505, 16
      %1510 = vst [vmem:[#allocation1] ss:$4 sm:$0xff] %v1502
      %v1511 = vld.sshfl [vmem:[#allocation1] sm:$0xff pattern:$0x73625140]
      %v1513 = vrot.slane %v1511, 1
      %s1515 = scalar_lea.vmem %s3, 384
      %v1516 = vld [vmem:[%s1515] sm:$0xf]
      %v1517 = vld [vmem:[%s1515 + $0x4] sm:$0xf]
      %v1518 = vld [vmem:[%s1515 + $0x8] sm:$0xf]
      %v1519 = vld [vmem:[%s1515 + $0xc] sm:$0xf]
      %v1520 = vld [vmem:[%s1515 + $0x10] sm:$0xf]
      %v1521 = vld [vmem:[%s1515 + $0x14] sm:$0xf]
      %v1522 = vld [vmem:[%s1515 + $0x18] sm:$0xf]
      %v1523 = vld [vmem:[%s1515 + $0x1c] sm:$0xf]
      %v1524 = vld [vmem:[%s1515 + $0x20] sm:$0xf]
      %v1525 = vld [vmem:[%s1515 + $0x24] sm:$0xf]
      %v1526 = vld [vmem:[%s1515 + $0x28] sm:$0xf]
      %v1527 = vld [vmem:[%s1515 + $0x2c] sm:$0xf]
      %v1528 = vld [vmem:[%s1515 + $0x30] sm:$0xf]
      %v1529 = vld [vmem:[%s1515 + $0x34] sm:$0xf]
      %v1530 = vld [vmem:[%s1515 + $0x38] sm:$0xf]
      %v1531 = vld [vmem:[%s1515 + $0x3c] sm:$0xf]
      %v1532 = vld [vmem:[%s1515 + $0x40] sm:$0xf]
      %v1533 = vld [vmem:[%s1515 + $0x44] sm:$0xf]
      %v1534 = vld [vmem:[%s1515 + $0x48] sm:$0xf]
      %v1535 = vld [vmem:[%s1515 + $0x4c] sm:$0xf]
      %v1536 = vld [vmem:[%s1515 + $0x50] sm:$0xf]
      %v1537 = vld [vmem:[%s1515 + $0x54] sm:$0xf]
      %v1538 = vld [vmem:[%s1515 + $0x58] sm:$0xf]
      %v1539 = vld [vmem:[%s1515 + $0x5c] sm:$0xf]
      %v1540 = vld [vmem:[%s1515 + $0x60] sm:$0xf]
      %v1541 = vld [vmem:[%s1515 + $0x64] sm:$0xf]
      %v1542 = vld [vmem:[%s1515 + $0x68] sm:$0xf]
      %v1543 = vld [vmem:[%s1515 + $0x6c] sm:$0xf]
      %v1544 = vld [vmem:[%s1515 + $0x70] sm:$0xf]
      %v1545 = vld [vmem:[%s1515 + $0x74] sm:$0xf]
      %v1546 = vld [vmem:[%s1515 + $0x78] sm:$0xf]
      %v1547 = vld [vmem:[%s1515 + $0x7c] sm:$0xf]
      %v1548 = vld [vmem:[%s1515 + $0x80] sm:$0xf]
      %v1549 = vld [vmem:[%s1515 + $0x84] sm:$0xf]
      %v1550 = vld [vmem:[%s1515 + $0x88] sm:$0xf]
      %v1551 = vld [vmem:[%s1515 + $0x8c] sm:$0xf]
      %v1552 = vld [vmem:[%s1515 + $0x90] sm:$0xf]
      %v1553 = vld [vmem:[%s1515 + $0x94] sm:$0xf]
      %v1554 = vld [vmem:[%s1515 + $0x98] sm:$0xf]
      %v1555 = vld [vmem:[%s1515 + $0x9c] sm:$0xf]
      %v1556 = vld [vmem:[%s1515 + $0xa0] sm:$0xf]
      %v1557 = vld [vmem:[%s1515 + $0xa4] sm:$0xf]
      %v1558 = vld [vmem:[%s1515 + $0xa8] sm:$0xf]
      %v1559 = vld [vmem:[%s1515 + $0xac] sm:$0xf]
      %v1560 = vld [vmem:[%s1515 + $0xb0] sm:$0xf]
      %v1561 = vld [vmem:[%s1515 + $0xb4] sm:$0xf]
      %v1562 = vld [vmem:[%s1515 + $0xb8] sm:$0xf]
      %v1563 = vld [vmem:[%s1515 + $0xbc] sm:$0xf]
      %v1612 = vunpack.c.l.b16 %v1516
      %v1613 = vunpack.c.l.b16 %v1517
      %v1614 = vunpack.c.l.b16 %v1518
      %v1615 = vunpack.c.l.b16 %v1519
      %v1616 = vunpack.c.l.b16 %v1520
      %v1617 = vunpack.c.l.b16 %v1521
      %v1618 = vunpack.c.l.b16 %v1522
      %v1619 = vunpack.c.l.b16 %v1523
      %v1620 = vunpack.c.l.b16 %v1524
      %v1621 = vunpack.c.l.b16 %v1525
      %v1622 = vunpack.c.l.b16 %v1526
      %v1623 = vunpack.c.l.b16 %v1527
      %v1624 = vunpack.c.l.b16 %v1528
      %v1625 = vunpack.c.l.b16 %v1529
      %v1626 = vunpack.c.l.b16 %v1530
      %v1627 = vunpack.c.l.b16 %v1531
      %v1628 = vunpack.c.l.b16 %v1532
      %v1629 = vunpack.c.l.b16 %v1533
      %v1630 = vunpack.c.l.b16 %v1534
      %v1631 = vunpack.c.l.b16 %v1535
      %v1632 = vunpack.c.l.b16 %v1536
      %v1633 = vunpack.c.l.b16 %v1537
      %v1634 = vunpack.c.l.b16 %v1538
      %v1635 = vunpack.c.l.b16 %v1539
      %v1636 = vunpack.c.l.b16 %v1540
      %v1637 = vunpack.c.l.b16 %v1541
      %v1638 = vunpack.c.l.b16 %v1542
      %v1639 = vunpack.c.l.b16 %v1543
      %v1640 = vunpack.c.l.b16 %v1544
      %v1641 = vunpack.c.l.b16 %v1545
      %v1642 = vunpack.c.l.b16 %v1546
      %v1643 = vunpack.c.l.b16 %v1547
      %v1644 = vunpack.c.l.b16 %v1548
      %v1645 = vunpack.c.l.b16 %v1549
      %v1646 = vunpack.c.l.b16 %v1550
      %v1647 = vunpack.c.l.b16 %v1551
      %v1648 = vunpack.c.l.b16 %v1552
      %v1649 = vunpack.c.l.b16 %v1553
      %v1650 = vunpack.c.l.b16 %v1554
      %v1651 = vunpack.c.l.b16 %v1555
      %v1652 = vunpack.c.l.b16 %v1556
      %v1653 = vunpack.c.l.b16 %v1557
      %v1654 = vunpack.c.l.b16 %v1558
      %v1655 = vunpack.c.l.b16 %v1559
      %v1656 = vunpack.c.l.b16 %v1560
      %v1657 = vunpack.c.l.b16 %v1561
      %v1658 = vunpack.c.l.b16 %v1562
      %v1659 = vunpack.c.l.b16 %v1563
      %v1660 = vpack.c.b16 %v1613, %v1612
      %v1661 = vpack.c.b16 %v1615, %v1614
      %v1662 = vpack.c.b16 %v1617, %v1616
      %v1663 = vpack.c.b16 %v1619, %v1618
      %v1664 = vpack.c.b16 %v1621, %v1620
      %v1665 = vpack.c.b16 %v1623, %v1622
      %v1666 = vpack.c.b16 %v1625, %v1624
      %v1667 = vpack.c.b16 %v1627, %v1626
      %v1668 = vpack.c.b16 %v1629, %v1628
      %v1669 = vpack.c.b16 %v1631, %v1630
      %v1670 = vpack.c.b16 %v1633, %v1632
      %v1671 = vpack.c.b16 %v1635, %v1634
      %v1672 = vpack.c.b16 %v1637, %v1636
      %v1673 = vpack.c.b16 %v1639, %v1638
      %v1674 = vpack.c.b16 %v1641, %v1640
      %v1675 = vpack.c.b16 %v1643, %v1642
      %v1676 = vpack.c.b16 %v1645, %v1644
      %v1677 = vpack.c.b16 %v1647, %v1646
      %v1678 = vpack.c.b16 %v1649, %v1648
      %v1679 = vpack.c.b16 %v1651, %v1650
      %v1680 = vpack.c.b16 %v1653, %v1652
      %v1681 = vpack.c.b16 %v1655, %v1654
      %v1682 = vpack.c.b16 %v1657, %v1656
      %v1683 = vpack.c.b16 %v1659, %v1658
      %1708 = vmatpush.bf16.msra.mxu0 %v1667
      %1709 = vmatpush.bf16.msra.mxu0 %v1666
      %1710 = vmatpush.bf16.msra.mxu0 %v1665
      %1711 = vmatpush.bf16.msra.mxu0 %v1664
      %1712 = vmatpush.bf16.msra.mxu0 %v1663
      %1713 = vmatpush.bf16.msra.mxu0 %v1662
      %1714 = vmatpush.bf16.msra.mxu0 %v1661
      %1715 = vmatpush.bf16.msra.mxu0 %v1660
      %1716 = vmatmul.bf16.gmra.mxu0 %v1501
      %v1717 = vpop.f32.mrf.mxu0
      %v1718 = vadd.f32 0.0, %v1717
      %v1719 = vpop.f32.mrf.mxu0
      %1720 = vdwg.mxu0
      %1721 = vmatpush.bf16.msra.mxu0 %v1675
      %1722 = vmatpush.bf16.msra.mxu0 %v1674
      %1723 = vmatpush.bf16.msra.mxu0 %v1673
      %1724 = vmatpush.bf16.msra.mxu0 %v1672
      %1725 = vmatpush.bf16.msra.mxu0 %v1671
      %1726 = vmatpush.bf16.msra.mxu0 %v1670
      %1727 = vmatpush.bf16.msra.mxu0 %v1669
      %1728 = vmatpush.bf16.msra.mxu0 %v1668
      %1729 = vmatmul.bf16.gmra.mxu0 %v1506
      %v1730 = vpop.f32.mrf.mxu0
      %v1731 = vadd.f32 %v1718, %v1730
      %v1732 = vpop.f32.mrf.mxu0
      %1733 = vdwg.mxu0
      %1734 = vmatpush.bf16.msra.mxu0 %v1683
      %1735 = vmatpush.bf16.msra.mxu0 %v1682
      %1736 = vmatpush.bf16.msra.mxu0 %v1681
      %1737 = vmatpush.bf16.msra.mxu0 %v1680
      %1738 = vmatpush.bf16.msra.mxu0 %v1679
      %1739 = vmatpush.bf16.msra.mxu0 %v1678
      %1740 = vmatpush.bf16.msra.mxu0 %v1677
      %1741 = vmatpush.bf16.msra.mxu0 %v1676
      %1742 = vmatmul.bf16.gmra.mxu0 %v1513
      %v1743 = vpop.f32.mrf.mxu0
      %v1744 = vadd.f32 %v1731, %v1743
      %v1745 = vpop.f32.mrf.mxu0
      %1746 = vdwg.mxu0
      %v1747 = vadd.f32 %v1497, %v1744
      %v1748 = vld [vmem:[%s4] sm:$0x1]
      %v1749 = vadd.f32 %v1747, %v1748
      %v1750 = vld [vmem:[%s211] sm:$0x1]
      %v1751 = vunpack.c.l.bf16 %v1750
      %v1752 = vadd.f32 %v1749, %v1751
      %v1753 = vpack.c.bf16 %v1752, %v1752
      %vm1754 = vsmask.f32 256
      %vm1755 = vmand %vm236, %vm1754
      %v1756 = vld [vmem:[%s214] sm:$0x1]
      %v1757 = vsel %vm1755, %v1753, %v1756
      %1758 = vst [vmem:[%s214] sm:$0x1] %v1757
      %p1759 = scmp.lt.s32.totalorder %s16, 1
      %s1760 = scalar_select %p1759, %s16, 1
      %s1761 = scalar_lea.vmem %s5, %s1760
      // Predicated region
      $region41: #{_lambda_.11} parent=39 // pred_check
        %p1762 = pneg %p144
      $region42: #{_lambda_.11} parent=39 // pred_check_branch
        %1764 = sbr.rel (%p1762) target = $region44
      $region43: #{_lambda_.11} parent=39 // pred_region
        _
      $region44: #{_lambda_.11} parent=39 // pred_fallthru
        _
    $region40: #{_lambda_.11} parent=5 // pred_fallthru
      _
    %p1765 = scmp.le.s32.totalorder 2, %s11
    // Predicated region
    $region45: #{_lambda_.11} parent=5 // pred_check
      %p1766 = pneg %p1765
    $region46: #{_lambda_.11} parent=5 // pred_check_branch
      %1768 = sbr.rel (%p1766) target = $region48
    $region47: #{_lambda_.11} parent=5 // pred_region
      %s1769 = ssub.s32 %s11, 2
      // Predicated region
      $region49: #{_lambda_.11} parent=47 // pred_check
        %p1770 = pneg %p150
      $region50: #{_lambda_.11} parent=47 // pred_check_branch
        %1772 = sbr.rel (%p1770) target = $region52
      $region51: #{_lambda_.11} parent=47 // pred_region
        %p1773 = scmp.lt.s32.totalorder %s17, 1
        %s1774 = scalar_select %p1773, %s17, 1
        %s1775 = scalar_lea.vmem %s5, %s1774
      $region52: #{_lambda_.11} parent=47 // pred_fallthru
        _
    $region48: #{_lambda_.11} parent=5 // pred_fallthru
      _
  $region6: #{_lambda_.11} parent=0 // loop_footer
    %s15 = sadd.s32 1, %s11
  $region7: #{_lambda_.11} parent=0 // loop_footer_branch
    %10 = sbr.rel target = $region3
  $region8: #{_lambda_.11} parent=0 // loop_exit
    _

// kernel: _lambda_.13
$region0: #{_lambda_.13}
  #allocation0 [shape = 'u32[]', space=smem, size = 0x4, offset = 0x4, fixed_abs, tag = 'smem constant byte address 0x4 - core index']
  #allocation1 [shape = 'u32[72,128]{1,0:T(1,128)}', space=vmem, size = 0x9000, scoped, tag = 'internal scratch']
  #allocation2 [shape = 'bf16[3,3,128]{2,1,0:T(4,128)(2,1)}', space=vmem, size = 0xc00, scoped, tag = 'scratch operand']
  #allocation3 [shape = 'bf16[3,3,128]{2,1,0:T(4,128)(2,1)}', space=vmem, size = 0xc00, scoped, tag = 'scratch operand']
  %s0 = inlined_call_operand.vmem [shape: bf16[2,1,1,128], index: 0, kind: input, shape index: {}]
  %s1 = inlined_call_operand.vmem [shape: bf16[3,384,128], index: 1, kind: input, shape index: {}]
  %s2 = inlined_call_operand.vmem [shape: f32[1,128], index: 2, kind: input, shape index: {}]
  %s3 = inlined_call_operand.vmem [shape: bf16[3,384,128], index: 3, kind: input, shape index: {}]
  %s4 = inlined_call_operand.vmem [shape: f32[1,128], index: 4, kind: input, shape index: {}]
  %s5 = inlined_call_operand.vmem [shape: bf16[3,384,128], index: 5, kind: input, shape index: {}]
  %s6 = inlined_call_operand.vmem [shape: f32[1,128], index: 6, kind: input, shape index: {}]
  %s7 = inlined_call_operand.vmem [shape: bf16[2,1,1,128], index: 7, kind: output, shape index: {0}]
  %s8 = inlined_call_operand.vmem [shape: bf16[2,1,1,128], index: 8, kind: output, shape index: {1}]
  %9 = xla_tuple %s7, %s8
  %s10 = sld [smem:[#allocation0]]
  $region69: #{_lambda_.13} parent=0
    _
  %s12 = ssub.s32 1, %s10
  %s13 = scalar_select 0, %s12, %s10
  loop: start=0, step=1, limit=4
  $region2: #{_lambda_.13} parent=0 // loop_pre_header
    _
  $region3: #{_lambda_.13} parent=0 // loop_header
    %s15 = sphi 0, %s19
    %p16 = scmp.ge.s32.totalorder %s15, 4
    %s25 = sphi 0, %s27
    %s28 = sphi 0, %s25
    %s29 = sphi 0, %s28
    %s45 = sphi 0, %s29
    %s49 = sphi 0, %s49
    %s51 = sphi 0, %s49
    %s52 = sphi 0, %s51
    %s66 = sphi 0, %s52
    %s70 = sphi 0, %s70
    %s72 = sphi 0, %s70
    %s73 = sphi 0, %s72
    %s87 = sphi 0, %s73
    %s91 = sphi 0, %s91
    %s93 = sphi 0, %s91
    %s94 = sphi 0, %s93
    %s108 = sphi 0, %s94
    %s112 = sphi 0, %s112
    %s114 = sphi 0, %s112
    %s115 = sphi 0, %s114
    %s129 = sphi 0, %s115
    %s133 = sphi 0, %s133
    %s135 = sphi 0, %s133
    %s136 = sphi 0, %s135
    %s150 = sphi 0, %s136
    %s154 = sphi 0, %s154
    %s156 = sphi 0, %s154
    %s157 = sphi 0, %s156
    %s171 = sphi 0, %s157
    %s177 = sphi 0, %s179
    %s180 = sphi 0, %s177
    %s181 = sphi 0, %s180
    %s197 = sphi 0, %s181
    %s203 = sphi 0, %s205
    %s206 = sphi 0, %s203
    %s207 = sphi 0, %s206
    %s223 = sphi 0, %s207
  $region4: #{_lambda_.13} parent=0 // loop_header_branch
    %18 = sbr.rel (%p16) target = $region8
  $region5: #{_lambda_.13} parent=0 // loop_body
    %s20 = ssub.s32 %s15, 1
    %s21 = ssub.s32 %s15, 2
    %s22 = sadd.s32 %s15, 1
    %s23 = ssub.s32 %s15, %s22
    %p24 = scmp.eq.s32.totalorder %s23, 0
    %s26 = sadd.s32 %s25, 1
    %s27 = scalar_select %p24, %s25, %s26
    %p30 = pneg %p24
    %p31 = scmp.eq.s32.totalorder %s15, 1
    %p32 = por %p30, %p31
    %p33 = scmp.ne.s32.totalorder %s25, %s28
    %p34 = scmp.eq.s32.totalorder %s15, 0
    %p35 = por %p33, %p34
    %p36 = scmp.ne.s32.totalorder %s25, %s28
    %p37 = scmp.eq.s32.totalorder %s20, 1
    %p38 = por %p36, %p37
    %p39 = scmp.ne.s32.totalorder %s28, %s29
    %p40 = scmp.eq.s32.totalorder %s20, 0
    %p41 = por %p39, %p40
    %p42 = scmp.ne.s32.totalorder %s28, %s29
    %p43 = scmp.eq.s32.totalorder %s21, 1
    %p44 = por %p42, %p43
    %p46 = scmp.ne.s32.totalorder %s29, %s45
    %p47 = scmp.eq.s32.totalorder %s21, 0
    %p48 = por %p46, %p47
    %s50 = sadd.s32 %s49, 1
    %p53 = scmp.eq.s32.totalorder %s15, 1
    %p54 = scmp.ne.s32.totalorder %s49, %s51
    %p55 = scmp.eq.s32.totalorder %s15, 0
    %p56 = por %p54, %p55
    %p57 = scmp.ne.s32.totalorder %s49, %s51
    %p58 = scmp.eq.s32.totalorder %s20, 1
    %p59 = por %p57, %p58
    %p60 = scmp.ne.s32.totalorder %s51, %s52
    %p61 = scmp.eq.s32.totalorder %s20, 0
    %p62 = por %p60, %p61
    %p63 = scmp.ne.s32.totalorder %s51, %s52
    %p64 = scmp.eq.s32.totalorder %s21, 1
    %p65 = por %p63, %p64
    %p67 = scmp.ne.s32.totalorder %s52, %s66
    %p68 = scmp.eq.s32.totalorder %s21, 0
    %p69 = por %p67, %p68
    %s71 = sadd.s32 %s70, 1
    %p74 = scmp.eq.s32.totalorder %s15, 1
    %p75 = scmp.ne.s32.totalorder %s70, %s72
    %p76 = scmp.eq.s32.totalorder %s15, 0
    %p77 = por %p75, %p76
    %p78 = scmp.ne.s32.totalorder %s70, %s72
    %p79 = scmp.eq.s32.totalorder %s20, 1
    %p80 = por %p78, %p79
    %p81 = scmp.ne.s32.totalorder %s72, %s73
    %p82 = scmp.eq.s32.totalorder %s20, 0
    %p83 = por %p81, %p82
    %p84 = scmp.ne.s32.totalorder %s72, %s73
    %p85 = scmp.eq.s32.totalorder %s21, 1
    %p86 = por %p84, %p85
    %p88 = scmp.ne.s32.totalorder %s73, %s87
    %p89 = scmp.eq.s32.totalorder %s21, 0
    %p90 = por %p88, %p89
    %s92 = sadd.s32 %s91, 1
    %p95 = scmp.eq.s32.totalorder %s15, 1
    %p96 = scmp.ne.s32.totalorder %s91, %s93
    %p97 = scmp.eq.s32.totalorder %s15, 0
    %p98 = por %p96, %p97
    %p99 = scmp.ne.s32.totalorder %s91, %s93
    %p100 = scmp.eq.s32.totalorder %s20, 1
    %p101 = por %p99, %p100
    %p102 = scmp.ne.s32.totalorder %s93, %s94
    %p103 = scmp.eq.s32.totalorder %s20, 0
    %p104 = por %p102, %p103
    %p105 = scmp.ne.s32.totalorder %s93, %s94
    %p106 = scmp.eq.s32.totalorder %s21, 1
    %p107 = por %p105, %p106
    %p109 = scmp.ne.s32.totalorder %s94, %s108
    %p110 = scmp.eq.s32.totalorder %s21, 0
    %p111 = por %p109, %p110
    %s113 = sadd.s32 %s112, 1
    %p116 = scmp.eq.s32.totalorder %s15, 1
    %p117 = scmp.ne.s32.totalorder %s112, %s114
    %p118 = scmp.eq.s32.totalorder %s15, 0
    %p119 = por %p117, %p118
    %p120 = scmp.ne.s32.totalorder %s112, %s114
    %p121 = scmp.eq.s32.totalorder %s20, 1
    %p122 = por %p120, %p121
    %p123 = scmp.ne.s32.totalorder %s114, %s115
    %p124 = scmp.eq.s32.totalorder %s20, 0
    %p125 = por %p123, %p124
    %p126 = scmp.ne.s32.totalorder %s114, %s115
    %p127 = scmp.eq.s32.totalorder %s21, 1
    %p128 = por %p126, %p127
    %p130 = scmp.ne.s32.totalorder %s115, %s129
    %p131 = scmp.eq.s32.totalorder %s21, 0
    %p132 = por %p130, %p131
    %s134 = sadd.s32 %s133, 1
    %p137 = scmp.eq.s32.totalorder %s15, 1
    %p138 = scmp.ne.s32.totalorder %s133, %s135
    %p139 = scmp.eq.s32.totalorder %s15, 0
    %p140 = por %p138, %p139
    %p141 = scmp.ne.s32.totalorder %s133, %s135
    %p142 = scmp.eq.s32.totalorder %s20, 1
    %p143 = por %p141, %p142
    %p144 = scmp.ne.s32.totalorder %s135, %s136
    %p145 = scmp.eq.s32.totalorder %s20, 0
    %p146 = por %p144, %p145
    %p147 = scmp.ne.s32.totalorder %s135, %s136
    %p148 = scmp.eq.s32.totalorder %s21, 1
    %p149 = por %p147, %p148
    %p151 = scmp.ne.s32.totalorder %s136, %s150
    %p152 = scmp.eq.s32.totalorder %s21, 0
    %p153 = por %p151, %p152
    %s155 = sadd.s32 %s154, 1
    %p158 = scmp.eq.s32.totalorder %s15, 1
    %p159 = scmp.ne.s32.totalorder %s154, %s156
    %p160 = scmp.eq.s32.totalorder %s15, 0
    %p161 = por %p159, %p160
    %p162 = scmp.ne.s32.totalorder %s154, %s156
    %p163 = scmp.eq.s32.totalorder %s20, 1
    %p164 = por %p162, %p163
    %p165 = scmp.ne.s32.totalorder %s156, %s157
    %p166 = scmp.eq.s32.totalorder %s20, 0
    %p167 = por %p165, %p166
    %p168 = scmp.ne.s32.totalorder %s156, %s157
    %p169 = scmp.eq.s32.totalorder %s21, 1
    %p170 = por %p168, %p169
    %p172 = scmp.ne.s32.totalorder %s157, %s171
    %p173 = scmp.eq.s32.totalorder %s21, 0
    %p174 = por %p172, %p173
    %s175 = ssub.s32 %s15, %s22
    %p176 = scmp.eq.s32.totalorder %s175, 0
    %s178 = sadd.s32 %s177, 1
    %s179 = scalar_select %p176, %s177, %s178
    %p182 = pneg %p176
    %p183 = scmp.eq.s32.totalorder %s15, 1
    %p184 = por %p182, %p183
    %p185 = scmp.ne.s32.totalorder %s177, %s180
    %p186 = scmp.eq.s32.totalorder %s15, 0
    %p187 = por %p185, %p186
    %p188 = scmp.ne.s32.totalorder %s177, %s180
    %p189 = scmp.eq.s32.totalorder %s20, 1
    %p190 = por %p188, %p189
    %p191 = scmp.ne.s32.totalorder %s180, %s181
    %p192 = scmp.eq.s32.totalorder %s20, 0
    %p193 = por %p191, %p192
    %p194 = scmp.ne.s32.totalorder %s180, %s181
    %p195 = scmp.eq.s32.totalorder %s21, 1
    %p196 = por %p194, %p195
    %p198 = scmp.ne.s32.totalorder %s181, %s197
    %p199 = scmp.eq.s32.totalorder %s21, 0
    %p200 = por %p198, %p199
    %s201 = ssub.s32 %s15, %s22
    %p202 = scmp.eq.s32.totalorder %s201, 0
    %s204 = sadd.s32 %s203, 1
    %s205 = scalar_select %p202, %s203, %s204
    %p208 = pneg %p202
    %p209 = scmp.eq.s32.totalorder %s15, 1
    %p210 = por %p208, %p209
    %p211 = scmp.ne.s32.totalorder %s203, %s206
    %p212 = scmp.eq.s32.totalorder %s15, 0
    %p213 = por %p211, %p212
    %p214 = scmp.ne.s32.totalorder %s203, %s206
    %p215 = scmp.eq.s32.totalorder %s20, 1
    %p216 = por %p214, %p215
    %p217 = scmp.ne.s32.totalorder %s206, %s207
    %p218 = scmp.eq.s32.totalorder %s20, 0
    %p219 = por %p217, %p218
    %p220 = scmp.ne.s32.totalorder %s206, %s207
    %p221 = scmp.eq.s32.totalorder %s21, 1
    %p222 = por %p220, %p221
    %p224 = scmp.ne.s32.totalorder %s207, %s223
    %p225 = scmp.eq.s32.totalorder %s21, 0
    %p226 = por %p224, %p225
    %p227 = scmp.le.s32.totalorder 1, %s15
    %p228 = scmp.lt.s32.totalorder %s15, 3
    %p229 = pnand %p227, %p228
    %p230 = pneg %p229
    // Predicated region
    $region9: #{_lambda_.13} parent=5 // pred_check
      _
    $region10: #{_lambda_.13} parent=5 // pred_check_branch
      %232 = sbr.rel (%p229) target = $region12
    $region11: #{_lambda_.13} parent=5 // pred_region
      %s233 = ssub.s32 %s15, 1
      // Predicated region
      $region13: #{_lambda_.13} parent=11 // pred_check
        %p234 = pneg %p62
      $region14: #{_lambda_.13} parent=11 // pred_check_branch
        %236 = sbr.rel (%p234) target = $region16
      $region15: #{_lambda_.13} parent=11 // pred_region
        _
      $region16: #{_lambda_.13} parent=11 // pred_fallthru
        _
      // Predicated region
      $region17: #{_lambda_.13} parent=11 // pred_check
        %p237 = pneg %p83
      $region18: #{_lambda_.13} parent=11 // pred_check_branch
        %239 = sbr.rel (%p237) target = $region20
      $region19: #{_lambda_.13} parent=11 // pred_region
        _
      $region20: #{_lambda_.13} parent=11 // pred_fallthru
        _
      // Predicated region
      $region21: #{_lambda_.13} parent=11 // pred_check
        %p240 = pneg %p104
      $region22: #{_lambda_.13} parent=11 // pred_check_branch
        %242 = sbr.rel (%p240) target = $region24
      $region23: #{_lambda_.13} parent=11 // pred_region
        _
      $region24: #{_lambda_.13} parent=11 // pred_fallthru
        _
      // Predicated region
      $region25: #{_lambda_.13} parent=11 // pred_check
        %p243 = pneg %p125
      $region26: #{_lambda_.13} parent=11 // pred_check_branch
        %245 = sbr.rel (%p243) target = $region28
      $region27: #{_lambda_.13} parent=11 // pred_region
        _
      $region28: #{_lambda_.13} parent=11 // pred_fallthru
        _
      // Predicated region
      $region29: #{_lambda_.13} parent=11 // pred_check
        %p246 = pneg %p146
      $region30: #{_lambda_.13} parent=11 // pred_check_branch
        %248 = sbr.rel (%p246) target = $region32
      $region31: #{_lambda_.13} parent=11 // pred_region
        _
      $region32: #{_lambda_.13} parent=11 // pred_fallthru
        _
      // Predicated region
      $region33: #{_lambda_.13} parent=11 // pred_check
        %p249 = pneg %p167
      $region34: #{_lambda_.13} parent=11 // pred_check_branch
        %251 = sbr.rel (%p249) target = $region36
      $region35: #{_lambda_.13} parent=11 // pred_region
        _
      $region36: #{_lambda_.13} parent=11 // pred_fallthru
        _
    $region12: #{_lambda_.13} parent=5 // pred_fallthru
      _
    %p252 = scmp.lt.s32.totalorder %s15, 2
    // Predicated region
    $region37: #{_lambda_.13} parent=5 // pred_check
      %p253 = pneg %p252
    $region38: #{_lambda_.13} parent=5 // pred_check_branch
      %255 = sbr.rel (%p253) target = $region40
    $region39: #{_lambda_.13} parent=5 // pred_region
      // Predicated region
      $region41: #{_lambda_.13} parent=39 // pred_check
        %p256 = pneg %p35
      $region42: #{_lambda_.13} parent=39 // pred_check_branch
        %258 = sbr.rel (%p256) target = $region44
      $region43: #{_lambda_.13} parent=39 // pred_region
        %p259 = scmp.lt.s32.totalorder %s15, 1
        %s260 = scalar_select %p259, %s15, 1
        %s261 = scalar_lea.vmem %s0, %s260
      $region44: #{_lambda_.13} parent=39 // pred_fallthru
        _
    $region40: #{_lambda_.13} parent=5 // pred_fallthru
      _
    %p262 = scmp.le.s32.totalorder 1, %s15
    %p263 = scmp.lt.s32.totalorder %s15, 3
    %p264 = pnand %p262, %p263
    %p265 = pneg %p264
    // Predicated region
    $region45: #{_lambda_.13} parent=5 // pred_check
      _
    $region46: #{_lambda_.13} parent=5 // pred_check_branch
      %267 = sbr.rel (%p264) target = $region48
    $region47: #{_lambda_.13} parent=5 // pred_region
      %s268 = ssub.s32 %s15, 1
      %p269 = scmp.lt.s32.totalorder %s20, 1
      %s270 = scalar_select %p269, %s20, 1
      %s271 = scalar_lea.vmem %s0, %s270
      %p272 = pneg %p41
      %p273 = pneg %p38
      %p274 = pneg %p62
      %p275 = pneg %p59
      %p276 = pneg %p83
      %p277 = pneg %p80
      %p278 = pneg %p104
      %p279 = pneg %p101
      %p280 = pneg %p125
      %p281 = pneg %p122
      %p282 = pneg %p146
      %p283 = pneg %p143
      %p284 = pneg %p167
      %p285 = pneg %p164
      %p286 = pneg %p193
      %p287 = pneg %p190
      %p288 = scmp.lt.s32.totalorder %s20, 1
      %s289 = scalar_select %p288, %s20, 1
      %s290 = scalar_lea.vmem %s7, %s289
      %p291 = pneg %p219
      %p292 = pneg %p216
      %p293 = scmp.lt.s32.totalorder %s20, 1
      %s294 = scalar_select %p293, %s20, 1
      %s295 = scalar_lea.vmem %s8, %s294
      %p296 = scmp.lt.s32.totalorder %s20, 1
      %s297 = scalar_select %p296, %s20, 1
      %s298 = scalar_lea.vmem %s0, %s297
      %p299 = scmp.lt.s32.totalorder %s20, 1
      %s300 = scalar_select %p299, %s20, 1
      %s301 = scalar_lea.vmem %s7, %s300
      %p302 = scmp.lt.s32.totalorder %s20, 1
      %s303 = scalar_select %p302, %s20, 1
      %s304 = scalar_lea.vmem %s8, %s303
      %vm306 = vcmask 1041408
      %vm307 = vsmask.f32 1280
      %vm308 = vmand %vm306, %vm307
      %v309 = vld [vmem:[#allocation2] sm:$0x3]
      %v310 = vsel %vm308, 0, %v309
      %311 = vst [vmem:[#allocation2] sm:$0x3] %v310
      %v312 = vld [vmem:[#allocation2 + $0x2] sm:$0x3]
      %v313 = vsel %vm308, 0, %v312
      %314 = vst [vmem:[#allocation2 + $0x2] sm:$0x3] %v313
      %v315 = vld [vmem:[#allocation2 + $0x4] sm:$0x3]
      %v316 = vsel %vm308, 0, %v315
      %317 = vst [vmem:[#allocation2 + $0x4] sm:$0x3] %v316
      %v318 = vld [vmem:[%s298] sm:$0x1]
      %320 = vst [vmem:[#allocation1] ss:$2 sm:$0xff] %v318
      %v321 = vld [vmem:[#allocation1] sm:$0xff]
      %v322 = vshll.u32 %v321, 16
      %s325 = scalar_lea.vmem [#allocation2], 2
      %vm326 = vcmask 1040384
      %vm327 = vsmask.f32 7938
      %vm328 = vmand %vm326, %vm327
      %v329 = vld [vmem:[%s325] sm:$0x1]
      %v330 = vsel %vm328, %v322, %v329
      %331 = vst [vmem:[%s325] sm:$0x1] %v330
      %v332 = vld [vmem:[#allocation2] sm:$0x1]
      %v333 = vld [vmem:[#allocation2] sm:$0x2]
      %335 = vst [vmem:[#allocation1] ss:$4 sm:$0xff] %v332
      %v336 = vld.sshfl [vmem:[#allocation1] sm:$0xff pattern:$0x73625140]
      %v337 = vshrl.u32 %v336, 16
      %341 = vst [vmem:[#allocation1] ss:$4 sm:$0xff] %v333
      %v342 = vld.sshfl [vmem:[#allocation1] sm:$0xff pattern:$0x73625140]
      %v344 = vrot.slane %v342, 1
      %v346 = vld [vmem:[%s1] sm:$0xf]
      %v347 = vld [vmem:[%s1 + $0x4] sm:$0xf]
      %v348 = vld [vmem:[%s1 + $0x8] sm:$0xf]
      %v349 = vld [vmem:[%s1 + $0xc] sm:$0xf]
      %v350 = vld [vmem:[%s1 + $0x10] sm:$0xf]
      %v351 = vld [vmem:[%s1 + $0x14] sm:$0xf]
      %v352 = vld [vmem:[%s1 + $0x18] sm:$0xf]
      %v353 = vld [vmem:[%s1 + $0x1c] sm:$0xf]
      %v354 = vld [vmem:[%s1 + $0x20] sm:$0xf]
      %v355 = vld [vmem:[%s1 + $0x24] sm:$0xf]
      %v356 = vld [vmem:[%s1 + $0x28] sm:$0xf]
      %v357 = vld [vmem:[%s1 + $0x2c] sm:$0xf]
      %v358 = vld [vmem:[%s1 + $0x30] sm:$0xf]
      %v359 = vld [vmem:[%s1 + $0x34] sm:$0xf]
      %v360 = vld [vmem:[%s1 + $0x38] sm:$0xf]
      %v361 = vld [vmem:[%s1 + $0x3c] sm:$0xf]
      %v362 = vld [vmem:[%s1 + $0x40] sm:$0xf]
      %v363 = vld [vmem:[%s1 + $0x44] sm:$0xf]
      %v364 = vld [vmem:[%s1 + $0x48] sm:$0xf]
      %v365 = vld [vmem:[%s1 + $0x4c] sm:$0xf]
      %v366 = vld [vmem:[%s1 + $0x50] sm:$0xf]
      %v367 = vld [vmem:[%s1 + $0x54] sm:$0xf]
      %v368 = vld [vmem:[%s1 + $0x58] sm:$0xf]
      %v369 = vld [vmem:[%s1 + $0x5c] sm:$0xf]
      %v370 = vld [vmem:[%s1 + $0x60] sm:$0xf]
      %v371 = vld [vmem:[%s1 + $0x64] sm:$0xf]
      %v372 = vld [vmem:[%s1 + $0x68] sm:$0xf]
      %v373 = vld [vmem:[%s1 + $0x6c] sm:$0xf]
      %v374 = vld [vmem:[%s1 + $0x70] sm:$0xf]
      %v375 = vld [vmem:[%s1 + $0x74] sm:$0xf]
      %v376 = vld [vmem:[%s1 + $0x78] sm:$0xf]
      %v377 = vld [vmem:[%s1 + $0x7c] sm:$0xf]
      %v378 = vld [vmem:[%s1 + $0x80] sm:$0xf]
      %v379 = vld [vmem:[%s1 + $0x84] sm:$0xf]
      %v380 = vld [vmem:[%s1 + $0x88] sm:$0xf]
      %v381 = vld [vmem:[%s1 + $0x8c] sm:$0xf]
      %v382 = vld [vmem:[%s1 + $0x90] sm:$0xf]
      %v383 = vld [vmem:[%s1 + $0x94] sm:$0xf]
      %v384 = vld [vmem:[%s1 + $0x98] sm:$0xf]
      %v385 = vld [vmem:[%s1 + $0x9c] sm:$0xf]
      %v386 = vld [vmem:[%s1 + $0xa0] sm:$0xf]
      %v387 = vld [vmem:[%s1 + $0xa4] sm:$0xf]
      %v388 = vld [vmem:[%s1 + $0xa8] sm:$0xf]
      %v389 = vld [vmem:[%s1 + $0xac] sm:$0xf]
      %v390 = vld [vmem:[%s1 + $0xb0] sm:$0xf]
      %v391 = vld [vmem:[%s1 + $0xb4] sm:$0xf]
      %v392 = vld [vmem:[%s1 + $0xb8] sm:$0xf]
      %v393 = vld [vmem:[%s1 + $0xbc] sm:$0xf]
      %v394 = vld [vmem:[%s325] sm:$0x1]
      %v395 = vld [vmem:[%s325] sm:$0x2]
      %397 = vst [vmem:[#allocation1] ss:$4 sm:$0xff] %v394
      %v398 = vld.sshfl [vmem:[#allocation1] sm:$0xff pattern:$0x73625140]
      %v399 = vshrl.u32 %v398, 16
      %403 = vst [vmem:[#allocation1] ss:$4 sm:$0xff] %v395
      %v404 = vld.sshfl [vmem:[#allocation1] sm:$0xff pattern:$0x73625140]
      %v406 = vrot.slane %v404, 1
      %s408 = scalar_lea.vmem %s1, 192
      %v409 = vld [vmem:[%s408] sm:$0xf]
      %v410 = vld [vmem:[%s408 + $0x4] sm:$0xf]
      %v411 = vld [vmem:[%s408 + $0x8] sm:$0xf]
      %v412 = vld [vmem:[%s408 + $0xc] sm:$0xf]
      %v413 = vld [vmem:[%s408 + $0x10] sm:$0xf]
      %v414 = vld [vmem:[%s408 + $0x14] sm:$0xf]
      %v415 = vld [vmem:[%s408 + $0x18] sm:$0xf]
      %v416 = vld [vmem:[%s408 + $0x1c] sm:$0xf]
      %v417 = vld [vmem:[%s408 + $0x20] sm:$0xf]
      %v418 = vld [vmem:[%s408 + $0x24] sm:$0xf]
      %v419 = vld [vmem:[%s408 + $0x28] sm:$0xf]
      %v420 = vld [vmem:[%s408 + $0x2c] sm:$0xf]
      %v421 = vld [vmem:[%s408 + $0x30] sm:$0xf]
      %v422 = vld [vmem:[%s408 + $0x34] sm:$0xf]
      %v423 = vld [vmem:[%s408 + $0x38] sm:$0xf]
      %v424 = vld [vmem:[%s408 + $0x3c] sm:$0xf]
      %v425 = vld [vmem:[%s408 + $0x40] sm:$0xf]
      %v426 = vld [vmem:[%s408 + $0x44] sm:$0xf]
      %v427 = vld [vmem:[%s408 + $0x48] sm:$0xf]
      %v428 = vld [vmem:[%s408 + $0x4c] sm:$0xf]
      %v429 = vld [vmem:[%s408 + $0x50] sm:$0xf]
      %v430 = vld [vmem:[%s408 + $0x54] sm:$0xf]
      %v431 = vld [vmem:[%s408 + $0x58] sm:$0xf]
      %v432 = vld [vmem:[%s408 + $0x5c] sm:$0xf]
      %v433 = vld [vmem:[%s408 + $0x60] sm:$0xf]
      %v434 = vld [vmem:[%s408 + $0x64] sm:$0xf]
      %v435 = vld [vmem:[%s408 + $0x68] sm:$0xf]
      %v436 = vld [vmem:[%s408 + $0x6c] sm:$0xf]
      %v437 = vld [vmem:[%s408 + $0x70] sm:$0xf]
      %v438 = vld [vmem:[%s408 + $0x74] sm:$0xf]
      %v439 = vld [vmem:[%s408 + $0x78] sm:$0xf]
      %v440 = vld [vmem:[%s408 + $0x7c] sm:$0xf]
      %v441 = vld [vmem:[%s408 + $0x80] sm:$0xf]
      %v442 = vld [vmem:[%s408 + $0x84] sm:$0xf]
      %v443 = vld [vmem:[%s408 + $0x88] sm:$0xf]
      %v444 = vld [vmem:[%s408 + $0x8c] sm:$0xf]
      %v445 = vld [vmem:[%s408 + $0x90] sm:$0xf]
      %v446 = vld [vmem:[%s408 + $0x94] sm:$0xf]
      %v447 = vld [vmem:[%s408 + $0x98] sm:$0xf]
      %v448 = vld [vmem:[%s408 + $0x9c] sm:$0xf]
      %v449 = vld [vmem:[%s408 + $0xa0] sm:$0xf]
      %v450 = vld [vmem:[%s408 + $0xa4] sm:$0xf]
      %v451 = vld [vmem:[%s408 + $0xa8] sm:$0xf]
      %v452 = vld [vmem:[%s408 + $0xac] sm:$0xf]
      %v453 = vld [vmem:[%s408 + $0xb0] sm:$0xf]
      %v454 = vld [vmem:[%s408 + $0xb4] sm:$0xf]
      %v455 = vld [vmem:[%s408 + $0xb8] sm:$0xf]
      %v456 = vld [vmem:[%s408 + $0xbc] sm:$0xf]
      %v505 = vunpack.c.l.b16 %v409
      %v506 = vunpack.c.l.b16 %v410
      %v507 = vunpack.c.l.b16 %v411
      %v508 = vunpack.c.l.b16 %v412
      %v509 = vunpack.c.l.b16 %v413
      %v510 = vunpack.c.l.b16 %v414
      %v511 = vunpack.c.l.b16 %v415
      %v512 = vunpack.c.l.b16 %v416
      %v513 = vunpack.c.l.b16 %v417
      %v514 = vunpack.c.l.b16 %v418
      %v515 = vunpack.c.l.b16 %v419
      %v516 = vunpack.c.l.b16 %v420
      %v517 = vunpack.c.l.b16 %v421
      %v518 = vunpack.c.l.b16 %v422
      %v519 = vunpack.c.l.b16 %v423
      %v520 = vunpack.c.l.b16 %v424
      %v521 = vunpack.c.l.b16 %v425
      %v522 = vunpack.c.l.b16 %v426
      %v523 = vunpack.c.l.b16 %v427
      %v524 = vunpack.c.l.b16 %v428
      %v525 = vunpack.c.l.b16 %v429
      %v526 = vunpack.c.l.b16 %v430
      %v527 = vunpack.c.l.b16 %v431
      %v528 = vunpack.c.l.b16 %v432
      %v529 = vunpack.c.l.b16 %v433
      %v530 = vunpack.c.l.b16 %v434
      %v531 = vunpack.c.l.b16 %v435
      %v532 = vunpack.c.l.b16 %v436
      %v533 = vunpack.c.l.b16 %v437
      %v534 = vunpack.c.l.b16 %v438
      %v535 = vunpack.c.l.b16 %v439
      %v536 = vunpack.c.l.b16 %v440
      %v537 = vunpack.c.l.b16 %v441
      %v538 = vunpack.c.l.b16 %v442
      %v539 = vunpack.c.l.b16 %v443
      %v540 = vunpack.c.l.b16 %v444
      %v541 = vunpack.c.l.b16 %v445
      %v542 = vunpack.c.l.b16 %v446
      %v543 = vunpack.c.l.b16 %v447
      %v544 = vunpack.c.l.b16 %v448
      %v545 = vunpack.c.l.b16 %v449
      %v546 = vunpack.c.l.b16 %v450
      %v547 = vunpack.c.l.b16 %v451
      %v548 = vunpack.c.l.b16 %v452
      %v549 = vunpack.c.l.b16 %v453
      %v550 = vunpack.c.l.b16 %v454
      %v551 = vunpack.c.l.b16 %v455
      %v552 = vunpack.c.l.b16 %v456
      %v553 = vpack.c.b16 %v506, %v505
      %v554 = vpack.c.b16 %v508, %v507
      %v555 = vpack.c.b16 %v510, %v509
      %v556 = vpack.c.b16 %v512, %v511
      %v557 = vpack.c.b16 %v514, %v513
      %v558 = vpack.c.b16 %v516, %v515
      %v559 = vpack.c.b16 %v518, %v517
      %v560 = vpack.c.b16 %v520, %v519
      %v561 = vpack.c.b16 %v522, %v521
      %v562 = vpack.c.b16 %v524, %v523
      %v563 = vpack.c.b16 %v526, %v525
      %v564 = vpack.c.b16 %v528, %v527
      %v565 = vpack.c.b16 %v530, %v529
      %v566 = vpack.c.b16 %v532, %v531
      %v567 = vpack.c.b16 %v534, %v533
      %v568 = vpack.c.b16 %v536, %v535
      %v569 = vpack.c.b16 %v538, %v537
      %v570 = vpack.c.b16 %v540, %v539
      %v571 = vpack.c.b16 %v542, %v541
      %v572 = vpack.c.b16 %v544, %v543
      %v573 = vpack.c.b16 %v546, %v545
      %v574 = vpack.c.b16 %v548, %v547
      %v575 = vpack.c.b16 %v550, %v549
      %v576 = vpack.c.b16 %v552, %v551
      %601 = vmatpush.bf16.msra.mxu0 %v560
      %602 = vmatpush.bf16.msra.mxu0 %v559
      %603 = vmatpush.bf16.msra.mxu0 %v558
      %604 = vmatpush.bf16.msra.mxu0 %v557
      %605 = vmatpush.bf16.msra.mxu0 %v556
      %606 = vmatpush.bf16.msra.mxu0 %v555
      %607 = vmatpush.bf16.msra.mxu0 %v554
      %608 = vmatpush.bf16.msra.mxu0 %v553
      %609 = vmatmul.bf16.gmra.mxu0 %v394
      %v610 = vpop.f32.mrf.mxu0
      %v611 = vadd.f32 0.0, %v610
      %v612 = vpop.f32.mrf.mxu0
      %613 = vdwg.mxu0
      %614 = vmatpush.bf16.msra.mxu0 %v568
      %615 = vmatpush.bf16.msra.mxu0 %v567
      %616 = vmatpush.bf16.msra.mxu0 %v566
      %617 = vmatpush.bf16.msra.mxu0 %v565
      %618 = vmatpush.bf16.msra.mxu0 %v564
      %619 = vmatpush.bf16.msra.mxu0 %v563
      %620 = vmatpush.bf16.msra.mxu0 %v562
      %621 = vmatpush.bf16.msra.mxu0 %v561
      %622 = vmatmul.bf16.gmra.mxu0 %v399
      %v623 = vpop.f32.mrf.mxu0
      %v624 = vadd.f32 %v611, %v623
      %v625 = vpop.f32.mrf.mxu0
      %626 = vdwg.mxu0
      %627 = vmatpush.bf16.msra.mxu0 %v576
      %628 = vmatpush.bf16.msra.mxu0 %v575
      %629 = vmatpush.bf16.msra.mxu0 %v574
      %630 = vmatpush.bf16.msra.mxu0 %v573
      %631 = vmatpush.bf16.msra.mxu0 %v572
      %632 = vmatpush.bf16.msra.mxu0 %v571
      %633 = vmatpush.bf16.msra.mxu0 %v570
      %634 = vmatpush.bf16.msra.mxu0 %v569
      %635 = vmatmul.bf16.gmra.mxu0 %v406
      %v636 = vpop.f32.mrf.mxu0
      %v637 = vadd.f32 %v624, %v636
      %v638 = vpop.f32.mrf.mxu0
      %639 = vdwg.mxu0
      %v688 = vunpack.c.l.b16 %v346
      %v689 = vunpack.c.l.b16 %v347
      %v690 = vunpack.c.l.b16 %v348
      %v691 = vunpack.c.l.b16 %v349
      %v692 = vunpack.c.l.b16 %v350
      %v693 = vunpack.c.l.b16 %v351
      %v694 = vunpack.c.l.b16 %v352
      %v695 = vunpack.c.l.b16 %v353
      %v696 = vunpack.c.l.b16 %v354
      %v697 = vunpack.c.l.b16 %v355
      %v698 = vunpack.c.l.b16 %v356
      %v699 = vunpack.c.l.b16 %v357
      %v700 = vunpack.c.l.b16 %v358
      %v701 = vunpack.c.l.b16 %v359
      %v702 = vunpack.c.l.b16 %v360
      %v703 = vunpack.c.l.b16 %v361
      %v704 = vunpack.c.l.b16 %v362
      %v705 = vunpack.c.l.b16 %v363
      %v706 = vunpack.c.l.b16 %v364
      %v707 = vunpack.c.l.b16 %v365
      %v708 = vunpack.c.l.b16 %v366
      %v709 = vunpack.c.l.b16 %v367
      %v710 = vunpack.c.l.b16 %v368
      %v711 = vunpack.c.l.b16 %v369
      %v712 = vunpack.c.l.b16 %v370
      %v713 = vunpack.c.l.b16 %v371
      %v714 = vunpack.c.l.b16 %v372
      %v715 = vunpack.c.l.b16 %v373
      %v716 = vunpack.c.l.b16 %v374
      %v717 = vunpack.c.l.b16 %v375
      %v718 = vunpack.c.l.b16 %v376
      %v719 = vunpack.c.l.b16 %v377
      %v720 = vunpack.c.l.b16 %v378
      %v721 = vunpack.c.l.b16 %v379
      %v722 = vunpack.c.l.b16 %v380
      %v723 = vunpack.c.l.b16 %v381
      %v724 = vunpack.c.l.b16 %v382
      %v725 = vunpack.c.l.b16 %v383
      %v726 = vunpack.c.l.b16 %v384
      %v727 = vunpack.c.l.b16 %v385
      %v728 = vunpack.c.l.b16 %v386
      %v729 = vunpack.c.l.b16 %v387
      %v730 = vunpack.c.l.b16 %v388
      %v731 = vunpack.c.l.b16 %v389
      %v732 = vunpack.c.l.b16 %v390
      %v733 = vunpack.c.l.b16 %v391
      %v734 = vunpack.c.l.b16 %v392
      %v735 = vunpack.c.l.b16 %v393
      %v736 = vpack.c.b16 %v689, %v688
      %v737 = vpack.c.b16 %v691, %v690
      %v738 = vpack.c.b16 %v693, %v692
      %v739 = vpack.c.b16 %v695, %v694
      %v740 = vpack.c.b16 %v697, %v696
      %v741 = vpack.c.b16 %v699, %v698
      %v742 = vpack.c.b16 %v701, %v700
      %v743 = vpack.c.b16 %v703, %v702
      %v744 = vpack.c.b16 %v705, %v704
      %v745 = vpack.c.b16 %v707, %v706
      %v746 = vpack.c.b16 %v709, %v708
      %v747 = vpack.c.b16 %v711, %v710
      %v748 = vpack.c.b16 %v713, %v712
      %v749 = vpack.c.b16 %v715, %v714
      %v750 = vpack.c.b16 %v717, %v716
      %v751 = vpack.c.b16 %v719, %v718
      %v752 = vpack.c.b16 %v721, %v720
      %v753 = vpack.c.b16 %v723, %v722
      %v754 = vpack.c.b16 %v725, %v724
      %v755 = vpack.c.b16 %v727, %v726
      %v756 = vpack.c.b16 %v729, %v728
      %v757 = vpack.c.b16 %v731, %v730
      %v758 = vpack.c.b16 %v733, %v732
      %v759 = vpack.c.b16 %v735, %v734
      %784 = vmatpush.bf16.msra.mxu0 %v743
      %785 = vmatpush.bf16.msra.mxu0 %v742
      %786 = vmatpush.bf16.msra.mxu0 %v741
      %787 = vmatpush.bf16.msra.mxu0 %v740
      %788 = vmatpush.bf16.msra.mxu0 %v739
      %789 = vmatpush.bf16.msra.mxu0 %v738
      %790 = vmatpush.bf16.msra.mxu0 %v737
      %791 = vmatpush.bf16.msra.mxu0 %v736
      %792 = vmatmul.bf16.gmra.mxu0 %v332
      %v793 = vpop.f32.mrf.mxu0
      %v794 = vadd.f32 %v637, %v793
      %v795 = vpop.f32.mrf.mxu0
      %796 = vdwg.mxu0
      %797 = vmatpush.bf16.msra.mxu0 %v751
      %798 = vmatpush.bf16.msra.mxu0 %v750
      %799 = vmatpush.bf16.msra.mxu0 %v749
      %800 = vmatpush.bf16.msra.mxu0 %v748
      %801 = vmatpush.bf16.msra.mxu0 %v747
      %802 = vmatpush.bf16.msra.mxu0 %v746
      %803 = vmatpush.bf16.msra.mxu0 %v745
      %804 = vmatpush.bf16.msra.mxu0 %v744
      %805 = vmatmul.bf16.gmra.mxu0 %v337
      %v806 = vpop.f32.mrf.mxu0
      %v807 = vadd.f32 %v794, %v806
      %v808 = vpop.f32.mrf.mxu0
      %809 = vdwg.mxu0
      %810 = vmatpush.bf16.msra.mxu0 %v759
      %811 = vmatpush.bf16.msra.mxu0 %v758
      %812 = vmatpush.bf16.msra.mxu0 %v757
      %813 = vmatpush.bf16.msra.mxu0 %v756
      %814 = vmatpush.bf16.msra.mxu0 %v755
      %815 = vmatpush.bf16.msra.mxu0 %v754
      %816 = vmatpush.bf16.msra.mxu0 %v753
      %817 = vmatpush.bf16.msra.mxu0 %v752
      %818 = vmatmul.bf16.gmra.mxu0 %v344
      %v819 = vpop.f32.mrf.mxu0
      %v820 = vadd.f32 %v807, %v819
      %v821 = vpop.f32.mrf.mxu0
      %822 = vdwg.mxu0
      %s823 = scalar_lea.vmem [#allocation2], 4
      %v824 = vld [vmem:[%s823] sm:$0x1]
      %v825 = vld [vmem:[%s823] sm:$0x2]
      %827 = vst [vmem:[#allocation1] ss:$4 sm:$0xff] %v824
      %v828 = vld.sshfl [vmem:[#allocation1] sm:$0xff pattern:$0x73625140]
      %v829 = vshrl.u32 %v828, 16
      %833 = vst [vmem:[#allocation1] ss:$4 sm:$0xff] %v825
      %v834 = vld.sshfl [vmem:[#allocation1] sm:$0xff pattern:$0x73625140]
      %v836 = vrot.slane %v834, 1
      %s838 = scalar_lea.vmem %s1, 384
      %v839 = vld [vmem:[%s838] sm:$0xf]
      %v840 = vld [vmem:[%s838 + $0x4] sm:$0xf]
      %v841 = vld [vmem:[%s838 + $0x8] sm:$0xf]
      %v842 = vld [vmem:[%s838 + $0xc] sm:$0xf]
      %v843 = vld [vmem:[%s838 + $0x10] sm:$0xf]
      %v844 = vld [vmem:[%s838 + $0x14] sm:$0xf]
      %v845 = vld [vmem:[%s838 + $0x18] sm:$0xf]
      %v846 = vld [vmem:[%s838 + $0x1c] sm:$0xf]
      %v847 = vld [vmem:[%s838 + $0x20] sm:$0xf]
      %v848 = vld [vmem:[%s838 + $0x24] sm:$0xf]
      %v849 = vld [vmem:[%s838 + $0x28] sm:$0xf]
      %v850 = vld [vmem:[%s838 + $0x2c] sm:$0xf]
      %v851 = vld [vmem:[%s838 + $0x30] sm:$0xf]
      %v852 = vld [vmem:[%s838 + $0x34] sm:$0xf]
      %v853 = vld [vmem:[%s838 + $0x38] sm:$0xf]
      %v854 = vld [vmem:[%s838 + $0x3c] sm:$0xf]
      %v855 = vld [vmem:[%s838 + $0x40] sm:$0xf]
      %v856 = vld [vmem:[%s838 + $0x44] sm:$0xf]
      %v857 = vld [vmem:[%s838 + $0x48] sm:$0xf]
      %v858 = vld [vmem:[%s838 + $0x4c] sm:$0xf]
      %v859 = vld [vmem:[%s838 + $0x50] sm:$0xf]
      %v860 = vld [vmem:[%s838 + $0x54] sm:$0xf]
      %v861 = vld [vmem:[%s838 + $0x58] sm:$0xf]
      %v862 = vld [vmem:[%s838 + $0x5c] sm:$0xf]
      %v863 = vld [vmem:[%s838 + $0x60] sm:$0xf]
      %v864 = vld [vmem:[%s838 + $0x64] sm:$0xf]
      %v865 = vld [vmem:[%s838 + $0x68] sm:$0xf]
      %v866 = vld [vmem:[%s838 + $0x6c] sm:$0xf]
      %v867 = vld [vmem:[%s838 + $0x70] sm:$0xf]
      %v868 = vld [vmem:[%s838 + $0x74] sm:$0xf]
      %v869 = vld [vmem:[%s838 + $0x78] sm:$0xf]
      %v870 = vld [vmem:[%s838 + $0x7c] sm:$0xf]
      %v871 = vld [vmem:[%s838 + $0x80] sm:$0xf]
      %v872 = vld [vmem:[%s838 + $0x84] sm:$0xf]
      %v873 = vld [vmem:[%s838 + $0x88] sm:$0xf]
      %v874 = vld [vmem:[%s838 + $0x8c] sm:$0xf]
      %v875 = vld [vmem:[%s838 + $0x90] sm:$0xf]
      %v876 = vld [vmem:[%s838 + $0x94] sm:$0xf]
      %v877 = vld [vmem:[%s838 + $0x98] sm:$0xf]
      %v878 = vld [vmem:[%s838 + $0x9c] sm:$0xf]
      %v879 = vld [vmem:[%s838 + $0xa0] sm:$0xf]
      %v880 = vld [vmem:[%s838 + $0xa4] sm:$0xf]
      %v881 = vld [vmem:[%s838 + $0xa8] sm:$0xf]
      %v882 = vld [vmem:[%s838 + $0xac] sm:$0xf]
      %v883 = vld [vmem:[%s838 + $0xb0] sm:$0xf]
      %v884 = vld [vmem:[%s838 + $0xb4] sm:$0xf]
      %v885 = vld [vmem:[%s838 + $0xb8] sm:$0xf]
      %v886 = vld [vmem:[%s838 + $0xbc] sm:$0xf]
      %v935 = vunpack.c.l.b16 %v839
      %v936 = vunpack.c.l.b16 %v840
      %v937 = vunpack.c.l.b16 %v841
      %v938 = vunpack.c.l.b16 %v842
      %v939 = vunpack.c.l.b16 %v843
      %v940 = vunpack.c.l.b16 %v844
      %v941 = vunpack.c.l.b16 %v845
      %v942 = vunpack.c.l.b16 %v846
      %v943 = vunpack.c.l.b16 %v847
      %v944 = vunpack.c.l.b16 %v848
      %v945 = vunpack.c.l.b16 %v849
      %v946 = vunpack.c.l.b16 %v850
      %v947 = vunpack.c.l.b16 %v851
      %v948 = vunpack.c.l.b16 %v852
      %v949 = vunpack.c.l.b16 %v853
      %v950 = vunpack.c.l.b16 %v854
      %v951 = vunpack.c.l.b16 %v855
      %v952 = vunpack.c.l.b16 %v856
      %v953 = vunpack.c.l.b16 %v857
      %v954 = vunpack.c.l.b16 %v858
      %v955 = vunpack.c.l.b16 %v859
      %v956 = vunpack.c.l.b16 %v860
      %v957 = vunpack.c.l.b16 %v861
      %v958 = vunpack.c.l.b16 %v862
      %v959 = vunpack.c.l.b16 %v863
      %v960 = vunpack.c.l.b16 %v864
      %v961 = vunpack.c.l.b16 %v865
      %v962 = vunpack.c.l.b16 %v866
      %v963 = vunpack.c.l.b16 %v867
      %v964 = vunpack.c.l.b16 %v868
      %v965 = vunpack.c.l.b16 %v869
      %v966 = vunpack.c.l.b16 %v870
      %v967 = vunpack.c.l.b16 %v871
      %v968 = vunpack.c.l.b16 %v872
      %v969 = vunpack.c.l.b16 %v873
      %v970 = vunpack.c.l.b16 %v874
      %v971 = vunpack.c.l.b16 %v875
      %v972 = vunpack.c.l.b16 %v876
      %v973 = vunpack.c.l.b16 %v877
      %v974 = vunpack.c.l.b16 %v878
      %v975 = vunpack.c.l.b16 %v879
      %v976 = vunpack.c.l.b16 %v880
      %v977 = vunpack.c.l.b16 %v881
      %v978 = vunpack.c.l.b16 %v882
      %v979 = vunpack.c.l.b16 %v883
      %v980 = vunpack.c.l.b16 %v884
      %v981 = vunpack.c.l.b16 %v885
      %v982 = vunpack.c.l.b16 %v886
      %v983 = vpack.c.b16 %v936, %v935
      %v984 = vpack.c.b16 %v938, %v937
      %v985 = vpack.c.b16 %v940, %v939
      %v986 = vpack.c.b16 %v942, %v941
      %v987 = vpack.c.b16 %v944, %v943
      %v988 = vpack.c.b16 %v946, %v945
      %v989 = vpack.c.b16 %v948, %v947
      %v990 = vpack.c.b16 %v950, %v949
      %v991 = vpack.c.b16 %v952, %v951
      %v992 = vpack.c.b16 %v954, %v953
      %v993 = vpack.c.b16 %v956, %v955
      %v994 = vpack.c.b16 %v958, %v957
      %v995 = vpack.c.b16 %v960, %v959
      %v996 = vpack.c.b16 %v962, %v961
      %v997 = vpack.c.b16 %v964, %v963
      %v998 = vpack.c.b16 %v966, %v965
      %v999 = vpack.c.b16 %v968, %v967
      %v1000 = vpack.c.b16 %v970, %v969
      %v1001 = vpack.c.b16 %v972, %v971
      %v1002 = vpack.c.b16 %v974, %v973
      %v1003 = vpack.c.b16 %v976, %v975
      %v1004 = vpack.c.b16 %v978, %v977
      %v1005 = vpack.c.b16 %v980, %v979
      %v1006 = vpack.c.b16 %v982, %v981
      %1031 = vmatpush.bf16.msra.mxu0 %v990
      %1032 = vmatpush.bf16.msra.mxu0 %v989
      %1033 = vmatpush.bf16.msra.mxu0 %v988
      %1034 = vmatpush.bf16.msra.mxu0 %v987
      %1035 = vmatpush.bf16.msra.mxu0 %v986
      %1036 = vmatpush.bf16.msra.mxu0 %v985
      %1037 = vmatpush.bf16.msra.mxu0 %v984
      %1038 = vmatpush.bf16.msra.mxu0 %v983
      %1039 = vmatmul.bf16.gmra.mxu0 %v824
      %v1040 = vpop.f32.mrf.mxu0
      %v1041 = vadd.f32 0.0, %v1040
      %v1042 = vpop.f32.mrf.mxu0
      %1043 = vdwg.mxu0
      %1044 = vmatpush.bf16.msra.mxu0 %v998
      %1045 = vmatpush.bf16.msra.mxu0 %v997
      %1046 = vmatpush.bf16.msra.mxu0 %v996
      %1047 = vmatpush.bf16.msra.mxu0 %v995
      %1048 = vmatpush.bf16.msra.mxu0 %v994
      %1049 = vmatpush.bf16.msra.mxu0 %v993
      %1050 = vmatpush.bf16.msra.mxu0 %v992
      %1051 = vmatpush.bf16.msra.mxu0 %v991
      %1052 = vmatmul.bf16.gmra.mxu0 %v829
      %v1053 = vpop.f32.mrf.mxu0
      %v1054 = vadd.f32 %v1041, %v1053
      %v1055 = vpop.f32.mrf.mxu0
      %1056 = vdwg.mxu0
      %1057 = vmatpush.bf16.msra.mxu0 %v1006
      %1058 = vmatpush.bf16.msra.mxu0 %v1005
      %1059 = vmatpush.bf16.msra.mxu0 %v1004
      %1060 = vmatpush.bf16.msra.mxu0 %v1003
      %1061 = vmatpush.bf16.msra.mxu0 %v1002
      %1062 = vmatpush.bf16.msra.mxu0 %v1001
      %1063 = vmatpush.bf16.msra.mxu0 %v1000
      %1064 = vmatpush.bf16.msra.mxu0 %v999
      %1065 = vmatmul.bf16.gmra.mxu0 %v836
      %v1066 = vpop.f32.mrf.mxu0
      %v1067 = vadd.f32 %v1054, %v1066
      %v1068 = vpop.f32.mrf.mxu0
      %1069 = vdwg.mxu0
      %v1070 = vadd.f32 %v820, %v1067
      %v1071 = vld [vmem:[%s2] sm:$0x1]
      %v1072 = vadd.f32 %v1070, %v1071
      %vm1073 = vcmp.ge.f32.partialorder %v1072, 0.0
      %v1074 = vmul.f32 %v1072, 0.01
      %v1075 = vsel %vm1073, %v1072, %v1074
      %v1076 = vld [vmem:[#allocation3] sm:$0x3]
      %v1077 = vsel %vm308, 0, %v1076
      %1078 = vst [vmem:[#allocation3] sm:$0x3] %v1077
      %v1079 = vld [vmem:[#allocation3 + $0x2] sm:$0x3]
      %v1080 = vsel %vm308, 0, %v1079
      %1081 = vst [vmem:[#allocation3 + $0x2] sm:$0x3] %v1080
      %v1082 = vld [vmem:[#allocation3 + $0x4] sm:$0x3]
      %v1083 = vsel %vm308, 0, %v1082
      %1084 = vst [vmem:[#allocation3 + $0x4] sm:$0x3] %v1083
      %v1085 = vpack.c.bf16 %v1075, %v1075
      %v1087 = vrot.slane %v1085, 2
      %vm1088 = vcmask 1041408
      %v1091 = vsel %vm1088, %v1085, %v1087
      %v1092 = vshll.u32 %v1091, 16
      %s1095 = scalar_lea.vmem [#allocation3], 2
      %v1096 = vld [vmem:[%s1095] sm:$0x1]
      %v1097 = vsel %vm328, %v1092, %v1096
      %1098 = vst [vmem:[%s1095] sm:$0x1] %v1097
      %v1099 = vld [vmem:[#allocation3] sm:$0x1]
      %v1100 = vld [vmem:[#allocation3] sm:$0x2]
      %1102 = vst [vmem:[#allocation1] ss:$4 sm:$0xff] %v1099
      %v1103 = vld.sshfl [vmem:[#allocation1] sm:$0xff pattern:$0x73625140]
      %v1104 = vshrl.u32 %v1103, 16
      %1108 = vst [vmem:[#allocation1] ss:$4 sm:$0xff] %v1100
      %v1109 = vld.sshfl [vmem:[#allocation1] sm:$0xff pattern:$0x73625140]
      %v1111 = vrot.slane %v1109, 1
      %v1113 = vld [vmem:[%s3] sm:$0xf]
      %v1114 = vld [vmem:[%s3 + $0x4] sm:$0xf]
      %v1115 = vld [vmem:[%s3 + $0x8] sm:$0xf]
      %v1116 = vld [vmem:[%s3 + $0xc] sm:$0xf]
      %v1117 = vld [vmem:[%s3 + $0x10] sm:$0xf]
      %v1118 = vld [vmem:[%s3 + $0x14] sm:$0xf]
      %v1119 = vld [vmem:[%s3 + $0x18] sm:$0xf]
      %v1120 = vld [vmem:[%s3 + $0x1c] sm:$0xf]
      %v1121 = vld [vmem:[%s3 + $0x20] sm:$0xf]
      %v1122 = vld [vmem:[%s3 + $0x24] sm:$0xf]
      %v1123 = vld [vmem:[%s3 + $0x28] sm:$0xf]
      %v1124 = vld [vmem:[%s3 + $0x2c] sm:$0xf]
      %v1125 = vld [vmem:[%s3 + $0x30] sm:$0xf]
      %v1126 = vld [vmem:[%s3 + $0x34] sm:$0xf]
      %v1127 = vld [vmem:[%s3 + $0x38] sm:$0xf]
      %v1128 = vld [vmem:[%s3 + $0x3c] sm:$0xf]
      %v1129 = vld [vmem:[%s3 + $0x40] sm:$0xf]
      %v1130 = vld [vmem:[%s3 + $0x44] sm:$0xf]
      %v1131 = vld [vmem:[%s3 + $0x48] sm:$0xf]
      %v1132 = vld [vmem:[%s3 + $0x4c] sm:$0xf]
      %v1133 = vld [vmem:[%s3 + $0x50] sm:$0xf]
      %v1134 = vld [vmem:[%s3 + $0x54] sm:$0xf]
      %v1135 = vld [vmem:[%s3 + $0x58] sm:$0xf]
      %v1136 = vld [vmem:[%s3 + $0x5c] sm:$0xf]
      %v1137 = vld [vmem:[%s3 + $0x60] sm:$0xf]
      %v1138 = vld [vmem:[%s3 + $0x64] sm:$0xf]
      %v1139 = vld [vmem:[%s3 + $0x68] sm:$0xf]
      %v1140 = vld [vmem:[%s3 + $0x6c] sm:$0xf]
      %v1141 = vld [vmem:[%s3 + $0x70] sm:$0xf]
      %v1142 = vld [vmem:[%s3 + $0x74] sm:$0xf]
      %v1143 = vld [vmem:[%s3 + $0x78] sm:$0xf]
      %v1144 = vld [vmem:[%s3 + $0x7c] sm:$0xf]
      %v1145 = vld [vmem:[%s3 + $0x80] sm:$0xf]
      %v1146 = vld [vmem:[%s3 + $0x84] sm:$0xf]
      %v1147 = vld [vmem:[%s3 + $0x88] sm:$0xf]
      %v1148 = vld [vmem:[%s3 + $0x8c] sm:$0xf]
      %v1149 = vld [vmem:[%s3 + $0x90] sm:$0xf]
      %v1150 = vld [vmem:[%s3 + $0x94] sm:$0xf]
      %v1151 = vld [vmem:[%s3 + $0x98] sm:$0xf]
      %v1152 = vld [vmem:[%s3 + $0x9c] sm:$0xf]
      %v1153 = vld [vmem:[%s3 + $0xa0] sm:$0xf]
      %v1154 = vld [vmem:[%s3 + $0xa4] sm:$0xf]
      %v1155 = vld [vmem:[%s3 + $0xa8] sm:$0xf]
      %v1156 = vld [vmem:[%s3 + $0xac] sm:$0xf]
      %v1157 = vld [vmem:[%s3 + $0xb0] sm:$0xf]
      %v1158 = vld [vmem:[%s3 + $0xb4] sm:$0xf]
      %v1159 = vld [vmem:[%s3 + $0xb8] sm:$0xf]
      %v1160 = vld [vmem:[%s3 + $0xbc] sm:$0xf]
      %v1161 = vld [vmem:[%s1095] sm:$0x1]
      %v1162 = vld [vmem:[%s1095] sm:$0x2]
      %1164 = vst [vmem:[#allocation1] ss:$4 sm:$0xff] %v1161
      %v1165 = vld.sshfl [vmem:[#allocation1] sm:$0xff pattern:$0x73625140]
      %v1166 = vshrl.u32 %v1165, 16
      %1170 = vst [vmem:[#allocation1] ss:$4 sm:$0xff] %v1162
      %v1171 = vld.sshfl [vmem:[#allocation1] sm:$0xff pattern:$0x73625140]
      %v1173 = vrot.slane %v1171, 1
      %s1175 = scalar_lea.vmem %s3, 192
      %v1176 = vld [vmem:[%s1175] sm:$0xf]
      %v1177 = vld [vmem:[%s1175 + $0x4] sm:$0xf]
      %v1178 = vld [vmem:[%s1175 + $0x8] sm:$0xf]
      %v1179 = vld [vmem:[%s1175 + $0xc] sm:$0xf]
      %v1180 = vld [vmem:[%s1175 + $0x10] sm:$0xf]
      %v1181 = vld [vmem:[%s1175 + $0x14] sm:$0xf]
      %v1182 = vld [vmem:[%s1175 + $0x18] sm:$0xf]
      %v1183 = vld [vmem:[%s1175 + $0x1c] sm:$0xf]
      %v1184 = vld [vmem:[%s1175 + $0x20] sm:$0xf]
      %v1185 = vld [vmem:[%s1175 + $0x24] sm:$0xf]
      %v1186 = vld [vmem:[%s1175 + $0x28] sm:$0xf]
      %v1187 = vld [vmem:[%s1175 + $0x2c] sm:$0xf]
      %v1188 = vld [vmem:[%s1175 + $0x30] sm:$0xf]
      %v1189 = vld [vmem:[%s1175 + $0x34] sm:$0xf]
      %v1190 = vld [vmem:[%s1175 + $0x38] sm:$0xf]
      %v1191 = vld [vmem:[%s1175 + $0x3c] sm:$0xf]
      %v1192 = vld [vmem:[%s1175 + $0x40] sm:$0xf]
      %v1193 = vld [vmem:[%s1175 + $0x44] sm:$0xf]
      %v1194 = vld [vmem:[%s1175 + $0x48] sm:$0xf]
      %v1195 = vld [vmem:[%s1175 + $0x4c] sm:$0xf]
      %v1196 = vld [vmem:[%s1175 + $0x50] sm:$0xf]
      %v1197 = vld [vmem:[%s1175 + $0x54] sm:$0xf]
      %v1198 = vld [vmem:[%s1175 + $0x58] sm:$0xf]
      %v1199 = vld [vmem:[%s1175 + $0x5c] sm:$0xf]
      %v1200 = vld [vmem:[%s1175 + $0x60] sm:$0xf]
      %v1201 = vld [vmem:[%s1175 + $0x64] sm:$0xf]
      %v1202 = vld [vmem:[%s1175 + $0x68] sm:$0xf]
      %v1203 = vld [vmem:[%s1175 + $0x6c] sm:$0xf]
      %v1204 = vld [vmem:[%s1175 + $0x70] sm:$0xf]
      %v1205 = vld [vmem:[%s1175 + $0x74] sm:$0xf]
      %v1206 = vld [vmem:[%s1175 + $0x78] sm:$0xf]
      %v1207 = vld [vmem:[%s1175 + $0x7c] sm:$0xf]
      %v1208 = vld [vmem:[%s1175 + $0x80] sm:$0xf]
      %v1209 = vld [vmem:[%s1175 + $0x84] sm:$0xf]
      %v1210 = vld [vmem:[%s1175 + $0x88] sm:$0xf]
      %v1211 = vld [vmem:[%s1175 + $0x8c] sm:$0xf]
      %v1212 = vld [vmem:[%s1175 + $0x90] sm:$0xf]
      %v1213 = vld [vmem:[%s1175 + $0x94] sm:$0xf]
      %v1214 = vld [vmem:[%s1175 + $0x98] sm:$0xf]
      %v1215 = vld [vmem:[%s1175 + $0x9c] sm:$0xf]
      %v1216 = vld [vmem:[%s1175 + $0xa0] sm:$0xf]
      %v1217 = vld [vmem:[%s1175 + $0xa4] sm:$0xf]
      %v1218 = vld [vmem:[%s1175 + $0xa8] sm:$0xf]
      %v1219 = vld [vmem:[%s1175 + $0xac] sm:$0xf]
      %v1220 = vld [vmem:[%s1175 + $0xb0] sm:$0xf]
      %v1221 = vld [vmem:[%s1175 + $0xb4] sm:$0xf]
      %v1222 = vld [vmem:[%s1175 + $0xb8] sm:$0xf]
      %v1223 = vld [vmem:[%s1175 + $0xbc] sm:$0xf]
      %v1272 = vunpack.c.l.b16 %v1176
      %v1273 = vunpack.c.l.b16 %v1177
      %v1274 = vunpack.c.l.b16 %v1178
      %v1275 = vunpack.c.l.b16 %v1179
      %v1276 = vunpack.c.l.b16 %v1180
      %v1277 = vunpack.c.l.b16 %v1181
      %v1278 = vunpack.c.l.b16 %v1182
      %v1279 = vunpack.c.l.b16 %v1183
      %v1280 = vunpack.c.l.b16 %v1184
      %v1281 = vunpack.c.l.b16 %v1185
      %v1282 = vunpack.c.l.b16 %v1186
      %v1283 = vunpack.c.l.b16 %v1187
      %v1284 = vunpack.c.l.b16 %v1188
      %v1285 = vunpack.c.l.b16 %v1189
      %v1286 = vunpack.c.l.b16 %v1190
      %v1287 = vunpack.c.l.b16 %v1191
      %v1288 = vunpack.c.l.b16 %v1192
      %v1289 = vunpack.c.l.b16 %v1193
      %v1290 = vunpack.c.l.b16 %v1194
      %v1291 = vunpack.c.l.b16 %v1195
      %v1292 = vunpack.c.l.b16 %v1196
      %v1293 = vunpack.c.l.b16 %v1197
      %v1294 = vunpack.c.l.b16 %v1198
      %v1295 = vunpack.c.l.b16 %v1199
      %v1296 = vunpack.c.l.b16 %v1200
      %v1297 = vunpack.c.l.b16 %v1201
      %v1298 = vunpack.c.l.b16 %v1202
      %v1299 = vunpack.c.l.b16 %v1203
      %v1300 = vunpack.c.l.b16 %v1204
      %v1301 = vunpack.c.l.b16 %v1205
      %v1302 = vunpack.c.l.b16 %v1206
      %v1303 = vunpack.c.l.b16 %v1207
      %v1304 = vunpack.c.l.b16 %v1208
      %v1305 = vunpack.c.l.b16 %v1209
      %v1306 = vunpack.c.l.b16 %v1210
      %v1307 = vunpack.c.l.b16 %v1211
      %v1308 = vunpack.c.l.b16 %v1212
      %v1309 = vunpack.c.l.b16 %v1213
      %v1310 = vunpack.c.l.b16 %v1214
      %v1311 = vunpack.c.l.b16 %v1215
      %v1312 = vunpack.c.l.b16 %v1216
      %v1313 = vunpack.c.l.b16 %v1217
      %v1314 = vunpack.c.l.b16 %v1218
      %v1315 = vunpack.c.l.b16 %v1219
      %v1316 = vunpack.c.l.b16 %v1220
      %v1317 = vunpack.c.l.b16 %v1221
      %v1318 = vunpack.c.l.b16 %v1222
      %v1319 = vunpack.c.l.b16 %v1223
      %v1320 = vpack.c.b16 %v1273, %v1272
      %v1321 = vpack.c.b16 %v1275, %v1274
      %v1322 = vpack.c.b16 %v1277, %v1276
      %v1323 = vpack.c.b16 %v1279, %v1278
      %v1324 = vpack.c.b16 %v1281, %v1280
      %v1325 = vpack.c.b16 %v1283, %v1282
      %v1326 = vpack.c.b16 %v1285, %v1284
      %v1327 = vpack.c.b16 %v1287, %v1286
      %v1328 = vpack.c.b16 %v1289, %v1288
      %v1329 = vpack.c.b16 %v1291, %v1290
      %v1330 = vpack.c.b16 %v1293, %v1292
      %v1331 = vpack.c.b16 %v1295, %v1294
      %v1332 = vpack.c.b16 %v1297, %v1296
      %v1333 = vpack.c.b16 %v1299, %v1298
      %v1334 = vpack.c.b16 %v1301, %v1300
      %v1335 = vpack.c.b16 %v1303, %v1302
      %v1336 = vpack.c.b16 %v1305, %v1304
      %v1337 = vpack.c.b16 %v1307, %v1306
      %v1338 = vpack.c.b16 %v1309, %v1308
      %v1339 = vpack.c.b16 %v1311, %v1310
      %v1340 = vpack.c.b16 %v1313, %v1312
      %v1341 = vpack.c.b16 %v1315, %v1314
      %v1342 = vpack.c.b16 %v1317, %v1316
      %v1343 = vpack.c.b16 %v1319, %v1318
      %1368 = vmatpush.bf16.msra.mxu0 %v1327
      %1369 = vmatpush.bf16.msra.mxu0 %v1326
      %1370 = vmatpush.bf16.msra.mxu0 %v1325
      %1371 = vmatpush.bf16.msra.mxu0 %v1324
      %1372 = vmatpush.bf16.msra.mxu0 %v1323
      %1373 = vmatpush.bf16.msra.mxu0 %v1322
      %1374 = vmatpush.bf16.msra.mxu0 %v1321
      %1375 = vmatpush.bf16.msra.mxu0 %v1320
      %1376 = vmatmul.bf16.gmra.mxu0 %v1161
      %v1377 = vpop.f32.mrf.mxu0
      %v1378 = vadd.f32 0.0, %v1377
      %v1379 = vpop.f32.mrf.mxu0
      %1380 = vdwg.mxu0
      %1381 = vmatpush.bf16.msra.mxu0 %v1335
      %1382 = vmatpush.bf16.msra.mxu0 %v1334
      %1383 = vmatpush.bf16.msra.mxu0 %v1333
      %1384 = vmatpush.bf16.msra.mxu0 %v1332
      %1385 = vmatpush.bf16.msra.mxu0 %v1331
      %1386 = vmatpush.bf16.msra.mxu0 %v1330
      %1387 = vmatpush.bf16.msra.mxu0 %v1329
      %1388 = vmatpush.bf16.msra.mxu0 %v1328
      %1389 = vmatmul.bf16.gmra.mxu0 %v1166
      %v1390 = vpop.f32.mrf.mxu0
      %v1391 = vadd.f32 %v1378, %v1390
      %v1392 = vpop.f32.mrf.mxu0
      %1393 = vdwg.mxu0
      %1394 = vmatpush.bf16.msra.mxu0 %v1343
      %1395 = vmatpush.bf16.msra.mxu0 %v1342
      %1396 = vmatpush.bf16.msra.mxu0 %v1341
      %1397 = vmatpush.bf16.msra.mxu0 %v1340
      %1398 = vmatpush.bf16.msra.mxu0 %v1339
      %1399 = vmatpush.bf16.msra.mxu0 %v1338
      %1400 = vmatpush.bf16.msra.mxu0 %v1337
      %1401 = vmatpush.bf16.msra.mxu0 %v1336
      %1402 = vmatmul.bf16.gmra.mxu0 %v1173
      %v1403 = vpop.f32.mrf.mxu0
      %v1404 = vadd.f32 %v1391, %v1403
      %v1405 = vpop.f32.mrf.mxu0
      %1406 = vdwg.mxu0
      %v1455 = vunpack.c.l.b16 %v1113
      %v1456 = vunpack.c.l.b16 %v1114
      %v1457 = vunpack.c.l.b16 %v1115
      %v1458 = vunpack.c.l.b16 %v1116
      %v1459 = vunpack.c.l.b16 %v1117
      %v1460 = vunpack.c.l.b16 %v1118
      %v1461 = vunpack.c.l.b16 %v1119
      %v1462 = vunpack.c.l.b16 %v1120
      %v1463 = vunpack.c.l.b16 %v1121
      %v1464 = vunpack.c.l.b16 %v1122
      %v1465 = vunpack.c.l.b16 %v1123
      %v1466 = vunpack.c.l.b16 %v1124
      %v1467 = vunpack.c.l.b16 %v1125
      %v1468 = vunpack.c.l.b16 %v1126
      %v1469 = vunpack.c.l.b16 %v1127
      %v1470 = vunpack.c.l.b16 %v1128
      %v1471 = vunpack.c.l.b16 %v1129
      %v1472 = vunpack.c.l.b16 %v1130
      %v1473 = vunpack.c.l.b16 %v1131
      %v1474 = vunpack.c.l.b16 %v1132
      %v1475 = vunpack.c.l.b16 %v1133
      %v1476 = vunpack.c.l.b16 %v1134
      %v1477 = vunpack.c.l.b16 %v1135
      %v1478 = vunpack.c.l.b16 %v1136
      %v1479 = vunpack.c.l.b16 %v1137
      %v1480 = vunpack.c.l.b16 %v1138
      %v1481 = vunpack.c.l.b16 %v1139
      %v1482 = vunpack.c.l.b16 %v1140
      %v1483 = vunpack.c.l.b16 %v1141
      %v1484 = vunpack.c.l.b16 %v1142
      %v1485 = vunpack.c.l.b16 %v1143
      %v1486 = vunpack.c.l.b16 %v1144
      %v1487 = vunpack.c.l.b16 %v1145
      %v1488 = vunpack.c.l.b16 %v1146
      %v1489 = vunpack.c.l.b16 %v1147
      %v1490 = vunpack.c.l.b16 %v1148
      %v1491 = vunpack.c.l.b16 %v1149
      %v1492 = vunpack.c.l.b16 %v1150
      %v1493 = vunpack.c.l.b16 %v1151
      %v1494 = vunpack.c.l.b16 %v1152
      %v1495 = vunpack.c.l.b16 %v1153
      %v1496 = vunpack.c.l.b16 %v1154
      %v1497 = vunpack.c.l.b16 %v1155
      %v1498 = vunpack.c.l.b16 %v1156
      %v1499 = vunpack.c.l.b16 %v1157
      %v1500 = vunpack.c.l.b16 %v1158
      %v1501 = vunpack.c.l.b16 %v1159
      %v1502 = vunpack.c.l.b16 %v1160
      %v1503 = vpack.c.b16 %v1456, %v1455
      %v1504 = vpack.c.b16 %v1458, %v1457
      %v1505 = vpack.c.b16 %v1460, %v1459
      %v1506 = vpack.c.b16 %v1462, %v1461
      %v1507 = vpack.c.b16 %v1464, %v1463
      %v1508 = vpack.c.b16 %v1466, %v1465
      %v1509 = vpack.c.b16 %v1468, %v1467
      %v1510 = vpack.c.b16 %v1470, %v1469
      %v1511 = vpack.c.b16 %v1472, %v1471
      %v1512 = vpack.c.b16 %v1474, %v1473
      %v1513 = vpack.c.b16 %v1476, %v1475
      %v1514 = vpack.c.b16 %v1478, %v1477
      %v1515 = vpack.c.b16 %v1480, %v1479
      %v1516 = vpack.c.b16 %v1482, %v1481
      %v1517 = vpack.c.b16 %v1484, %v1483
      %v1518 = vpack.c.b16 %v1486, %v1485
      %v1519 = vpack.c.b16 %v1488, %v1487
      %v1520 = vpack.c.b16 %v1490, %v1489
      %v1521 = vpack.c.b16 %v1492, %v1491
      %v1522 = vpack.c.b16 %v1494, %v1493
      %v1523 = vpack.c.b16 %v1496, %v1495
      %v1524 = vpack.c.b16 %v1498, %v1497
      %v1525 = vpack.c.b16 %v1500, %v1499
      %v1526 = vpack.c.b16 %v1502, %v1501
      %1551 = vmatpush.bf16.msra.mxu0 %v1510
      %1552 = vmatpush.bf16.msra.mxu0 %v1509
      %1553 = vmatpush.bf16.msra.mxu0 %v1508
      %1554 = vmatpush.bf16.msra.mxu0 %v1507
      %1555 = vmatpush.bf16.msra.mxu0 %v1506
      %1556 = vmatpush.bf16.msra.mxu0 %v1505
      %1557 = vmatpush.bf16.msra.mxu0 %v1504
      %1558 = vmatpush.bf16.msra.mxu0 %v1503
      %1559 = vmatmul.bf16.gmra.mxu0 %v1099
      %v1560 = vpop.f32.mrf.mxu0
      %v1561 = vadd.f32 %v1404, %v1560
      %v1562 = vpop.f32.mrf.mxu0
      %1563 = vdwg.mxu0
      %1564 = vmatpush.bf16.msra.mxu0 %v1518
      %1565 = vmatpush.bf16.msra.mxu0 %v1517
      %1566 = vmatpush.bf16.msra.mxu0 %v1516
      %1567 = vmatpush.bf16.msra.mxu0 %v1515
      %1568 = vmatpush.bf16.msra.mxu0 %v1514
      %1569 = vmatpush.bf16.msra.mxu0 %v1513
      %1570 = vmatpush.bf16.msra.mxu0 %v1512
      %1571 = vmatpush.bf16.msra.mxu0 %v1511
      %1572 = vmatmul.bf16.gmra.mxu0 %v1104
      %v1573 = vpop.f32.mrf.mxu0
      %v1574 = vadd.f32 %v1561, %v1573
      %v1575 = vpop.f32.mrf.mxu0
      %1576 = vdwg.mxu0
      %1577 = vmatpush.bf16.msra.mxu0 %v1526
      %1578 = vmatpush.bf16.msra.mxu0 %v1525
      %1579 = vmatpush.bf16.msra.mxu0 %v1524
      %1580 = vmatpush.bf16.msra.mxu0 %v1523
      %1581 = vmatpush.bf16.msra.mxu0 %v1522
      %1582 = vmatpush.bf16.msra.mxu0 %v1521
      %1583 = vmatpush.bf16.msra.mxu0 %v1520
      %1584 = vmatpush.bf16.msra.mxu0 %v1519
      %1585 = vmatmul.bf16.gmra.mxu0 %v1111
      %v1586 = vpop.f32.mrf.mxu0
      %v1587 = vadd.f32 %v1574, %v1586
      %v1588 = vpop.f32.mrf.mxu0
      %1589 = vdwg.mxu0
      %s1590 = scalar_lea.vmem [#allocation3], 4
      %v1591 = vld [vmem:[%s1590] sm:$0x1]
      %v1592 = vld [vmem:[%s1590] sm:$0x2]
      %1594 = vst [vmem:[#allocation1] ss:$4 sm:$0xff] %v1591
      %v1595 = vld.sshfl [vmem:[#allocation1] sm:$0xff pattern:$0x73625140]
      %v1596 = vshrl.u32 %v1595, 16
      %1600 = vst [vmem:[#allocation1] ss:$4 sm:$0xff] %v1592
      %v1601 = vld.sshfl [vmem:[#allocation1] sm:$0xff pattern:$0x73625140]
      %v1603 = vrot.slane %v1601, 1
      %s1605 = scalar_lea.vmem %s3, 384
      %v1606 = vld [vmem:[%s1605] sm:$0xf]
      %v1607 = vld [vmem:[%s1605 + $0x4] sm:$0xf]
      %v1608 = vld [vmem:[%s1605 + $0x8] sm:$0xf]
      %v1609 = vld [vmem:[%s1605 + $0xc] sm:$0xf]
      %v1610 = vld [vmem:[%s1605 + $0x10] sm:$0xf]
      %v1611 = vld [vmem:[%s1605 + $0x14] sm:$0xf]
      %v1612 = vld [vmem:[%s1605 + $0x18] sm:$0xf]
      %v1613 = vld [vmem:[%s1605 + $0x1c] sm:$0xf]
      %v1614 = vld [vmem:[%s1605 + $0x20] sm:$0xf]
      %v1615 = vld [vmem:[%s1605 + $0x24] sm:$0xf]
      %v1616 = vld [vmem:[%s1605 + $0x28] sm:$0xf]
      %v1617 = vld [vmem:[%s1605 + $0x2c] sm:$0xf]
      %v1618 = vld [vmem:[%s1605 + $0x30] sm:$0xf]
      %v1619 = vld [vmem:[%s1605 + $0x34] sm:$0xf]
      %v1620 = vld [vmem:[%s1605 + $0x38] sm:$0xf]
      %v1621 = vld [vmem:[%s1605 + $0x3c] sm:$0xf]
      %v1622 = vld [vmem:[%s1605 + $0x40] sm:$0xf]
      %v1623 = vld [vmem:[%s1605 + $0x44] sm:$0xf]
      %v1624 = vld [vmem:[%s1605 + $0x48] sm:$0xf]
      %v1625 = vld [vmem:[%s1605 + $0x4c] sm:$0xf]
      %v1626 = vld [vmem:[%s1605 + $0x50] sm:$0xf]
      %v1627 = vld [vmem:[%s1605 + $0x54] sm:$0xf]
      %v1628 = vld [vmem:[%s1605 + $0x58] sm:$0xf]
      %v1629 = vld [vmem:[%s1605 + $0x5c] sm:$0xf]
      %v1630 = vld [vmem:[%s1605 + $0x60] sm:$0xf]
      %v1631 = vld [vmem:[%s1605 + $0x64] sm:$0xf]
      %v1632 = vld [vmem:[%s1605 + $0x68] sm:$0xf]
      %v1633 = vld [vmem:[%s1605 + $0x6c] sm:$0xf]
      %v1634 = vld [vmem:[%s1605 + $0x70] sm:$0xf]
      %v1635 = vld [vmem:[%s1605 + $0x74] sm:$0xf]
      %v1636 = vld [vmem:[%s1605 + $0x78] sm:$0xf]
      %v1637 = vld [vmem:[%s1605 + $0x7c] sm:$0xf]
      %v1638 = vld [vmem:[%s1605 + $0x80] sm:$0xf]
      %v1639 = vld [vmem:[%s1605 + $0x84] sm:$0xf]
      %v1640 = vld [vmem:[%s1605 + $0x88] sm:$0xf]
      %v1641 = vld [vmem:[%s1605 + $0x8c] sm:$0xf]
      %v1642 = vld [vmem:[%s1605 + $0x90] sm:$0xf]
      %v1643 = vld [vmem:[%s1605 + $0x94] sm:$0xf]
      %v1644 = vld [vmem:[%s1605 + $0x98] sm:$0xf]
      %v1645 = vld [vmem:[%s1605 + $0x9c] sm:$0xf]
      %v1646 = vld [vmem:[%s1605 + $0xa0] sm:$0xf]
      %v1647 = vld [vmem:[%s1605 + $0xa4] sm:$0xf]
      %v1648 = vld [vmem:[%s1605 + $0xa8] sm:$0xf]
      %v1649 = vld [vmem:[%s1605 + $0xac] sm:$0xf]
      %v1650 = vld [vmem:[%s1605 + $0xb0] sm:$0xf]
      %v1651 = vld [vmem:[%s1605 + $0xb4] sm:$0xf]
      %v1652 = vld [vmem:[%s1605 + $0xb8] sm:$0xf]
      %v1653 = vld [vmem:[%s1605 + $0xbc] sm:$0xf]
      %v1702 = vunpack.c.l.b16 %v1606
      %v1703 = vunpack.c.l.b16 %v1607
      %v1704 = vunpack.c.l.b16 %v1608
      %v1705 = vunpack.c.l.b16 %v1609
      %v1706 = vunpack.c.l.b16 %v1610
      %v1707 = vunpack.c.l.b16 %v1611
      %v1708 = vunpack.c.l.b16 %v1612
      %v1709 = vunpack.c.l.b16 %v1613
      %v1710 = vunpack.c.l.b16 %v1614
      %v1711 = vunpack.c.l.b16 %v1615
      %v1712 = vunpack.c.l.b16 %v1616
      %v1713 = vunpack.c.l.b16 %v1617
      %v1714 = vunpack.c.l.b16 %v1618
      %v1715 = vunpack.c.l.b16 %v1619
      %v1716 = vunpack.c.l.b16 %v1620
      %v1717 = vunpack.c.l.b16 %v1621
      %v1718 = vunpack.c.l.b16 %v1622
      %v1719 = vunpack.c.l.b16 %v1623
      %v1720 = vunpack.c.l.b16 %v1624
      %v1721 = vunpack.c.l.b16 %v1625
      %v1722 = vunpack.c.l.b16 %v1626
      %v1723 = vunpack.c.l.b16 %v1627
      %v1724 = vunpack.c.l.b16 %v1628
      %v1725 = vunpack.c.l.b16 %v1629
      %v1726 = vunpack.c.l.b16 %v1630
      %v1727 = vunpack.c.l.b16 %v1631
      %v1728 = vunpack.c.l.b16 %v1632
      %v1729 = vunpack.c.l.b16 %v1633
      %v1730 = vunpack.c.l.b16 %v1634
      %v1731 = vunpack.c.l.b16 %v1635
      %v1732 = vunpack.c.l.b16 %v1636
      %v1733 = vunpack.c.l.b16 %v1637
      %v1734 = vunpack.c.l.b16 %v1638
      %v1735 = vunpack.c.l.b16 %v1639
      %v1736 = vunpack.c.l.b16 %v1640
      %v1737 = vunpack.c.l.b16 %v1641
      %v1738 = vunpack.c.l.b16 %v1642
      %v1739 = vunpack.c.l.b16 %v1643
      %v1740 = vunpack.c.l.b16 %v1644
      %v1741 = vunpack.c.l.b16 %v1645
      %v1742 = vunpack.c.l.b16 %v1646
      %v1743 = vunpack.c.l.b16 %v1647
      %v1744 = vunpack.c.l.b16 %v1648
      %v1745 = vunpack.c.l.b16 %v1649
      %v1746 = vunpack.c.l.b16 %v1650
      %v1747 = vunpack.c.l.b16 %v1651
      %v1748 = vunpack.c.l.b16 %v1652
      %v1749 = vunpack.c.l.b16 %v1653
      %v1750 = vpack.c.b16 %v1703, %v1702
      %v1751 = vpack.c.b16 %v1705, %v1704
      %v1752 = vpack.c.b16 %v1707, %v1706
      %v1753 = vpack.c.b16 %v1709, %v1708
      %v1754 = vpack.c.b16 %v1711, %v1710
      %v1755 = vpack.c.b16 %v1713, %v1712
      %v1756 = vpack.c.b16 %v1715, %v1714
      %v1757 = vpack.c.b16 %v1717, %v1716
      %v1758 = vpack.c.b16 %v1719, %v1718
      %v1759 = vpack.c.b16 %v1721, %v1720
      %v1760 = vpack.c.b16 %v1723, %v1722
      %v1761 = vpack.c.b16 %v1725, %v1724
      %v1762 = vpack.c.b16 %v1727, %v1726
      %v1763 = vpack.c.b16 %v1729, %v1728
      %v1764 = vpack.c.b16 %v1731, %v1730
      %v1765 = vpack.c.b16 %v1733, %v1732
      %v1766 = vpack.c.b16 %v1735, %v1734
      %v1767 = vpack.c.b16 %v1737, %v1736
      %v1768 = vpack.c.b16 %v1739, %v1738
      %v1769 = vpack.c.b16 %v1741, %v1740
      %v1770 = vpack.c.b16 %v1743, %v1742
      %v1771 = vpack.c.b16 %v1745, %v1744
      %v1772 = vpack.c.b16 %v1747, %v1746
      %v1773 = vpack.c.b16 %v1749, %v1748
      %1798 = vmatpush.bf16.msra.mxu0 %v1757
      %1799 = vmatpush.bf16.msra.mxu0 %v1756
      %1800 = vmatpush.bf16.msra.mxu0 %v1755
      %1801 = vmatpush.bf16.msra.mxu0 %v1754
      %1802 = vmatpush.bf16.msra.mxu0 %v1753
      %1803 = vmatpush.bf16.msra.mxu0 %v1752
      %1804 = vmatpush.bf16.msra.mxu0 %v1751
      %1805 = vmatpush.bf16.msra.mxu0 %v1750
      %1806 = vmatmul.bf16.gmra.mxu0 %v1591
      %v1807 = vpop.f32.mrf.mxu0
      %v1808 = vadd.f32 0.0, %v1807
      %v1809 = vpop.f32.mrf.mxu0
      %1810 = vdwg.mxu0
      %1811 = vmatpush.bf16.msra.mxu0 %v1765
      %1812 = vmatpush.bf16.msra.mxu0 %v1764
      %1813 = vmatpush.bf16.msra.mxu0 %v1763
      %1814 = vmatpush.bf16.msra.mxu0 %v1762
      %1815 = vmatpush.bf16.msra.mxu0 %v1761
      %1816 = vmatpush.bf16.msra.mxu0 %v1760
      %1817 = vmatpush.bf16.msra.mxu0 %v1759
      %1818 = vmatpush.bf16.msra.mxu0 %v1758
      %1819 = vmatmul.bf16.gmra.mxu0 %v1596
      %v1820 = vpop.f32.mrf.mxu0
      %v1821 = vadd.f32 %v1808, %v1820
      %v1822 = vpop.f32.mrf.mxu0
      %1823 = vdwg.mxu0
      %1824 = vmatpush.bf16.msra.mxu0 %v1773
      %1825 = vmatpush.bf16.msra.mxu0 %v1772
      %1826 = vmatpush.bf16.msra.mxu0 %v1771
      %1827 = vmatpush.bf16.msra.mxu0 %v1770
      %1828 = vmatpush.bf16.msra.mxu0 %v1769
      %1829 = vmatpush.bf16.msra.mxu0 %v1768
      %1830 = vmatpush.bf16.msra.mxu0 %v1767
      %1831 = vmatpush.bf16.msra.mxu0 %v1766
      %1832 = vmatmul.bf16.gmra.mxu0 %v1603
      %v1833 = vpop.f32.mrf.mxu0
      %v1834 = vadd.f32 %v1821, %v1833
      %v1835 = vpop.f32.mrf.mxu0
      %1836 = vdwg.mxu0
      %v1837 = vadd.f32 %v1587, %v1834
      %v1838 = vld [vmem:[%s4] sm:$0x1]
      %v1839 = vadd.f32 %v1837, %v1838
      %v1840 = vld [vmem:[%s298] sm:$0x1]
      %v1841 = vunpack.c.l.bf16 %v1840
      %v1842 = vadd.f32 %v1839, %v1841
      %v1843 = vpack.c.bf16 %v1842, %v1842
      %vm1844 = vsmask.f32 256
      %vm1845 = vmand %vm326, %vm1844
      %v1846 = vld [vmem:[%s301] sm:$0x1]
      %v1847 = vsel %vm1845, %v1843, %v1846
      %1848 = vst [vmem:[%s301] sm:$0x1] %v1847
      %v1850 = vrot.slane %v1843, 2
      %v1853 = vsel %vm1088, %v1843, %v1850
      %v1854 = vshll.u32 %v1853, 16
      %v1857 = vld [vmem:[%s1095] sm:$0x1]
      %v1858 = vsel %vm328, %v1854, %v1857
      %1859 = vst [vmem:[%s1095] sm:$0x1] %v1858
      %v1860 = vld [vmem:[#allocation3] sm:$0x1]
      %v1861 = vld [vmem:[#allocation3] sm:$0x2]
      %1863 = vst [vmem:[#allocation1] ss:$4 sm:$0xff] %v1860
      %v1864 = vld.sshfl [vmem:[#allocation1] sm:$0xff pattern:$0x73625140]
      %v1865 = vshrl.u32 %v1864, 16
      %1869 = vst [vmem:[#allocation1] ss:$4 sm:$0xff] %v1861
      %v1870 = vld.sshfl [vmem:[#allocation1] sm:$0xff pattern:$0x73625140]
      %v1872 = vrot.slane %v1870, 1
      %v1874 = vld [vmem:[%s5] sm:$0xf]
      %v1875 = vld [vmem:[%s5 + $0x4] sm:$0xf]
      %v1876 = vld [vmem:[%s5 + $0x8] sm:$0xf]
      %v1877 = vld [vmem:[%s5 + $0xc] sm:$0xf]
      %v1878 = vld [vmem:[%s5 + $0x10] sm:$0xf]
      %v1879 = vld [vmem:[%s5 + $0x14] sm:$0xf]
      %v1880 = vld [vmem:[%s5 + $0x18] sm:$0xf]
      %v1881 = vld [vmem:[%s5 + $0x1c] sm:$0xf]
      %v1882 = vld [vmem:[%s5 + $0x20] sm:$0xf]
      %v1883 = vld [vmem:[%s5 + $0x24] sm:$0xf]
      %v1884 = vld [vmem:[%s5 + $0x28] sm:$0xf]
      %v1885 = vld [vmem:[%s5 + $0x2c] sm:$0xf]
      %v1886 = vld [vmem:[%s5 + $0x30] sm:$0xf]
      %v1887 = vld [vmem:[%s5 + $0x34] sm:$0xf]
      %v1888 = vld [vmem:[%s5 + $0x38] sm:$0xf]
      %v1889 = vld [vmem:[%s5 + $0x3c] sm:$0xf]
      %v1890 = vld [vmem:[%s5 + $0x40] sm:$0xf]
      %v1891 = vld [vmem:[%s5 + $0x44] sm:$0xf]
      %v1892 = vld [vmem:[%s5 + $0x48] sm:$0xf]
      %v1893 = vld [vmem:[%s5 + $0x4c] sm:$0xf]
      %v1894 = vld [vmem:[%s5 + $0x50] sm:$0xf]
      %v1895 = vld [vmem:[%s5 + $0x54] sm:$0xf]
      %v1896 = vld [vmem:[%s5 + $0x58] sm:$0xf]
      %v1897 = vld [vmem:[%s5 + $0x5c] sm:$0xf]
      %v1898 = vld [vmem:[%s5 + $0x60] sm:$0xf]
      %v1899 = vld [vmem:[%s5 + $0x64] sm:$0xf]
      %v1900 = vld [vmem:[%s5 + $0x68] sm:$0xf]
      %v1901 = vld [vmem:[%s5 + $0x6c] sm:$0xf]
      %v1902 = vld [vmem:[%s5 + $0x70] sm:$0xf]
      %v1903 = vld [vmem:[%s5 + $0x74] sm:$0xf]
      %v1904 = vld [vmem:[%s5 + $0x78] sm:$0xf]
      %v1905 = vld [vmem:[%s5 + $0x7c] sm:$0xf]
      %v1906 = vld [vmem:[%s5 + $0x80] sm:$0xf]
      %v1907 = vld [vmem:[%s5 + $0x84] sm:$0xf]
      %v1908 = vld [vmem:[%s5 + $0x88] sm:$0xf]
      %v1909 = vld [vmem:[%s5 + $0x8c] sm:$0xf]
      %v1910 = vld [vmem:[%s5 + $0x90] sm:$0xf]
      %v1911 = vld [vmem:[%s5 + $0x94] sm:$0xf]
      %v1912 = vld [vmem:[%s5 + $0x98] sm:$0xf]
      %v1913 = vld [vmem:[%s5 + $0x9c] sm:$0xf]
      %v1914 = vld [vmem:[%s5 + $0xa0] sm:$0xf]
      %v1915 = vld [vmem:[%s5 + $0xa4] sm:$0xf]
      %v1916 = vld [vmem:[%s5 + $0xa8] sm:$0xf]
      %v1917 = vld [vmem:[%s5 + $0xac] sm:$0xf]
      %v1918 = vld [vmem:[%s5 + $0xb0] sm:$0xf]
      %v1919 = vld [vmem:[%s5 + $0xb4] sm:$0xf]
      %v1920 = vld [vmem:[%s5 + $0xb8] sm:$0xf]
      %v1921 = vld [vmem:[%s5 + $0xbc] sm:$0xf]
      %v1922 = vld [vmem:[%s1095] sm:$0x1]
      %v1923 = vld [vmem:[%s1095] sm:$0x2]
      %1925 = vst [vmem:[#allocation1] ss:$4 sm:$0xff] %v1922
      %v1926 = vld.sshfl [vmem:[#allocation1] sm:$0xff pattern:$0x73625140]
      %v1927 = vshrl.u32 %v1926, 16
      %1931 = vst [vmem:[#allocation1] ss:$4 sm:$0xff] %v1923
      %v1932 = vld.sshfl [vmem:[#allocation1] sm:$0xff pattern:$0x73625140]
      %v1934 = vrot.slane %v1932, 1
      %s1936 = scalar_lea.vmem %s5, 192
      %v1937 = vld [vmem:[%s1936] sm:$0xf]
      %v1938 = vld [vmem:[%s1936 + $0x4] sm:$0xf]
      %v1939 = vld [vmem:[%s1936 + $0x8] sm:$0xf]
      %v1940 = vld [vmem:[%s1936 + $0xc] sm:$0xf]
      %v1941 = vld [vmem:[%s1936 + $0x10] sm:$0xf]
      %v1942 = vld [vmem:[%s1936 + $0x14] sm:$0xf]
      %v1943 = vld [vmem:[%s1936 + $0x18] sm:$0xf]
      %v1944 = vld [vmem:[%s1936 + $0x1c] sm:$0xf]
      %v1945 = vld [vmem:[%s1936 + $0x20] sm:$0xf]
      %v1946 = vld [vmem:[%s1936 + $0x24] sm:$0xf]
      %v1947 = vld [vmem:[%s1936 + $0x28] sm:$0xf]
      %v1948 = vld [vmem:[%s1936 + $0x2c] sm:$0xf]
      %v1949 = vld [vmem:[%s1936 + $0x30] sm:$0xf]
      %v1950 = vld [vmem:[%s1936 + $0x34] sm:$0xf]
      %v1951 = vld [vmem:[%s1936 + $0x38] sm:$0xf]
      %v1952 = vld [vmem:[%s1936 + $0x3c] sm:$0xf]
      %v1953 = vld [vmem:[%s1936 + $0x40] sm:$0xf]
      %v1954 = vld [vmem:[%s1936 + $0x44] sm:$0xf]
      %v1955 = vld [vmem:[%s1936 + $0x48] sm:$0xf]
      %v1956 = vld [vmem:[%s1936 + $0x4c] sm:$0xf]
      %v1957 = vld [vmem:[%s1936 + $0x50] sm:$0xf]
      %v1958 = vld [vmem:[%s1936 + $0x54] sm:$0xf]
      %v1959 = vld [vmem:[%s1936 + $0x58] sm:$0xf]
      %v1960 = vld [vmem:[%s1936 + $0x5c] sm:$0xf]
      %v1961 = vld [vmem:[%s1936 + $0x60] sm:$0xf]
      %v1962 = vld [vmem:[%s1936 + $0x64] sm:$0xf]
      %v1963 = vld [vmem:[%s1936 + $0x68] sm:$0xf]
      %v1964 = vld [vmem:[%s1936 + $0x6c] sm:$0xf]
      %v1965 = vld [vmem:[%s1936 + $0x70] sm:$0xf]
      %v1966 = vld [vmem:[%s1936 + $0x74] sm:$0xf]
      %v1967 = vld [vmem:[%s1936 + $0x78] sm:$0xf]
      %v1968 = vld [vmem:[%s1936 + $0x7c] sm:$0xf]
      %v1969 = vld [vmem:[%s1936 + $0x80] sm:$0xf]
      %v1970 = vld [vmem:[%s1936 + $0x84] sm:$0xf]
      %v1971 = vld [vmem:[%s1936 + $0x88] sm:$0xf]
      %v1972 = vld [vmem:[%s1936 + $0x8c] sm:$0xf]
      %v1973 = vld [vmem:[%s1936 + $0x90] sm:$0xf]
      %v1974 = vld [vmem:[%s1936 + $0x94] sm:$0xf]
      %v1975 = vld [vmem:[%s1936 + $0x98] sm:$0xf]
      %v1976 = vld [vmem:[%s1936 + $0x9c] sm:$0xf]
      %v1977 = vld [vmem:[%s1936 + $0xa0] sm:$0xf]
      %v1978 = vld [vmem:[%s1936 + $0xa4] sm:$0xf]
      %v1979 = vld [vmem:[%s1936 + $0xa8] sm:$0xf]
      %v1980 = vld [vmem:[%s1936 + $0xac] sm:$0xf]
      %v1981 = vld [vmem:[%s1936 + $0xb0] sm:$0xf]
      %v1982 = vld [vmem:[%s1936 + $0xb4] sm:$0xf]
      %v1983 = vld [vmem:[%s1936 + $0xb8] sm:$0xf]
      %v1984 = vld [vmem:[%s1936 + $0xbc] sm:$0xf]
      %v2033 = vunpack.c.l.b16 %v1937
      %v2034 = vunpack.c.l.b16 %v1938
      %v2035 = vunpack.c.l.b16 %v1939
      %v2036 = vunpack.c.l.b16 %v1940
      %v2037 = vunpack.c.l.b16 %v1941
      %v2038 = vunpack.c.l.b16 %v1942
      %v2039 = vunpack.c.l.b16 %v1943
      %v2040 = vunpack.c.l.b16 %v1944
      %v2041 = vunpack.c.l.b16 %v1945
      %v2042 = vunpack.c.l.b16 %v1946
      %v2043 = vunpack.c.l.b16 %v1947
      %v2044 = vunpack.c.l.b16 %v1948
      %v2045 = vunpack.c.l.b16 %v1949
      %v2046 = vunpack.c.l.b16 %v1950
      %v2047 = vunpack.c.l.b16 %v1951
      %v2048 = vunpack.c.l.b16 %v1952
      %v2049 = vunpack.c.l.b16 %v1953
      %v2050 = vunpack.c.l.b16 %v1954
      %v2051 = vunpack.c.l.b16 %v1955
      %v2052 = vunpack.c.l.b16 %v1956
      %v2053 = vunpack.c.l.b16 %v1957
      %v2054 = vunpack.c.l.b16 %v1958
      %v2055 = vunpack.c.l.b16 %v1959
      %v2056 = vunpack.c.l.b16 %v1960
      %v2057 = vunpack.c.l.b16 %v1961
      %v2058 = vunpack.c.l.b16 %v1962
      %v2059 = vunpack.c.l.b16 %v1963
      %v2060 = vunpack.c.l.b16 %v1964
      %v2061 = vunpack.c.l.b16 %v1965
      %v2062 = vunpack.c.l.b16 %v1966
      %v2063 = vunpack.c.l.b16 %v1967
      %v2064 = vunpack.c.l.b16 %v1968
      %v2065 = vunpack.c.l.b16 %v1969
      %v2066 = vunpack.c.l.b16 %v1970
      %v2067 = vunpack.c.l.b16 %v1971
      %v2068 = vunpack.c.l.b16 %v1972
      %v2069 = vunpack.c.l.b16 %v1973
      %v2070 = vunpack.c.l.b16 %v1974
      %v2071 = vunpack.c.l.b16 %v1975
      %v2072 = vunpack.c.l.b16 %v1976
      %v2073 = vunpack.c.l.b16 %v1977
      %v2074 = vunpack.c.l.b16 %v1978
      %v2075 = vunpack.c.l.b16 %v1979
      %v2076 = vunpack.c.l.b16 %v1980
      %v2077 = vunpack.c.l.b16 %v1981
      %v2078 = vunpack.c.l.b16 %v1982
      %v2079 = vunpack.c.l.b16 %v1983
      %v2080 = vunpack.c.l.b16 %v1984
      %v2081 = vpack.c.b16 %v2034, %v2033
      %v2082 = vpack.c.b16 %v2036, %v2035
      %v2083 = vpack.c.b16 %v2038, %v2037
      %v2084 = vpack.c.b16 %v2040, %v2039
      %v2085 = vpack.c.b16 %v2042, %v2041
      %v2086 = vpack.c.b16 %v2044, %v2043
      %v2087 = vpack.c.b16 %v2046, %v2045
      %v2088 = vpack.c.b16 %v2048, %v2047
      %v2089 = vpack.c.b16 %v2050, %v2049
      %v2090 = vpack.c.b16 %v2052, %v2051
      %v2091 = vpack.c.b16 %v2054, %v2053
      %v2092 = vpack.c.b16 %v2056, %v2055
      %v2093 = vpack.c.b16 %v2058, %v2057
      %v2094 = vpack.c.b16 %v2060, %v2059
      %v2095 = vpack.c.b16 %v2062, %v2061
      %v2096 = vpack.c.b16 %v2064, %v2063
      %v2097 = vpack.c.b16 %v2066, %v2065
      %v2098 = vpack.c.b16 %v2068, %v2067
      %v2099 = vpack.c.b16 %v2070, %v2069
      %v2100 = vpack.c.b16 %v2072, %v2071
      %v2101 = vpack.c.b16 %v2074, %v2073
      %v2102 = vpack.c.b16 %v2076, %v2075
      %v2103 = vpack.c.b16 %v2078, %v2077
      %v2104 = vpack.c.b16 %v2080, %v2079
      %2129 = vmatpush.bf16.msra.mxu0 %v2088
      %2130 = vmatpush.bf16.msra.mxu0 %v2087
      %2131 = vmatpush.bf16.msra.mxu0 %v2086
      %2132 = vmatpush.bf16.msra.mxu0 %v2085
      %2133 = vmatpush.bf16.msra.mxu0 %v2084
      %2134 = vmatpush.bf16.msra.mxu0 %v2083
      %2135 = vmatpush.bf16.msra.mxu0 %v2082
      %2136 = vmatpush.bf16.msra.mxu0 %v2081
      %2137 = vmatmul.bf16.gmra.mxu0 %v1922
      %v2138 = vpop.f32.mrf.mxu0
      %v2139 = vadd.f32 0.0, %v2138
      %v2140 = vpop.f32.mrf.mxu0
      %2141 = vdwg.mxu0
      %2142 = vmatpush.bf16.msra.mxu0 %v2096
      %2143 = vmatpush.bf16.msra.mxu0 %v2095
      %2144 = vmatpush.bf16.msra.mxu0 %v2094
      %2145 = vmatpush.bf16.msra.mxu0 %v2093
      %2146 = vmatpush.bf16.msra.mxu0 %v2092
      %2147 = vmatpush.bf16.msra.mxu0 %v2091
      %2148 = vmatpush.bf16.msra.mxu0 %v2090
      %2149 = vmatpush.bf16.msra.mxu0 %v2089
      %2150 = vmatmul.bf16.gmra.mxu0 %v1927
      %v2151 = vpop.f32.mrf.mxu0
      %v2152 = vadd.f32 %v2139, %v2151
      %v2153 = vpop.f32.mrf.mxu0
      %2154 = vdwg.mxu0
      %2155 = vmatpush.bf16.msra.mxu0 %v2104
      %2156 = vmatpush.bf16.msra.mxu0 %v2103
      %2157 = vmatpush.bf16.msra.mxu0 %v2102
      %2158 = vmatpush.bf16.msra.mxu0 %v2101
      %2159 = vmatpush.bf16.msra.mxu0 %v2100
      %2160 = vmatpush.bf16.msra.mxu0 %v2099
      %2161 = vmatpush.bf16.msra.mxu0 %v2098
      %2162 = vmatpush.bf16.msra.mxu0 %v2097
      %2163 = vmatmul.bf16.gmra.mxu0 %v1934
      %v2164 = vpop.f32.mrf.mxu0
      %v2165 = vadd.f32 %v2152, %v2164
      %v2166 = vpop.f32.mrf.mxu0
      %2167 = vdwg.mxu0
      %v2216 = vunpack.c.l.b16 %v1874
      %v2217 = vunpack.c.l.b16 %v1875
      %v2218 = vunpack.c.l.b16 %v1876
      %v2219 = vunpack.c.l.b16 %v1877
      %v2220 = vunpack.c.l.b16 %v1878
      %v2221 = vunpack.c.l.b16 %v1879
      %v2222 = vunpack.c.l.b16 %v1880
      %v2223 = vunpack.c.l.b16 %v1881
      %v2224 = vunpack.c.l.b16 %v1882
      %v2225 = vunpack.c.l.b16 %v1883
      %v2226 = vunpack.c.l.b16 %v1884
      %v2227 = vunpack.c.l.b16 %v1885
      %v2228 = vunpack.c.l.b16 %v1886
      %v2229 = vunpack.c.l.b16 %v1887
      %v2230 = vunpack.c.l.b16 %v1888
      %v2231 = vunpack.c.l.b16 %v1889
      %v2232 = vunpack.c.l.b16 %v1890
      %v2233 = vunpack.c.l.b16 %v1891
      %v2234 = vunpack.c.l.b16 %v1892
      %v2235 = vunpack.c.l.b16 %v1893
      %v2236 = vunpack.c.l.b16 %v1894
      %v2237 = vunpack.c.l.b16 %v1895
      %v2238 = vunpack.c.l.b16 %v1896
      %v2239 = vunpack.c.l.b16 %v1897
      %v2240 = vunpack.c.l.b16 %v1898
      %v2241 = vunpack.c.l.b16 %v1899
      %v2242 = vunpack.c.l.b16 %v1900
      %v2243 = vunpack.c.l.b16 %v1901
      %v2244 = vunpack.c.l.b16 %v1902
      %v2245 = vunpack.c.l.b16 %v1903
      %v2246 = vunpack.c.l.b16 %v1904
      %v2247 = vunpack.c.l.b16 %v1905
      %v2248 = vunpack.c.l.b16 %v1906
      %v2249 = vunpack.c.l.b16 %v1907
      %v2250 = vunpack.c.l.b16 %v1908
      %v2251 = vunpack.c.l.b16 %v1909
      %v2252 = vunpack.c.l.b16 %v1910
      %v2253 = vunpack.c.l.b16 %v1911
      %v2254 = vunpack.c.l.b16 %v1912
      %v2255 = vunpack.c.l.b16 %v1913
      %v2256 = vunpack.c.l.b16 %v1914
      %v2257 = vunpack.c.l.b16 %v1915
      %v2258 = vunpack.c.l.b16 %v1916
      %v2259 = vunpack.c.l.b16 %v1917
      %v2260 = vunpack.c.l.b16 %v1918
      %v2261 = vunpack.c.l.b16 %v1919
      %v2262 = vunpack.c.l.b16 %v1920
      %v2263 = vunpack.c.l.b16 %v1921
      %v2264 = vpack.c.b16 %v2217, %v2216
      %v2265 = vpack.c.b16 %v2219, %v2218
      %v2266 = vpack.c.b16 %v2221, %v2220
      %v2267 = vpack.c.b16 %v2223, %v2222
      %v2268 = vpack.c.b16 %v2225, %v2224
      %v2269 = vpack.c.b16 %v2227, %v2226
      %v2270 = vpack.c.b16 %v2229, %v2228
      %v2271 = vpack.c.b16 %v2231, %v2230
      %v2272 = vpack.c.b16 %v2233, %v2232
      %v2273 = vpack.c.b16 %v2235, %v2234
      %v2274 = vpack.c.b16 %v2237, %v2236
      %v2275 = vpack.c.b16 %v2239, %v2238
      %v2276 = vpack.c.b16 %v2241, %v2240
      %v2277 = vpack.c.b16 %v2243, %v2242
      %v2278 = vpack.c.b16 %v2245, %v2244
      %v2279 = vpack.c.b16 %v2247, %v2246
      %v2280 = vpack.c.b16 %v2249, %v2248
      %v2281 = vpack.c.b16 %v2251, %v2250
      %v2282 = vpack.c.b16 %v2253, %v2252
      %v2283 = vpack.c.b16 %v2255, %v2254
      %v2284 = vpack.c.b16 %v2257, %v2256
      %v2285 = vpack.c.b16 %v2259, %v2258
      %v2286 = vpack.c.b16 %v2261, %v2260
      %v2287 = vpack.c.b16 %v2263, %v2262
      %2312 = vmatpush.bf16.msra.mxu0 %v2271
      %2313 = vmatpush.bf16.msra.mxu0 %v2270
      %2314 = vmatpush.bf16.msra.mxu0 %v2269
      %2315 = vmatpush.bf16.msra.mxu0 %v2268
      %2316 = vmatpush.bf16.msra.mxu0 %v2267
      %2317 = vmatpush.bf16.msra.mxu0 %v2266
      %2318 = vmatpush.bf16.msra.mxu0 %v2265
      %2319 = vmatpush.bf16.msra.mxu0 %v2264
      %2320 = vmatmul.bf16.gmra.mxu0 %v1860
      %v2321 = vpop.f32.mrf.mxu0
      %v2322 = vadd.f32 %v2165, %v2321
      %v2323 = vpop.f32.mrf.mxu0
      %2324 = vdwg.mxu0
      %2325 = vmatpush.bf16.msra.mxu0 %v2279
      %2326 = vmatpush.bf16.msra.mxu0 %v2278
      %2327 = vmatpush.bf16.msra.mxu0 %v2277
      %2328 = vmatpush.bf16.msra.mxu0 %v2276
      %2329 = vmatpush.bf16.msra.mxu0 %v2275
      %2330 = vmatpush.bf16.msra.mxu0 %v2274
      %2331 = vmatpush.bf16.msra.mxu0 %v2273
      %2332 = vmatpush.bf16.msra.mxu0 %v2272
      %2333 = vmatmul.bf16.gmra.mxu0 %v1865
      %v2334 = vpop.f32.mrf.mxu0
      %v2335 = vadd.f32 %v2322, %v2334
      %v2336 = vpop.f32.mrf.mxu0
      %2337 = vdwg.mxu0
      %2338 = vmatpush.bf16.msra.mxu0 %v2287
      %2339 = vmatpush.bf16.msra.mxu0 %v2286
      %2340 = vmatpush.bf16.msra.mxu0 %v2285
      %2341 = vmatpush.bf16.msra.mxu0 %v2284
      %2342 = vmatpush.bf16.msra.mxu0 %v2283
      %2343 = vmatpush.bf16.msra.mxu0 %v2282
      %2344 = vmatpush.bf16.msra.mxu0 %v2281
      %2345 = vmatpush.bf16.msra.mxu0 %v2280
      %2346 = vmatmul.bf16.gmra.mxu0 %v1872
      %v2347 = vpop.f32.mrf.mxu0
      %v2348 = vadd.f32 %v2335, %v2347
      %v2349 = vpop.f32.mrf.mxu0
      %2350 = vdwg.mxu0
      %v2351 = vld [vmem:[%s1590] sm:$0x1]
      %v2352 = vld [vmem:[%s1590] sm:$0x2]
      %2354 = vst [vmem:[#allocation1] ss:$4 sm:$0xff] %v2351
      %v2355 = vld.sshfl [vmem:[#allocation1] sm:$0xff pattern:$0x73625140]
      %v2356 = vshrl.u32 %v2355, 16
      %2360 = vst [vmem:[#allocation1] ss:$4 sm:$0xff] %v2352
      %v2361 = vld.sshfl [vmem:[#allocation1] sm:$0xff pattern:$0x73625140]
      %v2363 = vrot.slane %v2361, 1
      %s2365 = scalar_lea.vmem %s5, 384
      %v2366 = vld [vmem:[%s2365] sm:$0xf]
      %v2367 = vld [vmem:[%s2365 + $0x4] sm:$0xf]
      %v2368 = vld [vmem:[%s2365 + $0x8] sm:$0xf]
      %v2369 = vld [vmem:[%s2365 + $0xc] sm:$0xf]
      %v2370 = vld [vmem:[%s2365 + $0x10] sm:$0xf]
      %v2371 = vld [vmem:[%s2365 + $0x14] sm:$0xf]
      %v2372 = vld [vmem:[%s2365 + $0x18] sm:$0xf]
      %v2373 = vld [vmem:[%s2365 + $0x1c] sm:$0xf]
      %v2374 = vld [vmem:[%s2365 + $0x20] sm:$0xf]
      %v2375 = vld [vmem:[%s2365 + $0x24] sm:$0xf]
      %v2376 = vld [vmem:[%s2365 + $0x28] sm:$0xf]
      %v2377 = vld [vmem:[%s2365 + $0x2c] sm:$0xf]
      %v2378 = vld [vmem:[%s2365 + $0x30] sm:$0xf]
      %v2379 = vld [vmem:[%s2365 + $0x34] sm:$0xf]
      %v2380 = vld [vmem:[%s2365 + $0x38] sm:$0xf]
      %v2381 = vld [vmem:[%s2365 + $0x3c] sm:$0xf]
      %v2382 = vld [vmem:[%s2365 + $0x40] sm:$0xf]
      %v2383 = vld [vmem:[%s2365 + $0x44] sm:$0xf]
      %v2384 = vld [vmem:[%s2365 + $0x48] sm:$0xf]
      %v2385 = vld [vmem:[%s2365 + $0x4c] sm:$0xf]
      %v2386 = vld [vmem:[%s2365 + $0x50] sm:$0xf]
      %v2387 = vld [vmem:[%s2365 + $0x54] sm:$0xf]
      %v2388 = vld [vmem:[%s2365 + $0x58] sm:$0xf]
      %v2389 = vld [vmem:[%s2365 + $0x5c] sm:$0xf]
      %v2390 = vld [vmem:[%s2365 + $0x60] sm:$0xf]
      %v2391 = vld [vmem:[%s2365 + $0x64] sm:$0xf]
      %v2392 = vld [vmem:[%s2365 + $0x68] sm:$0xf]
      %v2393 = vld [vmem:[%s2365 + $0x6c] sm:$0xf]
      %v2394 = vld [vmem:[%s2365 + $0x70] sm:$0xf]
      %v2395 = vld [vmem:[%s2365 + $0x74] sm:$0xf]
      %v2396 = vld [vmem:[%s2365 + $0x78] sm:$0xf]
      %v2397 = vld [vmem:[%s2365 + $0x7c] sm:$0xf]
      %v2398 = vld [vmem:[%s2365 + $0x80] sm:$0xf]
      %v2399 = vld [vmem:[%s2365 + $0x84] sm:$0xf]
      %v2400 = vld [vmem:[%s2365 + $0x88] sm:$0xf]
      %v2401 = vld [vmem:[%s2365 + $0x8c] sm:$0xf]
      %v2402 = vld [vmem:[%s2365 + $0x90] sm:$0xf]
      %v2403 = vld [vmem:[%s2365 + $0x94] sm:$0xf]
      %v2404 = vld [vmem:[%s2365 + $0x98] sm:$0xf]
      %v2405 = vld [vmem:[%s2365 + $0x9c] sm:$0xf]
      %v2406 = vld [vmem:[%s2365 + $0xa0] sm:$0xf]
      %v2407 = vld [vmem:[%s2365 + $0xa4] sm:$0xf]
      %v2408 = vld [vmem:[%s2365 + $0xa8] sm:$0xf]
      %v2409 = vld [vmem:[%s2365 + $0xac] sm:$0xf]
      %v2410 = vld [vmem:[%s2365 + $0xb0] sm:$0xf]
      %v2411 = vld [vmem:[%s2365 + $0xb4] sm:$0xf]
      %v2412 = vld [vmem:[%s2365 + $0xb8] sm:$0xf]
      %v2413 = vld [vmem:[%s2365 + $0xbc] sm:$0xf]
      %v2462 = vunpack.c.l.b16 %v2366
      %v2463 = vunpack.c.l.b16 %v2367
      %v2464 = vunpack.c.l.b16 %v2368
      %v2465 = vunpack.c.l.b16 %v2369
      %v2466 = vunpack.c.l.b16 %v2370
      %v2467 = vunpack.c.l.b16 %v2371
      %v2468 = vunpack.c.l.b16 %v2372
      %v2469 = vunpack.c.l.b16 %v2373
      %v2470 = vunpack.c.l.b16 %v2374
      %v2471 = vunpack.c.l.b16 %v2375
      %v2472 = vunpack.c.l.b16 %v2376
      %v2473 = vunpack.c.l.b16 %v2377
      %v2474 = vunpack.c.l.b16 %v2378
      %v2475 = vunpack.c.l.b16 %v2379
      %v2476 = vunpack.c.l.b16 %v2380
      %v2477 = vunpack.c.l.b16 %v2381
      %v2478 = vunpack.c.l.b16 %v2382
      %v2479 = vunpack.c.l.b16 %v2383
      %v2480 = vunpack.c.l.b16 %v2384
      %v2481 = vunpack.c.l.b16 %v2385
      %v2482 = vunpack.c.l.b16 %v2386
      %v2483 = vunpack.c.l.b16 %v2387
      %v2484 = vunpack.c.l.b16 %v2388
      %v2485 = vunpack.c.l.b16 %v2389
      %v2486 = vunpack.c.l.b16 %v2390
      %v2487 = vunpack.c.l.b16 %v2391
      %v2488 = vunpack.c.l.b16 %v2392
      %v2489 = vunpack.c.l.b16 %v2393
      %v2490 = vunpack.c.l.b16 %v2394
      %v2491 = vunpack.c.l.b16 %v2395
      %v2492 = vunpack.c.l.b16 %v2396
      %v2493 = vunpack.c.l.b16 %v2397
      %v2494 = vunpack.c.l.b16 %v2398
      %v2495 = vunpack.c.l.b16 %v2399
      %v2496 = vunpack.c.l.b16 %v2400
      %v2497 = vunpack.c.l.b16 %v2401
      %v2498 = vunpack.c.l.b16 %v2402
      %v2499 = vunpack.c.l.b16 %v2403
      %v2500 = vunpack.c.l.b16 %v2404
      %v2501 = vunpack.c.l.b16 %v2405
      %v2502 = vunpack.c.l.b16 %v2406
      %v2503 = vunpack.c.l.b16 %v2407
      %v2504 = vunpack.c.l.b16 %v2408
      %v2505 = vunpack.c.l.b16 %v2409
      %v2506 = vunpack.c.l.b16 %v2410
      %v2507 = vunpack.c.l.b16 %v2411
      %v2508 = vunpack.c.l.b16 %v2412
      %v2509 = vunpack.c.l.b16 %v2413
      %v2510 = vpack.c.b16 %v2463, %v2462
      %v2511 = vpack.c.b16 %v2465, %v2464
      %v2512 = vpack.c.b16 %v2467, %v2466
      %v2513 = vpack.c.b16 %v2469, %v2468
      %v2514 = vpack.c.b16 %v2471, %v2470
      %v2515 = vpack.c.b16 %v2473, %v2472
      %v2516 = vpack.c.b16 %v2475, %v2474
      %v2517 = vpack.c.b16 %v2477, %v2476
      %v2518 = vpack.c.b16 %v2479, %v2478
      %v2519 = vpack.c.b16 %v2481, %v2480
      %v2520 = vpack.c.b16 %v2483, %v2482
      %v2521 = vpack.c.b16 %v2485, %v2484
      %v2522 = vpack.c.b16 %v2487, %v2486
      %v2523 = vpack.c.b16 %v2489, %v2488
      %v2524 = vpack.c.b16 %v2491, %v2490
      %v2525 = vpack.c.b16 %v2493, %v2492
      %v2526 = vpack.c.b16 %v2495, %v2494
      %v2527 = vpack.c.b16 %v2497, %v2496
      %v2528 = vpack.c.b16 %v2499, %v2498
      %v2529 = vpack.c.b16 %v2501, %v2500
      %v2530 = vpack.c.b16 %v2503, %v2502
      %v2531 = vpack.c.b16 %v2505, %v2504
      %v2532 = vpack.c.b16 %v2507, %v2506
      %v2533 = vpack.c.b16 %v2509, %v2508
      %2558 = vmatpush.bf16.msra.mxu0 %v2517
      %2559 = vmatpush.bf16.msra.mxu0 %v2516
      %2560 = vmatpush.bf16.msra.mxu0 %v2515
      %2561 = vmatpush.bf16.msra.mxu0 %v2514
      %2562 = vmatpush.bf16.msra.mxu0 %v2513
      %2563 = vmatpush.bf16.msra.mxu0 %v2512
      %2564 = vmatpush.bf16.msra.mxu0 %v2511
      %2565 = vmatpush.bf16.msra.mxu0 %v2510
      %2566 = vmatmul.bf16.gmra.mxu0 %v2351
      %v2567 = vpop.f32.mrf.mxu0
      %v2568 = vadd.f32 0.0, %v2567
      %v2569 = vpop.f32.mrf.mxu0
      %2570 = vdwg.mxu0
      %2571 = vmatpush.bf16.msra.mxu0 %v2525
      %2572 = vmatpush.bf16.msra.mxu0 %v2524
      %2573 = vmatpush.bf16.msra.mxu0 %v2523
      %2574 = vmatpush.bf16.msra.mxu0 %v2522
      %2575 = vmatpush.bf16.msra.mxu0 %v2521
      %2576 = vmatpush.bf16.msra.mxu0 %v2520
      %2577 = vmatpush.bf16.msra.mxu0 %v2519
      %2578 = vmatpush.bf16.msra.mxu0 %v2518
      %2579 = vmatmul.bf16.gmra.mxu0 %v2356
      %v2580 = vpop.f32.mrf.mxu0
      %v2581 = vadd.f32 %v2568, %v2580
      %v2582 = vpop.f32.mrf.mxu0
      %2583 = vdwg.mxu0
      %2584 = vmatpush.bf16.msra.mxu0 %v2533
      %2585 = vmatpush.bf16.msra.mxu0 %v2532
      %2586 = vmatpush.bf16.msra.mxu0 %v2531
      %2587 = vmatpush.bf16.msra.mxu0 %v2530
      %2588 = vmatpush.bf16.msra.mxu0 %v2529
      %2589 = vmatpush.bf16.msra.mxu0 %v2528
      %2590 = vmatpush.bf16.msra.mxu0 %v2527
      %2591 = vmatpush.bf16.msra.mxu0 %v2526
      %2592 = vmatmul.bf16.gmra.mxu0 %v2363
      %v2593 = vpop.f32.mrf.mxu0
      %v2594 = vadd.f32 %v2581, %v2593
      %v2595 = vpop.f32.mrf.mxu0
      %2596 = vdwg.mxu0
      %v2597 = vadd.f32 %v2348, %v2594
      %v2598 = vld [vmem:[%s6] sm:$0x1]
      %v2599 = vadd.f32 %v2597, %v2598
      %v2600 = vpack.c.bf16 %v2599, %v2599
      %v2601 = vld [vmem:[%s304] sm:$0x1]
      %v2602 = vsel %vm1845, %v2600, %v2601
      %2603 = vst [vmem:[%s304] sm:$0x1] %v2602
      %p2604 = scmp.lt.s32.totalorder %s20, 1
      %s2605 = scalar_select %p2604, %s20, 1
      %s2606 = scalar_lea.vmem %s7, %s2605
      %p2607 = scmp.lt.s32.totalorder %s20, 1
      %s2608 = scalar_select %p2607, %s20, 1
      %s2609 = scalar_lea.vmem %s8, %s2608
      // Predicated region
      $region49: #{_lambda_.13} parent=47 // pred_check
        %p2610 = pneg %p190
      $region50: #{_lambda_.13} parent=47 // pred_check_branch
        %2612 = sbr.rel (%p2610) target = $region52
      $region51: #{_lambda_.13} parent=47 // pred_region
        _
      $region52: #{_lambda_.13} parent=47 // pred_fallthru
        _
      // Predicated region
      $region53: #{_lambda_.13} parent=47 // pred_check
        %p2613 = pneg %p216
      $region54: #{_lambda_.13} parent=47 // pred_check_branch
        %2615 = sbr.rel (%p2613) target = $region56
      $region55: #{_lambda_.13} parent=47 // pred_region
        _
      $region56: #{_lambda_.13} parent=47 // pred_fallthru
        _
    $region48: #{_lambda_.13} parent=5 // pred_fallthru
      _
    %p2616 = scmp.le.s32.totalorder 2, %s15
    // Predicated region
    $region57: #{_lambda_.13} parent=5 // pred_check
      %p2617 = pneg %p2616
    $region58: #{_lambda_.13} parent=5 // pred_check_branch
      %2619 = sbr.rel (%p2617) target = $region60
    $region59: #{_lambda_.13} parent=5 // pred_region
      %s2620 = ssub.s32 %s15, 2
      // Predicated region
      $region61: #{_lambda_.13} parent=59 // pred_check
        %p2621 = pneg %p196
      $region62: #{_lambda_.13} parent=59 // pred_check_branch
        %2623 = sbr.rel (%p2621) target = $region64
      $region63: #{_lambda_.13} parent=59 // pred_region
        %p2624 = scmp.lt.s32.totalorder %s21, 1
        %s2625 = scalar_select %p2624, %s21, 1
        %s2626 = scalar_lea.vmem %s7, %s2625
      $region64: #{_lambda_.13} parent=59 // pred_fallthru
        _
      // Predicated region
      $region65: #{_lambda_.13} parent=59 // pred_check
        %p2627 = pneg %p222
      $region66: #{_lambda_.13} parent=59 // pred_check_branch
        %2629 = sbr.rel (%p2627) target = $region68
      $region67: #{_lambda_.13} parent=59 // pred_region
        %p2630 = scmp.lt.s32.totalorder %s21, 1
        %s2631 = scalar_select %p2630, %s21, 1
        %s2632 = scalar_lea.vmem %s8, %s2631
      $region68: #{_lambda_.13} parent=59 // pred_fallthru
        _
    $region60: #{_lambda_.13} parent=5 // pred_fallthru
      _
  $region6: #{_lambda_.13} parent=0 // loop_footer
    %s19 = sadd.s32 1, %s15
  $region7: #{_lambda_.13} parent=0 // loop_footer_branch
    %14 = sbr.rel target = $region3
  $region8: #{_lambda_.13} parent=0 // loop_exit
    _

</llo_original>
